<compile_context>
chip_gen: v5e
topology: v5e:2x2
jax: 0.10.0
libtpu: 0.0.40
codegen_flags: <defaults>
</compile_context>

<pallas_src>
import functools

import jax
import jax.numpy as jnp
from jax.experimental import pallas as pl
from jax.experimental.pallas import tpu as pltpu

_LANES = 128
_SUBLANES = 8
_NEG_BIG = -1e30          # finite "minus infinity" (avoids inf-inf -> nan)
_UNDERFLOW_GUARD = 1e-20  # fast-path column-sum floor before exact recompute


def _round_up(x, m):
    return (x + m - 1) // m * m


def _process_one(x_ref, cm_ref, cs_ref, rlse_ref, diag_ref, m_ref, s_ref, *,
                 i, j, nc, tr, tc, b, ragged_rows, ragged_cols):
    """Per-tile work for one (B, B) logits matrix; tile = (tr, tc)."""
    x = x_ref[...].astype(jnp.float32)                        # (tr, tc), f32 math

    ir = i * tr + jax.lax.broadcasted_iota(jnp.int32, (tr, 1), 0)   # global rows
    ic = j * tc + jax.lax.broadcasted_iota(jnp.int32, (1, tc), 1)   # global cols
    row_ok = (ir < b) if ragged_rows else None
    col_ok = (ic < b) if ragged_cols else None

    # Mask ragged edges (padding region of partial blocks may hold garbage).
    if row_ok is not None and col_ok is not None:
        x = jnp.where(jnp.logical_and(row_ok, col_ok), x, _NEG_BIG)
    elif row_ok is not None:
        x = jnp.where(row_ok, x, _NEG_BIG)
    elif col_ok is not None:
        x = jnp.where(col_ok, x, _NEG_BIG)

    # ---- single-exp core: E = exp(x - rowmax) feeds both reductions --------
    rmax = jnp.max(x, axis=1, keepdims=True)                  # (tr, 1)
    e = jnp.exp(x - rmax)                                     # (tr, tc): 1 EUP exp/elem
    rsum = jnp.sum(e, axis=1, keepdims=True)                  # (tr, 1)

    # ---- column partials (unique output block per (i, j)) ------------------
    tmax = jnp.max(rmax)                                      # per-tile max (scalar)
    w = jnp.exp(rmax - tmax)                                  # (tr, 1), all <= 1
    s_col = jnp.sum(e * w, axis=0, keepdims=True)             # (1, tc): sum exp(x - tmax)

    s_chk = s_col if col_ok is None else jnp.where(col_ok, s_col, 1.0)
    need_fix = jnp.min(s_chk) < _UNDERFLOW_GUARD              # extreme tile dynamic range?

    @pl.when(jnp.logical_not(need_fix))
    def _():
        cm_ref[...] = jnp.full(cm_ref.shape, tmax, jnp.float32)
        cs_ref[...] = s_col[None]

    @pl.when(need_fix)
    def _():  # rare exact path: per-column shift, one extra exp over the tile
        cmax = jnp.max(x, axis=0, keepdims=True)              # (1, tc)
        cs_ref[...] = jnp.sum(jnp.exp(x - cmax), axis=0, keepdims=True)[None]
        cm_ref[...] = cmax[None]

    # ---- row logsumexp ------------------------------------------------------
    if nc == 1:
        lse = jnp.log(rsum) + rmax                            # (tr, 1)
        if row_ok is not None:
            lse = jnp.where(row_ok, lse, 0.0)
        rlse_ref[...] = jnp.full(rlse_ref.shape, jnp.sum(lse), jnp.float32)
    else:
        @pl.when(j == 0)
        def _():
            m_ref[...] = jnp.full(m_ref.shape, _NEG_BIG, jnp.float32)
            s_ref[...] = jnp.zeros(s_ref.shape, jnp.float32)

        m_new = jnp.maximum(m_ref[...], rmax)
        s_ref[...] = (s_ref[...] * jnp.exp(m_ref[...] - m_new)
                      + rsum * jnp.exp(rmax - m_new))
        m_ref[...] = m_new

        @pl.when(j == nc - 1)
        def _():
            lse = jnp.log(s_ref[...]) + m_ref[...]
            if row_ok is not None:
                lse = jnp.where(row_ok, lse, 0.0)
            rlse_ref[...] = jnp.full(rlse_ref.shape, jnp.sum(lse), jnp.float32)

    # ---- diagonal (label) term: accumulate in the resident output block ----
    @pl.when(j == 0)
    def _():
        diag_ref[...] = jnp.zeros(diag_ref.shape, jnp.float32)

    row_lo = i * tr
    col_lo = j * tc
    intersects = jnp.logical_and(row_lo < col_lo + tc, col_lo < row_lo + tr)

    @pl.when(intersects)
    def _():
        dmask = ir == ic                                      # (tr, tc) via broadcast
        if ragged_rows or ragged_cols:
            dmask = jnp.logical_and(dmask, ir < b)
        dsum = jnp.sum(jnp.where(dmask, x, 0.0))
        diag_ref[...] = diag_ref[...] + dsum


def _make_kernel(nc, tr, tc, b, ragged_rows, ragged_cols):
    def kernel(*refs):
        # refs = 3 inputs, 12 outputs (4 per matrix), 6 scratch (2 per matrix)
        x_refs = refs[0:3]
        out_refs = refs[3:15]
        scratch_refs = refs[15:21]
        i = pl.program_id(0)
        j = pl.program_id(1)
        for m in range(3):
            _process_one(x_refs[m], *out_refs[4 * m:4 * m + 4],
                         *scratch_refs[2 * m:2 * m + 2],
                         i=i, j=j, nc=nc, tr=tr, tc=tc, b=b,
                         ragged_rows=ragged_rows, ragged_cols=ragged_cols)
    return kernel


def _combine(b, cm, cs, rlse, diag):
    """Tiny epilogue merging per-row-block partials into the scalar loss."""
    cm = cm[:, 0, :b]                                         # (NR, B)  column shifts
    cs = cs[:, 0, :b]                                         # (NR, B)  shifted sums
    gmax = jnp.max(cm, axis=0)                                # (B,)
    tot = jnp.sum(cs * jnp.exp(cm - gmax[None, :]), axis=0)   # (B,)
    sum_lse_col = jnp.sum(jnp.log(tot) + gmax)
    sum_lse_row = jnp.sum(rlse[:, 0, 0])
    trace = jnp.sum(diag[:, 0, 0])
    return (sum_lse_row + sum_lse_col - 2.0 * trace) / jnp.float32(b)


def _vmem_plan():
    """(vmem_limit_bytes, tile working-set budget) per TPU generation."""
    try:
        kind = jax.devices()[0].device_kind.lower()
    except Exception:  # pragma: no cover - defensive
        kind = ""
    if ("v5" in kind) or ("v6" in kind):
        # v5e/v6e: 128 MiB physical VMEM per core -> raise the scoped limit.
        return 88 * 1024 * 1024, 56 * 1024 * 1024
    # v7x (64 MiB physical / TC) and unknown chips: stay conservative.
    return 48 * 1024 * 1024, 30 * 1024 * 1024


def _select_tiles(b, itemsize):
    vmem_limit, budget = _vmem_plan()
    # Per tile element: 3 matrices x 2 pipeline buffers x input itemsize plus
    # up to ~6 live (tr, tc) f32 temporaries (cast tile, exp tile, reduces).
    per_elem = 6 * itemsize + 24
    max_elems = max(budget // per_elem, 256 * _LANES)
    tr = 256
    tc_cap = max(_LANES, (max_elems // tr) // _LANES * _LANES)
    tc = min(_round_up(b, _LANES), tc_cap)
    return tr, tc, vmem_limit


@functools.partial(jax.jit, static_argnames=("tr", "tc", "vmem_limit"))
def _clip_loss_tiled(logits_ps, logits_sm, logits_mp, *, tr, tc, vmem_limit):
    b = logits_ps.shape[0]
    nr = pl.cdiv(b, tr)
    nc = pl.cdiv(b, tc)
    ragged_rows = (b % tr) != 0
    ragged_cols = (b % tc) != 0

    tile_spec = pl.BlockSpec((tr, tc), lambda i, j: (i, j))
    col_spec = pl.BlockSpec((1, 1, tc), lambda i, j: (i, 0, j))
    scl_spec = pl.BlockSpec((1, 1, _LANES), lambda i, j: (i, 0, 0))
    col_shape = jax.ShapeDtypeStruct((nr, 1, nc * tc), jnp.float32)
    scl_shape = jax.ShapeDtypeStruct((nr, 1, _LANES), jnp.float32)

    itemsize = jnp.dtype(logits_ps.dtype).itemsize
    cost = pl.CostEstimate(
        flops=int(8 * 3 * b * b),
        transcendentals=int(3 * b * b),
        bytes_accessed=int(3 * b * b * itemsize
                           + 3 * 4 * (2 * nr * nc * tc + 2 * nr * _LANES)))

    kernel = _make_kernel(nc, tr, tc, b, ragged_rows, ragged_cols)

    outs = pl.pallas_call(
        kernel,
        out_shape=tuple([col_shape, col_shape, scl_shape, scl_shape] * 3),
        grid=(nr, nc),
        in_specs=[tile_spec, tile_spec, tile_spec],
        out_specs=tuple([col_spec, col_spec, scl_spec, scl_spec] * 3),
        scratch_shapes=[pltpu.VMEM((tr, 1), jnp.float32) for _ in range(6)],
        compiler_params=pltpu.CompilerParams(
            # Row blocks are fully independent -> megacore can split axis 0.
            # TODO(synk): confirm axis 0 actually shards across v7x's two TCs;
            # if not, switch that axis to pltpu.CORE_PARALLEL.
            dimension_semantics=("parallel", "arbitrary"),
            vmem_limit_bytes=int(vmem_limit)),
        cost_estimate=cost,
    )(logits_ps, logits_sm, logits_mp)

    return tuple(_combine(b, *outs[4 * m:4 * m + 4]) for m in range(3))


def _loss_jnp(x):
    x = x.astype(jnp.float32)
    b = x.shape[0]
    idx = jnp.arange(b)

    def ce(l):
        return -jnp.mean(jax.nn.log_softmax(l, axis=-1)[idx, idx])

    return ce(x) + ce(x.T)


def clip_loss(logits_ps, logits_sm, logits_mp, *, block_rows=None, block_cols=None):
    """JAX wrapper reproducing CLIPLoss.forward: returns 3 scalar losses."""
    assert logits_ps.shape == logits_sm.shape == logits_mp.shape
    b = logits_ps.shape[0]
    assert logits_ps.shape == (b, b)

    if b < 256:
        # Tiny batches: grid / custom-call overhead dominates -> plain jnp.
        return tuple(_loss_jnp(x) for x in (logits_ps, logits_sm, logits_mp))

    itemsize = jnp.dtype(logits_ps.dtype).itemsize
    tr, tc, vmem_limit = _select_tiles(b, itemsize)
    if block_rows is not None:
        tr = block_rows
    if block_cols is not None:
        tc = block_cols
    assert tr % _SUBLANES == 0 and tc % _LANES == 0
    return _clip_loss_tiled(logits_ps, logits_sm, logits_mp,
                            tr=tr, tc=tc, vmem_limit=vmem_limit)


def _reference(logits_ps, logits_sm, logits_mp):
    """Pure-JAX reference matching F.cross_entropy semantics."""
    def ce(l):
        b = l.shape[0]
        idx = jnp.arange(b)
        logp = jax.nn.log_softmax(l.astype(jnp.float32), axis=-1)
        return -jnp.mean(logp[idx, idx])

    def sym(l):
        return ce(l) + ce(l.T)

    return sym(logits_ps), sym(logits_sm), sym(logits_mp)


if __name__ == "__main__":
    key = jax.random.PRNGKey(0)
    k_ps, k_sm, k_mp, k_small, k_rag = jax.random.split(key, 5)

    # 1) Aligned bf16 batch: default wide tiles (single column block -> column
    #    partials written once per row block, single-exp fast path, 2 row blocks).
    B = 512
    logits_ps = (jax.random.normal(k_ps, (B, B), jnp.float32) * 3.0).astype(jnp.bfloat16)
    logits_sm = (jax.random.normal(k_sm, (B, B), jnp.float32) * 3.0).astype(jnp.bfloat16)
    logits_mp = (jax.random.normal(k_mp, (B, B), jnp.float32) * 3.0).astype(jnp.bfloat16)

    out = clip_loss(logits_ps, logits_sm, logits_mp)
    jax.block_until_ready(out)
    ref = _reference(logits_ps, logits_sm, logits_mp)
    for got, want in zip(out, ref):
        assert jnp.allclose(got, want, atol=2e-3, rtol=1e-5), (got, want)

    # 2) Ragged f32 batch with forced small tiles: exercises the cdiv grid +
    #    edge masking, the online row-LSE across column blocks, the diagonal
    #    accumulator and the multi-block epilogue merge.  An extreme outlier is
    #    injected so the underflow-guarded exact column path is exercised too.
    Br = 384
    keys = jax.random.split(k_rag, 3)
    rag = [jax.random.normal(k, (Br, Br), jnp.float32) * 3.0 for k in keys]
    rag[0] = rag[0].at[5, 9].add(300.0)
    out_r = clip_loss(*rag, block_rows=256, block_cols=256)
    jax.block_until_ready(out_r)
    ref_r = _reference(*rag)
    for got, want in zip(out_r, ref_r):
        assert jnp.allclose(got, want, atol=2e-3, rtol=1e-5), (got, want)

    # 3) Small-B fallback (plain jnp, no Pallas overhead for tiny matrices).
    ks = jax.random.split(k_small, 3)
    small = [jax.random.normal(k, (8, 8), jnp.float32) * 3.0 for k in ks]
    s_out = clip_loss(*small)
    s_ref = _reference(*small)
    for got, want in zip(s_out, s_ref):
        assert jnp.allclose(got, want, atol=1e-5, rtol=1e-5), (got, want)

    print("KERNEL_OK")
</pallas_src>

<mosaic_0001>
module attributes {stable_mosaic.version = 11 : i64} {
  func.func @kernel(%arg0: i32, %arg1: i32, %arg2: memref<256x512xbf16, #tpu.memory_space<vmem>>, %arg3: memref<256x512xbf16, #tpu.memory_space<vmem>>, %arg4: memref<256x512xbf16, #tpu.memory_space<vmem>>, %arg5: memref<1x1x512xf32, #tpu.memory_space<vmem>>, %arg6: memref<1x1x512xf32, #tpu.memory_space<vmem>>, %arg7: memref<1x1x128xf32, #tpu.memory_space<vmem>>, %arg8: memref<1x1x128xf32, #tpu.memory_space<vmem>>, %arg9: memref<1x1x512xf32, #tpu.memory_space<vmem>>, %arg10: memref<1x1x512xf32, #tpu.memory_space<vmem>>, %arg11: memref<1x1x128xf32, #tpu.memory_space<vmem>>, %arg12: memref<1x1x128xf32, #tpu.memory_space<vmem>>, %arg13: memref<1x1x512xf32, #tpu.memory_space<vmem>>, %arg14: memref<1x1x512xf32, #tpu.memory_space<vmem>>, %arg15: memref<1x1x128xf32, #tpu.memory_space<vmem>>, %arg16: memref<1x1x128xf32, #tpu.memory_space<vmem>>, %arg17: memref<256x1xf32, #tpu.memory_space<vmem>>, %arg18: memref<256x1xf32, #tpu.memory_space<vmem>>, %arg19: memref<256x1xf32, #tpu.memory_space<vmem>>, %arg20: memref<256x1xf32, #tpu.memory_space<vmem>>, %arg21: memref<256x1xf32, #tpu.memory_space<vmem>>, %arg22: memref<256x1xf32, #tpu.memory_space<vmem>>) attributes {dimension_semantics = [#tpu.dimension_semantics<parallel>, #tpu.dimension_semantics<arbitrary>], iteration_bounds = array<i64: 2, 1>, scalar_prefetch = 0 : i64, scratch_operands = 6 : i64, tpu.core_type = #tpu.core_type<tc>, window_params = [{transform_indices = @transform_0, window_bounds = array<i64: 256, 512>}, {transform_indices = @transform_1, window_bounds = array<i64: 256, 512>}, {transform_indices = @transform_2, window_bounds = array<i64: 256, 512>}, {transform_indices = @transform_3, window_bounds = array<i64: 1, 1, 512>}, {transform_indices = @transform_4, window_bounds = array<i64: 1, 1, 512>}, {transform_indices = @transform_5, window_bounds = array<i64: 1, 1, 128>}, {transform_indices = @transform_6, window_bounds = array<i64: 1, 1, 128>}, {transform_indices = @transform_7, window_bounds = array<i64: 1, 1, 512>}, {transform_indices = @transform_8, window_bounds = array<i64: 1, 1, 512>}, {transform_indices = @transform_9, window_bounds = array<i64: 1, 1, 128>}, {transform_indices = @transform_10, window_bounds = array<i64: 1, 1, 128>}, {transform_indices = @transform_11, window_bounds = array<i64: 1, 1, 512>}, {transform_indices = @transform_12, window_bounds = array<i64: 1, 1, 512>}, {transform_indices = @transform_13, window_bounds = array<i64: 1, 1, 128>}, {transform_indices = @transform_14, window_bounds = array<i64: 1, 1, 128>}]} {
    %c0 = arith.constant 0 : index
    %c0_0 = arith.constant 0 : index
    %0 = vector.load %arg2[%c0, %c0_0] : memref<256x512xbf16, #tpu.memory_space<vmem>>, vector<256x512xbf16>
    %1 = arith.extf %0 : vector<256x512xbf16> to vector<256x512xf32>
    %c256_i32 = arith.constant 256 : i32
    %2 = arith.muli %arg0, %c256_i32 : i32
    %3 = tpu.iota {dimensions = array<i32: 0>} : vector<256x1xi32>
    %4 = vector.broadcast %2 : i32 to vector<256x1xi32>
    %5 = arith.addi %4, %3 : vector<256x1xi32>
    %c512_i32 = arith.constant 512 : i32
    %6 = arith.muli %arg1, %c512_i32 : i32
    %7 = tpu.iota {dimensions = array<i32: 1>} : vector<1x512xi32>
    %8 = vector.broadcast %6 : i32 to vector<1x512xi32>
    %9 = arith.addi %8, %7 : vector<1x512xi32>
    %cst = arith.constant dense<0xFF800000> : vector<256xf32>
    %10 = vector.multi_reduction <maximumf>, %1, %cst [1] : vector<256x512xf32> to vector<256xf32>
    %11 = vector.shape_cast %10 : vector<256xf32> to vector<256x1xf32>
    %12 = vector.broadcast %11 : vector<256x1xf32> to vector<256x512xf32>
    %13 = arith.subf %1, %12 : vector<256x512xf32>
    %14 = math.exp %13 : vector<256x512xf32>
    %cst_1 = arith.constant dense<0.000000e+00> : vector<256xf32>
    %15 = vector.multi_reduction <add>, %14, %cst_1 [1] : vector<256x512xf32> to vector<256xf32>
    %16 = vector.shape_cast %15 : vector<256xf32> to vector<256x1xf32>
    %17 = vector.shape_cast %11 : vector<256x1xf32> to vector<1x256x1xf32>
    %cst_2 = arith.constant dense<0xFF800000> : vector<1xf32>
    %18 = vector.multi_reduction <maximumf>, %17, %cst_2 [1, 2] : vector<1x256x1xf32> to vector<1xf32>
    %19 = vector.shape_cast %18 : vector<1xf32> to vector<1x1x1xf32>
    %20 = vector.extract %19[0, 0, 0] : f32 from vector<1x1x1xf32>
    %21 = vector.broadcast %20 : f32 to vector<256x1xf32>
    %22 = arith.subf %11, %21 : vector<256x1xf32>
    %23 = math.exp %22 : vector<256x1xf32>
    %24 = vector.broadcast %23 : vector<256x1xf32> to vector<256x512xf32>
    %25 = arith.mulf %14, %24 : vector<256x512xf32>
    %cst_3 = arith.constant dense<0.000000e+00> : vector<512xf32>
    %26 = vector.multi_reduction <add>, %25, %cst_3 [0] : vector<256x512xf32> to vector<512xf32>
    %27 = vector.shape_cast %26 : vector<512xf32> to vector<1x512xf32>
    %28 = vector.shape_cast %27 : vector<1x512xf32> to vector<1x1x512xf32>
    %cst_4 = arith.constant dense<0x7F800000> : vector<1xf32>
    %29 = vector.multi_reduction <minimumf>, %28, %cst_4 [1, 2] : vector<1x1x512xf32> to vector<1xf32>
    %30 = vector.shape_cast %29 : vector<1xf32> to vector<1x1x1xf32>
    %31 = vector.extract %30[0, 0, 0] : f32 from vector<1x1x1xf32>
    %cst_5 = arith.constant 9.99999968E-21 : f32
    %32 = arith.cmpf olt, %31, %cst_5 : f32
    %true = arith.constant true
    %33 = arith.xori %32, %true : i1
    %34 = arith.extui %33 : i1 to i32
    %c0_i32 = arith.constant 0 : i32
    %35 = arith.cmpi ne, %34, %c0_i32 : i32
    scf.if %35 {
      %174 = vector.broadcast %20 : f32 to vector<1x1x512xf32>
      %c0_66 = arith.constant 0 : index
      %c0_67 = arith.constant 0 : index
      %c0_68 = arith.constant 0 : index
      %175 = vector.load %arg5[%c0_66, %c0_67, %c0_68] : memref<1x1x512xf32, #tpu.memory_space<vmem>>, vector<1x1x512xf32>
      tpu.vector_store %arg5[%c0_66, %c0_67, %c0_68], %174 {strides = array<i32>} : memref<1x1x512xf32, #tpu.memory_space<vmem>>, vector<1x1x512xf32>,
      %176 = vector.shape_cast %27 : vector<1x512xf32> to vector<1x1x512xf32>
      %c0_69 = arith.constant 0 : index
      %c0_70 = arith.constant 0 : index
      %c0_71 = arith.constant 0 : index
      %177 = vector.load %arg6[%c0_69, %c0_70, %c0_71] : memref<1x1x512xf32, #tpu.memory_space<vmem>>, vector<1x1x512xf32>
      tpu.vector_store %arg6[%c0_69, %c0_70, %c0_71], %176 {strides = array<i32>} : memref<1x1x512xf32, #tpu.memory_space<vmem>>, vector<1x1x512xf32>,
    } else {
    }
    %36 = arith.extui %32 : i1 to i32
    %c0_i32_6 = arith.constant 0 : i32
    %37 = arith.cmpi ne, %36, %c0_i32_6 : i32
    scf.if %37 {
      %cst_66 = arith.constant dense<0xFF800000> : vector<512xf32>
      %174 = vector.multi_reduction <maximumf>, %1, %cst_66 [0] : vector<256x512xf32> to vector<512xf32>
      %175 = vector.shape_cast %174 : vector<512xf32> to vector<1x512xf32>
      %176 = vector.broadcast %175 : vector<1x512xf32> to vector<256x512xf32>
      %177 = arith.subf %1, %176 : vector<256x512xf32>
      %178 = math.exp %177 : vector<256x512xf32>
      %cst_67 = arith.constant dense<0.000000e+00> : vector<512xf32>
      %179 = vector.multi_reduction <add>, %178, %cst_67 [0] : vector<256x512xf32> to vector<512xf32>
      %180 = vector.shape_cast %179 : vector<512xf32> to vector<1x512xf32>
      %181 = vector.shape_cast %180 : vector<1x512xf32> to vector<1x1x512xf32>
      %c0_68 = arith.constant 0 : index
      %c0_69 = arith.constant 0 : index
      %c0_70 = arith.constant 0 : index
      %182 = vector.load %arg6[%c0_68, %c0_69, %c0_70] : memref<1x1x512xf32, #tpu.memory_space<vmem>>, vector<1x1x512xf32>
      tpu.vector_store %arg6[%c0_68, %c0_69, %c0_70], %181 {strides = array<i32>} : memref<1x1x512xf32, #tpu.memory_space<vmem>>, vector<1x1x512xf32>,
      %183 = vector.shape_cast %175 : vector<1x512xf32> to vector<1x1x512xf32>
      %c0_71 = arith.constant 0 : index
      %c0_72 = arith.constant 0 : index
      %c0_73 = arith.constant 0 : index
      %184 = vector.load %arg5[%c0_71, %c0_72, %c0_73] : memref<1x1x512xf32, #tpu.memory_space<vmem>>, vector<1x1x512xf32>
      tpu.vector_store %arg5[%c0_71, %c0_72, %c0_73], %183 {strides = array<i32>} : memref<1x1x512xf32, #tpu.memory_space<vmem>>, vector<1x1x512xf32>,
    } else {
    }
    %38 = math.log %16 : vector<256x1xf32>
    %39 = arith.addf %38, %11 : vector<256x1xf32>
    %40 = vector.shape_cast %39 : vector<256x1xf32> to vector<1x256x1xf32>
    %cst_7 = arith.constant dense<0.000000e+00> : vector<1xf32>
    %41 = vector.multi_reduction <add>, %40, %cst_7 [1, 2] : vector<1x256x1xf32> to vector<1xf32>
    %42 = vector.shape_cast %41 : vector<1xf32> to vector<1x1x1xf32>
    %43 = vector.extract %42[0, 0, 0] : f32 from vector<1x1x1xf32>
    %44 = vector.broadcast %43 : f32 to vector<1x1x128xf32>
    %c0_8 = arith.constant 0 : index
    %c0_9 = arith.constant 0 : index
    %c0_10 = arith.constant 0 : index
    %45 = vector.load %arg7[%c0_8, %c0_9, %c0_10] : memref<1x1x128xf32, #tpu.memory_space<vmem>>, vector<1x1x128xf32>
    tpu.vector_store %arg7[%c0_8, %c0_9, %c0_10], %44 {strides = array<i32>} : memref<1x1x128xf32, #tpu.memory_space<vmem>>, vector<1x1x128xf32>,
    %c0_i32_11 = arith.constant 0 : i32
    %46 = arith.cmpi eq, %arg1, %c0_i32_11 : i32
    %47 = arith.extui %46 : i1 to i32
    %c0_i32_12 = arith.constant 0 : i32
    %48 = arith.cmpi ne, %47, %c0_i32_12 : i32
    scf.if %48 {
      %cst_66 = arith.constant 0.000000e+00 : f32
      %174 = vector.broadcast %cst_66 : f32 to vector<1x1x128xf32>
      %c0_67 = arith.constant 0 : index
      %c0_68 = arith.constant 0 : index
      %c0_69 = arith.constant 0 : index
      %175 = vector.load %arg8[%c0_67, %c0_68, %c0_69] : memref<1x1x128xf32, #tpu.memory_space<vmem>>, vector<1x1x128xf32>
      tpu.vector_store %arg8[%c0_67, %c0_68, %c0_69], %174 {strides = array<i32>} : memref<1x1x128xf32, #tpu.memory_space<vmem>>, vector<1x1x128xf32>,
    } else {
    }
    %c256_i32_13 = arith.constant 256 : i32
    %49 = arith.muli %arg0, %c256_i32_13 : i32
    %c512_i32_14 = arith.constant 512 : i32
    %50 = arith.muli %arg1, %c512_i32_14 : i32
    %c512_i32_15 = arith.constant 512 : i32
    %51 = arith.addi %50, %c512_i32_15 : i32
    %52 = arith.cmpi slt, %49, %51 : i32
    %c256_i32_16 = arith.constant 256 : i32
    %53 = arith.addi %49, %c256_i32_16 : i32
    %54 = arith.cmpi slt, %50, %53 : i32
    %55 = arith.andi %52, %54 : i1
    %56 = arith.extui %55 : i1 to i32
    %c0_i32_17 = arith.constant 0 : i32
    %57 = arith.cmpi ne, %56, %c0_i32_17 : i32
    scf.if %57 {
      %174 = vector.broadcast %5 : vector<256x1xi32> to vector<256x512xi32>
      %175 = vector.broadcast %9 : vector<1x512xi32> to vector<256x512xi32>
      %176 = arith.cmpi eq, %174, %175 : vector<256x512xi32>
      %cst_66 = arith.constant 0.000000e+00 : f32
      %177 = vector.broadcast %cst_66 : f32 to vector<256x512xf32>
      %178 = arith.select %176, %1, %177 : vector<256x512xi1>, vector<256x512xf32>
      %179 = vector.shape_cast %178 : vector<256x512xf32> to vector<1x256x512xf32>
      %cst_67 = arith.constant dense<0.000000e+00> : vector<1xf32>
      %180 = vector.multi_reduction <add>, %179, %cst_67 [1, 2] : vector<1x256x512xf32> to vector<1xf32>
      %181 = vector.shape_cast %180 : vector<1xf32> to vector<1x1x1xf32>
      %182 = vector.extract %181[0, 0, 0] : f32 from vector<1x1x1xf32>
      %c0_68 = arith.constant 0 : index
      %c0_69 = arith.constant 0 : index
      %c0_70 = arith.constant 0 : index
      %183 = vector.load %arg8[%c0_68, %c0_69, %c0_70] : memref<1x1x128xf32, #tpu.memory_space<vmem>>, vector<1x1x128xf32>
      %184 = vector.broadcast %182 : f32 to vector<1x1x128xf32>
      %185 = arith.addf %183, %184 : vector<1x1x128xf32>
      %c0_71 = arith.constant 0 : index
      %c0_72 = arith.constant 0 : index
      %c0_73 = arith.constant 0 : index
      %186 = vector.load %arg8[%c0_71, %c0_72, %c0_73] : memref<1x1x128xf32, #tpu.memory_space<vmem>>, vector<1x1x128xf32>
      tpu.vector_store %arg8[%c0_71, %c0_72, %c0_73], %185 {strides = array<i32>} : memref<1x1x128xf32, #tpu.memory_space<vmem>>, vector<1x1x128xf32>,
    } else {
    }
    %c0_18 = arith.constant 0 : index
    %c0_19 = arith.constant 0 : index
    %58 = vector.load %arg3[%c0_18, %c0_19] : memref<256x512xbf16, #tpu.memory_space<vmem>>, vector<256x512xbf16>
    %59 = arith.extf %58 : vector<256x512xbf16> to vector<256x512xf32>
    %c256_i32_20 = arith.constant 256 : i32
    %60 = arith.muli %arg0, %c256_i32_20 : i32
    %61 = tpu.iota {dimensions = array<i32: 0>} : vector<256x1xi32>
    %62 = vector.broadcast %60 : i32 to vector<256x1xi32>
    %63 = arith.addi %62, %61 : vector<256x1xi32>
    %c512_i32_21 = arith.constant 512 : i32
    %64 = arith.muli %arg1, %c512_i32_21 : i32
    %65 = tpu.iota {dimensions = array<i32: 1>} : vector<1x512xi32>
    %66 = vector.broadcast %64 : i32 to vector<1x512xi32>
    %67 = arith.addi %66, %65 : vector<1x512xi32>
    %cst_22 = arith.constant dense<0xFF800000> : vector<256xf32>
    %68 = vector.multi_reduction <maximumf>, %59, %cst_22 [1] : vector<256x512xf32> to vector<256xf32>
    %69 = vector.shape_cast %68 : vector<256xf32> to vector<256x1xf32>
    %70 = vector.broadcast %69 : vector<256x1xf32> to vector<256x512xf32>
    %71 = arith.subf %59, %70 : vector<256x512xf32>
    %72 = math.exp %71 : vector<256x512xf32>
    %cst_23 = arith.constant dense<0.000000e+00> : vector<256xf32>
    %73 = vector.multi_reduction <add>, %72, %cst_23 [1] : vector<256x512xf32> to vector<256xf32>
    %74 = vector.shape_cast %73 : vector<256xf32> to vector<256x1xf32>
    %75 = vector.shape_cast %69 : vector<256x1xf32> to vector<1x256x1xf32>
    %cst_24 = arith.constant dense<0xFF800000> : vector<1xf32>
    %76 = vector.multi_reduction <maximumf>, %75, %cst_24 [1, 2] : vector<1x256x1xf32> to vector<1xf32>
    %77 = vector.shape_cast %76 : vector<1xf32> to vector<1x1x1xf32>
    %78 = vector.extract %77[0, 0, 0] : f32 from vector<1x1x1xf32>
    %79 = vector.broadcast %78 : f32 to vector<256x1xf32>
    %80 = arith.subf %69, %79 : vector<256x1xf32>
    %81 = math.exp %80 : vector<256x1xf32>
    %82 = vector.broadcast %81 : vector<256x1xf32> to vector<256x512xf32>
    %83 = arith.mulf %72, %82 : vector<256x512xf32>
    %cst_25 = arith.constant dense<0.000000e+00> : vector<512xf32>
    %84 = vector.multi_reduction <add>, %83, %cst_25 [0] : vector<256x512xf32> to vector<512xf32>
    %85 = vector.shape_cast %84 : vector<512xf32> to vector<1x512xf32>
    %86 = vector.shape_cast %85 : vector<1x512xf32> to vector<1x1x512xf32>
    %cst_26 = arith.constant dense<0x7F800000> : vector<1xf32>
    %87 = vector.multi_reduction <minimumf>, %86, %cst_26 [1, 2] : vector<1x1x512xf32> to vector<1xf32>
    %88 = vector.shape_cast %87 : vector<1xf32> to vector<1x1x1xf32>
    %89 = vector.extract %88[0, 0, 0] : f32 from vector<1x1x1xf32>
    %cst_27 = arith.constant 9.99999968E-21 : f32
    %90 = arith.cmpf olt, %89, %cst_27 : f32
    %true_28 = arith.constant true
    %91 = arith.xori %90, %true_28 : i1
    %92 = arith.extui %91 : i1 to i32
    %c0_i32_29 = arith.constant 0 : i32
    %93 = arith.cmpi ne, %92, %c0_i32_29 : i32
    scf.if %93 {
      %174 = vector.broadcast %78 : f32 to vector<1x1x512xf32>
      %c0_66 = arith.constant 0 : index
      %c0_67 = arith.constant 0 : index
      %c0_68 = arith.constant 0 : index
      %175 = vector.load %arg9[%c0_66, %c0_67, %c0_68] : memref<1x1x512xf32, #tpu.memory_space<vmem>>, vector<1x1x512xf32>
      tpu.vector_store %arg9[%c0_66, %c0_67, %c0_68], %174 {strides = array<i32>} : memref<1x1x512xf32, #tpu.memory_space<vmem>>, vector<1x1x512xf32>,
      %176 = vector.shape_cast %85 : vector<1x512xf32> to vector<1x1x512xf32>
      %c0_69 = arith.constant 0 : index
      %c0_70 = arith.constant 0 : index
      %c0_71 = arith.constant 0 : index
      %177 = vector.load %arg10[%c0_69, %c0_70, %c0_71] : memref<1x1x512xf32, #tpu.memory_space<vmem>>, vector<1x1x512xf32>
      tpu.vector_store %arg10[%c0_69, %c0_70, %c0_71], %176 {strides = array<i32>} : memref<1x1x512xf32, #tpu.memory_space<vmem>>, vector<1x1x512xf32>,
    } else {
    }
    %94 = arith.extui %90 : i1 to i32
    %c0_i32_30 = arith.constant 0 : i32
    %95 = arith.cmpi ne, %94, %c0_i32_30 : i32
    scf.if %95 {
      %cst_66 = arith.constant dense<0xFF800000> : vector<512xf32>
      %174 = vector.multi_reduction <maximumf>, %59, %cst_66 [0] : vector<256x512xf32> to vector<512xf32>
      %175 = vector.shape_cast %174 : vector<512xf32> to vector<1x512xf32>
      %176 = vector.broadcast %175 : vector<1x512xf32> to vector<256x512xf32>
      %177 = arith.subf %59, %176 : vector<256x512xf32>
      %178 = math.exp %177 : vector<256x512xf32>
      %cst_67 = arith.constant dense<0.000000e+00> : vector<512xf32>
      %179 = vector.multi_reduction <add>, %178, %cst_67 [0] : vector<256x512xf32> to vector<512xf32>
      %180 = vector.shape_cast %179 : vector<512xf32> to vector<1x512xf32>
      %181 = vector.shape_cast %180 : vector<1x512xf32> to vector<1x1x512xf32>
      %c0_68 = arith.constant 0 : index
      %c0_69 = arith.constant 0 : index
      %c0_70 = arith.constant 0 : index
      %182 = vector.load %arg10[%c0_68, %c0_69, %c0_70] : memref<1x1x512xf32, #tpu.memory_space<vmem>>, vector<1x1x512xf32>
      tpu.vector_store %arg10[%c0_68, %c0_69, %c0_70], %181 {strides = array<i32>} : memref<1x1x512xf32, #tpu.memory_space<vmem>>, vector<1x1x512xf32>,
      %183 = vector.shape_cast %175 : vector<1x512xf32> to vector<1x1x512xf32>
      %c0_71 = arith.constant 0 : index
      %c0_72 = arith.constant 0 : index
      %c0_73 = arith.constant 0 : index
      %184 = vector.load %arg9[%c0_71, %c0_72, %c0_73] : memref<1x1x512xf32, #tpu.memory_space<vmem>>, vector<1x1x512xf32>
      tpu.vector_store %arg9[%c0_71, %c0_72, %c0_73], %183 {strides = array<i32>} : memref<1x1x512xf32, #tpu.memory_space<vmem>>, vector<1x1x512xf32>,
    } else {
    }
    %96 = math.log %74 : vector<256x1xf32>
    %97 = arith.addf %96, %69 : vector<256x1xf32>
    %98 = vector.shape_cast %97 : vector<256x1xf32> to vector<1x256x1xf32>
    %cst_31 = arith.constant dense<0.000000e+00> : vector<1xf32>
    %99 = vector.multi_reduction <add>, %98, %cst_31 [1, 2] : vector<1x256x1xf32> to vector<1xf32>
    %100 = vector.shape_cast %99 : vector<1xf32> to vector<1x1x1xf32>
    %101 = vector.extract %100[0, 0, 0] : f32 from vector<1x1x1xf32>
    %102 = vector.broadcast %101 : f32 to vector<1x1x128xf32>
    %c0_32 = arith.constant 0 : index
    %c0_33 = arith.constant 0 : index
    %c0_34 = arith.constant 0 : index
    %103 = vector.load %arg11[%c0_32, %c0_33, %c0_34] : memref<1x1x128xf32, #tpu.memory_space<vmem>>, vector<1x1x128xf32>
    tpu.vector_store %arg11[%c0_32, %c0_33, %c0_34], %102 {strides = array<i32>} : memref<1x1x128xf32, #tpu.memory_space<vmem>>, vector<1x1x128xf32>,
    %c0_i32_35 = arith.constant 0 : i32
    %104 = arith.cmpi eq, %arg1, %c0_i32_35 : i32
    %105 = arith.extui %104 : i1 to i32
    %c0_i32_36 = arith.constant 0 : i32
    %106 = arith.cmpi ne, %105, %c0_i32_36 : i32
    scf.if %106 {
      %cst_66 = arith.constant 0.000000e+00 : f32
      %174 = vector.broadcast %cst_66 : f32 to vector<1x1x128xf32>
      %c0_67 = arith.constant 0 : index
      %c0_68 = arith.constant 0 : index
      %c0_69 = arith.constant 0 : index
      %175 = vector.load %arg12[%c0_67, %c0_68, %c0_69] : memref<1x1x128xf32, #tpu.memory_space<vmem>>, vector<1x1x128xf32>
      tpu.vector_store %arg12[%c0_67, %c0_68, %c0_69], %174 {strides = array<i32>} : memref<1x1x128xf32, #tpu.memory_space<vmem>>, vector<1x1x128xf32>,
    } else {
    }
    %c256_i32_37 = arith.constant 256 : i32
    %107 = arith.muli %arg0, %c256_i32_37 : i32
    %c512_i32_38 = arith.constant 512 : i32
    %108 = arith.muli %arg1, %c512_i32_38 : i32
    %c512_i32_39 = arith.constant 512 : i32
    %109 = arith.addi %108, %c512_i32_39 : i32
    %110 = arith.cmpi slt, %107, %109 : i32
    %c256_i32_40 = arith.constant 256 : i32
    %111 = arith.addi %107, %c256_i32_40 : i32
    %112 = arith.cmpi slt, %108, %111 : i32
    %113 = arith.andi %110, %112 : i1
    %114 = arith.extui %113 : i1 to i32
    %c0_i32_41 = arith.constant 0 : i32
    %115 = arith.cmpi ne, %114, %c0_i32_41 : i32
    scf.if %115 {
      %174 = vector.broadcast %63 : vector<256x1xi32> to vector<256x512xi32>
      %175 = vector.broadcast %67 : vector<1x512xi32> to vector<256x512xi32>
      %176 = arith.cmpi eq, %174, %175 : vector<256x512xi32>
      %cst_66 = arith.constant 0.000000e+00 : f32
      %177 = vector.broadcast %cst_66 : f32 to vector<256x512xf32>
      %178 = arith.select %176, %59, %177 : vector<256x512xi1>, vector<256x512xf32>
      %179 = vector.shape_cast %178 : vector<256x512xf32> to vector<1x256x512xf32>
      %cst_67 = arith.constant dense<0.000000e+00> : vector<1xf32>
      %180 = vector.multi_reduction <add>, %179, %cst_67 [1, 2] : vector<1x256x512xf32> to vector<1xf32>
      %181 = vector.shape_cast %180 : vector<1xf32> to vector<1x1x1xf32>
      %182 = vector.extract %181[0, 0, 0] : f32 from vector<1x1x1xf32>
      %c0_68 = arith.constant 0 : index
      %c0_69 = arith.constant 0 : index
      %c0_70 = arith.constant 0 : index
      %183 = vector.load %arg12[%c0_68, %c0_69, %c0_70] : memref<1x1x128xf32, #tpu.memory_space<vmem>>, vector<1x1x128xf32>
      %184 = vector.broadcast %182 : f32 to vector<1x1x128xf32>
      %185 = arith.addf %183, %184 : vector<1x1x128xf32>
      %c0_71 = arith.constant 0 : index
      %c0_72 = arith.constant 0 : index
      %c0_73 = arith.constant 0 : index
      %186 = vector.load %arg12[%c0_71, %c0_72, %c0_73] : memref<1x1x128xf32, #tpu.memory_space<vmem>>, vector<1x1x128xf32>
      tpu.vector_store %arg12[%c0_71, %c0_72, %c0_73], %185 {strides = array<i32>} : memref<1x1x128xf32, #tpu.memory_space<vmem>>, vector<1x1x128xf32>,
    } else {
    }
    %c0_42 = arith.constant 0 : index
    %c0_43 = arith.constant 0 : index
    %116 = vector.load %arg4[%c0_42, %c0_43] : memref<256x512xbf16, #tpu.memory_space<vmem>>, vector<256x512xbf16>
    %117 = arith.extf %116 : vector<256x512xbf16> to vector<256x512xf32>
    %c256_i32_44 = arith.constant 256 : i32
    %118 = arith.muli %arg0, %c256_i32_44 : i32
    %119 = tpu.iota {dimensions = array<i32: 0>} : vector<256x1xi32>
    %120 = vector.broadcast %118 : i32 to vector<256x1xi32>
    %121 = arith.addi %120, %119 : vector<256x1xi32>
    %c512_i32_45 = arith.constant 512 : i32
    %122 = arith.muli %arg1, %c512_i32_45 : i32
    %123 = tpu.iota {dimensions = array<i32: 1>} : vector<1x512xi32>
    %124 = vector.broadcast %122 : i32 to vector<1x512xi32>
    %125 = arith.addi %124, %123 : vector<1x512xi32>
    %cst_46 = arith.constant dense<0xFF800000> : vector<256xf32>
    %126 = vector.multi_reduction <maximumf>, %117, %cst_46 [1] : vector<256x512xf32> to vector<256xf32>
    %127 = vector.shape_cast %126 : vector<256xf32> to vector<256x1xf32>
    %128 = vector.broadcast %127 : vector<256x1xf32> to vector<256x512xf32>
    %129 = arith.subf %117, %128 : vector<256x512xf32>
    %130 = math.exp %129 : vector<256x512xf32>
    %cst_47 = arith.constant dense<0.000000e+00> : vector<256xf32>
    %131 = vector.multi_reduction <add>, %130, %cst_47 [1] : vector<256x512xf32> to vector<256xf32>
    %132 = vector.shape_cast %131 : vector<256xf32> to vector<256x1xf32>
    %133 = vector.shape_cast %127 : vector<256x1xf32> to vector<1x256x1xf32>
    %cst_48 = arith.constant dense<0xFF800000> : vector<1xf32>
    %134 = vector.multi_reduction <maximumf>, %133, %cst_48 [1, 2] : vector<1x256x1xf32> to vector<1xf32>
    %135 = vector.shape_cast %134 : vector<1xf32> to vector<1x1x1xf32>
    %136 = vector.extract %135[0, 0, 0] : f32 from vector<1x1x1xf32>
    %137 = vector.broadcast %136 : f32 to vector<256x1xf32>
    %138 = arith.subf %127, %137 : vector<256x1xf32>
    %139 = math.exp %138 : vector<256x1xf32>
    %140 = vector.broadcast %139 : vector<256x1xf32> to vector<256x512xf32>
    %141 = arith.mulf %130, %140 : vector<256x512xf32>
    %cst_49 = arith.constant dense<0.000000e+00> : vector<512xf32>
    %142 = vector.multi_reduction <add>, %141, %cst_49 [0] : vector<256x512xf32> to vector<512xf32>
    %143 = vector.shape_cast %142 : vector<512xf32> to vector<1x512xf32>
    %144 = vector.shape_cast %143 : vector<1x512xf32> to vector<1x1x512xf32>
    %cst_50 = arith.constant dense<0x7F800000> : vector<1xf32>
    %145 = vector.multi_reduction <minimumf>, %144, %cst_50 [1, 2] : vector<1x1x512xf32> to vector<1xf32>
    %146 = vector.shape_cast %145 : vector<1xf32> to vector<1x1x1xf32>
    %147 = vector.extract %146[0, 0, 0] : f32 from vector<1x1x1xf32>
    %cst_51 = arith.constant 9.99999968E-21 : f32
    %148 = arith.cmpf olt, %147, %cst_51 : f32
    %true_52 = arith.constant true
    %149 = arith.xori %148, %true_52 : i1
    %150 = arith.extui %149 : i1 to i32
    %c0_i32_53 = arith.constant 0 : i32
    %151 = arith.cmpi ne, %150, %c0_i32_53 : i32
    scf.if %151 {
      %174 = vector.broadcast %136 : f32 to vector<1x1x512xf32>
      %c0_66 = arith.constant 0 : index
      %c0_67 = arith.constant 0 : index
      %c0_68 = arith.constant 0 : index
      %175 = vector.load %arg13[%c0_66, %c0_67, %c0_68] : memref<1x1x512xf32, #tpu.memory_space<vmem>>, vector<1x1x512xf32>
      tpu.vector_store %arg13[%c0_66, %c0_67, %c0_68], %174 {strides = array<i32>} : memref<1x1x512xf32, #tpu.memory_space<vmem>>, vector<1x1x512xf32>,
      %176 = vector.shape_cast %143 : vector<1x512xf32> to vector<1x1x512xf32>
      %c0_69 = arith.constant 0 : index
      %c0_70 = arith.constant 0 : index
      %c0_71 = arith.constant 0 : index
      %177 = vector.load %arg14[%c0_69, %c0_70, %c0_71] : memref<1x1x512xf32, #tpu.memory_space<vmem>>, vector<1x1x512xf32>
      tpu.vector_store %arg14[%c0_69, %c0_70, %c0_71], %176 {strides = array<i32>} : memref<1x1x512xf32, #tpu.memory_space<vmem>>, vector<1x1x512xf32>,
    } else {
    }
    %152 = arith.extui %148 : i1 to i32
    %c0_i32_54 = arith.constant 0 : i32
    %153 = arith.cmpi ne, %152, %c0_i32_54 : i32
    scf.if %153 {
      %cst_66 = arith.constant dense<0xFF800000> : vector<512xf32>
      %174 = vector.multi_reduction <maximumf>, %117, %cst_66 [0] : vector<256x512xf32> to vector<512xf32>
      %175 = vector.shape_cast %174 : vector<512xf32> to vector<1x512xf32>
      %176 = vector.broadcast %175 : vector<1x512xf32> to vector<256x512xf32>
      %177 = arith.subf %117, %176 : vector<256x512xf32>
      %178 = math.exp %177 : vector<256x512xf32>
      %cst_67 = arith.constant dense<0.000000e+00> : vector<512xf32>
      %179 = vector.multi_reduction <add>, %178, %cst_67 [0] : vector<256x512xf32> to vector<512xf32>
      %180 = vector.shape_cast %179 : vector<512xf32> to vector<1x512xf32>
      %181 = vector.shape_cast %180 : vector<1x512xf32> to vector<1x1x512xf32>
      %c0_68 = arith.constant 0 : index
      %c0_69 = arith.constant 0 : index
      %c0_70 = arith.constant 0 : index
      %182 = vector.load %arg14[%c0_68, %c0_69, %c0_70] : memref<1x1x512xf32, #tpu.memory_space<vmem>>, vector<1x1x512xf32>
      tpu.vector_store %arg14[%c0_68, %c0_69, %c0_70], %181 {strides = array<i32>} : memref<1x1x512xf32, #tpu.memory_space<vmem>>, vector<1x1x512xf32>,
      %183 = vector.shape_cast %175 : vector<1x512xf32> to vector<1x1x512xf32>
      %c0_71 = arith.constant 0 : index
      %c0_72 = arith.constant 0 : index
      %c0_73 = arith.constant 0 : index
      %184 = vector.load %arg13[%c0_71, %c0_72, %c0_73] : memref<1x1x512xf32, #tpu.memory_space<vmem>>, vector<1x1x512xf32>
      tpu.vector_store %arg13[%c0_71, %c0_72, %c0_73], %183 {strides = array<i32>} : memref<1x1x512xf32, #tpu.memory_space<vmem>>, vector<1x1x512xf32>,
    } else {
    }
    %154 = math.log %132 : vector<256x1xf32>
    %155 = arith.addf %154, %127 : vector<256x1xf32>
    %156 = vector.shape_cast %155 : vector<256x1xf32> to vector<1x256x1xf32>
    %cst_55 = arith.constant dense<0.000000e+00> : vector<1xf32>
    %157 = vector.multi_reduction <add>, %156, %cst_55 [1, 2] : vector<1x256x1xf32> to vector<1xf32>
    %158 = vector.shape_cast %157 : vector<1xf32> to vector<1x1x1xf32>
    %159 = vector.extract %158[0, 0, 0] : f32 from vector<1x1x1xf32>
    %160 = vector.broadcast %159 : f32 to vector<1x1x128xf32>
    %c0_56 = arith.constant 0 : index
    %c0_57 = arith.constant 0 : index
    %c0_58 = arith.constant 0 : index
    %161 = vector.load %arg15[%c0_56, %c0_57, %c0_58] : memref<1x1x128xf32, #tpu.memory_space<vmem>>, vector<1x1x128xf32>
    tpu.vector_store %arg15[%c0_56, %c0_57, %c0_58], %160 {strides = array<i32>} : memref<1x1x128xf32, #tpu.memory_space<vmem>>, vector<1x1x128xf32>,
    %c0_i32_59 = arith.constant 0 : i32
    %162 = arith.cmpi eq, %arg1, %c0_i32_59 : i32
    %163 = arith.extui %162 : i1 to i32
    %c0_i32_60 = arith.constant 0 : i32
    %164 = arith.cmpi ne, %163, %c0_i32_60 : i32
    scf.if %164 {
      %cst_66 = arith.constant 0.000000e+00 : f32
      %174 = vector.broadcast %cst_66 : f32 to vector<1x1x128xf32>
      %c0_67 = arith.constant 0 : index
      %c0_68 = arith.constant 0 : index
      %c0_69 = arith.constant 0 : index
      %175 = vector.load %arg16[%c0_67, %c0_68, %c0_69] : memref<1x1x128xf32, #tpu.memory_space<vmem>>, vector<1x1x128xf32>
      tpu.vector_store %arg16[%c0_67, %c0_68, %c0_69], %174 {strides = array<i32>} : memref<1x1x128xf32, #tpu.memory_space<vmem>>, vector<1x1x128xf32>,
    } else {
    }
    %c256_i32_61 = arith.constant 256 : i32
    %165 = arith.muli %arg0, %c256_i32_61 : i32
    %c512_i32_62 = arith.constant 512 : i32
    %166 = arith.muli %arg1, %c512_i32_62 : i32
    %c512_i32_63 = arith.constant 512 : i32
    %167 = arith.addi %166, %c512_i32_63 : i32
    %168 = arith.cmpi slt, %165, %167 : i32
    %c256_i32_64 = arith.constant 256 : i32
    %169 = arith.addi %165, %c256_i32_64 : i32
    %170 = arith.cmpi slt, %166, %169 : i32
    %171 = arith.andi %168, %170 : i1
    %172 = arith.extui %171 : i1 to i32
    %c0_i32_65 = arith.constant 0 : i32
    %173 = arith.cmpi ne, %172, %c0_i32_65 : i32
    scf.if %173 {
      %174 = vector.broadcast %121 : vector<256x1xi32> to vector<256x512xi32>
      %175 = vector.broadcast %125 : vector<1x512xi32> to vector<256x512xi32>
      %176 = arith.cmpi eq, %174, %175 : vector<256x512xi32>
      %cst_66 = arith.constant 0.000000e+00 : f32
      %177 = vector.broadcast %cst_66 : f32 to vector<256x512xf32>
      %178 = arith.select %176, %117, %177 : vector<256x512xi1>, vector<256x512xf32>
      %179 = vector.shape_cast %178 : vector<256x512xf32> to vector<1x256x512xf32>
      %cst_67 = arith.constant dense<0.000000e+00> : vector<1xf32>
      %180 = vector.multi_reduction <add>, %179, %cst_67 [1, 2] : vector<1x256x512xf32> to vector<1xf32>
      %181 = vector.shape_cast %180 : vector<1xf32> to vector<1x1x1xf32>
      %182 = vector.extract %181[0, 0, 0] : f32 from vector<1x1x1xf32>
      %c0_68 = arith.constant 0 : index
      %c0_69 = arith.constant 0 : index
      %c0_70 = arith.constant 0 : index
      %183 = vector.load %arg16[%c0_68, %c0_69, %c0_70] : memref<1x1x128xf32, #tpu.memory_space<vmem>>, vector<1x1x128xf32>
      %184 = vector.broadcast %182 : f32 to vector<1x1x128xf32>
      %185 = arith.addf %183, %184 : vector<1x1x128xf32>
      %c0_71 = arith.constant 0 : index
      %c0_72 = arith.constant 0 : index
      %c0_73 = arith.constant 0 : index
      %186 = vector.load %arg16[%c0_71, %c0_72, %c0_73] : memref<1x1x128xf32, #tpu.memory_space<vmem>>, vector<1x1x128xf32>
      tpu.vector_store %arg16[%c0_71, %c0_72, %c0_73], %185 {strides = array<i32>} : memref<1x1x128xf32, #tpu.memory_space<vmem>>, vector<1x1x128xf32>,
    } else {
    }
    return
  }
  func.func @transform_0(%arg0: i32, %arg1: i32) -> (i32, i32) {
    %c0_i32 = arith.constant 0 : i32
    return %arg0, %arg1 : i32, i32
  }
  func.func @transform_1(%arg0: i32, %arg1: i32) -> (i32, i32) {
    %c0_i32 = arith.constant 0 : i32
    return %arg0, %arg1 : i32, i32
  }
  func.func @transform_2(%arg0: i32, %arg1: i32) -> (i32, i32) {
    %c0_i32 = arith.constant 0 : i32
    return %arg0, %arg1 : i32, i32
  }
  func.func @transform_3(%arg0: i32, %arg1: i32) -> (i32, i32, i32) {
    %c0_i32 = arith.constant 0 : i32
    %c0_i32_0 = arith.constant 0 : i32
    return %arg0, %c0_i32, %arg1 : i32, i32, i32
  }
  func.func @transform_4(%arg0: i32, %arg1: i32) -> (i32, i32, i32) {
    %c0_i32 = arith.constant 0 : i32
    %c0_i32_0 = arith.constant 0 : i32
    return %arg0, %c0_i32, %arg1 : i32, i32, i32
  }
  func.func @transform_5(%arg0: i32, %arg1: i32) -> (i32, i32, i32) {
    %c0_i32 = arith.constant 0 : i32
    %c0_i32_0 = arith.constant 0 : i32
    %c0_i32_1 = arith.constant 0 : i32
    return %arg0, %c0_i32, %c0_i32_0 : i32, i32, i32
  }
  func.func @transform_6(%arg0: i32, %arg1: i32) -> (i32, i32, i32) {
    %c0_i32 = arith.constant 0 : i32
    %c0_i32_0 = arith.constant 0 : i32
    %c0_i32_1 = arith.constant 0 : i32
    return %arg0, %c0_i32, %c0_i32_0 : i32, i32, i32
  }
  func.func @transform_7(%arg0: i32, %arg1: i32) -> (i32, i32, i32) {
    %c0_i32 = arith.constant 0 : i32
    %c0_i32_0 = arith.constant 0 : i32
    return %arg0, %c0_i32, %arg1 : i32, i32, i32
  }
  func.func @transform_8(%arg0: i32, %arg1: i32) -> (i32, i32, i32) {
    %c0_i32 = arith.constant 0 : i32
    %c0_i32_0 = arith.constant 0 : i32
    return %arg0, %c0_i32, %arg1 : i32, i32, i32
  }
  func.func @transform_9(%arg0: i32, %arg1: i32) -> (i32, i32, i32) {
    %c0_i32 = arith.constant 0 : i32
    %c0_i32_0 = arith.constant 0 : i32
    %c0_i32_1 = arith.constant 0 : i32
    return %arg0, %c0_i32, %c0_i32_0 : i32, i32, i32
  }
  func.func @transform_10(%arg0: i32, %arg1: i32) -> (i32, i32, i32) {
    %c0_i32 = arith.constant 0 : i32
    %c0_i32_0 = arith.constant 0 : i32
    %c0_i32_1 = arith.constant 0 : i32
    return %arg0, %c0_i32, %c0_i32_0 : i32, i32, i32
  }
  func.func @transform_11(%arg0: i32, %arg1: i32) -> (i32, i32, i32) {
    %c0_i32 = arith.constant 0 : i32
    %c0_i32_0 = arith.constant 0 : i32
    return %arg0, %c0_i32, %arg1 : i32, i32, i32
  }
  func.func @transform_12(%arg0: i32, %arg1: i32) -> (i32, i32, i32) {
    %c0_i32 = arith.constant 0 : i32
    %c0_i32_0 = arith.constant 0 : i32
    return %arg0, %c0_i32, %arg1 : i32, i32, i32
  }
  func.func @transform_13(%arg0: i32, %arg1: i32) -> (i32, i32, i32) {
    %c0_i32 = arith.constant 0 : i32
    %c0_i32_0 = arith.constant 0 : i32
    %c0_i32_1 = arith.constant 0 : i32
    return %arg0, %c0_i32, %c0_i32_0 : i32, i32, i32
  }
  func.func @transform_14(%arg0: i32, %arg1: i32) -> (i32, i32, i32) {
    %c0_i32 = arith.constant 0 : i32
    %c0_i32_0 = arith.constant 0 : i32
    %c0_i32_1 = arith.constant 0 : i32
    return %arg0, %c0_i32, %c0_i32_0 : i32, i32, i32
  }
}

</mosaic_0001>

<llo_original>
// kernel: _clip_loss_tiled.1
$region0: #{_clip_loss_tiled.1}
  #allocation0 [shape = 'u32[]', space=smem, size = 0x4, offset = 0x4, fixed_abs, tag = 'smem constant byte address 0x4 - core index']
  #allocation1 [shape = 'u32[72,128]{1,0:T(1,128)}', space=vmem, size = 0x9000, scoped, tag = 'internal scratch']
  #allocation2 [shape = 'f32[256,1]{1,0:T(8,128)}', space=vmem, size = 0x20000, scoped, tag = 'scratch operand']
  #allocation3 [shape = 'f32[256,1]{1,0:T(8,128)}', space=vmem, size = 0x20000, scoped, tag = 'scratch operand']
  #allocation4 [shape = 'f32[256,1]{1,0:T(8,128)}', space=vmem, size = 0x20000, scoped, tag = 'scratch operand']
  #allocation5 [shape = 'f32[256,1]{1,0:T(8,128)}', space=vmem, size = 0x20000, scoped, tag = 'scratch operand']
  #allocation6 [shape = 'f32[256,1]{1,0:T(8,128)}', space=vmem, size = 0x20000, scoped, tag = 'scratch operand']
  #allocation7 [shape = 'f32[256,1]{1,0:T(8,128)}', space=vmem, size = 0x20000, scoped, tag = 'scratch operand']
  %s0 = inlined_call_operand.hbm [shape: bf16[512,512], index: 0, kind: input, shape index: {}]
  %s1 = inlined_call_operand.hbm [shape: bf16[512,512], index: 1, kind: input, shape index: {}]
  %s2 = inlined_call_operand.hbm [shape: bf16[512,512], index: 2, kind: input, shape index: {}]
  %s3 = inlined_call_operand.vmem [shape: f32[2,1,512], index: 3, kind: output, shape index: {0}]
  %s4 = inlined_call_operand.vmem [shape: f32[2,1,512], index: 4, kind: output, shape index: {1}]
  %s5 = inlined_call_operand.vmem [shape: f32[2,1,128], index: 5, kind: output, shape index: {2}]
  %s6 = inlined_call_operand.vmem [shape: f32[2,1,128], index: 6, kind: output, shape index: {3}]
  %s7 = inlined_call_operand.vmem [shape: f32[2,1,512], index: 7, kind: output, shape index: {4}]
  %s8 = inlined_call_operand.vmem [shape: f32[2,1,512], index: 8, kind: output, shape index: {5}]
  %s9 = inlined_call_operand.vmem [shape: f32[2,1,128], index: 9, kind: output, shape index: {6}]
  %s10 = inlined_call_operand.vmem [shape: f32[2,1,128], index: 10, kind: output, shape index: {7}]
  %s11 = inlined_call_operand.vmem [shape: f32[2,1,512], index: 11, kind: output, shape index: {8}]
  %s12 = inlined_call_operand.vmem [shape: f32[2,1,512], index: 12, kind: output, shape index: {9}]
  %s13 = inlined_call_operand.vmem [shape: f32[2,1,128], index: 13, kind: output, shape index: {10}]
  %s14 = inlined_call_operand.vmem [shape: f32[2,1,128], index: 14, kind: output, shape index: {11}]
  %15 = xla_tuple %s3, %s4, %s5, %s6, %s7, %s8, %s9, %s10, %s11, %s12, %s13, %s14
  %s16 = sld [smem:[#allocation0]]
  $region193: #{_clip_loss_tiled.1} parent=0
    _
  %s18 = ssub.s32 1, %s16
  %s19 = scalar_select 0, %s18, %s16
  $region1: #{_clip_loss_tiled.1} parent=0
    #allocation8 [shape = 'u8[524288]{0}', space=vmem, size = 0x80000, scoped, tag = 'input window, operand 0']
    #allocation9 [shape = 's32[2]{0}', space=sflag, size = 0x8, scoped, tag = 'scoped memory for _clip_loss_tiled.1']
    #allocation10 [shape = 'u8[524288]{0}', space=vmem, size = 0x80000, scoped, tag = 'input window, operand 1']
    #allocation11 [shape = 's32[2]{0}', space=sflag, size = 0x8, scoped, tag = 'scoped memory for _clip_loss_tiled.1']
    #allocation12 [shape = 'u8[524288]{0}', space=vmem, size = 0x80000, scoped, tag = 'input window, operand 2']
    %20 = vsyncpa [#allocation9], 0
    %s21 = scalar_lea.sflag [#allocation9], 1
    %22 = vsyncpa %s21, 0
    %23 = vsyncpa [#allocation11], 0
    %s24 = scalar_lea.sflag [#allocation11], 1
    %25 = vsyncpa %s24, 0
    loop: start=0, step=1, limit=4
    $region2: #{_clip_loss_tiled.1} parent=1 // loop_pre_header
      _
    $region3: #{_clip_loss_tiled.1} parent=1 // loop_header
      %s27 = sphi 0, %s31
      %p28 = scmp.ge.s32.totalorder %s27, 4
      %s34 = sphi 0, %s46
      %s35 = sphi 0, %s42
      %s36 = sphi 0, %s34
      %s37 = sphi 0, %s35
      %s38 = sphi 0, %s36
      %s39 = sphi 0, %s37
      %s51 = sphi 0, %s53
      %s54 = sphi 0, %s51
      %s55 = sphi 0, %s54
      %s71 = sphi 0, %s55
      %s79 = sphi 0, %s81
      %s82 = sphi 0, %s79
      %s83 = sphi 0, %s82
      %s99 = sphi 0, %s83
      %s107 = sphi 0, %s109
      %s110 = sphi 0, %s107
      %s111 = sphi 0, %s110
      %s127 = sphi 0, %s111
      %s135 = sphi 0, %s137
      %s138 = sphi 0, %s135
      %s139 = sphi 0, %s138
      %s155 = sphi 0, %s139
      %s163 = sphi 0, %s165
      %s166 = sphi 0, %s163
      %s167 = sphi 0, %s166
      %s183 = sphi 0, %s167
      %s189 = sphi 0, %s191
      %s192 = sphi 0, %s189
      %s193 = sphi 0, %s192
      %s209 = sphi 0, %s193
      %s215 = sphi 0, %s217
      %s218 = sphi 0, %s215
      %s219 = sphi 0, %s218
      %s235 = sphi 0, %s219
      %s243 = sphi 0, %s245
      %s246 = sphi 0, %s243
      %s247 = sphi 0, %s246
      %s263 = sphi 0, %s247
      %s271 = sphi 0, %s273
      %s274 = sphi 0, %s271
      %s275 = sphi 0, %s274
      %s291 = sphi 0, %s275
      %s297 = sphi 0, %s299
      %s300 = sphi 0, %s297
      %s301 = sphi 0, %s300
      %s317 = sphi 0, %s301
      %s323 = sphi 0, %s325
      %s326 = sphi 0, %s323
      %s327 = sphi 0, %s326
      %s343 = sphi 0, %s327
      %s351 = sphi 0, %s353
      %s354 = sphi 0, %s351
      %s355 = sphi 0, %s354
      %s371 = sphi 0, %s355
      %s379 = sphi 0, %s381
      %s382 = sphi 0, %s379
      %s383 = sphi 0, %s382
      %s399 = sphi 0, %s383
      %s405 = sphi 0, %s407
      %s408 = sphi 0, %s405
      %s409 = sphi 0, %s408
      %s425 = sphi 0, %s409
      %s431 = sphi 0, %s433
      %s434 = sphi 0, %s431
      %s435 = sphi 0, %s434
      %s451 = sphi 0, %s435
    $region4: #{_clip_loss_tiled.1} parent=1 // loop_header_branch
      %30 = sbr.rel (%p28) target = $region8
    $region5: #{_clip_loss_tiled.1} parent=1 // loop_body
      %s32 = ssub.s32 %s27, 1
      %s33 = ssub.s32 %s27, 2
      %s40 = sadd.s32 1, %s35
      %p41 = scmp.ge.s32.totalorder %s40, 1
      %s42 = scalar_select %p41, 0, %s40
      %s43 = sadd.s32 1, %s34
      %s44 = scalar_select %p41, %s43, %s34
      %p45 = scmp.ge.s32.totalorder %s44, 2
      %s46 = scalar_select %p45, 0, %s44
      %s47 = ssub.s32 %s34, %s46
      %s48 = ssub.s32 %s35, %s42
      %s49 = sor.u32 %s47, %s48
      %p50 = scmp.eq.s32.totalorder %s49, 0
      %s52 = sadd.s32 %s51, 1
      %s53 = scalar_select %p50, %s51, %s52
      %p56 = pneg %p50
      %p57 = scmp.eq.s32.totalorder %s27, 1
      %p58 = por %p56, %p57
      %p59 = scmp.ne.s32.totalorder %s51, %s54
      %p60 = scmp.eq.s32.totalorder %s27, 0
      %p61 = por %p59, %p60
      %p62 = scmp.ne.s32.totalorder %s51, %s54
      %p63 = scmp.eq.s32.totalorder %s32, 1
      %p64 = por %p62, %p63
      %p65 = scmp.ne.s32.totalorder %s54, %s55
      %p66 = scmp.eq.s32.totalorder %s32, 0
      %p67 = por %p65, %p66
      %p68 = scmp.ne.s32.totalorder %s54, %s55
      %p69 = scmp.eq.s32.totalorder %s33, 1
      %p70 = por %p68, %p69
      %p72 = scmp.ne.s32.totalorder %s55, %s71
      %p73 = scmp.eq.s32.totalorder %s33, 0
      %p74 = por %p72, %p73
      %s75 = ssub.s32 %s34, %s46
      %s76 = ssub.s32 %s35, %s42
      %s77 = sor.u32 %s75, %s76
      %p78 = scmp.eq.s32.totalorder %s77, 0
      %s80 = sadd.s32 %s79, 1
      %s81 = scalar_select %p78, %s79, %s80
      %p84 = pneg %p78
      %p85 = scmp.eq.s32.totalorder %s27, 1
      %p86 = por %p84, %p85
      %p87 = scmp.ne.s32.totalorder %s79, %s82
      %p88 = scmp.eq.s32.totalorder %s27, 0
      %p89 = por %p87, %p88
      %p90 = scmp.ne.s32.totalorder %s79, %s82
      %p91 = scmp.eq.s32.totalorder %s32, 1
      %p92 = por %p90, %p91
      %p93 = scmp.ne.s32.totalorder %s82, %s83
      %p94 = scmp.eq.s32.totalorder %s32, 0
      %p95 = por %p93, %p94
      %p96 = scmp.ne.s32.totalorder %s82, %s83
      %p97 = scmp.eq.s32.totalorder %s33, 1
      %p98 = por %p96, %p97
      %p100 = scmp.ne.s32.totalorder %s83, %s99
      %p101 = scmp.eq.s32.totalorder %s33, 0
      %p102 = por %p100, %p101
      %s103 = ssub.s32 %s34, %s46
      %s104 = ssub.s32 %s35, %s42
      %s105 = sor.u32 %s103, %s104
      %p106 = scmp.eq.s32.totalorder %s105, 0
      %s108 = sadd.s32 %s107, 1
      %s109 = scalar_select %p106, %s107, %s108
      %p112 = pneg %p106
      %p113 = scmp.eq.s32.totalorder %s27, 1
      %p114 = por %p112, %p113
      %p115 = scmp.ne.s32.totalorder %s107, %s110
      %p116 = scmp.eq.s32.totalorder %s27, 0
      %p117 = por %p115, %p116
      %p118 = scmp.ne.s32.totalorder %s107, %s110
      %p119 = scmp.eq.s32.totalorder %s32, 1
      %p120 = por %p118, %p119
      %p121 = scmp.ne.s32.totalorder %s110, %s111
      %p122 = scmp.eq.s32.totalorder %s32, 0
      %p123 = por %p121, %p122
      %p124 = scmp.ne.s32.totalorder %s110, %s111
      %p125 = scmp.eq.s32.totalorder %s33, 1
      %p126 = por %p124, %p125
      %p128 = scmp.ne.s32.totalorder %s111, %s127
      %p129 = scmp.eq.s32.totalorder %s33, 0
      %p130 = por %p128, %p129
      %s131 = ssub.s32 %s34, %s46
      %s132 = ssub.s32 %s35, %s42
      %s133 = sor.u32 %s131, %s132
      %p134 = scmp.eq.s32.totalorder %s133, 0
      %s136 = sadd.s32 %s135, 1
      %s137 = scalar_select %p134, %s135, %s136
      %p140 = pneg %p134
      %p141 = scmp.eq.s32.totalorder %s27, 1
      %p142 = por %p140, %p141
      %p143 = scmp.ne.s32.totalorder %s135, %s138
      %p144 = scmp.eq.s32.totalorder %s27, 0
      %p145 = por %p143, %p144
      %p146 = scmp.ne.s32.totalorder %s135, %s138
      %p147 = scmp.eq.s32.totalorder %s32, 1
      %p148 = por %p146, %p147
      %p149 = scmp.ne.s32.totalorder %s138, %s139
      %p150 = scmp.eq.s32.totalorder %s32, 0
      %p151 = por %p149, %p150
      %p152 = scmp.ne.s32.totalorder %s138, %s139
      %p153 = scmp.eq.s32.totalorder %s33, 1
      %p154 = por %p152, %p153
      %p156 = scmp.ne.s32.totalorder %s139, %s155
      %p157 = scmp.eq.s32.totalorder %s33, 0
      %p158 = por %p156, %p157
      %s159 = ssub.s32 %s34, %s46
      %s160 = ssub.s32 %s35, %s42
      %s161 = sor.u32 %s159, %s160
      %p162 = scmp.eq.s32.totalorder %s161, 0
      %s164 = sadd.s32 %s163, 1
      %s165 = scalar_select %p162, %s163, %s164
      %p168 = pneg %p162
      %p169 = scmp.eq.s32.totalorder %s27, 1
      %p170 = por %p168, %p169
      %p171 = scmp.ne.s32.totalorder %s163, %s166
      %p172 = scmp.eq.s32.totalorder %s27, 0
      %p173 = por %p171, %p172
      %p174 = scmp.ne.s32.totalorder %s163, %s166
      %p175 = scmp.eq.s32.totalorder %s32, 1
      %p176 = por %p174, %p175
      %p177 = scmp.ne.s32.totalorder %s166, %s167
      %p178 = scmp.eq.s32.totalorder %s32, 0
      %p179 = por %p177, %p178
      %p180 = scmp.ne.s32.totalorder %s166, %s167
      %p181 = scmp.eq.s32.totalorder %s33, 1
      %p182 = por %p180, %p181
      %p184 = scmp.ne.s32.totalorder %s167, %s183
      %p185 = scmp.eq.s32.totalorder %s33, 0
      %p186 = por %p184, %p185
      %s187 = ssub.s32 %s34, %s46
      %p188 = scmp.eq.s32.totalorder %s187, 0
      %s190 = sadd.s32 %s189, 1
      %s191 = scalar_select %p188, %s189, %s190
      %p194 = pneg %p188
      %p195 = scmp.eq.s32.totalorder %s27, 1
      %p196 = por %p194, %p195
      %p197 = scmp.ne.s32.totalorder %s189, %s192
      %p198 = scmp.eq.s32.totalorder %s27, 0
      %p199 = por %p197, %p198
      %p200 = scmp.ne.s32.totalorder %s189, %s192
      %p201 = scmp.eq.s32.totalorder %s32, 1
      %p202 = por %p200, %p201
      %p203 = scmp.ne.s32.totalorder %s192, %s193
      %p204 = scmp.eq.s32.totalorder %s32, 0
      %p205 = por %p203, %p204
      %p206 = scmp.ne.s32.totalorder %s192, %s193
      %p207 = scmp.eq.s32.totalorder %s33, 1
      %p208 = por %p206, %p207
      %p210 = scmp.ne.s32.totalorder %s193, %s209
      %p211 = scmp.eq.s32.totalorder %s33, 0
      %p212 = por %p210, %p211
      %s213 = ssub.s32 %s34, %s46
      %p214 = scmp.eq.s32.totalorder %s213, 0
      %s216 = sadd.s32 %s215, 1
      %s217 = scalar_select %p214, %s215, %s216
      %p220 = pneg %p214
      %p221 = scmp.eq.s32.totalorder %s27, 1
      %p222 = por %p220, %p221
      %p223 = scmp.ne.s32.totalorder %s215, %s218
      %p224 = scmp.eq.s32.totalorder %s27, 0
      %p225 = por %p223, %p224
      %p226 = scmp.ne.s32.totalorder %s215, %s218
      %p227 = scmp.eq.s32.totalorder %s32, 1
      %p228 = por %p226, %p227
      %p229 = scmp.ne.s32.totalorder %s218, %s219
      %p230 = scmp.eq.s32.totalorder %s32, 0
      %p231 = por %p229, %p230
      %p232 = scmp.ne.s32.totalorder %s218, %s219
      %p233 = scmp.eq.s32.totalorder %s33, 1
      %p234 = por %p232, %p233
      %p236 = scmp.ne.s32.totalorder %s219, %s235
      %p237 = scmp.eq.s32.totalorder %s33, 0
      %p238 = por %p236, %p237
      %s239 = ssub.s32 %s34, %s46
      %s240 = ssub.s32 %s35, %s42
      %s241 = sor.u32 %s239, %s240
      %p242 = scmp.eq.s32.totalorder %s241, 0
      %s244 = sadd.s32 %s243, 1
      %s245 = scalar_select %p242, %s243, %s244
      %p248 = pneg %p242
      %p249 = scmp.eq.s32.totalorder %s27, 1
      %p250 = por %p248, %p249
      %p251 = scmp.ne.s32.totalorder %s243, %s246
      %p252 = scmp.eq.s32.totalorder %s27, 0
      %p253 = por %p251, %p252
      %p254 = scmp.ne.s32.totalorder %s243, %s246
      %p255 = scmp.eq.s32.totalorder %s32, 1
      %p256 = por %p254, %p255
      %p257 = scmp.ne.s32.totalorder %s246, %s247
      %p258 = scmp.eq.s32.totalorder %s32, 0
      %p259 = por %p257, %p258
      %p260 = scmp.ne.s32.totalorder %s246, %s247
      %p261 = scmp.eq.s32.totalorder %s33, 1
      %p262 = por %p260, %p261
      %p264 = scmp.ne.s32.totalorder %s247, %s263
      %p265 = scmp.eq.s32.totalorder %s33, 0
      %p266 = por %p264, %p265
      %s267 = ssub.s32 %s34, %s46
      %s268 = ssub.s32 %s35, %s42
      %s269 = sor.u32 %s267, %s268
      %p270 = scmp.eq.s32.totalorder %s269, 0
      %s272 = sadd.s32 %s271, 1
      %s273 = scalar_select %p270, %s271, %s272
      %p276 = pneg %p270
      %p277 = scmp.eq.s32.totalorder %s27, 1
      %p278 = por %p276, %p277
      %p279 = scmp.ne.s32.totalorder %s271, %s274
      %p280 = scmp.eq.s32.totalorder %s27, 0
      %p281 = por %p279, %p280
      %p282 = scmp.ne.s32.totalorder %s271, %s274
      %p283 = scmp.eq.s32.totalorder %s32, 1
      %p284 = por %p282, %p283
      %p285 = scmp.ne.s32.totalorder %s274, %s275
      %p286 = scmp.eq.s32.totalorder %s32, 0
      %p287 = por %p285, %p286
      %p288 = scmp.ne.s32.totalorder %s274, %s275
      %p289 = scmp.eq.s32.totalorder %s33, 1
      %p290 = por %p288, %p289
      %p292 = scmp.ne.s32.totalorder %s275, %s291
      %p293 = scmp.eq.s32.totalorder %s33, 0
      %p294 = por %p292, %p293
      %s295 = ssub.s32 %s34, %s46
      %p296 = scmp.eq.s32.totalorder %s295, 0
      %s298 = sadd.s32 %s297, 1
      %s299 = scalar_select %p296, %s297, %s298
      %p302 = pneg %p296
      %p303 = scmp.eq.s32.totalorder %s27, 1
      %p304 = por %p302, %p303
      %p305 = scmp.ne.s32.totalorder %s297, %s300
      %p306 = scmp.eq.s32.totalorder %s27, 0
      %p307 = por %p305, %p306
      %p308 = scmp.ne.s32.totalorder %s297, %s300
      %p309 = scmp.eq.s32.totalorder %s32, 1
      %p310 = por %p308, %p309
      %p311 = scmp.ne.s32.totalorder %s300, %s301
      %p312 = scmp.eq.s32.totalorder %s32, 0
      %p313 = por %p311, %p312
      %p314 = scmp.ne.s32.totalorder %s300, %s301
      %p315 = scmp.eq.s32.totalorder %s33, 1
      %p316 = por %p314, %p315
      %p318 = scmp.ne.s32.totalorder %s301, %s317
      %p319 = scmp.eq.s32.totalorder %s33, 0
      %p320 = por %p318, %p319
      %s321 = ssub.s32 %s34, %s46
      %p322 = scmp.eq.s32.totalorder %s321, 0
      %s324 = sadd.s32 %s323, 1
      %s325 = scalar_select %p322, %s323, %s324
      %p328 = pneg %p322
      %p329 = scmp.eq.s32.totalorder %s27, 1
      %p330 = por %p328, %p329
      %p331 = scmp.ne.s32.totalorder %s323, %s326
      %p332 = scmp.eq.s32.totalorder %s27, 0
      %p333 = por %p331, %p332
      %p334 = scmp.ne.s32.totalorder %s323, %s326
      %p335 = scmp.eq.s32.totalorder %s32, 1
      %p336 = por %p334, %p335
      %p337 = scmp.ne.s32.totalorder %s326, %s327
      %p338 = scmp.eq.s32.totalorder %s32, 0
      %p339 = por %p337, %p338
      %p340 = scmp.ne.s32.totalorder %s326, %s327
      %p341 = scmp.eq.s32.totalorder %s33, 1
      %p342 = por %p340, %p341
      %p344 = scmp.ne.s32.totalorder %s327, %s343
      %p345 = scmp.eq.s32.totalorder %s33, 0
      %p346 = por %p344, %p345
      %s347 = ssub.s32 %s34, %s46
      %s348 = ssub.s32 %s35, %s42
      %s349 = sor.u32 %s347, %s348
      %p350 = scmp.eq.s32.totalorder %s349, 0
      %s352 = sadd.s32 %s351, 1
      %s353 = scalar_select %p350, %s351, %s352
      %p356 = pneg %p350
      %p357 = scmp.eq.s32.totalorder %s27, 1
      %p358 = por %p356, %p357
      %p359 = scmp.ne.s32.totalorder %s351, %s354
      %p360 = scmp.eq.s32.totalorder %s27, 0
      %p361 = por %p359, %p360
      %p362 = scmp.ne.s32.totalorder %s351, %s354
      %p363 = scmp.eq.s32.totalorder %s32, 1
      %p364 = por %p362, %p363
      %p365 = scmp.ne.s32.totalorder %s354, %s355
      %p366 = scmp.eq.s32.totalorder %s32, 0
      %p367 = por %p365, %p366
      %p368 = scmp.ne.s32.totalorder %s354, %s355
      %p369 = scmp.eq.s32.totalorder %s33, 1
      %p370 = por %p368, %p369
      %p372 = scmp.ne.s32.totalorder %s355, %s371
      %p373 = scmp.eq.s32.totalorder %s33, 0
      %p374 = por %p372, %p373
      %s375 = ssub.s32 %s34, %s46
      %s376 = ssub.s32 %s35, %s42
      %s377 = sor.u32 %s375, %s376
      %p378 = scmp.eq.s32.totalorder %s377, 0
      %s380 = sadd.s32 %s379, 1
      %s381 = scalar_select %p378, %s379, %s380
      %p384 = pneg %p378
      %p385 = scmp.eq.s32.totalorder %s27, 1
      %p386 = por %p384, %p385
      %p387 = scmp.ne.s32.totalorder %s379, %s382
      %p388 = scmp.eq.s32.totalorder %s27, 0
      %p389 = por %p387, %p388
      %p390 = scmp.ne.s32.totalorder %s379, %s382
      %p391 = scmp.eq.s32.totalorder %s32, 1
      %p392 = por %p390, %p391
      %p393 = scmp.ne.s32.totalorder %s382, %s383
      %p394 = scmp.eq.s32.totalorder %s32, 0
      %p395 = por %p393, %p394
      %p396 = scmp.ne.s32.totalorder %s382, %s383
      %p397 = scmp.eq.s32.totalorder %s33, 1
      %p398 = por %p396, %p397
      %p400 = scmp.ne.s32.totalorder %s383, %s399
      %p401 = scmp.eq.s32.totalorder %s33, 0
      %p402 = por %p400, %p401
      %s403 = ssub.s32 %s34, %s46
      %p404 = scmp.eq.s32.totalorder %s403, 0
      %s406 = sadd.s32 %s405, 1
      %s407 = scalar_select %p404, %s405, %s406
      %p410 = pneg %p404
      %p411 = scmp.eq.s32.totalorder %s27, 1
      %p412 = por %p410, %p411
      %p413 = scmp.ne.s32.totalorder %s405, %s408
      %p414 = scmp.eq.s32.totalorder %s27, 0
      %p415 = por %p413, %p414
      %p416 = scmp.ne.s32.totalorder %s405, %s408
      %p417 = scmp.eq.s32.totalorder %s32, 1
      %p418 = por %p416, %p417
      %p419 = scmp.ne.s32.totalorder %s408, %s409
      %p420 = scmp.eq.s32.totalorder %s32, 0
      %p421 = por %p419, %p420
      %p422 = scmp.ne.s32.totalorder %s408, %s409
      %p423 = scmp.eq.s32.totalorder %s33, 1
      %p424 = por %p422, %p423
      %p426 = scmp.ne.s32.totalorder %s409, %s425
      %p427 = scmp.eq.s32.totalorder %s33, 0
      %p428 = por %p426, %p427
      %s429 = ssub.s32 %s34, %s46
      %p430 = scmp.eq.s32.totalorder %s429, 0
      %s432 = sadd.s32 %s431, 1
      %s433 = scalar_select %p430, %s431, %s432
      %p436 = pneg %p430
      %p437 = scmp.eq.s32.totalorder %s27, 1
      %p438 = por %p436, %p437
      %p439 = scmp.ne.s32.totalorder %s431, %s434
      %p440 = scmp.eq.s32.totalorder %s27, 0
      %p441 = por %p439, %p440
      %p442 = scmp.ne.s32.totalorder %s431, %s434
      %p443 = scmp.eq.s32.totalorder %s32, 1
      %p444 = por %p442, %p443
      %p445 = scmp.ne.s32.totalorder %s434, %s435
      %p446 = scmp.eq.s32.totalorder %s32, 0
      %p447 = por %p445, %p446
      %p448 = scmp.ne.s32.totalorder %s434, %s435
      %p449 = scmp.eq.s32.totalorder %s33, 1
      %p450 = por %p448, %p449
      %p452 = scmp.ne.s32.totalorder %s435, %s451
      %p453 = scmp.eq.s32.totalorder %s33, 0
      %p454 = por %p452, %p453
      %p455 = scmp.le.s32.totalorder 1, %s27
      %p456 = scmp.lt.s32.totalorder %s27, 3
      %p457 = pnand %p455, %p456
      %p458 = pneg %p457
      // Predicated region
      $region9: #{_clip_loss_tiled.1} parent=5 // pred_check
        _
      $region10: #{_clip_loss_tiled.1} parent=5 // pred_check_branch
        %460 = sbr.rel (%p457) target = $region12
      $region11: #{_clip_loss_tiled.1} parent=5 // pred_region
        %s461 = ssub.s32 %s27, 1
      $region12: #{_clip_loss_tiled.1} parent=5 // pred_fallthru
        _
      %p462 = scmp.lt.s32.totalorder %s27, 2
      // Predicated region
      $region13: #{_clip_loss_tiled.1} parent=5 // pred_check
        %p463 = pneg %p462
      $region14: #{_clip_loss_tiled.1} parent=5 // pred_check_branch
        %465 = sbr.rel (%p463) target = $region16
      $region15: #{_clip_loss_tiled.1} parent=5 // pred_region
        // Predicated region
        $region17: #{_clip_loss_tiled.1} parent=15 // pred_check
          %p466 = pneg %p61
        $region18: #{_clip_loss_tiled.1} parent=15 // pred_check_branch
          %468 = sbr.rel (%p466) target = $region20
        $region19: #{_clip_loss_tiled.1} parent=15 // pred_region
          %s469 = sand.u32 %s51, 1
          %s470 = scalar_lea.sflag [#allocation9], %s469
          %s471 = sand.u32 %s51, 1
          %s472 = smul.addr %s471, 512
          %s473 = scalar_lea.vmem [#allocation8], %s472
          %s474 = smul.u32 32, %s34
          %s475 = smul.u32 4, %s35
          %477 = vsyncadd %s470, 0
          %s478 = smul.addr %s474, 4
          %s479 = sadd.s32 %s475, %s478
          %s480 = smul.addr %s479, 4
          %s481 = scalar_lea.hbm %s0, %s480
          %s482 = sshll.u32 %s481, 4
          %s483 = int_to_ptr.hbm [resolvable:$true] %s482
          %s484 = sshll.u32 %s473, 4
          %s485 = int_to_ptr.vmem [resolvable:$true] %s484
          %490 = dma.hbm_to_vmem [thread:$0]  %s483, 8192, %s485, %s470, 256, 256, 16
        $region20: #{_clip_loss_tiled.1} parent=15 // pred_fallthru
          _
        // Predicated region
        $region21: #{_clip_loss_tiled.1} parent=15 // pred_check
          %p491 = pneg %p89
        $region22: #{_clip_loss_tiled.1} parent=15 // pred_check_branch
          %493 = sbr.rel (%p491) target = $region24
        $region23: #{_clip_loss_tiled.1} parent=15 // pred_region
          %s494 = sand.u32 %s27, 1
          %s495 = scalar_lea.sflag [#allocation11], %s494
          %s496 = sand.u32 %s79, 1
          %s497 = smul.addr %s496, 512
          %s498 = scalar_lea.vmem [#allocation10], %s497
          %s499 = smul.u32 32, %s34
          %s500 = smul.u32 4, %s35
          %502 = vsyncadd %s495, 0
          %s503 = smul.addr %s499, 4
          %s504 = sadd.s32 %s500, %s503
          %s505 = smul.addr %s504, 4
          %s506 = scalar_lea.hbm %s1, %s505
          %s507 = sshll.u32 %s506, 4
          %s508 = int_to_ptr.hbm [resolvable:$true] %s507
          %s509 = sshll.u32 %s498, 4
          %s510 = int_to_ptr.vmem [resolvable:$true] %s509
          %515 = dma.hbm_to_vmem [thread:$0]  %s508, 8192, %s510, %s495, 256, 256, 16
        $region24: #{_clip_loss_tiled.1} parent=15 // pred_fallthru
          _
        // Predicated region
        $region25: #{_clip_loss_tiled.1} parent=15 // pred_check
          %p516 = pneg %p117
        $region26: #{_clip_loss_tiled.1} parent=15 // pred_check_branch
          %518 = sbr.rel (%p516) target = $region28
        $region27: #{_clip_loss_tiled.1} parent=15 // pred_region
          %s519 = sand.u32 %s27, 1
          %s520 = scalar_lea.sflag [#allocation11], %s519
          %s521 = sand.u32 %s107, 1
          %s522 = smul.addr %s521, 512
          %s523 = scalar_lea.vmem [#allocation12], %s522
          %s524 = smul.u32 32, %s34
          %s525 = smul.u32 4, %s35
          %527 = vsyncadd %s520, 0
          %s528 = smul.addr %s524, 4
          %s529 = sadd.s32 %s525, %s528
          %s530 = smul.addr %s529, 4
          %s531 = scalar_lea.hbm %s2, %s530
          %s532 = sshll.u32 %s531, 4
          %s533 = int_to_ptr.hbm [resolvable:$true] %s532
          %s534 = sshll.u32 %s523, 4
          %s535 = int_to_ptr.vmem [resolvable:$true] %s534
          %540 = dma.hbm_to_vmem [thread:$0]  %s533, 8192, %s535, %s520, 256, 256, 16
        $region28: #{_clip_loss_tiled.1} parent=15 // pred_fallthru
          _
      $region16: #{_clip_loss_tiled.1} parent=5 // pred_fallthru
        _
      %p541 = scmp.le.s32.totalorder 1, %s27
      %p542 = scmp.lt.s32.totalorder %s27, 3
      %p543 = pnand %p541, %p542
      %p544 = pneg %p543
      // Predicated region
      $region29: #{_clip_loss_tiled.1} parent=5 // pred_check
        _
      $region30: #{_clip_loss_tiled.1} parent=5 // pred_check_branch
        %546 = sbr.rel (%p543) target = $region32
      $region31: #{_clip_loss_tiled.1} parent=5 // pred_region
        %s547 = ssub.s32 %s27, 1
        %s548 = sand.u32 %s54, 1
        %s549 = scalar_lea.sflag [#allocation9], %s548
        %s550 = sand.u32 %s54, 1
        %s551 = smul.addr %s550, 512
        %s552 = scalar_lea.vmem [#allocation8], %s551
        // Predicated region
        $region33: #{_clip_loss_tiled.1} parent=31 // pred_check
          %p553 = pneg %p67
        $region34: #{_clip_loss_tiled.1} parent=31 // pred_check_branch
          %555 = sbr.rel (%p553) target = $region36
        $region35: #{_clip_loss_tiled.1} parent=31 // pred_region
          %557 = dma.done %s549, 8192
        $region36: #{_clip_loss_tiled.1} parent=31 // pred_fallthru
          _
        %s558 = sand.u32 %s32, 1
        %s559 = scalar_lea.sflag [#allocation11], %s558
        %s560 = sand.u32 %s82, 1
        %s561 = smul.addr %s560, 512
        %s562 = scalar_lea.vmem [#allocation10], %s561
        // Predicated region
        $region37: #{_clip_loss_tiled.1} parent=31 // pred_check
          %p563 = pneg %p95
        $region38: #{_clip_loss_tiled.1} parent=31 // pred_check_branch
          %565 = sbr.rel (%p563) target = $region40
        $region39: #{_clip_loss_tiled.1} parent=31 // pred_region
          %567 = dma.done %s559, 8192
        $region40: #{_clip_loss_tiled.1} parent=31 // pred_fallthru
          _
        %s568 = sand.u32 %s32, 1
        %s569 = scalar_lea.sflag [#allocation11], %s568
        %s570 = sand.u32 %s110, 1
        %s571 = smul.addr %s570, 512
        %s572 = scalar_lea.vmem [#allocation12], %s571
        // Predicated region
        $region41: #{_clip_loss_tiled.1} parent=31 // pred_check
          %p573 = pneg %p123
        $region42: #{_clip_loss_tiled.1} parent=31 // pred_check_branch
          %575 = sbr.rel (%p573) target = $region44
        $region43: #{_clip_loss_tiled.1} parent=31 // pred_region
          %577 = dma.done %s569, 8192
        $region44: #{_clip_loss_tiled.1} parent=31 // pred_fallthru
          _
        %s578 = sand.u32 %s54, 1
        %s579 = scalar_lea.sflag [#allocation9], %s578
        %s580 = sand.u32 %s54, 1
        %s581 = smul.addr %s580, 512
        %s582 = scalar_lea.vmem [#allocation8], %s581
        %p583 = pneg %p67
        %p584 = pneg %p64
        %s585 = sand.u32 %s32, 1
        %s586 = scalar_lea.sflag [#allocation11], %s585
        %s587 = sand.u32 %s82, 1
        %s588 = smul.addr %s587, 512
        %s589 = scalar_lea.vmem [#allocation10], %s588
        %p590 = pneg %p95
        %p591 = pneg %p92
        %s592 = sand.u32 %s32, 1
        %s593 = scalar_lea.sflag [#allocation11], %s592
        %s594 = sand.u32 %s110, 1
        %s595 = smul.addr %s594, 512
        %s596 = scalar_lea.vmem [#allocation12], %s595
        %p597 = pneg %p123
        %p598 = pneg %p120
        %p599 = pneg %p151
        %p600 = pneg %p148
        %s601 = smul.u32 4, %s37
        %p602 = scmp.lt.s32.totalorder %s36, 1
        %s603 = scalar_select %p602, %s36, 1
        %p604 = scmp.lt.s32.totalorder %s601, 3
        %s605 = scalar_select %p604, %s601, 3
        %s606 = smul.addr %s603, 4
        %s607 = sadd.s32 %s605, %s606
        %s608 = scalar_lea.vmem %s3, %s607
        %p609 = pneg %p179
        %p610 = pneg %p176
        %s611 = smul.u32 4, %s37
        %p612 = scmp.lt.s32.totalorder %s36, 1
        %s613 = scalar_select %p612, %s36, 1
        %p614 = scmp.lt.s32.totalorder %s611, 3
        %s615 = scalar_select %p614, %s611, 3
        %s616 = smul.addr %s613, 4
        %s617 = sadd.s32 %s615, %s616
        %s618 = scalar_lea.vmem %s4, %s617
        %p619 = pneg %p205
        %p620 = pneg %p202
        %p621 = scmp.lt.s32.totalorder %s36, 1
        %s622 = scalar_select %p621, %s36, 1
        %s623 = scalar_lea.vmem %s5, %s622
        %p624 = pneg %p231
        %p625 = pneg %p228
        %p626 = scmp.lt.s32.totalorder %s36, 1
        %s627 = scalar_select %p626, %s36, 1
        %s628 = scalar_lea.vmem %s6, %s627
        %p629 = pneg %p259
        %p630 = pneg %p256
        %s631 = smul.u32 4, %s37
        %p632 = scmp.lt.s32.totalorder %s36, 1
        %s633 = scalar_select %p632, %s36, 1
        %p634 = scmp.lt.s32.totalorder %s631, 3
        %s635 = scalar_select %p634, %s631, 3
        %s636 = smul.addr %s633, 4
        %s637 = sadd.s32 %s635, %s636
        %s638 = scalar_lea.vmem %s7, %s637
        %p639 = pneg %p287
        %p640 = pneg %p284
        %s641 = smul.u32 4, %s37
        %p642 = scmp.lt.s32.totalorder %s36, 1
        %s643 = scalar_select %p642, %s36, 1
        %p644 = scmp.lt.s32.totalorder %s641, 3
        %s645 = scalar_select %p644, %s641, 3
        %s646 = smul.addr %s643, 4
        %s647 = sadd.s32 %s645, %s646
        %s648 = scalar_lea.vmem %s8, %s647
        %p649 = pneg %p313
        %p650 = pneg %p310
        %p651 = scmp.lt.s32.totalorder %s36, 1
        %s652 = scalar_select %p651, %s36, 1
        %s653 = scalar_lea.vmem %s9, %s652
        %p654 = pneg %p339
        %p655 = pneg %p336
        %p656 = scmp.lt.s32.totalorder %s36, 1
        %s657 = scalar_select %p656, %s36, 1
        %s658 = scalar_lea.vmem %s10, %s657
        %p659 = pneg %p367
        %p660 = pneg %p364
        %s661 = smul.u32 4, %s37
        %p662 = scmp.lt.s32.totalorder %s36, 1
        %s663 = scalar_select %p662, %s36, 1
        %p664 = scmp.lt.s32.totalorder %s661, 3
        %s665 = scalar_select %p664, %s661, 3
        %s666 = smul.addr %s663, 4
        %s667 = sadd.s32 %s665, %s666
        %s668 = scalar_lea.vmem %s11, %s667
        %p669 = pneg %p395
        %p670 = pneg %p392
        %s671 = smul.u32 4, %s37
        %p672 = scmp.lt.s32.totalorder %s36, 1
        %s673 = scalar_select %p672, %s36, 1
        %p674 = scmp.lt.s32.totalorder %s671, 3
        %s675 = scalar_select %p674, %s671, 3
        %s676 = smul.addr %s673, 4
        %s677 = sadd.s32 %s675, %s676
        %s678 = scalar_lea.vmem %s12, %s677
        %p679 = pneg %p421
        %p680 = pneg %p418
        %p681 = scmp.lt.s32.totalorder %s36, 1
        %s682 = scalar_select %p681, %s36, 1
        %s683 = scalar_lea.vmem %s13, %s682
        %p684 = pneg %p447
        %p685 = pneg %p444
        %p686 = scmp.lt.s32.totalorder %s36, 1
        %s687 = scalar_select %p686, %s36, 1
        %s688 = scalar_lea.vmem %s14, %s687
        %s689 = smul.u32 32, %s36
        %s690 = smul.u32 4, %s37
        %s691 = smul.u32 32, %s36
        %s692 = smul.u32 4, %s37
        %s693 = smul.u32 32, %s36
        %s694 = smul.u32 4, %s37
        %s695 = smul.u32 4, %s37
        %p696 = scmp.lt.s32.totalorder %s36, 1
        %s697 = scalar_select %p696, %s36, 1
        %p698 = scmp.lt.s32.totalorder %s695, 3
        %s699 = scalar_select %p698, %s695, 3
        %s700 = smul.addr %s697, 4
        %s701 = sadd.s32 %s699, %s700
        %s702 = scalar_lea.vmem %s3, %s701
        %s703 = smul.u32 4, %s37
        %s704 = smul.u32 4, %s37
        %p705 = scmp.lt.s32.totalorder %s36, 1
        %s706 = scalar_select %p705, %s36, 1
        %p707 = scmp.lt.s32.totalorder %s704, 3
        %s708 = scalar_select %p707, %s704, 3
        %s709 = smul.addr %s706, 4
        %s710 = sadd.s32 %s708, %s709
        %s711 = scalar_lea.vmem %s4, %s710
        %s712 = smul.u32 4, %s37
        %p713 = scmp.lt.s32.totalorder %s36, 1
        %s714 = scalar_select %p713, %s36, 1
        %s715 = scalar_lea.vmem %s5, %s714
        %p716 = scmp.lt.s32.totalorder %s36, 1
        %s717 = scalar_select %p716, %s36, 1
        %s718 = scalar_lea.vmem %s6, %s717
        %s719 = smul.u32 4, %s37
        %p720 = scmp.lt.s32.totalorder %s36, 1
        %s721 = scalar_select %p720, %s36, 1
        %p722 = scmp.lt.s32.totalorder %s719, 3
        %s723 = scalar_select %p722, %s719, 3
        %s724 = smul.addr %s721, 4
        %s725 = sadd.s32 %s723, %s724
        %s726 = scalar_lea.vmem %s7, %s725
        %s727 = smul.u32 4, %s37
        %s728 = smul.u32 4, %s37
        %p729 = scmp.lt.s32.totalorder %s36, 1
        %s730 = scalar_select %p729, %s36, 1
        %p731 = scmp.lt.s32.totalorder %s728, 3
        %s732 = scalar_select %p731, %s728, 3
        %s733 = smul.addr %s730, 4
        %s734 = sadd.s32 %s732, %s733
        %s735 = scalar_lea.vmem %s8, %s734
        %s736 = smul.u32 4, %s37
        %p737 = scmp.lt.s32.totalorder %s36, 1
        %s738 = scalar_select %p737, %s36, 1
        %s739 = scalar_lea.vmem %s9, %s738
        %p740 = scmp.lt.s32.totalorder %s36, 1
        %s741 = scalar_select %p740, %s36, 1
        %s742 = scalar_lea.vmem %s10, %s741
        %s743 = smul.u32 4, %s37
        %p744 = scmp.lt.s32.totalorder %s36, 1
        %s745 = scalar_select %p744, %s36, 1
        %p746 = scmp.lt.s32.totalorder %s743, 3
        %s747 = scalar_select %p746, %s743, 3
        %s748 = smul.addr %s745, 4
        %s749 = sadd.s32 %s747, %s748
        %s750 = scalar_lea.vmem %s11, %s749
        %s751 = smul.u32 4, %s37
        %s752 = smul.u32 4, %s37
        %p753 = scmp.lt.s32.totalorder %s36, 1
        %s754 = scalar_select %p753, %s36, 1
        %p755 = scmp.lt.s32.totalorder %s752, 3
        %s756 = scalar_select %p755, %s752, 3
        %s757 = smul.addr %s754, 4
        %s758 = sadd.s32 %s756, %s757
        %s759 = scalar_lea.vmem %s12, %s758
        %s760 = smul.u32 4, %s37
        %p761 = scmp.lt.s32.totalorder %s36, 1
        %s762 = scalar_select %p761, %s36, 1
        %s763 = scalar_lea.vmem %s13, %s762
        %p764 = scmp.lt.s32.totalorder %s36, 1
        %s765 = scalar_select %p764, %s36, 1
        %s766 = scalar_lea.vmem %s14, %s765
        %v767 = vld [vmem:[%s552] sm:$0xff]
        %v768 = vld [vmem:[%s552 + $0x8] sm:$0xff]
        %v769 = vld [vmem:[%s552 + $0x10] sm:$0xff]
        %v770 = vld [vmem:[%s552 + $0x18] sm:$0xff]
        %v771 = vld [vmem:[%s552 + $0x20] sm:$0xff]
        %v772 = vld [vmem:[%s552 + $0x28] sm:$0xff]
        %v773 = vld [vmem:[%s552 + $0x30] sm:$0xff]
        %v774 = vld [vmem:[%s552 + $0x38] sm:$0xff]
        %v775 = vld [vmem:[%s552 + $0x40] sm:$0xff]
        %v776 = vld [vmem:[%s552 + $0x48] sm:$0xff]
        %v777 = vld [vmem:[%s552 + $0x50] sm:$0xff]
        %v778 = vld [vmem:[%s552 + $0x58] sm:$0xff]
        %v779 = vld [vmem:[%s552 + $0x60] sm:$0xff]
        %v780 = vld [vmem:[%s552 + $0x68] sm:$0xff]
        %v781 = vld [vmem:[%s552 + $0x70] sm:$0xff]
        %v782 = vld [vmem:[%s552 + $0x78] sm:$0xff]
        %v783 = vld [vmem:[%s552 + $0x80] sm:$0xff]
        %v784 = vld [vmem:[%s552 + $0x88] sm:$0xff]
        %v785 = vld [vmem:[%s552 + $0x90] sm:$0xff]
        %v786 = vld [vmem:[%s552 + $0x98] sm:$0xff]
        %v787 = vld [vmem:[%s552 + $0xa0] sm:$0xff]
        %v788 = vld [vmem:[%s552 + $0xa8] sm:$0xff]
        %v789 = vld [vmem:[%s552 + $0xb0] sm:$0xff]
        %v790 = vld [vmem:[%s552 + $0xb8] sm:$0xff]
        %v791 = vld [vmem:[%s552 + $0xc0] sm:$0xff]
        %v792 = vld [vmem:[%s552 + $0xc8] sm:$0xff]
        %v793 = vld [vmem:[%s552 + $0xd0] sm:$0xff]
        %v794 = vld [vmem:[%s552 + $0xd8] sm:$0xff]
        %v795 = vld [vmem:[%s552 + $0xe0] sm:$0xff]
        %v796 = vld [vmem:[%s552 + $0xe8] sm:$0xff]
        %v797 = vld [vmem:[%s552 + $0xf0] sm:$0xff]
        %v798 = vld [vmem:[%s552 + $0xf8] sm:$0xff]
        %v799 = vld [vmem:[%s552 + $0x100] sm:$0xff]
        %v800 = vld [vmem:[%s552 + $0x108] sm:$0xff]
        %v801 = vld [vmem:[%s552 + $0x110] sm:$0xff]
        %v802 = vld [vmem:[%s552 + $0x118] sm:$0xff]
        %v803 = vld [vmem:[%s552 + $0x120] sm:$0xff]
        %v804 = vld [vmem:[%s552 + $0x128] sm:$0xff]
        %v805 = vld [vmem:[%s552 + $0x130] sm:$0xff]
        %v806 = vld [vmem:[%s552 + $0x138] sm:$0xff]
        %v807 = vld [vmem:[%s552 + $0x140] sm:$0xff]
        %v808 = vld [vmem:[%s552 + $0x148] sm:$0xff]
        %v809 = vld [vmem:[%s552 + $0x150] sm:$0xff]
        %v810 = vld [vmem:[%s552 + $0x158] sm:$0xff]
        %v811 = vld [vmem:[%s552 + $0x160] sm:$0xff]
        %v812 = vld [vmem:[%s552 + $0x168] sm:$0xff]
        %v813 = vld [vmem:[%s552 + $0x170] sm:$0xff]
        %v814 = vld [vmem:[%s552 + $0x178] sm:$0xff]
        %v815 = vld [vmem:[%s552 + $0x180] sm:$0xff]
        %v816 = vld [vmem:[%s552 + $0x188] sm:$0xff]
        %v817 = vld [vmem:[%s552 + $0x190] sm:$0xff]
        %v818 = vld [vmem:[%s552 + $0x198] sm:$0xff]
        %v819 = vld [vmem:[%s552 + $0x1a0] sm:$0xff]
        %v820 = vld [vmem:[%s552 + $0x1a8] sm:$0xff]
        %v821 = vld [vmem:[%s552 + $0x1b0] sm:$0xff]
        %v822 = vld [vmem:[%s552 + $0x1b8] sm:$0xff]
        %v823 = vld [vmem:[%s552 + $0x1c0] sm:$0xff]
        %v824 = vld [vmem:[%s552 + $0x1c8] sm:$0xff]
        %v825 = vld [vmem:[%s552 + $0x1d0] sm:$0xff]
        %v826 = vld [vmem:[%s552 + $0x1d8] sm:$0xff]
        %v827 = vld [vmem:[%s552 + $0x1e0] sm:$0xff]
        %v828 = vld [vmem:[%s552 + $0x1e8] sm:$0xff]
        %v829 = vld [vmem:[%s552 + $0x1f0] sm:$0xff]
        %v830 = vld [vmem:[%s552 + $0x1f8] sm:$0xff]
        %v831 = vunpack.c.l.bf16 %v767
        %v832 = vunpack.c.h.bf16 %v767
        %v833 = vunpack.c.l.bf16 %v768
        %v834 = vunpack.c.h.bf16 %v768
        %v835 = vunpack.c.l.bf16 %v769
        %v836 = vunpack.c.h.bf16 %v769
        %v837 = vunpack.c.l.bf16 %v770
        %v838 = vunpack.c.h.bf16 %v770
        %v839 = vunpack.c.l.bf16 %v771
        %v840 = vunpack.c.h.bf16 %v771
        %v841 = vunpack.c.l.bf16 %v772
        %v842 = vunpack.c.h.bf16 %v772
        %v843 = vunpack.c.l.bf16 %v773
        %v844 = vunpack.c.h.bf16 %v773
        %v845 = vunpack.c.l.bf16 %v774
        %v846 = vunpack.c.h.bf16 %v774
        %v847 = vunpack.c.l.bf16 %v775
        %v848 = vunpack.c.h.bf16 %v775
        %v849 = vunpack.c.l.bf16 %v776
        %v850 = vunpack.c.h.bf16 %v776
        %v851 = vunpack.c.l.bf16 %v777
        %v852 = vunpack.c.h.bf16 %v777
        %v853 = vunpack.c.l.bf16 %v778
        %v854 = vunpack.c.h.bf16 %v778
        %v855 = vunpack.c.l.bf16 %v779
        %v856 = vunpack.c.h.bf16 %v779
        %v857 = vunpack.c.l.bf16 %v780
        %v858 = vunpack.c.h.bf16 %v780
        %v859 = vunpack.c.l.bf16 %v781
        %v860 = vunpack.c.h.bf16 %v781
        %v861 = vunpack.c.l.bf16 %v782
        %v862 = vunpack.c.h.bf16 %v782
        %v863 = vunpack.c.l.bf16 %v783
        %v864 = vunpack.c.h.bf16 %v783
        %v865 = vunpack.c.l.bf16 %v784
        %v866 = vunpack.c.h.bf16 %v784
        %v867 = vunpack.c.l.bf16 %v785
        %v868 = vunpack.c.h.bf16 %v785
        %v869 = vunpack.c.l.bf16 %v786
        %v870 = vunpack.c.h.bf16 %v786
        %v871 = vunpack.c.l.bf16 %v787
        %v872 = vunpack.c.h.bf16 %v787
        %v873 = vunpack.c.l.bf16 %v788
        %v874 = vunpack.c.h.bf16 %v788
        %v875 = vunpack.c.l.bf16 %v789
        %v876 = vunpack.c.h.bf16 %v789
        %v877 = vunpack.c.l.bf16 %v790
        %v878 = vunpack.c.h.bf16 %v790
        %v879 = vunpack.c.l.bf16 %v791
        %v880 = vunpack.c.h.bf16 %v791
        %v881 = vunpack.c.l.bf16 %v792
        %v882 = vunpack.c.h.bf16 %v792
        %v883 = vunpack.c.l.bf16 %v793
        %v884 = vunpack.c.h.bf16 %v793
        %v885 = vunpack.c.l.bf16 %v794
        %v886 = vunpack.c.h.bf16 %v794
        %v887 = vunpack.c.l.bf16 %v795
        %v888 = vunpack.c.h.bf16 %v795
        %v889 = vunpack.c.l.bf16 %v796
        %v890 = vunpack.c.h.bf16 %v796
        %v891 = vunpack.c.l.bf16 %v797
        %v892 = vunpack.c.h.bf16 %v797
        %v893 = vunpack.c.l.bf16 %v798
        %v894 = vunpack.c.h.bf16 %v798
        %v895 = vunpack.c.l.bf16 %v799
        %v896 = vunpack.c.h.bf16 %v799
        %v897 = vunpack.c.l.bf16 %v800
        %v898 = vunpack.c.h.bf16 %v800
        %v899 = vunpack.c.l.bf16 %v801
        %v900 = vunpack.c.h.bf16 %v801
        %v901 = vunpack.c.l.bf16 %v802
        %v902 = vunpack.c.h.bf16 %v802
        %v903 = vunpack.c.l.bf16 %v803
        %v904 = vunpack.c.h.bf16 %v803
        %v905 = vunpack.c.l.bf16 %v804
        %v906 = vunpack.c.h.bf16 %v804
        %v907 = vunpack.c.l.bf16 %v805
        %v908 = vunpack.c.h.bf16 %v805
        %v909 = vunpack.c.l.bf16 %v806
        %v910 = vunpack.c.h.bf16 %v806
        %v911 = vunpack.c.l.bf16 %v807
        %v912 = vunpack.c.h.bf16 %v807
        %v913 = vunpack.c.l.bf16 %v808
        %v914 = vunpack.c.h.bf16 %v808
        %v915 = vunpack.c.l.bf16 %v809
        %v916 = vunpack.c.h.bf16 %v809
        %v917 = vunpack.c.l.bf16 %v810
        %v918 = vunpack.c.h.bf16 %v810
        %v919 = vunpack.c.l.bf16 %v811
        %v920 = vunpack.c.h.bf16 %v811
        %v921 = vunpack.c.l.bf16 %v812
        %v922 = vunpack.c.h.bf16 %v812
        %v923 = vunpack.c.l.bf16 %v813
        %v924 = vunpack.c.h.bf16 %v813
        %v925 = vunpack.c.l.bf16 %v814
        %v926 = vunpack.c.h.bf16 %v814
        %v927 = vunpack.c.l.bf16 %v815
        %v928 = vunpack.c.h.bf16 %v815
        %v929 = vunpack.c.l.bf16 %v816
        %v930 = vunpack.c.h.bf16 %v816
        %v931 = vunpack.c.l.bf16 %v817
        %v932 = vunpack.c.h.bf16 %v817
        %v933 = vunpack.c.l.bf16 %v818
        %v934 = vunpack.c.h.bf16 %v818
        %v935 = vunpack.c.l.bf16 %v819
        %v936 = vunpack.c.h.bf16 %v819
        %v937 = vunpack.c.l.bf16 %v820
        %v938 = vunpack.c.h.bf16 %v820
        %v939 = vunpack.c.l.bf16 %v821
        %v940 = vunpack.c.h.bf16 %v821
        %v941 = vunpack.c.l.bf16 %v822
        %v942 = vunpack.c.h.bf16 %v822
        %v943 = vunpack.c.l.bf16 %v823
        %v944 = vunpack.c.h.bf16 %v823
        %v945 = vunpack.c.l.bf16 %v824
        %v946 = vunpack.c.h.bf16 %v824
        %v947 = vunpack.c.l.bf16 %v825
        %v948 = vunpack.c.h.bf16 %v825
        %v949 = vunpack.c.l.bf16 %v826
        %v950 = vunpack.c.h.bf16 %v826
        %v951 = vunpack.c.l.bf16 %v827
        %v952 = vunpack.c.h.bf16 %v827
        %v953 = vunpack.c.l.bf16 %v828
        %v954 = vunpack.c.h.bf16 %v828
        %v955 = vunpack.c.l.bf16 %v829
        %v956 = vunpack.c.h.bf16 %v829
        %v957 = vunpack.c.l.bf16 %v830
        %v958 = vunpack.c.h.bf16 %v830
        %s959 = smul.u32 %s36, 256
        %v960 = vlaneseq
        %v961 = vshrl.u32 %v960, 7
        %v962 = vadd.s32 %v961, 8
        %v963 = vadd.s32 %v961, 16
        %v964 = vadd.s32 %v961, 24
        %v965 = vadd.s32 %v961, 32
        %v966 = vadd.s32 %v961, 40
        %v967 = vadd.s32 %v961, 48
        %v968 = vadd.s32 %v961, 56
        %v969 = vadd.s32 %v961, 64
        %v970 = vadd.s32 %v961, 72
        %v971 = vadd.s32 %v961, 80
        %v972 = vadd.s32 %v961, 88
        %v973 = vadd.s32 %v961, 96
        %v974 = vadd.s32 %v961, 104
        %v975 = vadd.s32 %v961, 112
        %v976 = vadd.s32 %v961, 120
        %v977 = vadd.s32 %v961, 128
        %v978 = vadd.s32 %v961, 136
        %v979 = vadd.s32 %v961, 144
        %v980 = vadd.s32 %v961, 152
        %v981 = vadd.s32 %v961, 160
        %v982 = vadd.s32 %v961, 168
        %v983 = vadd.s32 %v961, 176
        %v984 = vadd.s32 %v961, 184
        %v985 = vadd.s32 %v961, 192
        %v986 = vadd.s32 %v961, 200
        %v987 = vadd.s32 %v961, 208
        %v988 = vadd.s32 %v961, 216
        %v989 = vadd.s32 %v961, 224
        %v990 = vadd.s32 %v961, 232
        %v991 = vadd.s32 %v961, 240
        %v992 = vadd.s32 %v961, 248
        %v993 = vstv %s959
        %v994 = vadd.s32 %v993, %v961
        %v995 = vadd.s32 %v993, %v962
        %v996 = vadd.s32 %v993, %v963
        %v997 = vadd.s32 %v993, %v964
        %v998 = vadd.s32 %v993, %v965
        %v999 = vadd.s32 %v993, %v966
        %v1000 = vadd.s32 %v993, %v967
        %v1001 = vadd.s32 %v993, %v968
        %v1002 = vadd.s32 %v993, %v969
        %v1003 = vadd.s32 %v993, %v970
        %v1004 = vadd.s32 %v993, %v971
        %v1005 = vadd.s32 %v993, %v972
        %v1006 = vadd.s32 %v993, %v973
        %v1007 = vadd.s32 %v993, %v974
        %v1008 = vadd.s32 %v993, %v975
        %v1009 = vadd.s32 %v993, %v976
        %v1010 = vadd.s32 %v993, %v977
        %v1011 = vadd.s32 %v993, %v978
        %v1012 = vadd.s32 %v993, %v979
        %v1013 = vadd.s32 %v993, %v980
        %v1014 = vadd.s32 %v993, %v981
        %v1015 = vadd.s32 %v993, %v982
        %v1016 = vadd.s32 %v993, %v983
        %v1017 = vadd.s32 %v993, %v984
        %v1018 = vadd.s32 %v993, %v985
        %v1019 = vadd.s32 %v993, %v986
        %v1020 = vadd.s32 %v993, %v987
        %v1021 = vadd.s32 %v993, %v988
        %v1022 = vadd.s32 %v993, %v989
        %v1023 = vadd.s32 %v993, %v990
        %v1024 = vadd.s32 %v993, %v991
        %v1025 = vadd.s32 %v993, %v992
        %s1026 = smul.u32 %s37, 512
        %v1027 = vlaneseq
        %v1028 = vand.u32 %v1027, 127
        %v1029 = vadd.s32 %v1028, 128
        %v1030 = vadd.s32 %v1028, 256
        %v1031 = vadd.s32 %v1028, 384
        %v1032 = vstv %s1026
        %v1033 = vadd.s32 %v1032, %v1028
        %v1034 = vadd.s32 %v1032, %v1029
        %v1035 = vadd.s32 %v1032, %v1030
        %v1036 = vadd.s32 %v1032, %v1031
        %v1037 = vmax.f32 %v831, %v832
        %v1038 = vmax.f32 %v1037, %v833
        %v1039 = vmax.f32 %v1038, %v834
        %1040 = vmax.xlane.f32.xlu0 %v1039
        %v1041 = vpop.xlane.xlu0 %1040
        %v1042 = vmax.f32 %v835, %v836
        %v1043 = vmax.f32 %v1042, %v837
        %v1044 = vmax.f32 %v1043, %v838
        %1045 = vmax.xlane.f32.xlu0 %v1044
        %v1046 = vpop.xlane.xlu0 %1045
        %v1047 = vmax.f32 %v839, %v840
        %v1048 = vmax.f32 %v1047, %v841
        %v1049 = vmax.f32 %v1048, %v842
        %1050 = vmax.xlane.f32.xlu0 %v1049
        %v1051 = vpop.xlane.xlu0 %1050
        %v1052 = vmax.f32 %v843, %v844
        %v1053 = vmax.f32 %v1052, %v845
        %v1054 = vmax.f32 %v1053, %v846
        %1055 = vmax.xlane.f32.xlu0 %v1054
        %v1056 = vpop.xlane.xlu0 %1055
        %v1057 = vmax.f32 %v847, %v848
        %v1058 = vmax.f32 %v1057, %v849
        %v1059 = vmax.f32 %v1058, %v850
        %1060 = vmax.xlane.f32.xlu0 %v1059
        %v1061 = vpop.xlane.xlu0 %1060
        %v1062 = vmax.f32 %v851, %v852
        %v1063 = vmax.f32 %v1062, %v853
        %v1064 = vmax.f32 %v1063, %v854
        %1065 = vmax.xlane.f32.xlu0 %v1064
        %v1066 = vpop.xlane.xlu0 %1065
        %v1067 = vmax.f32 %v855, %v856
        %v1068 = vmax.f32 %v1067, %v857
        %v1069 = vmax.f32 %v1068, %v858
        %1070 = vmax.xlane.f32.xlu0 %v1069
        %v1071 = vpop.xlane.xlu0 %1070
        %v1072 = vmax.f32 %v859, %v860
        %v1073 = vmax.f32 %v1072, %v861
        %v1074 = vmax.f32 %v1073, %v862
        %1075 = vmax.xlane.f32.xlu0 %v1074
        %v1076 = vpop.xlane.xlu0 %1075
        %v1077 = vmax.f32 %v863, %v864
        %v1078 = vmax.f32 %v1077, %v865
        %v1079 = vmax.f32 %v1078, %v866
        %1080 = vmax.xlane.f32.xlu0 %v1079
        %v1081 = vpop.xlane.xlu0 %1080
        %v1082 = vmax.f32 %v867, %v868
        %v1083 = vmax.f32 %v1082, %v869
        %v1084 = vmax.f32 %v1083, %v870
        %1085 = vmax.xlane.f32.xlu0 %v1084
        %v1086 = vpop.xlane.xlu0 %1085
        %v1087 = vmax.f32 %v871, %v872
        %v1088 = vmax.f32 %v1087, %v873
        %v1089 = vmax.f32 %v1088, %v874
        %1090 = vmax.xlane.f32.xlu0 %v1089
        %v1091 = vpop.xlane.xlu0 %1090
        %v1092 = vmax.f32 %v875, %v876
        %v1093 = vmax.f32 %v1092, %v877
        %v1094 = vmax.f32 %v1093, %v878
        %1095 = vmax.xlane.f32.xlu0 %v1094
        %v1096 = vpop.xlane.xlu0 %1095
        %v1097 = vmax.f32 %v879, %v880
        %v1098 = vmax.f32 %v1097, %v881
        %v1099 = vmax.f32 %v1098, %v882
        %1100 = vmax.xlane.f32.xlu0 %v1099
        %v1101 = vpop.xlane.xlu0 %1100
        %v1102 = vmax.f32 %v883, %v884
        %v1103 = vmax.f32 %v1102, %v885
        %v1104 = vmax.f32 %v1103, %v886
        %1105 = vmax.xlane.f32.xlu0 %v1104
        %v1106 = vpop.xlane.xlu0 %1105
        %v1107 = vmax.f32 %v887, %v888
        %v1108 = vmax.f32 %v1107, %v889
        %v1109 = vmax.f32 %v1108, %v890
        %1110 = vmax.xlane.f32.xlu0 %v1109
        %v1111 = vpop.xlane.xlu0 %1110
        %v1112 = vmax.f32 %v891, %v892
        %v1113 = vmax.f32 %v1112, %v893
        %v1114 = vmax.f32 %v1113, %v894
        %1115 = vmax.xlane.f32.xlu0 %v1114
        %v1116 = vpop.xlane.xlu0 %1115
        %v1117 = vmax.f32 %v895, %v896
        %v1118 = vmax.f32 %v1117, %v897
        %v1119 = vmax.f32 %v1118, %v898
        %1120 = vmax.xlane.f32.xlu0 %v1119
        %v1121 = vpop.xlane.xlu0 %1120
        %v1122 = vmax.f32 %v899, %v900
        %v1123 = vmax.f32 %v1122, %v901
        %v1124 = vmax.f32 %v1123, %v902
        %1125 = vmax.xlane.f32.xlu0 %v1124
        %v1126 = vpop.xlane.xlu0 %1125
        %v1127 = vmax.f32 %v903, %v904
        %v1128 = vmax.f32 %v1127, %v905
        %v1129 = vmax.f32 %v1128, %v906
        %1130 = vmax.xlane.f32.xlu0 %v1129
        %v1131 = vpop.xlane.xlu0 %1130
        %v1132 = vmax.f32 %v907, %v908
        %v1133 = vmax.f32 %v1132, %v909
        %v1134 = vmax.f32 %v1133, %v910
        %1135 = vmax.xlane.f32.xlu0 %v1134
        %v1136 = vpop.xlane.xlu0 %1135
        %v1137 = vmax.f32 %v911, %v912
        %v1138 = vmax.f32 %v1137, %v913
        %v1139 = vmax.f32 %v1138, %v914
        %1140 = vmax.xlane.f32.xlu0 %v1139
        %v1141 = vpop.xlane.xlu0 %1140
        %v1142 = vmax.f32 %v915, %v916
        %v1143 = vmax.f32 %v1142, %v917
        %v1144 = vmax.f32 %v1143, %v918
        %1145 = vmax.xlane.f32.xlu0 %v1144
        %v1146 = vpop.xlane.xlu0 %1145
        %v1147 = vmax.f32 %v919, %v920
        %v1148 = vmax.f32 %v1147, %v921
        %v1149 = vmax.f32 %v1148, %v922
        %1150 = vmax.xlane.f32.xlu0 %v1149
        %v1151 = vpop.xlane.xlu0 %1150
        %v1152 = vmax.f32 %v923, %v924
        %v1153 = vmax.f32 %v1152, %v925
        %v1154 = vmax.f32 %v1153, %v926
        %1155 = vmax.xlane.f32.xlu0 %v1154
        %v1156 = vpop.xlane.xlu0 %1155
        %v1157 = vmax.f32 %v927, %v928
        %v1158 = vmax.f32 %v1157, %v929
        %v1159 = vmax.f32 %v1158, %v930
        %1160 = vmax.xlane.f32.xlu0 %v1159
        %v1161 = vpop.xlane.xlu0 %1160
        %v1162 = vmax.f32 %v931, %v932
        %v1163 = vmax.f32 %v1162, %v933
        %v1164 = vmax.f32 %v1163, %v934
        %1165 = vmax.xlane.f32.xlu0 %v1164
        %v1166 = vpop.xlane.xlu0 %1165
        %v1167 = vmax.f32 %v935, %v936
        %v1168 = vmax.f32 %v1167, %v937
        %v1169 = vmax.f32 %v1168, %v938
        %1170 = vmax.xlane.f32.xlu0 %v1169
        %v1171 = vpop.xlane.xlu0 %1170
        %v1172 = vmax.f32 %v939, %v940
        %v1173 = vmax.f32 %v1172, %v941
        %v1174 = vmax.f32 %v1173, %v942
        %1175 = vmax.xlane.f32.xlu0 %v1174
        %v1176 = vpop.xlane.xlu0 %1175
        %v1177 = vmax.f32 %v943, %v944
        %v1178 = vmax.f32 %v1177, %v945
        %v1179 = vmax.f32 %v1178, %v946
        %1180 = vmax.xlane.f32.xlu0 %v1179
        %v1181 = vpop.xlane.xlu0 %1180
        %v1182 = vmax.f32 %v947, %v948
        %v1183 = vmax.f32 %v1182, %v949
        %v1184 = vmax.f32 %v1183, %v950
        %1185 = vmax.xlane.f32.xlu0 %v1184
        %v1186 = vpop.xlane.xlu0 %1185
        %v1187 = vmax.f32 %v951, %v952
        %v1188 = vmax.f32 %v1187, %v953
        %v1189 = vmax.f32 %v1188, %v954
        %1190 = vmax.xlane.f32.xlu0 %v1189
        %v1191 = vpop.xlane.xlu0 %1190
        %v1192 = vmax.f32 %v955, %v956
        %v1193 = vmax.f32 %v1192, %v957
        %v1194 = vmax.f32 %v1193, %v958
        %1195 = vmax.xlane.f32.xlu0 %v1194
        %v1196 = vpop.xlane.xlu0 %1195
        %v1197 = vsub.f32 %v831, %v1041
        %v1198 = vsub.f32 %v832, %v1041
        %v1199 = vsub.f32 %v833, %v1041
        %v1200 = vsub.f32 %v834, %v1041
        %v1201 = vsub.f32 %v835, %v1046
        %v1202 = vsub.f32 %v836, %v1046
        %v1203 = vsub.f32 %v837, %v1046
        %v1204 = vsub.f32 %v838, %v1046
        %v1205 = vsub.f32 %v839, %v1051
        %v1206 = vsub.f32 %v840, %v1051
        %v1207 = vsub.f32 %v841, %v1051
        %v1208 = vsub.f32 %v842, %v1051
        %v1209 = vsub.f32 %v843, %v1056
        %v1210 = vsub.f32 %v844, %v1056
        %v1211 = vsub.f32 %v845, %v1056
        %v1212 = vsub.f32 %v846, %v1056
        %v1213 = vsub.f32 %v847, %v1061
        %v1214 = vsub.f32 %v848, %v1061
        %v1215 = vsub.f32 %v849, %v1061
        %v1216 = vsub.f32 %v850, %v1061
        %v1217 = vsub.f32 %v851, %v1066
        %v1218 = vsub.f32 %v852, %v1066
        %v1219 = vsub.f32 %v853, %v1066
        %v1220 = vsub.f32 %v854, %v1066
        %v1221 = vsub.f32 %v855, %v1071
        %v1222 = vsub.f32 %v856, %v1071
        %v1223 = vsub.f32 %v857, %v1071
        %v1224 = vsub.f32 %v858, %v1071
        %v1225 = vsub.f32 %v859, %v1076
        %v1226 = vsub.f32 %v860, %v1076
        %v1227 = vsub.f32 %v861, %v1076
        %v1228 = vsub.f32 %v862, %v1076
        %v1229 = vsub.f32 %v863, %v1081
        %v1230 = vsub.f32 %v864, %v1081
        %v1231 = vsub.f32 %v865, %v1081
        %v1232 = vsub.f32 %v866, %v1081
        %v1233 = vsub.f32 %v867, %v1086
        %v1234 = vsub.f32 %v868, %v1086
        %v1235 = vsub.f32 %v869, %v1086
        %v1236 = vsub.f32 %v870, %v1086
        %v1237 = vsub.f32 %v871, %v1091
        %v1238 = vsub.f32 %v872, %v1091
        %v1239 = vsub.f32 %v873, %v1091
        %v1240 = vsub.f32 %v874, %v1091
        %v1241 = vsub.f32 %v875, %v1096
        %v1242 = vsub.f32 %v876, %v1096
        %v1243 = vsub.f32 %v877, %v1096
        %v1244 = vsub.f32 %v878, %v1096
        %v1245 = vsub.f32 %v879, %v1101
        %v1246 = vsub.f32 %v880, %v1101
        %v1247 = vsub.f32 %v881, %v1101
        %v1248 = vsub.f32 %v882, %v1101
        %v1249 = vsub.f32 %v883, %v1106
        %v1250 = vsub.f32 %v884, %v1106
        %v1251 = vsub.f32 %v885, %v1106
        %v1252 = vsub.f32 %v886, %v1106
        %v1253 = vsub.f32 %v887, %v1111
        %v1254 = vsub.f32 %v888, %v1111
        %v1255 = vsub.f32 %v889, %v1111
        %v1256 = vsub.f32 %v890, %v1111
        %v1257 = vsub.f32 %v891, %v1116
        %v1258 = vsub.f32 %v892, %v1116
        %v1259 = vsub.f32 %v893, %v1116
        %v1260 = vsub.f32 %v894, %v1116
        %v1261 = vsub.f32 %v895, %v1121
        %v1262 = vsub.f32 %v896, %v1121
        %v1263 = vsub.f32 %v897, %v1121
        %v1264 = vsub.f32 %v898, %v1121
        %v1265 = vsub.f32 %v899, %v1126
        %v1266 = vsub.f32 %v900, %v1126
        %v1267 = vsub.f32 %v901, %v1126
        %v1268 = vsub.f32 %v902, %v1126
        %v1269 = vsub.f32 %v903, %v1131
        %v1270 = vsub.f32 %v904, %v1131
        %v1271 = vsub.f32 %v905, %v1131
        %v1272 = vsub.f32 %v906, %v1131
        %v1273 = vsub.f32 %v907, %v1136
        %v1274 = vsub.f32 %v908, %v1136
        %v1275 = vsub.f32 %v909, %v1136
        %v1276 = vsub.f32 %v910, %v1136
        %v1277 = vsub.f32 %v911, %v1141
        %v1278 = vsub.f32 %v912, %v1141
        %v1279 = vsub.f32 %v913, %v1141
        %v1280 = vsub.f32 %v914, %v1141
        %v1281 = vsub.f32 %v915, %v1146
        %v1282 = vsub.f32 %v916, %v1146
        %v1283 = vsub.f32 %v917, %v1146
        %v1284 = vsub.f32 %v918, %v1146
        %v1285 = vsub.f32 %v919, %v1151
        %v1286 = vsub.f32 %v920, %v1151
        %v1287 = vsub.f32 %v921, %v1151
        %v1288 = vsub.f32 %v922, %v1151
        %v1289 = vsub.f32 %v923, %v1156
        %v1290 = vsub.f32 %v924, %v1156
        %v1291 = vsub.f32 %v925, %v1156
        %v1292 = vsub.f32 %v926, %v1156
        %v1293 = vsub.f32 %v927, %v1161
        %v1294 = vsub.f32 %v928, %v1161
        %v1295 = vsub.f32 %v929, %v1161
        %v1296 = vsub.f32 %v930, %v1161
        %v1297 = vsub.f32 %v931, %v1166
        %v1298 = vsub.f32 %v932, %v1166
        %v1299 = vsub.f32 %v933, %v1166
        %v1300 = vsub.f32 %v934, %v1166
        %v1301 = vsub.f32 %v935, %v1171
        %v1302 = vsub.f32 %v936, %v1171
        %v1303 = vsub.f32 %v937, %v1171
        %v1304 = vsub.f32 %v938, %v1171
        %v1305 = vsub.f32 %v939, %v1176
        %v1306 = vsub.f32 %v940, %v1176
        %v1307 = vsub.f32 %v941, %v1176
        %v1308 = vsub.f32 %v942, %v1176
        %v1309 = vsub.f32 %v943, %v1181
        %v1310 = vsub.f32 %v944, %v1181
        %v1311 = vsub.f32 %v945, %v1181
        %v1312 = vsub.f32 %v946, %v1181
        %v1313 = vsub.f32 %v947, %v1186
        %v1314 = vsub.f32 %v948, %v1186
        %v1315 = vsub.f32 %v949, %v1186
        %v1316 = vsub.f32 %v950, %v1186
        %v1317 = vsub.f32 %v951, %v1191
        %v1318 = vsub.f32 %v952, %v1191
        %v1319 = vsub.f32 %v953, %v1191
        %v1320 = vsub.f32 %v954, %v1191
        %v1321 = vsub.f32 %v955, %v1196
        %v1322 = vsub.f32 %v956, %v1196
        %v1323 = vsub.f32 %v957, %v1196
        %v1324 = vsub.f32 %v958, %v1196
        %v1325 = vmul.f32 %v1197, 1.442695
        %v1326 = vpow.pop %v1325
        %v1327 = vmul.f32 %v1198, 1.442695
        %v1328 = vpow.pop %v1327
        %v1329 = vmul.f32 %v1199, 1.442695
        %v1330 = vpow.pop %v1329
        %v1331 = vmul.f32 %v1200, 1.442695
        %v1332 = vpow.pop %v1331
        %v1333 = vmul.f32 %v1201, 1.442695
        %v1334 = vpow.pop %v1333
        %v1335 = vmul.f32 %v1202, 1.442695
        %v1336 = vpow.pop %v1335
        %v1337 = vmul.f32 %v1203, 1.442695
        %v1338 = vpow.pop %v1337
        %v1339 = vmul.f32 %v1204, 1.442695
        %v1340 = vpow.pop %v1339
        %v1341 = vmul.f32 %v1205, 1.442695
        %v1342 = vpow.pop %v1341
        %v1343 = vmul.f32 %v1206, 1.442695
        %v1344 = vpow.pop %v1343
        %v1345 = vmul.f32 %v1207, 1.442695
        %v1346 = vpow.pop %v1345
        %v1347 = vmul.f32 %v1208, 1.442695
        %v1348 = vpow.pop %v1347
        %v1349 = vmul.f32 %v1209, 1.442695
        %v1350 = vpow.pop %v1349
        %v1351 = vmul.f32 %v1210, 1.442695
        %v1352 = vpow.pop %v1351
        %v1353 = vmul.f32 %v1211, 1.442695
        %v1354 = vpow.pop %v1353
        %v1355 = vmul.f32 %v1212, 1.442695
        %v1356 = vpow.pop %v1355
        %v1357 = vmul.f32 %v1213, 1.442695
        %v1358 = vpow.pop %v1357
        %v1359 = vmul.f32 %v1214, 1.442695
        %v1360 = vpow.pop %v1359
        %v1361 = vmul.f32 %v1215, 1.442695
        %v1362 = vpow.pop %v1361
        %v1363 = vmul.f32 %v1216, 1.442695
        %v1364 = vpow.pop %v1363
        %v1365 = vmul.f32 %v1217, 1.442695
        %v1366 = vpow.pop %v1365
        %v1367 = vmul.f32 %v1218, 1.442695
        %v1368 = vpow.pop %v1367
        %v1369 = vmul.f32 %v1219, 1.442695
        %v1370 = vpow.pop %v1369
        %v1371 = vmul.f32 %v1220, 1.442695
        %v1372 = vpow.pop %v1371
        %v1373 = vmul.f32 %v1221, 1.442695
        %v1374 = vpow.pop %v1373
        %v1375 = vmul.f32 %v1222, 1.442695
        %v1376 = vpow.pop %v1375
        %v1377 = vmul.f32 %v1223, 1.442695
        %v1378 = vpow.pop %v1377
        %v1379 = vmul.f32 %v1224, 1.442695
        %v1380 = vpow.pop %v1379
        %v1381 = vmul.f32 %v1225, 1.442695
        %v1382 = vpow.pop %v1381
        %v1383 = vmul.f32 %v1226, 1.442695
        %v1384 = vpow.pop %v1383
        %v1385 = vmul.f32 %v1227, 1.442695
        %v1386 = vpow.pop %v1385
        %v1387 = vmul.f32 %v1228, 1.442695
        %v1388 = vpow.pop %v1387
        %v1389 = vmul.f32 %v1229, 1.442695
        %v1390 = vpow.pop %v1389
        %v1391 = vmul.f32 %v1230, 1.442695
        %v1392 = vpow.pop %v1391
        %v1393 = vmul.f32 %v1231, 1.442695
        %v1394 = vpow.pop %v1393
        %v1395 = vmul.f32 %v1232, 1.442695
        %v1396 = vpow.pop %v1395
        %v1397 = vmul.f32 %v1233, 1.442695
        %v1398 = vpow.pop %v1397
        %v1399 = vmul.f32 %v1234, 1.442695
        %v1400 = vpow.pop %v1399
        %v1401 = vmul.f32 %v1235, 1.442695
        %v1402 = vpow.pop %v1401
        %v1403 = vmul.f32 %v1236, 1.442695
        %v1404 = vpow.pop %v1403
        %v1405 = vmul.f32 %v1237, 1.442695
        %v1406 = vpow.pop %v1405
        %v1407 = vmul.f32 %v1238, 1.442695
        %v1408 = vpow.pop %v1407
        %v1409 = vmul.f32 %v1239, 1.442695
        %v1410 = vpow.pop %v1409
        %v1411 = vmul.f32 %v1240, 1.442695
        %v1412 = vpow.pop %v1411
        %v1413 = vmul.f32 %v1241, 1.442695
        %v1414 = vpow.pop %v1413
        %v1415 = vmul.f32 %v1242, 1.442695
        %v1416 = vpow.pop %v1415
        %v1417 = vmul.f32 %v1243, 1.442695
        %v1418 = vpow.pop %v1417
        %v1419 = vmul.f32 %v1244, 1.442695
        %v1420 = vpow.pop %v1419
        %v1421 = vmul.f32 %v1245, 1.442695
        %v1422 = vpow.pop %v1421
        %v1423 = vmul.f32 %v1246, 1.442695
        %v1424 = vpow.pop %v1423
        %v1425 = vmul.f32 %v1247, 1.442695
        %v1426 = vpow.pop %v1425
        %v1427 = vmul.f32 %v1248, 1.442695
        %v1428 = vpow.pop %v1427
        %v1429 = vmul.f32 %v1249, 1.442695
        %v1430 = vpow.pop %v1429
        %v1431 = vmul.f32 %v1250, 1.442695
        %v1432 = vpow.pop %v1431
        %v1433 = vmul.f32 %v1251, 1.442695
        %v1434 = vpow.pop %v1433
        %v1435 = vmul.f32 %v1252, 1.442695
        %v1436 = vpow.pop %v1435
        %v1437 = vmul.f32 %v1253, 1.442695
        %v1438 = vpow.pop %v1437
        %v1439 = vmul.f32 %v1254, 1.442695
        %v1440 = vpow.pop %v1439
        %v1441 = vmul.f32 %v1255, 1.442695
        %v1442 = vpow.pop %v1441
        %v1443 = vmul.f32 %v1256, 1.442695
        %v1444 = vpow.pop %v1443
        %v1445 = vmul.f32 %v1257, 1.442695
        %v1446 = vpow.pop %v1445
        %v1447 = vmul.f32 %v1258, 1.442695
        %v1448 = vpow.pop %v1447
        %v1449 = vmul.f32 %v1259, 1.442695
        %v1450 = vpow.pop %v1449
        %v1451 = vmul.f32 %v1260, 1.442695
        %v1452 = vpow.pop %v1451
        %v1453 = vmul.f32 %v1261, 1.442695
        %v1454 = vpow.pop %v1453
        %v1455 = vmul.f32 %v1262, 1.442695
        %v1456 = vpow.pop %v1455
        %v1457 = vmul.f32 %v1263, 1.442695
        %v1458 = vpow.pop %v1457
        %v1459 = vmul.f32 %v1264, 1.442695
        %v1460 = vpow.pop %v1459
        %v1461 = vmul.f32 %v1265, 1.442695
        %v1462 = vpow.pop %v1461
        %v1463 = vmul.f32 %v1266, 1.442695
        %v1464 = vpow.pop %v1463
        %v1465 = vmul.f32 %v1267, 1.442695
        %v1466 = vpow.pop %v1465
        %v1467 = vmul.f32 %v1268, 1.442695
        %v1468 = vpow.pop %v1467
        %v1469 = vmul.f32 %v1269, 1.442695
        %v1470 = vpow.pop %v1469
        %v1471 = vmul.f32 %v1270, 1.442695
        %v1472 = vpow.pop %v1471
        %v1473 = vmul.f32 %v1271, 1.442695
        %v1474 = vpow.pop %v1473
        %v1475 = vmul.f32 %v1272, 1.442695
        %v1476 = vpow.pop %v1475
        %v1477 = vmul.f32 %v1273, 1.442695
        %v1478 = vpow.pop %v1477
        %v1479 = vmul.f32 %v1274, 1.442695
        %v1480 = vpow.pop %v1479
        %v1481 = vmul.f32 %v1275, 1.442695
        %v1482 = vpow.pop %v1481
        %v1483 = vmul.f32 %v1276, 1.442695
        %v1484 = vpow.pop %v1483
        %v1485 = vmul.f32 %v1277, 1.442695
        %v1486 = vpow.pop %v1485
        %v1487 = vmul.f32 %v1278, 1.442695
        %v1488 = vpow.pop %v1487
        %v1489 = vmul.f32 %v1279, 1.442695
        %v1490 = vpow.pop %v1489
        %v1491 = vmul.f32 %v1280, 1.442695
        %v1492 = vpow.pop %v1491
        %v1493 = vmul.f32 %v1281, 1.442695
        %v1494 = vpow.pop %v1493
        %v1495 = vmul.f32 %v1282, 1.442695
        %v1496 = vpow.pop %v1495
        %v1497 = vmul.f32 %v1283, 1.442695
        %v1498 = vpow.pop %v1497
        %v1499 = vmul.f32 %v1284, 1.442695
        %v1500 = vpow.pop %v1499
        %v1501 = vmul.f32 %v1285, 1.442695
        %v1502 = vpow.pop %v1501
        %v1503 = vmul.f32 %v1286, 1.442695
        %v1504 = vpow.pop %v1503
        %v1505 = vmul.f32 %v1287, 1.442695
        %v1506 = vpow.pop %v1505
        %v1507 = vmul.f32 %v1288, 1.442695
        %v1508 = vpow.pop %v1507
        %v1509 = vmul.f32 %v1289, 1.442695
        %v1510 = vpow.pop %v1509
        %v1511 = vmul.f32 %v1290, 1.442695
        %v1512 = vpow.pop %v1511
        %v1513 = vmul.f32 %v1291, 1.442695
        %v1514 = vpow.pop %v1513
        %v1515 = vmul.f32 %v1292, 1.442695
        %v1516 = vpow.pop %v1515
        %v1517 = vmul.f32 %v1293, 1.442695
        %v1518 = vpow.pop %v1517
        %v1519 = vmul.f32 %v1294, 1.442695
        %v1520 = vpow.pop %v1519
        %v1521 = vmul.f32 %v1295, 1.442695
        %v1522 = vpow.pop %v1521
        %v1523 = vmul.f32 %v1296, 1.442695
        %v1524 = vpow.pop %v1523
        %v1525 = vmul.f32 %v1297, 1.442695
        %v1526 = vpow.pop %v1525
        %v1527 = vmul.f32 %v1298, 1.442695
        %v1528 = vpow.pop %v1527
        %v1529 = vmul.f32 %v1299, 1.442695
        %v1530 = vpow.pop %v1529
        %v1531 = vmul.f32 %v1300, 1.442695
        %v1532 = vpow.pop %v1531
        %v1533 = vmul.f32 %v1301, 1.442695
        %v1534 = vpow.pop %v1533
        %v1535 = vmul.f32 %v1302, 1.442695
        %v1536 = vpow.pop %v1535
        %v1537 = vmul.f32 %v1303, 1.442695
        %v1538 = vpow.pop %v1537
        %v1539 = vmul.f32 %v1304, 1.442695
        %v1540 = vpow.pop %v1539
        %v1541 = vmul.f32 %v1305, 1.442695
        %v1542 = vpow.pop %v1541
        %v1543 = vmul.f32 %v1306, 1.442695
        %v1544 = vpow.pop %v1543
        %v1545 = vmul.f32 %v1307, 1.442695
        %v1546 = vpow.pop %v1545
        %v1547 = vmul.f32 %v1308, 1.442695
        %v1548 = vpow.pop %v1547
        %v1549 = vmul.f32 %v1309, 1.442695
        %v1550 = vpow.pop %v1549
        %v1551 = vmul.f32 %v1310, 1.442695
        %v1552 = vpow.pop %v1551
        %v1553 = vmul.f32 %v1311, 1.442695
        %v1554 = vpow.pop %v1553
        %v1555 = vmul.f32 %v1312, 1.442695
        %v1556 = vpow.pop %v1555
        %v1557 = vmul.f32 %v1313, 1.442695
        %v1558 = vpow.pop %v1557
        %v1559 = vmul.f32 %v1314, 1.442695
        %v1560 = vpow.pop %v1559
        %v1561 = vmul.f32 %v1315, 1.442695
        %v1562 = vpow.pop %v1561
        %v1563 = vmul.f32 %v1316, 1.442695
        %v1564 = vpow.pop %v1563
        %v1565 = vmul.f32 %v1317, 1.442695
        %v1566 = vpow.pop %v1565
        %v1567 = vmul.f32 %v1318, 1.442695
        %v1568 = vpow.pop %v1567
        %v1569 = vmul.f32 %v1319, 1.442695
        %v1570 = vpow.pop %v1569
        %v1571 = vmul.f32 %v1320, 1.442695
        %v1572 = vpow.pop %v1571
        %v1573 = vmul.f32 %v1321, 1.442695
        %v1574 = vpow.pop %v1573
        %v1575 = vmul.f32 %v1322, 1.442695
        %v1576 = vpow.pop %v1575
        %v1577 = vmul.f32 %v1323, 1.442695
        %v1578 = vpow.pop %v1577
        %v1579 = vmul.f32 %v1324, 1.442695
        %v1580 = vpow.pop %v1579
        %v1581 = vadd.f32 %v1326, %v1328
        %v1582 = vadd.f32 %v1581, %v1330
        %v1583 = vadd.f32 %v1582, %v1332
        %1584 = vadd.xlane.f32.xlu0 %v1583
        %v1585 = vpop.xlane.xlu0 %1584
        %v1586 = vadd.f32 %v1334, %v1336
        %v1587 = vadd.f32 %v1586, %v1338
        %v1588 = vadd.f32 %v1587, %v1340
        %1589 = vadd.xlane.f32.xlu0 %v1588
        %v1590 = vpop.xlane.xlu0 %1589
        %v1591 = vadd.f32 %v1342, %v1344
        %v1592 = vadd.f32 %v1591, %v1346
        %v1593 = vadd.f32 %v1592, %v1348
        %1594 = vadd.xlane.f32.xlu0 %v1593
        %v1595 = vpop.xlane.xlu0 %1594
        %v1596 = vadd.f32 %v1350, %v1352
        %v1597 = vadd.f32 %v1596, %v1354
        %v1598 = vadd.f32 %v1597, %v1356
        %1599 = vadd.xlane.f32.xlu0 %v1598
        %v1600 = vpop.xlane.xlu0 %1599
        %v1601 = vadd.f32 %v1358, %v1360
        %v1602 = vadd.f32 %v1601, %v1362
        %v1603 = vadd.f32 %v1602, %v1364
        %1604 = vadd.xlane.f32.xlu0 %v1603
        %v1605 = vpop.xlane.xlu0 %1604
        %v1606 = vadd.f32 %v1366, %v1368
        %v1607 = vadd.f32 %v1606, %v1370
        %v1608 = vadd.f32 %v1607, %v1372
        %1609 = vadd.xlane.f32.xlu0 %v1608
        %v1610 = vpop.xlane.xlu0 %1609
        %v1611 = vadd.f32 %v1374, %v1376
        %v1612 = vadd.f32 %v1611, %v1378
        %v1613 = vadd.f32 %v1612, %v1380
        %1614 = vadd.xlane.f32.xlu0 %v1613
        %v1615 = vpop.xlane.xlu0 %1614
        %v1616 = vadd.f32 %v1382, %v1384
        %v1617 = vadd.f32 %v1616, %v1386
        %v1618 = vadd.f32 %v1617, %v1388
        %1619 = vadd.xlane.f32.xlu0 %v1618
        %v1620 = vpop.xlane.xlu0 %1619
        %v1621 = vadd.f32 %v1390, %v1392
        %v1622 = vadd.f32 %v1621, %v1394
        %v1623 = vadd.f32 %v1622, %v1396
        %1624 = vadd.xlane.f32.xlu0 %v1623
        %v1625 = vpop.xlane.xlu0 %1624
        %v1626 = vadd.f32 %v1398, %v1400
        %v1627 = vadd.f32 %v1626, %v1402
        %v1628 = vadd.f32 %v1627, %v1404
        %1629 = vadd.xlane.f32.xlu0 %v1628
        %v1630 = vpop.xlane.xlu0 %1629
        %v1631 = vadd.f32 %v1406, %v1408
        %v1632 = vadd.f32 %v1631, %v1410
        %v1633 = vadd.f32 %v1632, %v1412
        %1634 = vadd.xlane.f32.xlu0 %v1633
        %v1635 = vpop.xlane.xlu0 %1634
        %v1636 = vadd.f32 %v1414, %v1416
        %v1637 = vadd.f32 %v1636, %v1418
        %v1638 = vadd.f32 %v1637, %v1420
        %1639 = vadd.xlane.f32.xlu0 %v1638
        %v1640 = vpop.xlane.xlu0 %1639
        %v1641 = vadd.f32 %v1422, %v1424
        %v1642 = vadd.f32 %v1641, %v1426
        %v1643 = vadd.f32 %v1642, %v1428
        %1644 = vadd.xlane.f32.xlu0 %v1643
        %v1645 = vpop.xlane.xlu0 %1644
        %v1646 = vadd.f32 %v1430, %v1432
        %v1647 = vadd.f32 %v1646, %v1434
        %v1648 = vadd.f32 %v1647, %v1436
        %1649 = vadd.xlane.f32.xlu0 %v1648
        %v1650 = vpop.xlane.xlu0 %1649
        %v1651 = vadd.f32 %v1438, %v1440
        %v1652 = vadd.f32 %v1651, %v1442
        %v1653 = vadd.f32 %v1652, %v1444
        %1654 = vadd.xlane.f32.xlu0 %v1653
        %v1655 = vpop.xlane.xlu0 %1654
        %v1656 = vadd.f32 %v1446, %v1448
        %v1657 = vadd.f32 %v1656, %v1450
        %v1658 = vadd.f32 %v1657, %v1452
        %1659 = vadd.xlane.f32.xlu0 %v1658
        %v1660 = vpop.xlane.xlu0 %1659
        %v1661 = vadd.f32 %v1454, %v1456
        %v1662 = vadd.f32 %v1661, %v1458
        %v1663 = vadd.f32 %v1662, %v1460
        %1664 = vadd.xlane.f32.xlu0 %v1663
        %v1665 = vpop.xlane.xlu0 %1664
        %v1666 = vadd.f32 %v1462, %v1464
        %v1667 = vadd.f32 %v1666, %v1466
        %v1668 = vadd.f32 %v1667, %v1468
        %1669 = vadd.xlane.f32.xlu0 %v1668
        %v1670 = vpop.xlane.xlu0 %1669
        %v1671 = vadd.f32 %v1470, %v1472
        %v1672 = vadd.f32 %v1671, %v1474
        %v1673 = vadd.f32 %v1672, %v1476
        %1674 = vadd.xlane.f32.xlu0 %v1673
        %v1675 = vpop.xlane.xlu0 %1674
        %v1676 = vadd.f32 %v1478, %v1480
        %v1677 = vadd.f32 %v1676, %v1482
        %v1678 = vadd.f32 %v1677, %v1484
        %1679 = vadd.xlane.f32.xlu0 %v1678
        %v1680 = vpop.xlane.xlu0 %1679
        %v1681 = vadd.f32 %v1486, %v1488
        %v1682 = vadd.f32 %v1681, %v1490
        %v1683 = vadd.f32 %v1682, %v1492
        %1684 = vadd.xlane.f32.xlu0 %v1683
        %v1685 = vpop.xlane.xlu0 %1684
        %v1686 = vadd.f32 %v1494, %v1496
        %v1687 = vadd.f32 %v1686, %v1498
        %v1688 = vadd.f32 %v1687, %v1500
        %1689 = vadd.xlane.f32.xlu0 %v1688
        %v1690 = vpop.xlane.xlu0 %1689
        %v1691 = vadd.f32 %v1502, %v1504
        %v1692 = vadd.f32 %v1691, %v1506
        %v1693 = vadd.f32 %v1692, %v1508
        %1694 = vadd.xlane.f32.xlu0 %v1693
        %v1695 = vpop.xlane.xlu0 %1694
        %v1696 = vadd.f32 %v1510, %v1512
        %v1697 = vadd.f32 %v1696, %v1514
        %v1698 = vadd.f32 %v1697, %v1516
        %1699 = vadd.xlane.f32.xlu0 %v1698
        %v1700 = vpop.xlane.xlu0 %1699
        %v1701 = vadd.f32 %v1518, %v1520
        %v1702 = vadd.f32 %v1701, %v1522
        %v1703 = vadd.f32 %v1702, %v1524
        %1704 = vadd.xlane.f32.xlu0 %v1703
        %v1705 = vpop.xlane.xlu0 %1704
        %v1706 = vadd.f32 %v1526, %v1528
        %v1707 = vadd.f32 %v1706, %v1530
        %v1708 = vadd.f32 %v1707, %v1532
        %1709 = vadd.xlane.f32.xlu0 %v1708
        %v1710 = vpop.xlane.xlu0 %1709
        %v1711 = vadd.f32 %v1534, %v1536
        %v1712 = vadd.f32 %v1711, %v1538
        %v1713 = vadd.f32 %v1712, %v1540
        %1714 = vadd.xlane.f32.xlu0 %v1713
        %v1715 = vpop.xlane.xlu0 %1714
        %v1716 = vadd.f32 %v1542, %v1544
        %v1717 = vadd.f32 %v1716, %v1546
        %v1718 = vadd.f32 %v1717, %v1548
        %1719 = vadd.xlane.f32.xlu0 %v1718
        %v1720 = vpop.xlane.xlu0 %1719
        %v1721 = vadd.f32 %v1550, %v1552
        %v1722 = vadd.f32 %v1721, %v1554
        %v1723 = vadd.f32 %v1722, %v1556
        %1724 = vadd.xlane.f32.xlu0 %v1723
        %v1725 = vpop.xlane.xlu0 %1724
        %v1726 = vadd.f32 %v1558, %v1560
        %v1727 = vadd.f32 %v1726, %v1562
        %v1728 = vadd.f32 %v1727, %v1564
        %1729 = vadd.xlane.f32.xlu0 %v1728
        %v1730 = vpop.xlane.xlu0 %1729
        %v1731 = vadd.f32 %v1566, %v1568
        %v1732 = vadd.f32 %v1731, %v1570
        %v1733 = vadd.f32 %v1732, %v1572
        %1734 = vadd.xlane.f32.xlu0 %v1733
        %v1735 = vpop.xlane.xlu0 %1734
        %v1736 = vadd.f32 %v1574, %v1576
        %v1737 = vadd.f32 %v1736, %v1578
        %v1738 = vadd.f32 %v1737, %v1580
        %1739 = vadd.xlane.f32.xlu0 %v1738
        %v1740 = vpop.xlane.xlu0 %1739
        %v1741 = vmax.f32 %v1041, %v1061
        %v1742 = vmax.f32 %v1046, %v1066
        %v1743 = vmax.f32 %v1051, %v1071
        %v1744 = vmax.f32 %v1056, %v1076
        %v1745 = vmax.f32 %v1741, %v1081
        %v1746 = vmax.f32 %v1742, %v1086
        %v1747 = vmax.f32 %v1743, %v1091
        %v1748 = vmax.f32 %v1744, %v1096
        %v1749 = vmax.f32 %v1745, %v1101
        %v1750 = vmax.f32 %v1746, %v1106
        %v1751 = vmax.f32 %v1747, %v1111
        %v1752 = vmax.f32 %v1748, %v1116
        %v1753 = vmax.f32 %v1749, %v1121
        %v1754 = vmax.f32 %v1750, %v1126
        %v1755 = vmax.f32 %v1751, %v1131
        %v1756 = vmax.f32 %v1752, %v1136
        %v1757 = vmax.f32 %v1753, %v1141
        %v1758 = vmax.f32 %v1754, %v1146
        %v1759 = vmax.f32 %v1755, %v1151
        %v1760 = vmax.f32 %v1756, %v1156
        %v1761 = vmax.f32 %v1757, %v1161
        %v1762 = vmax.f32 %v1758, %v1166
        %v1763 = vmax.f32 %v1759, %v1171
        %v1764 = vmax.f32 %v1760, %v1176
        %v1765 = vmax.f32 %v1761, %v1181
        %v1766 = vmax.f32 %v1762, %v1186
        %v1767 = vmax.f32 %v1763, %v1191
        %v1768 = vmax.f32 %v1764, %v1196
        %v1769 = vmax.f32 %v1765, %v1766
        %v1770 = vmax.f32 %v1767, %v1768
        %v1771 = vmax.f32 %v1769, %v1770
        %v1772 = vrot.slane %v1771, 4
        %v1773 = vmax.f32 %v1771, %v1772
        %v1774 = vrot.slane %v1773, 2
        %v1775 = vmax.f32 %v1773, %v1774
        %v1776 = vrot.slane %v1775, 1
        %v1777 = vmax.f32 %v1775, %v1776
        %s1778 = vtos %v1777
        %v1779 = vstv %s1778
        %v1780 = vsub.f32 %v1041, %v1779
        %v1781 = vsub.f32 %v1046, %v1779
        %v1782 = vsub.f32 %v1051, %v1779
        %v1783 = vsub.f32 %v1056, %v1779
        %v1784 = vsub.f32 %v1061, %v1779
        %v1785 = vsub.f32 %v1066, %v1779
        %v1786 = vsub.f32 %v1071, %v1779
        %v1787 = vsub.f32 %v1076, %v1779
        %v1788 = vsub.f32 %v1081, %v1779
        %v1789 = vsub.f32 %v1086, %v1779
        %v1790 = vsub.f32 %v1091, %v1779
        %v1791 = vsub.f32 %v1096, %v1779
        %v1792 = vsub.f32 %v1101, %v1779
        %v1793 = vsub.f32 %v1106, %v1779
        %v1794 = vsub.f32 %v1111, %v1779
        %v1795 = vsub.f32 %v1116, %v1779
        %v1796 = vsub.f32 %v1121, %v1779
        %v1797 = vsub.f32 %v1126, %v1779
        %v1798 = vsub.f32 %v1131, %v1779
        %v1799 = vsub.f32 %v1136, %v1779
        %v1800 = vsub.f32 %v1141, %v1779
        %v1801 = vsub.f32 %v1146, %v1779
        %v1802 = vsub.f32 %v1151, %v1779
        %v1803 = vsub.f32 %v1156, %v1779
        %v1804 = vsub.f32 %v1161, %v1779
        %v1805 = vsub.f32 %v1166, %v1779
        %v1806 = vsub.f32 %v1171, %v1779
        %v1807 = vsub.f32 %v1176, %v1779
        %v1808 = vsub.f32 %v1181, %v1779
        %v1809 = vsub.f32 %v1186, %v1779
        %v1810 = vsub.f32 %v1191, %v1779
        %v1811 = vsub.f32 %v1196, %v1779
        %v1812 = vmul.f32 %v1780, 1.442695
        %v1813 = vpow.pop %v1812
        %v1814 = vmul.f32 %v1781, 1.442695
        %v1815 = vpow.pop %v1814
        %v1816 = vmul.f32 %v1782, 1.442695
        %v1817 = vpow.pop %v1816
        %v1818 = vmul.f32 %v1783, 1.442695
        %v1819 = vpow.pop %v1818
        %v1820 = vmul.f32 %v1784, 1.442695
        %v1821 = vpow.pop %v1820
        %v1822 = vmul.f32 %v1785, 1.442695
        %v1823 = vpow.pop %v1822
        %v1824 = vmul.f32 %v1786, 1.442695
        %v1825 = vpow.pop %v1824
        %v1826 = vmul.f32 %v1787, 1.442695
        %v1827 = vpow.pop %v1826
        %v1828 = vmul.f32 %v1788, 1.442695
        %v1829 = vpow.pop %v1828
        %v1830 = vmul.f32 %v1789, 1.442695
        %v1831 = vpow.pop %v1830
        %v1832 = vmul.f32 %v1790, 1.442695
        %v1833 = vpow.pop %v1832
        %v1834 = vmul.f32 %v1791, 1.442695
        %v1835 = vpow.pop %v1834
        %v1836 = vmul.f32 %v1792, 1.442695
        %v1837 = vpow.pop %v1836
        %v1838 = vmul.f32 %v1793, 1.442695
        %v1839 = vpow.pop %v1838
        %v1840 = vmul.f32 %v1794, 1.442695
        %v1841 = vpow.pop %v1840
        %v1842 = vmul.f32 %v1795, 1.442695
        %v1843 = vpow.pop %v1842
        %v1844 = vmul.f32 %v1796, 1.442695
        %v1845 = vpow.pop %v1844
        %v1846 = vmul.f32 %v1797, 1.442695
        %v1847 = vpow.pop %v1846
        %v1848 = vmul.f32 %v1798, 1.442695
        %v1849 = vpow.pop %v1848
        %v1850 = vmul.f32 %v1799, 1.442695
        %v1851 = vpow.pop %v1850
        %v1852 = vmul.f32 %v1800, 1.442695
        %v1853 = vpow.pop %v1852
        %v1854 = vmul.f32 %v1801, 1.442695
        %v1855 = vpow.pop %v1854
        %v1856 = vmul.f32 %v1802, 1.442695
        %v1857 = vpow.pop %v1856
        %v1858 = vmul.f32 %v1803, 1.442695
        %v1859 = vpow.pop %v1858
        %v1860 = vmul.f32 %v1804, 1.442695
        %v1861 = vpow.pop %v1860
        %v1862 = vmul.f32 %v1805, 1.442695
        %v1863 = vpow.pop %v1862
        %v1864 = vmul.f32 %v1806, 1.442695
        %v1865 = vpow.pop %v1864
        %v1866 = vmul.f32 %v1807, 1.442695
        %v1867 = vpow.pop %v1866
        %v1868 = vmul.f32 %v1808, 1.442695
        %v1869 = vpow.pop %v1868
        %v1870 = vmul.f32 %v1809, 1.442695
        %v1871 = vpow.pop %v1870
        %v1872 = vmul.f32 %v1810, 1.442695
        %v1873 = vpow.pop %v1872
        %v1874 = vmul.f32 %v1811, 1.442695
        %v1875 = vpow.pop %v1874
        %v1876 = vmul.f32 %v1326, %v1813
        %v1877 = vmul.f32 %v1328, %v1813
        %v1878 = vmul.f32 %v1330, %v1813
        %v1879 = vmul.f32 %v1332, %v1813
        %v1880 = vmul.f32 %v1334, %v1815
        %v1881 = vmul.f32 %v1336, %v1815
        %v1882 = vmul.f32 %v1338, %v1815
        %v1883 = vmul.f32 %v1340, %v1815
        %v1884 = vmul.f32 %v1342, %v1817
        %v1885 = vmul.f32 %v1344, %v1817
        %v1886 = vmul.f32 %v1346, %v1817
        %v1887 = vmul.f32 %v1348, %v1817
        %v1888 = vmul.f32 %v1350, %v1819
        %v1889 = vmul.f32 %v1352, %v1819
        %v1890 = vmul.f32 %v1354, %v1819
        %v1891 = vmul.f32 %v1356, %v1819
        %v1892 = vmul.f32 %v1358, %v1821
        %v1893 = vmul.f32 %v1360, %v1821
        %v1894 = vmul.f32 %v1362, %v1821
        %v1895 = vmul.f32 %v1364, %v1821
        %v1896 = vmul.f32 %v1366, %v1823
        %v1897 = vmul.f32 %v1368, %v1823
        %v1898 = vmul.f32 %v1370, %v1823
        %v1899 = vmul.f32 %v1372, %v1823
        %v1900 = vmul.f32 %v1374, %v1825
        %v1901 = vmul.f32 %v1376, %v1825
        %v1902 = vmul.f32 %v1378, %v1825
        %v1903 = vmul.f32 %v1380, %v1825
        %v1904 = vmul.f32 %v1382, %v1827
        %v1905 = vmul.f32 %v1384, %v1827
        %v1906 = vmul.f32 %v1386, %v1827
        %v1907 = vmul.f32 %v1388, %v1827
        %v1908 = vmul.f32 %v1390, %v1829
        %v1909 = vmul.f32 %v1392, %v1829
        %v1910 = vmul.f32 %v1394, %v1829
        %v1911 = vmul.f32 %v1396, %v1829
        %v1912 = vmul.f32 %v1398, %v1831
        %v1913 = vmul.f32 %v1400, %v1831
        %v1914 = vmul.f32 %v1402, %v1831
        %v1915 = vmul.f32 %v1404, %v1831
        %v1916 = vmul.f32 %v1406, %v1833
        %v1917 = vmul.f32 %v1408, %v1833
        %v1918 = vmul.f32 %v1410, %v1833
        %v1919 = vmul.f32 %v1412, %v1833
        %v1920 = vmul.f32 %v1414, %v1835
        %v1921 = vmul.f32 %v1416, %v1835
        %v1922 = vmul.f32 %v1418, %v1835
        %v1923 = vmul.f32 %v1420, %v1835
        %v1924 = vmul.f32 %v1422, %v1837
        %v1925 = vmul.f32 %v1424, %v1837
        %v1926 = vmul.f32 %v1426, %v1837
        %v1927 = vmul.f32 %v1428, %v1837
        %v1928 = vmul.f32 %v1430, %v1839
        %v1929 = vmul.f32 %v1432, %v1839
        %v1930 = vmul.f32 %v1434, %v1839
        %v1931 = vmul.f32 %v1436, %v1839
        %v1932 = vmul.f32 %v1438, %v1841
        %v1933 = vmul.f32 %v1440, %v1841
        %v1934 = vmul.f32 %v1442, %v1841
        %v1935 = vmul.f32 %v1444, %v1841
        %v1936 = vmul.f32 %v1446, %v1843
        %v1937 = vmul.f32 %v1448, %v1843
        %v1938 = vmul.f32 %v1450, %v1843
        %v1939 = vmul.f32 %v1452, %v1843
        %v1940 = vmul.f32 %v1454, %v1845
        %v1941 = vmul.f32 %v1456, %v1845
        %v1942 = vmul.f32 %v1458, %v1845
        %v1943 = vmul.f32 %v1460, %v1845
        %v1944 = vmul.f32 %v1462, %v1847
        %v1945 = vmul.f32 %v1464, %v1847
        %v1946 = vmul.f32 %v1466, %v1847
        %v1947 = vmul.f32 %v1468, %v1847
        %v1948 = vmul.f32 %v1470, %v1849
        %v1949 = vmul.f32 %v1472, %v1849
        %v1950 = vmul.f32 %v1474, %v1849
        %v1951 = vmul.f32 %v1476, %v1849
        %v1952 = vmul.f32 %v1478, %v1851
        %v1953 = vmul.f32 %v1480, %v1851
        %v1954 = vmul.f32 %v1482, %v1851
        %v1955 = vmul.f32 %v1484, %v1851
        %v1956 = vmul.f32 %v1486, %v1853
        %v1957 = vmul.f32 %v1488, %v1853
        %v1958 = vmul.f32 %v1490, %v1853
        %v1959 = vmul.f32 %v1492, %v1853
        %v1960 = vmul.f32 %v1494, %v1855
        %v1961 = vmul.f32 %v1496, %v1855
        %v1962 = vmul.f32 %v1498, %v1855
        %v1963 = vmul.f32 %v1500, %v1855
        %v1964 = vmul.f32 %v1502, %v1857
        %v1965 = vmul.f32 %v1504, %v1857
        %v1966 = vmul.f32 %v1506, %v1857
        %v1967 = vmul.f32 %v1508, %v1857
        %v1968 = vmul.f32 %v1510, %v1859
        %v1969 = vmul.f32 %v1512, %v1859
        %v1970 = vmul.f32 %v1514, %v1859
        %v1971 = vmul.f32 %v1516, %v1859
        %v1972 = vmul.f32 %v1518, %v1861
        %v1973 = vmul.f32 %v1520, %v1861
        %v1974 = vmul.f32 %v1522, %v1861
        %v1975 = vmul.f32 %v1524, %v1861
        %v1976 = vmul.f32 %v1526, %v1863
        %v1977 = vmul.f32 %v1528, %v1863
        %v1978 = vmul.f32 %v1530, %v1863
        %v1979 = vmul.f32 %v1532, %v1863
        %v1980 = vmul.f32 %v1534, %v1865
        %v1981 = vmul.f32 %v1536, %v1865
        %v1982 = vmul.f32 %v1538, %v1865
        %v1983 = vmul.f32 %v1540, %v1865
        %v1984 = vmul.f32 %v1542, %v1867
        %v1985 = vmul.f32 %v1544, %v1867
        %v1986 = vmul.f32 %v1546, %v1867
        %v1987 = vmul.f32 %v1548, %v1867
        %v1988 = vmul.f32 %v1550, %v1869
        %v1989 = vmul.f32 %v1552, %v1869
        %v1990 = vmul.f32 %v1554, %v1869
        %v1991 = vmul.f32 %v1556, %v1869
        %v1992 = vmul.f32 %v1558, %v1871
        %v1993 = vmul.f32 %v1560, %v1871
        %v1994 = vmul.f32 %v1562, %v1871
        %v1995 = vmul.f32 %v1564, %v1871
        %v1996 = vmul.f32 %v1566, %v1873
        %v1997 = vmul.f32 %v1568, %v1873
        %v1998 = vmul.f32 %v1570, %v1873
        %v1999 = vmul.f32 %v1572, %v1873
        %v2000 = vmul.f32 %v1574, %v1875
        %v2001 = vmul.f32 %v1576, %v1875
        %v2002 = vmul.f32 %v1578, %v1875
        %v2003 = vmul.f32 %v1580, %v1875
        %v2004 = vadd.f32 %v1876, %v1880
        %v2005 = vadd.f32 %v2004, %v1884
        %v2006 = vadd.f32 %v2005, %v1888
        %v2007 = vadd.f32 %v2006, %v1892
        %v2008 = vadd.f32 %v2007, %v1896
        %v2009 = vadd.f32 %v2008, %v1900
        %v2010 = vadd.f32 %v2009, %v1904
        %v2011 = vadd.f32 %v2010, %v1908
        %v2012 = vadd.f32 %v2011, %v1912
        %v2013 = vadd.f32 %v2012, %v1916
        %v2014 = vadd.f32 %v2013, %v1920
        %v2015 = vadd.f32 %v2014, %v1924
        %v2016 = vadd.f32 %v2015, %v1928
        %v2017 = vadd.f32 %v2016, %v1932
        %v2018 = vadd.f32 %v2017, %v1936
        %v2019 = vadd.f32 %v2018, %v1940
        %v2020 = vadd.f32 %v2019, %v1944
        %v2021 = vadd.f32 %v2020, %v1948
        %v2022 = vadd.f32 %v2021, %v1952
        %v2023 = vadd.f32 %v2022, %v1956
        %v2024 = vadd.f32 %v2023, %v1960
        %v2025 = vadd.f32 %v2024, %v1964
        %v2026 = vadd.f32 %v2025, %v1968
        %v2027 = vadd.f32 %v2026, %v1972
        %v2028 = vadd.f32 %v2027, %v1976
        %v2029 = vadd.f32 %v2028, %v1980
        %v2030 = vadd.f32 %v2029, %v1984
        %v2031 = vadd.f32 %v2030, %v1988
        %v2032 = vadd.f32 %v2031, %v1992
        %v2033 = vadd.f32 %v2032, %v1996
        %v2034 = vadd.f32 %v2033, %v2000
        %v2035 = vrot.slane %v2034, 4
        %v2036 = vadd.f32 %v2034, %v2035
        %v2037 = vrot.slane %v2036, 2
        %v2038 = vadd.f32 %v2036, %v2037
        %v2039 = vrot.slane %v2038, 1
        %v2040 = vadd.f32 %v2038, %v2039
        %v2041 = vadd.f32 %v1877, %v1881
        %v2042 = vadd.f32 %v2041, %v1885
        %v2043 = vadd.f32 %v2042, %v1889
        %v2044 = vadd.f32 %v2043, %v1893
        %v2045 = vadd.f32 %v2044, %v1897
        %v2046 = vadd.f32 %v2045, %v1901
        %v2047 = vadd.f32 %v2046, %v1905
        %v2048 = vadd.f32 %v2047, %v1909
        %v2049 = vadd.f32 %v2048, %v1913
        %v2050 = vadd.f32 %v2049, %v1917
        %v2051 = vadd.f32 %v2050, %v1921
        %v2052 = vadd.f32 %v2051, %v1925
        %v2053 = vadd.f32 %v2052, %v1929
        %v2054 = vadd.f32 %v2053, %v1933
        %v2055 = vadd.f32 %v2054, %v1937
        %v2056 = vadd.f32 %v2055, %v1941
        %v2057 = vadd.f32 %v2056, %v1945
        %v2058 = vadd.f32 %v2057, %v1949
        %v2059 = vadd.f32 %v2058, %v1953
        %v2060 = vadd.f32 %v2059, %v1957
        %v2061 = vadd.f32 %v2060, %v1961
        %v2062 = vadd.f32 %v2061, %v1965
        %v2063 = vadd.f32 %v2062, %v1969
        %v2064 = vadd.f32 %v2063, %v1973
        %v2065 = vadd.f32 %v2064, %v1977
        %v2066 = vadd.f32 %v2065, %v1981
        %v2067 = vadd.f32 %v2066, %v1985
        %v2068 = vadd.f32 %v2067, %v1989
        %v2069 = vadd.f32 %v2068, %v1993
        %v2070 = vadd.f32 %v2069, %v1997
        %v2071 = vadd.f32 %v2070, %v2001
        %v2072 = vrot.slane %v2071, 4
        %v2073 = vadd.f32 %v2071, %v2072
        %v2074 = vrot.slane %v2073, 2
        %v2075 = vadd.f32 %v2073, %v2074
        %v2076 = vrot.slane %v2075, 1
        %v2077 = vadd.f32 %v2075, %v2076
        %v2078 = vadd.f32 %v1878, %v1882
        %v2079 = vadd.f32 %v2078, %v1886
        %v2080 = vadd.f32 %v2079, %v1890
        %v2081 = vadd.f32 %v2080, %v1894
        %v2082 = vadd.f32 %v2081, %v1898
        %v2083 = vadd.f32 %v2082, %v1902
        %v2084 = vadd.f32 %v2083, %v1906
        %v2085 = vadd.f32 %v2084, %v1910
        %v2086 = vadd.f32 %v2085, %v1914
        %v2087 = vadd.f32 %v2086, %v1918
        %v2088 = vadd.f32 %v2087, %v1922
        %v2089 = vadd.f32 %v2088, %v1926
        %v2090 = vadd.f32 %v2089, %v1930
        %v2091 = vadd.f32 %v2090, %v1934
        %v2092 = vadd.f32 %v2091, %v1938
        %v2093 = vadd.f32 %v2092, %v1942
        %v2094 = vadd.f32 %v2093, %v1946
        %v2095 = vadd.f32 %v2094, %v1950
        %v2096 = vadd.f32 %v2095, %v1954
        %v2097 = vadd.f32 %v2096, %v1958
        %v2098 = vadd.f32 %v2097, %v1962
        %v2099 = vadd.f32 %v2098, %v1966
        %v2100 = vadd.f32 %v2099, %v1970
        %v2101 = vadd.f32 %v2100, %v1974
        %v2102 = vadd.f32 %v2101, %v1978
        %v2103 = vadd.f32 %v2102, %v1982
        %v2104 = vadd.f32 %v2103, %v1986
        %v2105 = vadd.f32 %v2104, %v1990
        %v2106 = vadd.f32 %v2105, %v1994
        %v2107 = vadd.f32 %v2106, %v1998
        %v2108 = vadd.f32 %v2107, %v2002
        %v2109 = vrot.slane %v2108, 4
        %v2110 = vadd.f32 %v2108, %v2109
        %v2111 = vrot.slane %v2110, 2
        %v2112 = vadd.f32 %v2110, %v2111
        %v2113 = vrot.slane %v2112, 1
        %v2114 = vadd.f32 %v2112, %v2113
        %v2115 = vadd.f32 %v1879, %v1883
        %v2116 = vadd.f32 %v2115, %v1887
        %v2117 = vadd.f32 %v2116, %v1891
        %v2118 = vadd.f32 %v2117, %v1895
        %v2119 = vadd.f32 %v2118, %v1899
        %v2120 = vadd.f32 %v2119, %v1903
        %v2121 = vadd.f32 %v2120, %v1907
        %v2122 = vadd.f32 %v2121, %v1911
        %v2123 = vadd.f32 %v2122, %v1915
        %v2124 = vadd.f32 %v2123, %v1919
        %v2125 = vadd.f32 %v2124, %v1923
        %v2126 = vadd.f32 %v2125, %v1927
        %v2127 = vadd.f32 %v2126, %v1931
        %v2128 = vadd.f32 %v2127, %v1935
        %v2129 = vadd.f32 %v2128, %v1939
        %v2130 = vadd.f32 %v2129, %v1943
        %v2131 = vadd.f32 %v2130, %v1947
        %v2132 = vadd.f32 %v2131, %v1951
        %v2133 = vadd.f32 %v2132, %v1955
        %v2134 = vadd.f32 %v2133, %v1959
        %v2135 = vadd.f32 %v2134, %v1963
        %v2136 = vadd.f32 %v2135, %v1967
        %v2137 = vadd.f32 %v2136, %v1971
        %v2138 = vadd.f32 %v2137, %v1975
        %v2139 = vadd.f32 %v2138, %v1979
        %v2140 = vadd.f32 %v2139, %v1983
        %v2141 = vadd.f32 %v2140, %v1987
        %v2142 = vadd.f32 %v2141, %v1991
        %v2143 = vadd.f32 %v2142, %v1995
        %v2144 = vadd.f32 %v2143, %v1999
        %v2145 = vadd.f32 %v2144, %v2003
        %v2146 = vrot.slane %v2145, 4
        %v2147 = vadd.f32 %v2145, %v2146
        %v2148 = vrot.slane %v2147, 2
        %v2149 = vadd.f32 %v2147, %v2148
        %v2150 = vrot.slane %v2149, 1
        %v2151 = vadd.f32 %v2149, %v2150
        %v2152 = vmin.f32 %v2040, %v2077
        %v2153 = vmin.f32 %v2114, %v2151
        %v2154 = vmin.f32 %v2152, %v2153
        %2155 = vmin.xlane.f32.xlu0 %v2154
        %v2156 = vpop.xlane.xlu0 %2155
        %s2157 = vtos %v2156
        %p2158 = scmp.lt.f32.partialorder %s2157, 1e-20
        // Predicated region
        $region45: #{_clip_loss_tiled.1} parent=31 // pred_check
          %p2159 = pneg %p2158
        $region46: #{_clip_loss_tiled.1} parent=31 // pred_check_branch
          %2161 = sbr.rel (%p2159) target = $region48
        $region47: #{_clip_loss_tiled.1} parent=31 // pred_region
          %v2162 = vmax.f32 %v831, %v835
          %v2163 = vmax.f32 %v2162, %v839
          %v2164 = vmax.f32 %v2163, %v843
          %v2165 = vmax.f32 %v2164, %v847
          %v2166 = vmax.f32 %v2165, %v851
          %v2167 = vmax.f32 %v2166, %v855
          %v2168 = vmax.f32 %v2167, %v859
          %v2169 = vmax.f32 %v2168, %v863
          %v2170 = vmax.f32 %v2169, %v867
          %v2171 = vmax.f32 %v2170, %v871
          %v2172 = vmax.f32 %v2171, %v875
          %v2173 = vmax.f32 %v2172, %v879
          %v2174 = vmax.f32 %v2173, %v883
          %v2175 = vmax.f32 %v2174, %v887
          %v2176 = vmax.f32 %v2175, %v891
          %v2177 = vmax.f32 %v2176, %v895
          %v2178 = vmax.f32 %v2177, %v899
          %v2179 = vmax.f32 %v2178, %v903
          %v2180 = vmax.f32 %v2179, %v907
          %v2181 = vmax.f32 %v2180, %v911
          %v2182 = vmax.f32 %v2181, %v915
          %v2183 = vmax.f32 %v2182, %v919
          %v2184 = vmax.f32 %v2183, %v923
          %v2185 = vmax.f32 %v2184, %v927
          %v2186 = vmax.f32 %v2185, %v931
          %v2187 = vmax.f32 %v2186, %v935
          %v2188 = vmax.f32 %v2187, %v939
          %v2189 = vmax.f32 %v2188, %v943
          %v2190 = vmax.f32 %v2189, %v947
          %v2191 = vmax.f32 %v2190, %v951
          %v2192 = vmax.f32 %v2191, %v955
          %v2193 = vrot.slane %v2192, 4
          %v2194 = vmax.f32 %v2192, %v2193
          %v2195 = vrot.slane %v2194, 2
          %v2196 = vmax.f32 %v2194, %v2195
          %v2197 = vrot.slane %v2196, 1
          %v2198 = vmax.f32 %v2196, %v2197
          %v2199 = vmax.f32 %v832, %v836
          %v2200 = vmax.f32 %v2199, %v840
          %v2201 = vmax.f32 %v2200, %v844
          %v2202 = vmax.f32 %v2201, %v848
          %v2203 = vmax.f32 %v2202, %v852
          %v2204 = vmax.f32 %v2203, %v856
          %v2205 = vmax.f32 %v2204, %v860
          %v2206 = vmax.f32 %v2205, %v864
          %v2207 = vmax.f32 %v2206, %v868
          %v2208 = vmax.f32 %v2207, %v872
          %v2209 = vmax.f32 %v2208, %v876
          %v2210 = vmax.f32 %v2209, %v880
          %v2211 = vmax.f32 %v2210, %v884
          %v2212 = vmax.f32 %v2211, %v888
          %v2213 = vmax.f32 %v2212, %v892
          %v2214 = vmax.f32 %v2213, %v896
          %v2215 = vmax.f32 %v2214, %v900
          %v2216 = vmax.f32 %v2215, %v904
          %v2217 = vmax.f32 %v2216, %v908
          %v2218 = vmax.f32 %v2217, %v912
          %v2219 = vmax.f32 %v2218, %v916
          %v2220 = vmax.f32 %v2219, %v920
          %v2221 = vmax.f32 %v2220, %v924
          %v2222 = vmax.f32 %v2221, %v928
          %v2223 = vmax.f32 %v2222, %v932
          %v2224 = vmax.f32 %v2223, %v936
          %v2225 = vmax.f32 %v2224, %v940
          %v2226 = vmax.f32 %v2225, %v944
          %v2227 = vmax.f32 %v2226, %v948
          %v2228 = vmax.f32 %v2227, %v952
          %v2229 = vmax.f32 %v2228, %v956
          %v2230 = vrot.slane %v2229, 4
          %v2231 = vmax.f32 %v2229, %v2230
          %v2232 = vrot.slane %v2231, 2
          %v2233 = vmax.f32 %v2231, %v2232
          %v2234 = vrot.slane %v2233, 1
          %v2235 = vmax.f32 %v2233, %v2234
          %v2236 = vmax.f32 %v833, %v837
          %v2237 = vmax.f32 %v2236, %v841
          %v2238 = vmax.f32 %v2237, %v845
          %v2239 = vmax.f32 %v2238, %v849
          %v2240 = vmax.f32 %v2239, %v853
          %v2241 = vmax.f32 %v2240, %v857
          %v2242 = vmax.f32 %v2241, %v861
          %v2243 = vmax.f32 %v2242, %v865
          %v2244 = vmax.f32 %v2243, %v869
          %v2245 = vmax.f32 %v2244, %v873
          %v2246 = vmax.f32 %v2245, %v877
          %v2247 = vmax.f32 %v2246, %v881
          %v2248 = vmax.f32 %v2247, %v885
          %v2249 = vmax.f32 %v2248, %v889
          %v2250 = vmax.f32 %v2249, %v893
          %v2251 = vmax.f32 %v2250, %v897
          %v2252 = vmax.f32 %v2251, %v901
          %v2253 = vmax.f32 %v2252, %v905
          %v2254 = vmax.f32 %v2253, %v909
          %v2255 = vmax.f32 %v2254, %v913
          %v2256 = vmax.f32 %v2255, %v917
          %v2257 = vmax.f32 %v2256, %v921
          %v2258 = vmax.f32 %v2257, %v925
          %v2259 = vmax.f32 %v2258, %v929
          %v2260 = vmax.f32 %v2259, %v933
          %v2261 = vmax.f32 %v2260, %v937
          %v2262 = vmax.f32 %v2261, %v941
          %v2263 = vmax.f32 %v2262, %v945
          %v2264 = vmax.f32 %v2263, %v949
          %v2265 = vmax.f32 %v2264, %v953
          %v2266 = vmax.f32 %v2265, %v957
          %v2267 = vrot.slane %v2266, 4
          %v2268 = vmax.f32 %v2266, %v2267
          %v2269 = vrot.slane %v2268, 2
          %v2270 = vmax.f32 %v2268, %v2269
          %v2271 = vrot.slane %v2270, 1
          %v2272 = vmax.f32 %v2270, %v2271
          %v2273 = vmax.f32 %v834, %v838
          %v2274 = vmax.f32 %v2273, %v842
          %v2275 = vmax.f32 %v2274, %v846
          %v2276 = vmax.f32 %v2275, %v850
          %v2277 = vmax.f32 %v2276, %v854
          %v2278 = vmax.f32 %v2277, %v858
          %v2279 = vmax.f32 %v2278, %v862
          %v2280 = vmax.f32 %v2279, %v866
          %v2281 = vmax.f32 %v2280, %v870
          %v2282 = vmax.f32 %v2281, %v874
          %v2283 = vmax.f32 %v2282, %v878
          %v2284 = vmax.f32 %v2283, %v882
          %v2285 = vmax.f32 %v2284, %v886
          %v2286 = vmax.f32 %v2285, %v890
          %v2287 = vmax.f32 %v2286, %v894
          %v2288 = vmax.f32 %v2287, %v898
          %v2289 = vmax.f32 %v2288, %v902
          %v2290 = vmax.f32 %v2289, %v906
          %v2291 = vmax.f32 %v2290, %v910
          %v2292 = vmax.f32 %v2291, %v914
          %v2293 = vmax.f32 %v2292, %v918
          %v2294 = vmax.f32 %v2293, %v922
          %v2295 = vmax.f32 %v2294, %v926
          %v2296 = vmax.f32 %v2295, %v930
          %v2297 = vmax.f32 %v2296, %v934
          %v2298 = vmax.f32 %v2297, %v938
          %v2299 = vmax.f32 %v2298, %v942
          %v2300 = vmax.f32 %v2299, %v946
          %v2301 = vmax.f32 %v2300, %v950
          %v2302 = vmax.f32 %v2301, %v954
          %v2303 = vmax.f32 %v2302, %v958
          %v2304 = vrot.slane %v2303, 4
          %v2305 = vmax.f32 %v2303, %v2304
          %v2306 = vrot.slane %v2305, 2
          %v2307 = vmax.f32 %v2305, %v2306
          %v2308 = vrot.slane %v2307, 1
          %v2309 = vmax.f32 %v2307, %v2308
          %v2310 = vsub.f32 %v831, %v2198
          %v2311 = vsub.f32 %v832, %v2235
          %v2312 = vsub.f32 %v833, %v2272
          %v2313 = vsub.f32 %v834, %v2309
          %v2314 = vsub.f32 %v835, %v2198
          %v2315 = vsub.f32 %v836, %v2235
          %v2316 = vsub.f32 %v837, %v2272
          %v2317 = vsub.f32 %v838, %v2309
          %v2318 = vsub.f32 %v839, %v2198
          %v2319 = vsub.f32 %v840, %v2235
          %v2320 = vsub.f32 %v841, %v2272
          %v2321 = vsub.f32 %v842, %v2309
          %v2322 = vsub.f32 %v843, %v2198
          %v2323 = vsub.f32 %v844, %v2235
          %v2324 = vsub.f32 %v845, %v2272
          %v2325 = vsub.f32 %v846, %v2309
          %v2326 = vsub.f32 %v847, %v2198
          %v2327 = vsub.f32 %v848, %v2235
          %v2328 = vsub.f32 %v849, %v2272
          %v2329 = vsub.f32 %v850, %v2309
          %v2330 = vsub.f32 %v851, %v2198
          %v2331 = vsub.f32 %v852, %v2235
          %v2332 = vsub.f32 %v853, %v2272
          %v2333 = vsub.f32 %v854, %v2309
          %v2334 = vsub.f32 %v855, %v2198
          %v2335 = vsub.f32 %v856, %v2235
          %v2336 = vsub.f32 %v857, %v2272
          %v2337 = vsub.f32 %v858, %v2309
          %v2338 = vsub.f32 %v859, %v2198
          %v2339 = vsub.f32 %v860, %v2235
          %v2340 = vsub.f32 %v861, %v2272
          %v2341 = vsub.f32 %v862, %v2309
          %v2342 = vsub.f32 %v863, %v2198
          %v2343 = vsub.f32 %v864, %v2235
          %v2344 = vsub.f32 %v865, %v2272
          %v2345 = vsub.f32 %v866, %v2309
          %v2346 = vsub.f32 %v867, %v2198
          %v2347 = vsub.f32 %v868, %v2235
          %v2348 = vsub.f32 %v869, %v2272
          %v2349 = vsub.f32 %v870, %v2309
          %v2350 = vsub.f32 %v871, %v2198
          %v2351 = vsub.f32 %v872, %v2235
          %v2352 = vsub.f32 %v873, %v2272
          %v2353 = vsub.f32 %v874, %v2309
          %v2354 = vsub.f32 %v875, %v2198
          %v2355 = vsub.f32 %v876, %v2235
          %v2356 = vsub.f32 %v877, %v2272
          %v2357 = vsub.f32 %v878, %v2309
          %v2358 = vsub.f32 %v879, %v2198
          %v2359 = vsub.f32 %v880, %v2235
          %v2360 = vsub.f32 %v881, %v2272
          %v2361 = vsub.f32 %v882, %v2309
          %v2362 = vsub.f32 %v883, %v2198
          %v2363 = vsub.f32 %v884, %v2235
          %v2364 = vsub.f32 %v885, %v2272
          %v2365 = vsub.f32 %v886, %v2309
          %v2366 = vsub.f32 %v887, %v2198
          %v2367 = vsub.f32 %v888, %v2235
          %v2368 = vsub.f32 %v889, %v2272
          %v2369 = vsub.f32 %v890, %v2309
          %v2370 = vsub.f32 %v891, %v2198
          %v2371 = vsub.f32 %v892, %v2235
          %v2372 = vsub.f32 %v893, %v2272
          %v2373 = vsub.f32 %v894, %v2309
          %v2374 = vsub.f32 %v895, %v2198
          %v2375 = vsub.f32 %v896, %v2235
          %v2376 = vsub.f32 %v897, %v2272
          %v2377 = vsub.f32 %v898, %v2309
          %v2378 = vsub.f32 %v899, %v2198
          %v2379 = vsub.f32 %v900, %v2235
          %v2380 = vsub.f32 %v901, %v2272
          %v2381 = vsub.f32 %v902, %v2309
          %v2382 = vsub.f32 %v903, %v2198
          %v2383 = vsub.f32 %v904, %v2235
          %v2384 = vsub.f32 %v905, %v2272
          %v2385 = vsub.f32 %v906, %v2309
          %v2386 = vsub.f32 %v907, %v2198
          %v2387 = vsub.f32 %v908, %v2235
          %v2388 = vsub.f32 %v909, %v2272
          %v2389 = vsub.f32 %v910, %v2309
          %v2390 = vsub.f32 %v911, %v2198
          %v2391 = vsub.f32 %v912, %v2235
          %v2392 = vsub.f32 %v913, %v2272
          %v2393 = vsub.f32 %v914, %v2309
          %v2394 = vsub.f32 %v915, %v2198
          %v2395 = vsub.f32 %v916, %v2235
          %v2396 = vsub.f32 %v917, %v2272
          %v2397 = vsub.f32 %v918, %v2309
          %v2398 = vsub.f32 %v919, %v2198
          %v2399 = vsub.f32 %v920, %v2235
          %v2400 = vsub.f32 %v921, %v2272
          %v2401 = vsub.f32 %v922, %v2309
          %v2402 = vsub.f32 %v923, %v2198
          %v2403 = vsub.f32 %v924, %v2235
          %v2404 = vsub.f32 %v925, %v2272
          %v2405 = vsub.f32 %v926, %v2309
          %v2406 = vsub.f32 %v927, %v2198
          %v2407 = vsub.f32 %v928, %v2235
          %v2408 = vsub.f32 %v929, %v2272
          %v2409 = vsub.f32 %v930, %v2309
          %v2410 = vsub.f32 %v931, %v2198
          %v2411 = vsub.f32 %v932, %v2235
          %v2412 = vsub.f32 %v933, %v2272
          %v2413 = vsub.f32 %v934, %v2309
          %v2414 = vsub.f32 %v935, %v2198
          %v2415 = vsub.f32 %v936, %v2235
          %v2416 = vsub.f32 %v937, %v2272
          %v2417 = vsub.f32 %v938, %v2309
          %v2418 = vsub.f32 %v939, %v2198
          %v2419 = vsub.f32 %v940, %v2235
          %v2420 = vsub.f32 %v941, %v2272
          %v2421 = vsub.f32 %v942, %v2309
          %v2422 = vsub.f32 %v943, %v2198
          %v2423 = vsub.f32 %v944, %v2235
          %v2424 = vsub.f32 %v945, %v2272
          %v2425 = vsub.f32 %v946, %v2309
          %v2426 = vsub.f32 %v947, %v2198
          %v2427 = vsub.f32 %v948, %v2235
          %v2428 = vsub.f32 %v949, %v2272
          %v2429 = vsub.f32 %v950, %v2309
          %v2430 = vsub.f32 %v951, %v2198
          %v2431 = vsub.f32 %v952, %v2235
          %v2432 = vsub.f32 %v953, %v2272
          %v2433 = vsub.f32 %v954, %v2309
          %v2434 = vsub.f32 %v955, %v2198
          %v2435 = vsub.f32 %v956, %v2235
          %v2436 = vsub.f32 %v957, %v2272
          %v2437 = vsub.f32 %v958, %v2309
          %v2438 = vmul.f32 %v2310, 1.442695
          %v2439 = vpow.pop %v2438
          %v2440 = vmul.f32 %v2311, 1.442695
          %v2441 = vpow.pop %v2440
          %v2442 = vmul.f32 %v2312, 1.442695
          %v2443 = vpow.pop %v2442
          %v2444 = vmul.f32 %v2313, 1.442695
          %v2445 = vpow.pop %v2444
          %v2446 = vmul.f32 %v2314, 1.442695
          %v2447 = vpow.pop %v2446
          %v2448 = vmul.f32 %v2315, 1.442695
          %v2449 = vpow.pop %v2448
          %v2450 = vmul.f32 %v2316, 1.442695
          %v2451 = vpow.pop %v2450
          %v2452 = vmul.f32 %v2317, 1.442695
          %v2453 = vpow.pop %v2452
          %v2454 = vmul.f32 %v2318, 1.442695
          %v2455 = vpow.pop %v2454
          %v2456 = vmul.f32 %v2319, 1.442695
          %v2457 = vpow.pop %v2456
          %v2458 = vmul.f32 %v2320, 1.442695
          %v2459 = vpow.pop %v2458
          %v2460 = vmul.f32 %v2321, 1.442695
          %v2461 = vpow.pop %v2460
          %v2462 = vmul.f32 %v2322, 1.442695
          %v2463 = vpow.pop %v2462
          %v2464 = vmul.f32 %v2323, 1.442695
          %v2465 = vpow.pop %v2464
          %v2466 = vmul.f32 %v2324, 1.442695
          %v2467 = vpow.pop %v2466
          %v2468 = vmul.f32 %v2325, 1.442695
          %v2469 = vpow.pop %v2468
          %v2470 = vmul.f32 %v2326, 1.442695
          %v2471 = vpow.pop %v2470
          %v2472 = vmul.f32 %v2327, 1.442695
          %v2473 = vpow.pop %v2472
          %v2474 = vmul.f32 %v2328, 1.442695
          %v2475 = vpow.pop %v2474
          %v2476 = vmul.f32 %v2329, 1.442695
          %v2477 = vpow.pop %v2476
          %v2478 = vmul.f32 %v2330, 1.442695
          %v2479 = vpow.pop %v2478
          %v2480 = vmul.f32 %v2331, 1.442695
          %v2481 = vpow.pop %v2480
          %v2482 = vmul.f32 %v2332, 1.442695
          %v2483 = vpow.pop %v2482
          %v2484 = vmul.f32 %v2333, 1.442695
          %v2485 = vpow.pop %v2484
          %v2486 = vmul.f32 %v2334, 1.442695
          %v2487 = vpow.pop %v2486
          %v2488 = vmul.f32 %v2335, 1.442695
          %v2489 = vpow.pop %v2488
          %v2490 = vmul.f32 %v2336, 1.442695
          %v2491 = vpow.pop %v2490
          %v2492 = vmul.f32 %v2337, 1.442695
          %v2493 = vpow.pop %v2492
          %v2494 = vmul.f32 %v2338, 1.442695
          %v2495 = vpow.pop %v2494
          %v2496 = vmul.f32 %v2339, 1.442695
          %v2497 = vpow.pop %v2496
          %v2498 = vmul.f32 %v2340, 1.442695
          %v2499 = vpow.pop %v2498
          %v2500 = vmul.f32 %v2341, 1.442695
          %v2501 = vpow.pop %v2500
          %v2502 = vmul.f32 %v2342, 1.442695
          %v2503 = vpow.pop %v2502
          %v2504 = vmul.f32 %v2343, 1.442695
          %v2505 = vpow.pop %v2504
          %v2506 = vmul.f32 %v2344, 1.442695
          %v2507 = vpow.pop %v2506
          %v2508 = vmul.f32 %v2345, 1.442695
          %v2509 = vpow.pop %v2508
          %v2510 = vmul.f32 %v2346, 1.442695
          %v2511 = vpow.pop %v2510
          %v2512 = vmul.f32 %v2347, 1.442695
          %v2513 = vpow.pop %v2512
          %v2514 = vmul.f32 %v2348, 1.442695
          %v2515 = vpow.pop %v2514
          %v2516 = vmul.f32 %v2349, 1.442695
          %v2517 = vpow.pop %v2516
          %v2518 = vmul.f32 %v2350, 1.442695
          %v2519 = vpow.pop %v2518
          %v2520 = vmul.f32 %v2351, 1.442695
          %v2521 = vpow.pop %v2520
          %v2522 = vmul.f32 %v2352, 1.442695
          %v2523 = vpow.pop %v2522
          %v2524 = vmul.f32 %v2353, 1.442695
          %v2525 = vpow.pop %v2524
          %v2526 = vmul.f32 %v2354, 1.442695
          %v2527 = vpow.pop %v2526
          %v2528 = vmul.f32 %v2355, 1.442695
          %v2529 = vpow.pop %v2528
          %v2530 = vmul.f32 %v2356, 1.442695
          %v2531 = vpow.pop %v2530
          %v2532 = vmul.f32 %v2357, 1.442695
          %v2533 = vpow.pop %v2532
          %v2534 = vmul.f32 %v2358, 1.442695
          %v2535 = vpow.pop %v2534
          %v2536 = vmul.f32 %v2359, 1.442695
          %v2537 = vpow.pop %v2536
          %v2538 = vmul.f32 %v2360, 1.442695
          %v2539 = vpow.pop %v2538
          %v2540 = vmul.f32 %v2361, 1.442695
          %v2541 = vpow.pop %v2540
          %v2542 = vmul.f32 %v2362, 1.442695
          %v2543 = vpow.pop %v2542
          %v2544 = vmul.f32 %v2363, 1.442695
          %v2545 = vpow.pop %v2544
          %v2546 = vmul.f32 %v2364, 1.442695
          %v2547 = vpow.pop %v2546
          %v2548 = vmul.f32 %v2365, 1.442695
          %v2549 = vpow.pop %v2548
          %v2550 = vmul.f32 %v2366, 1.442695
          %v2551 = vpow.pop %v2550
          %v2552 = vmul.f32 %v2367, 1.442695
          %v2553 = vpow.pop %v2552
          %v2554 = vmul.f32 %v2368, 1.442695
          %v2555 = vpow.pop %v2554
          %v2556 = vmul.f32 %v2369, 1.442695
          %v2557 = vpow.pop %v2556
          %v2558 = vmul.f32 %v2370, 1.442695
          %v2559 = vpow.pop %v2558
          %v2560 = vmul.f32 %v2371, 1.442695
          %v2561 = vpow.pop %v2560
          %v2562 = vmul.f32 %v2372, 1.442695
          %v2563 = vpow.pop %v2562
          %v2564 = vmul.f32 %v2373, 1.442695
          %v2565 = vpow.pop %v2564
          %v2566 = vmul.f32 %v2374, 1.442695
          %v2567 = vpow.pop %v2566
          %v2568 = vmul.f32 %v2375, 1.442695
          %v2569 = vpow.pop %v2568
          %v2570 = vmul.f32 %v2376, 1.442695
          %v2571 = vpow.pop %v2570
          %v2572 = vmul.f32 %v2377, 1.442695
          %v2573 = vpow.pop %v2572
          %v2574 = vmul.f32 %v2378, 1.442695
          %v2575 = vpow.pop %v2574
          %v2576 = vmul.f32 %v2379, 1.442695
          %v2577 = vpow.pop %v2576
          %v2578 = vmul.f32 %v2380, 1.442695
          %v2579 = vpow.pop %v2578
          %v2580 = vmul.f32 %v2381, 1.442695
          %v2581 = vpow.pop %v2580
          %v2582 = vmul.f32 %v2382, 1.442695
          %v2583 = vpow.pop %v2582
          %v2584 = vmul.f32 %v2383, 1.442695
          %v2585 = vpow.pop %v2584
          %v2586 = vmul.f32 %v2384, 1.442695
          %v2587 = vpow.pop %v2586
          %v2588 = vmul.f32 %v2385, 1.442695
          %v2589 = vpow.pop %v2588
          %v2590 = vmul.f32 %v2386, 1.442695
          %v2591 = vpow.pop %v2590
          %v2592 = vmul.f32 %v2387, 1.442695
          %v2593 = vpow.pop %v2592
          %v2594 = vmul.f32 %v2388, 1.442695
          %v2595 = vpow.pop %v2594
          %v2596 = vmul.f32 %v2389, 1.442695
          %v2597 = vpow.pop %v2596
          %v2598 = vmul.f32 %v2390, 1.442695
          %v2599 = vpow.pop %v2598
          %v2600 = vmul.f32 %v2391, 1.442695
          %v2601 = vpow.pop %v2600
          %v2602 = vmul.f32 %v2392, 1.442695
          %v2603 = vpow.pop %v2602
          %v2604 = vmul.f32 %v2393, 1.442695
          %v2605 = vpow.pop %v2604
          %v2606 = vmul.f32 %v2394, 1.442695
          %v2607 = vpow.pop %v2606
          %v2608 = vmul.f32 %v2395, 1.442695
          %v2609 = vpow.pop %v2608
          %v2610 = vmul.f32 %v2396, 1.442695
          %v2611 = vpow.pop %v2610
          %v2612 = vmul.f32 %v2397, 1.442695
          %v2613 = vpow.pop %v2612
          %v2614 = vmul.f32 %v2398, 1.442695
          %v2615 = vpow.pop %v2614
          %v2616 = vmul.f32 %v2399, 1.442695
          %v2617 = vpow.pop %v2616
          %v2618 = vmul.f32 %v2400, 1.442695
          %v2619 = vpow.pop %v2618
          %v2620 = vmul.f32 %v2401, 1.442695
          %v2621 = vpow.pop %v2620
          %v2622 = vmul.f32 %v2402, 1.442695
          %v2623 = vpow.pop %v2622
          %v2624 = vmul.f32 %v2403, 1.442695
          %v2625 = vpow.pop %v2624
          %v2626 = vmul.f32 %v2404, 1.442695
          %v2627 = vpow.pop %v2626
          %v2628 = vmul.f32 %v2405, 1.442695
          %v2629 = vpow.pop %v2628
          %v2630 = vmul.f32 %v2406, 1.442695
          %v2631 = vpow.pop %v2630
          %v2632 = vmul.f32 %v2407, 1.442695
          %v2633 = vpow.pop %v2632
          %v2634 = vmul.f32 %v2408, 1.442695
          %v2635 = vpow.pop %v2634
          %v2636 = vmul.f32 %v2409, 1.442695
          %v2637 = vpow.pop %v2636
          %v2638 = vmul.f32 %v2410, 1.442695
          %v2639 = vpow.pop %v2638
          %v2640 = vmul.f32 %v2411, 1.442695
          %v2641 = vpow.pop %v2640
          %v2642 = vmul.f32 %v2412, 1.442695
          %v2643 = vpow.pop %v2642
          %v2644 = vmul.f32 %v2413, 1.442695
          %v2645 = vpow.pop %v2644
          %v2646 = vmul.f32 %v2414, 1.442695
          %v2647 = vpow.pop %v2646
          %v2648 = vmul.f32 %v2415, 1.442695
          %v2649 = vpow.pop %v2648
          %v2650 = vmul.f32 %v2416, 1.442695
          %v2651 = vpow.pop %v2650
          %v2652 = vmul.f32 %v2417, 1.442695
          %v2653 = vpow.pop %v2652
          %v2654 = vmul.f32 %v2418, 1.442695
          %v2655 = vpow.pop %v2654
          %v2656 = vmul.f32 %v2419, 1.442695
          %v2657 = vpow.pop %v2656
          %v2658 = vmul.f32 %v2420, 1.442695
          %v2659 = vpow.pop %v2658
          %v2660 = vmul.f32 %v2421, 1.442695
          %v2661 = vpow.pop %v2660
          %v2662 = vmul.f32 %v2422, 1.442695
          %v2663 = vpow.pop %v2662
          %v2664 = vmul.f32 %v2423, 1.442695
          %v2665 = vpow.pop %v2664
          %v2666 = vmul.f32 %v2424, 1.442695
          %v2667 = vpow.pop %v2666
          %v2668 = vmul.f32 %v2425, 1.442695
          %v2669 = vpow.pop %v2668
          %v2670 = vmul.f32 %v2426, 1.442695
          %v2671 = vpow.pop %v2670
          %v2672 = vmul.f32 %v2427, 1.442695
          %v2673 = vpow.pop %v2672
          %v2674 = vmul.f32 %v2428, 1.442695
          %v2675 = vpow.pop %v2674
          %v2676 = vmul.f32 %v2429, 1.442695
          %v2677 = vpow.pop %v2676
          %v2678 = vmul.f32 %v2430, 1.442695
          %v2679 = vpow.pop %v2678
          %v2680 = vmul.f32 %v2431, 1.442695
          %v2681 = vpow.pop %v2680
          %v2682 = vmul.f32 %v2432, 1.442695
          %v2683 = vpow.pop %v2682
          %v2684 = vmul.f32 %v2433, 1.442695
          %v2685 = vpow.pop %v2684
          %v2686 = vmul.f32 %v2434, 1.442695
          %v2687 = vpow.pop %v2686
          %v2688 = vmul.f32 %v2435, 1.442695
          %v2689 = vpow.pop %v2688
          %v2690 = vmul.f32 %v2436, 1.442695
          %v2691 = vpow.pop %v2690
          %v2692 = vmul.f32 %v2437, 1.442695
          %v2693 = vpow.pop %v2692
          %v2694 = vadd.f32 %v2439, %v2447
          %v2695 = vadd.f32 %v2694, %v2455
          %v2696 = vadd.f32 %v2695, %v2463
          %v2697 = vadd.f32 %v2696, %v2471
          %v2698 = vadd.f32 %v2697, %v2479
          %v2699 = vadd.f32 %v2698, %v2487
          %v2700 = vadd.f32 %v2699, %v2495
          %v2701 = vadd.f32 %v2700, %v2503
          %v2702 = vadd.f32 %v2701, %v2511
          %v2703 = vadd.f32 %v2702, %v2519
          %v2704 = vadd.f32 %v2703, %v2527
          %v2705 = vadd.f32 %v2704, %v2535
          %v2706 = vadd.f32 %v2705, %v2543
          %v2707 = vadd.f32 %v2706, %v2551
          %v2708 = vadd.f32 %v2707, %v2559
          %v2709 = vadd.f32 %v2708, %v2567
          %v2710 = vadd.f32 %v2709, %v2575
          %v2711 = vadd.f32 %v2710, %v2583
          %v2712 = vadd.f32 %v2711, %v2591
          %v2713 = vadd.f32 %v2712, %v2599
          %v2714 = vadd.f32 %v2713, %v2607
          %v2715 = vadd.f32 %v2714, %v2615
          %v2716 = vadd.f32 %v2715, %v2623
          %v2717 = vadd.f32 %v2716, %v2631
          %v2718 = vadd.f32 %v2717, %v2639
          %v2719 = vadd.f32 %v2718, %v2647
          %v2720 = vadd.f32 %v2719, %v2655
          %v2721 = vadd.f32 %v2720, %v2663
          %v2722 = vadd.f32 %v2721, %v2671
          %v2723 = vadd.f32 %v2722, %v2679
          %v2724 = vadd.f32 %v2723, %v2687
          %v2725 = vrot.slane %v2724, 4
          %v2726 = vadd.f32 %v2724, %v2725
          %v2727 = vrot.slane %v2726, 2
          %v2728 = vadd.f32 %v2726, %v2727
          %v2729 = vrot.slane %v2728, 1
          %v2730 = vadd.f32 %v2728, %v2729
          %v2731 = vadd.f32 %v2441, %v2449
          %v2732 = vadd.f32 %v2731, %v2457
          %v2733 = vadd.f32 %v2732, %v2465
          %v2734 = vadd.f32 %v2733, %v2473
          %v2735 = vadd.f32 %v2734, %v2481
          %v2736 = vadd.f32 %v2735, %v2489
          %v2737 = vadd.f32 %v2736, %v2497
          %v2738 = vadd.f32 %v2737, %v2505
          %v2739 = vadd.f32 %v2738, %v2513
          %v2740 = vadd.f32 %v2739, %v2521
          %v2741 = vadd.f32 %v2740, %v2529
          %v2742 = vadd.f32 %v2741, %v2537
          %v2743 = vadd.f32 %v2742, %v2545
          %v2744 = vadd.f32 %v2743, %v2553
          %v2745 = vadd.f32 %v2744, %v2561
          %v2746 = vadd.f32 %v2745, %v2569
          %v2747 = vadd.f32 %v2746, %v2577
          %v2748 = vadd.f32 %v2747, %v2585
          %v2749 = vadd.f32 %v2748, %v2593
          %v2750 = vadd.f32 %v2749, %v2601
          %v2751 = vadd.f32 %v2750, %v2609
          %v2752 = vadd.f32 %v2751, %v2617
          %v2753 = vadd.f32 %v2752, %v2625
          %v2754 = vadd.f32 %v2753, %v2633
          %v2755 = vadd.f32 %v2754, %v2641
          %v2756 = vadd.f32 %v2755, %v2649
          %v2757 = vadd.f32 %v2756, %v2657
          %v2758 = vadd.f32 %v2757, %v2665
          %v2759 = vadd.f32 %v2758, %v2673
          %v2760 = vadd.f32 %v2759, %v2681
          %v2761 = vadd.f32 %v2760, %v2689
          %v2762 = vrot.slane %v2761, 4
          %v2763 = vadd.f32 %v2761, %v2762
          %v2764 = vrot.slane %v2763, 2
          %v2765 = vadd.f32 %v2763, %v2764
          %v2766 = vrot.slane %v2765, 1
          %v2767 = vadd.f32 %v2765, %v2766
          %v2768 = vadd.f32 %v2443, %v2451
          %v2769 = vadd.f32 %v2768, %v2459
          %v2770 = vadd.f32 %v2769, %v2467
          %v2771 = vadd.f32 %v2770, %v2475
          %v2772 = vadd.f32 %v2771, %v2483
          %v2773 = vadd.f32 %v2772, %v2491
          %v2774 = vadd.f32 %v2773, %v2499
          %v2775 = vadd.f32 %v2774, %v2507
          %v2776 = vadd.f32 %v2775, %v2515
          %v2777 = vadd.f32 %v2776, %v2523
          %v2778 = vadd.f32 %v2777, %v2531
          %v2779 = vadd.f32 %v2778, %v2539
          %v2780 = vadd.f32 %v2779, %v2547
          %v2781 = vadd.f32 %v2780, %v2555
          %v2782 = vadd.f32 %v2781, %v2563
          %v2783 = vadd.f32 %v2782, %v2571
          %v2784 = vadd.f32 %v2783, %v2579
          %v2785 = vadd.f32 %v2784, %v2587
          %v2786 = vadd.f32 %v2785, %v2595
          %v2787 = vadd.f32 %v2786, %v2603
          %v2788 = vadd.f32 %v2787, %v2611
          %v2789 = vadd.f32 %v2788, %v2619
          %v2790 = vadd.f32 %v2789, %v2627
          %v2791 = vadd.f32 %v2790, %v2635
          %v2792 = vadd.f32 %v2791, %v2643
          %v2793 = vadd.f32 %v2792, %v2651
          %v2794 = vadd.f32 %v2793, %v2659
          %v2795 = vadd.f32 %v2794, %v2667
          %v2796 = vadd.f32 %v2795, %v2675
          %v2797 = vadd.f32 %v2796, %v2683
          %v2798 = vadd.f32 %v2797, %v2691
          %v2799 = vrot.slane %v2798, 4
          %v2800 = vadd.f32 %v2798, %v2799
          %v2801 = vrot.slane %v2800, 2
          %v2802 = vadd.f32 %v2800, %v2801
          %v2803 = vrot.slane %v2802, 1
          %v2804 = vadd.f32 %v2802, %v2803
          %v2805 = vadd.f32 %v2445, %v2453
          %v2806 = vadd.f32 %v2805, %v2461
          %v2807 = vadd.f32 %v2806, %v2469
          %v2808 = vadd.f32 %v2807, %v2477
          %v2809 = vadd.f32 %v2808, %v2485
          %v2810 = vadd.f32 %v2809, %v2493
          %v2811 = vadd.f32 %v2810, %v2501
          %v2812 = vadd.f32 %v2811, %v2509
          %v2813 = vadd.f32 %v2812, %v2517
          %v2814 = vadd.f32 %v2813, %v2525
          %v2815 = vadd.f32 %v2814, %v2533
          %v2816 = vadd.f32 %v2815, %v2541
          %v2817 = vadd.f32 %v2816, %v2549
          %v2818 = vadd.f32 %v2817, %v2557
          %v2819 = vadd.f32 %v2818, %v2565
          %v2820 = vadd.f32 %v2819, %v2573
          %v2821 = vadd.f32 %v2820, %v2581
          %v2822 = vadd.f32 %v2821, %v2589
          %v2823 = vadd.f32 %v2822, %v2597
          %v2824 = vadd.f32 %v2823, %v2605
          %v2825 = vadd.f32 %v2824, %v2613
          %v2826 = vadd.f32 %v2825, %v2621
          %v2827 = vadd.f32 %v2826, %v2629
          %v2828 = vadd.f32 %v2827, %v2637
          %v2829 = vadd.f32 %v2828, %v2645
          %v2830 = vadd.f32 %v2829, %v2653
          %v2831 = vadd.f32 %v2830, %v2661
          %v2832 = vadd.f32 %v2831, %v2669
          %v2833 = vadd.f32 %v2832, %v2677
          %v2834 = vadd.f32 %v2833, %v2685
          %v2835 = vadd.f32 %v2834, %v2693
          %v2836 = vrot.slane %v2835, 4
          %v2837 = vadd.f32 %v2835, %v2836
          %v2838 = vrot.slane %v2837, 2
          %v2839 = vadd.f32 %v2837, %v2838
          %v2840 = vrot.slane %v2839, 1
          %v2841 = vadd.f32 %v2839, %v2840
          %v2846 = vrot.slane %v2767, 7
          %v2847 = vrot.slane %v2804, 6
          %v2848 = vrot.slane %v2841, 5
          %vm2849 = vcmask 1040384
          %v2850 = vsel %vm2849, %v2730, %v2846
          %vm2851 = vcmask 1042434
          %v2852 = vsel %vm2851, %v2847, %v2848
          %vm2853 = vcmask 1041408
          %v2854 = vsel %vm2853, %v2850, %v2852
          %v2856 = vlaneseq
          %vm2857 = vcmp.ge.s32.totalorder %v2856, 0
          %vm2858 = vcmp.lt.s32.totalorder %v2856, 512
          %vm2859 = vmand %vm2857, %vm2858
          %2860 = vst.msk [vmem:[%s711] sm:$0xf] %vm2859, %v2854
          %v2865 = vrot.slane %v2235, 7
          %v2866 = vrot.slane %v2272, 6
          %v2867 = vrot.slane %v2309, 5
          %v2868 = vsel %vm2849, %v2198, %v2865
          %v2869 = vsel %vm2851, %v2866, %v2867
          %v2870 = vsel %vm2853, %v2868, %v2869
          %2872 = vst.msk [vmem:[%s702] sm:$0xf] %vm2859, %v2870
        $region48: #{_clip_loss_tiled.1} parent=31 // pred_fallthru
          _
        %p2873 = pneg %p2158
        // Predicated region
        $region49: #{_clip_loss_tiled.1} parent=31 // pred_check
          _
        $region50: #{_clip_loss_tiled.1} parent=31 // pred_check_branch
          %2875 = sbr.rel (%p2158) target = $region52
        $region51: #{_clip_loss_tiled.1} parent=31 // pred_region
          %v2876 = vlaneseq
          %vm2877 = vcmp.ge.s32.totalorder %v2876, 0
          %vm2878 = vcmp.lt.s32.totalorder %v2876, 512
          %vm2879 = vmand %vm2877, %vm2878
          %2880 = vst.msk [vmem:[%s702] sm:$0xf] %vm2879, %v1779
          %v2885 = vrot.slane %v2077, 7
          %v2886 = vrot.slane %v2114, 6
          %v2887 = vrot.slane %v2151, 5
          %vm2888 = vcmask 1040384
          %v2889 = vsel %vm2888, %v2040, %v2885
          %vm2890 = vcmask 1042434
          %v2891 = vsel %vm2890, %v2886, %v2887
          %vm2892 = vcmask 1041408
          %v2893 = vsel %vm2892, %v2889, %v2891
          %2895 = vst.msk [vmem:[%s711] sm:$0xf] %vm2879, %v2893
        $region52: #{_clip_loss_tiled.1} parent=31 // pred_fallthru
          _
        %v2896 = vlog2.pop %v1585
        %v2897 = vmul.f32 %v2896, 0.6931472
        %v2898 = vlog2.pop %v1590
        %v2899 = vmul.f32 %v2898, 0.6931472
        %v2900 = vlog2.pop %v1595
        %v2901 = vmul.f32 %v2900, 0.6931472
        %v2902 = vlog2.pop %v1600
        %v2903 = vmul.f32 %v2902, 0.6931472
        %v2904 = vlog2.pop %v1605
        %v2905 = vmul.f32 %v2904, 0.6931472
        %v2906 = vlog2.pop %v1610
        %v2907 = vmul.f32 %v2906, 0.6931472
        %v2908 = vlog2.pop %v1615
        %v2909 = vmul.f32 %v2908, 0.6931472
        %v2910 = vlog2.pop %v1620
        %v2911 = vmul.f32 %v2910, 0.6931472
        %v2912 = vlog2.pop %v1625
        %v2913 = vmul.f32 %v2912, 0.6931472
        %v2914 = vlog2.pop %v1630
        %v2915 = vmul.f32 %v2914, 0.6931472
        %v2916 = vlog2.pop %v1635
        %v2917 = vmul.f32 %v2916, 0.6931472
        %v2918 = vlog2.pop %v1640
        %v2919 = vmul.f32 %v2918, 0.6931472
        %v2920 = vlog2.pop %v1645
        %v2921 = vmul.f32 %v2920, 0.6931472
        %v2922 = vlog2.pop %v1650
        %v2923 = vmul.f32 %v2922, 0.6931472
        %v2924 = vlog2.pop %v1655
        %v2925 = vmul.f32 %v2924, 0.6931472
        %v2926 = vlog2.pop %v1660
        %v2927 = vmul.f32 %v2926, 0.6931472
        %v2928 = vlog2.pop %v1665
        %v2929 = vmul.f32 %v2928, 0.6931472
        %v2930 = vlog2.pop %v1670
        %v2931 = vmul.f32 %v2930, 0.6931472
        %v2932 = vlog2.pop %v1675
        %v2933 = vmul.f32 %v2932, 0.6931472
        %v2934 = vlog2.pop %v1680
        %v2935 = vmul.f32 %v2934, 0.6931472
        %v2936 = vlog2.pop %v1685
        %v2937 = vmul.f32 %v2936, 0.6931472
        %v2938 = vlog2.pop %v1690
        %v2939 = vmul.f32 %v2938, 0.6931472
        %v2940 = vlog2.pop %v1695
        %v2941 = vmul.f32 %v2940, 0.6931472
        %v2942 = vlog2.pop %v1700
        %v2943 = vmul.f32 %v2942, 0.6931472
        %v2944 = vlog2.pop %v1705
        %v2945 = vmul.f32 %v2944, 0.6931472
        %v2946 = vlog2.pop %v1710
        %v2947 = vmul.f32 %v2946, 0.6931472
        %v2948 = vlog2.pop %v1715
        %v2949 = vmul.f32 %v2948, 0.6931472
        %v2950 = vlog2.pop %v1720
        %v2951 = vmul.f32 %v2950, 0.6931472
        %v2952 = vlog2.pop %v1725
        %v2953 = vmul.f32 %v2952, 0.6931472
        %v2954 = vlog2.pop %v1730
        %v2955 = vmul.f32 %v2954, 0.6931472
        %v2956 = vlog2.pop %v1735
        %v2957 = vmul.f32 %v2956, 0.6931472
        %v2958 = vlog2.pop %v1740
        %v2959 = vmul.f32 %v2958, 0.6931472
        %v2960 = vadd.f32 %v2897, %v1041
        %v2961 = vadd.f32 %v2899, %v1046
        %v2962 = vadd.f32 %v2901, %v1051
        %v2963 = vadd.f32 %v2903, %v1056
        %v2964 = vadd.f32 %v2905, %v1061
        %v2965 = vadd.f32 %v2907, %v1066
        %v2966 = vadd.f32 %v2909, %v1071
        %v2967 = vadd.f32 %v2911, %v1076
        %v2968 = vadd.f32 %v2913, %v1081
        %v2969 = vadd.f32 %v2915, %v1086
        %v2970 = vadd.f32 %v2917, %v1091
        %v2971 = vadd.f32 %v2919, %v1096
        %v2972 = vadd.f32 %v2921, %v1101
        %v2973 = vadd.f32 %v2923, %v1106
        %v2974 = vadd.f32 %v2925, %v1111
        %v2975 = vadd.f32 %v2927, %v1116
        %v2976 = vadd.f32 %v2929, %v1121
        %v2977 = vadd.f32 %v2931, %v1126
        %v2978 = vadd.f32 %v2933, %v1131
        %v2979 = vadd.f32 %v2935, %v1136
        %v2980 = vadd.f32 %v2937, %v1141
        %v2981 = vadd.f32 %v2939, %v1146
        %v2982 = vadd.f32 %v2941, %v1151
        %v2983 = vadd.f32 %v2943, %v1156
        %v2984 = vadd.f32 %v2945, %v1161
        %v2985 = vadd.f32 %v2947, %v1166
        %v2986 = vadd.f32 %v2949, %v1171
        %v2987 = vadd.f32 %v2951, %v1176
        %v2988 = vadd.f32 %v2953, %v1181
        %v2989 = vadd.f32 %v2955, %v1186
        %v2990 = vadd.f32 %v2957, %v1191
        %v2991 = vadd.f32 %v2959, %v1196
        %vm2992 = vcmask 7168
        %v2993 = vsel %vm2992, %v2960, 0.0
        %v2994 = vsel %vm2992, %v2961, 0.0
        %v2995 = vadd.f32 %v2993, %v2994
        %v2996 = vsel %vm2992, %v2962, 0.0
        %v2997 = vadd.f32 %v2995, %v2996
        %v2998 = vsel %vm2992, %v2963, 0.0
        %v2999 = vadd.f32 %v2997, %v2998
        %v3000 = vsel %vm2992, %v2964, 0.0
        %v3001 = vadd.f32 %v2999, %v3000
        %v3002 = vsel %vm2992, %v2965, 0.0
        %v3003 = vadd.f32 %v3001, %v3002
        %v3004 = vsel %vm2992, %v2966, 0.0
        %v3005 = vadd.f32 %v3003, %v3004
        %v3006 = vsel %vm2992, %v2967, 0.0
        %v3007 = vadd.f32 %v3005, %v3006
        %v3008 = vsel %vm2992, %v2968, 0.0
        %v3009 = vadd.f32 %v3007, %v3008
        %v3010 = vsel %vm2992, %v2969, 0.0
        %v3011 = vadd.f32 %v3009, %v3010
        %v3012 = vsel %vm2992, %v2970, 0.0
        %v3013 = vadd.f32 %v3011, %v3012
        %v3014 = vsel %vm2992, %v2971, 0.0
        %v3015 = vadd.f32 %v3013, %v3014
        %v3016 = vsel %vm2992, %v2972, 0.0
        %v3017 = vadd.f32 %v3015, %v3016
        %v3018 = vsel %vm2992, %v2973, 0.0
        %v3019 = vadd.f32 %v3017, %v3018
        %v3020 = vsel %vm2992, %v2974, 0.0
        %v3021 = vadd.f32 %v3019, %v3020
        %v3022 = vsel %vm2992, %v2975, 0.0
        %v3023 = vadd.f32 %v3021, %v3022
        %v3024 = vsel %vm2992, %v2976, 0.0
        %v3025 = vadd.f32 %v3023, %v3024
        %v3026 = vsel %vm2992, %v2977, 0.0
        %v3027 = vadd.f32 %v3025, %v3026
        %v3028 = vsel %vm2992, %v2978, 0.0
        %v3029 = vadd.f32 %v3027, %v3028
        %v3030 = vsel %vm2992, %v2979, 0.0
        %v3031 = vadd.f32 %v3029, %v3030
        %v3032 = vsel %vm2992, %v2980, 0.0
        %v3033 = vadd.f32 %v3031, %v3032
        %v3034 = vsel %vm2992, %v2981, 0.0
        %v3035 = vadd.f32 %v3033, %v3034
        %v3036 = vsel %vm2992, %v2982, 0.0
        %v3037 = vadd.f32 %v3035, %v3036
        %v3038 = vsel %vm2992, %v2983, 0.0
        %v3039 = vadd.f32 %v3037, %v3038
        %v3040 = vsel %vm2992, %v2984, 0.0
        %v3041 = vadd.f32 %v3039, %v3040
        %v3042 = vsel %vm2992, %v2985, 0.0
        %v3043 = vadd.f32 %v3041, %v3042
        %v3044 = vsel %vm2992, %v2986, 0.0
        %v3045 = vadd.f32 %v3043, %v3044
        %v3046 = vsel %vm2992, %v2987, 0.0
        %v3047 = vadd.f32 %v3045, %v3046
        %v3048 = vsel %vm2992, %v2988, 0.0
        %v3049 = vadd.f32 %v3047, %v3048
        %v3050 = vsel %vm2992, %v2989, 0.0
        %v3051 = vadd.f32 %v3049, %v3050
        %v3052 = vsel %vm2992, %v2990, 0.0
        %v3053 = vadd.f32 %v3051, %v3052
        %v3054 = vsel %vm2992, %v2991, 0.0
        %v3055 = vadd.f32 %v3053, %v3054
        %3056 = vadd.xlane.f32.xlu0 %v3055
        %v3057 = vpop.xlane.xlu0 %3056
        %v3058 = vrot.slane %v3057, 4
        %v3059 = vadd.f32 %v3057, %v3058
        %v3060 = vrot.slane %v3059, 2
        %v3061 = vadd.f32 %v3059, %v3060
        %v3062 = vrot.slane %v3061, 1
        %v3063 = vadd.f32 %v3061, %v3062
        %s3064 = vtos %v3063
        %v3065 = vstv %s3064
        %3066 = vst [vmem:[%s715] sm:$0x1] %v3065
        %p3067 = scmp.eq.s32.totalorder %s37, 0
        // Predicated region
        $region53: #{_clip_loss_tiled.1} parent=31 // pred_check
          %p3068 = pneg %p3067
        $region54: #{_clip_loss_tiled.1} parent=31 // pred_check_branch
          %3070 = sbr.rel (%p3068) target = $region56
        $region55: #{_clip_loss_tiled.1} parent=31 // pred_region
          %3071 = vst [vmem:[%s718] sm:$0x1] 0.0
        $region56: #{_clip_loss_tiled.1} parent=31 // pred_fallthru
          _
        %s3072 = sadd.s32 %s1026, 512
        %p3073 = scmp.lt.s32.totalorder %s959, %s3072
        %s3074 = sadd.s32 %s959, 256
        %p3075 = scmp.lt.s32.totalorder %s1026, %s3074
        %p3076 = pnand %p3073, %p3075
        %p3077 = pneg %p3076
        // Predicated region
        $region57: #{_clip_loss_tiled.1} parent=31 // pred_check
          _
        $region58: #{_clip_loss_tiled.1} parent=31 // pred_check_branch
          %3079 = sbr.rel (%p3076) target = $region60
        $region59: #{_clip_loss_tiled.1} parent=31 // pred_region
          %vm3080 = vcmp.eq.s32.totalorder %v994, %v1033
          %vm3081 = vcmp.eq.s32.totalorder %v994, %v1034
          %vm3082 = vcmp.eq.s32.totalorder %v994, %v1035
          %vm3083 = vcmp.eq.s32.totalorder %v994, %v1036
          %vm3084 = vcmp.eq.s32.totalorder %v995, %v1033
          %vm3085 = vcmp.eq.s32.totalorder %v995, %v1034
          %vm3086 = vcmp.eq.s32.totalorder %v995, %v1035
          %vm3087 = vcmp.eq.s32.totalorder %v995, %v1036
          %vm3088 = vcmp.eq.s32.totalorder %v996, %v1033
          %vm3089 = vcmp.eq.s32.totalorder %v996, %v1034
          %vm3090 = vcmp.eq.s32.totalorder %v996, %v1035
          %vm3091 = vcmp.eq.s32.totalorder %v996, %v1036
          %vm3092 = vcmp.eq.s32.totalorder %v997, %v1033
          %vm3093 = vcmp.eq.s32.totalorder %v997, %v1034
          %vm3094 = vcmp.eq.s32.totalorder %v997, %v1035
          %vm3095 = vcmp.eq.s32.totalorder %v997, %v1036
          %vm3096 = vcmp.eq.s32.totalorder %v998, %v1033
          %vm3097 = vcmp.eq.s32.totalorder %v998, %v1034
          %vm3098 = vcmp.eq.s32.totalorder %v998, %v1035
          %vm3099 = vcmp.eq.s32.totalorder %v998, %v1036
          %vm3100 = vcmp.eq.s32.totalorder %v999, %v1033
          %vm3101 = vcmp.eq.s32.totalorder %v999, %v1034
          %vm3102 = vcmp.eq.s32.totalorder %v999, %v1035
          %vm3103 = vcmp.eq.s32.totalorder %v999, %v1036
          %vm3104 = vcmp.eq.s32.totalorder %v1000, %v1033
          %vm3105 = vcmp.eq.s32.totalorder %v1000, %v1034
          %vm3106 = vcmp.eq.s32.totalorder %v1000, %v1035
          %vm3107 = vcmp.eq.s32.totalorder %v1000, %v1036
          %vm3108 = vcmp.eq.s32.totalorder %v1001, %v1033
          %vm3109 = vcmp.eq.s32.totalorder %v1001, %v1034
          %vm3110 = vcmp.eq.s32.totalorder %v1001, %v1035
          %vm3111 = vcmp.eq.s32.totalorder %v1001, %v1036
          %vm3112 = vcmp.eq.s32.totalorder %v1002, %v1033
          %vm3113 = vcmp.eq.s32.totalorder %v1002, %v1034
          %vm3114 = vcmp.eq.s32.totalorder %v1002, %v1035
          %vm3115 = vcmp.eq.s32.totalorder %v1002, %v1036
          %vm3116 = vcmp.eq.s32.totalorder %v1003, %v1033
          %vm3117 = vcmp.eq.s32.totalorder %v1003, %v1034
          %vm3118 = vcmp.eq.s32.totalorder %v1003, %v1035
          %vm3119 = vcmp.eq.s32.totalorder %v1003, %v1036
          %vm3120 = vcmp.eq.s32.totalorder %v1004, %v1033
          %vm3121 = vcmp.eq.s32.totalorder %v1004, %v1034
          %vm3122 = vcmp.eq.s32.totalorder %v1004, %v1035
          %vm3123 = vcmp.eq.s32.totalorder %v1004, %v1036
          %vm3124 = vcmp.eq.s32.totalorder %v1005, %v1033
          %vm3125 = vcmp.eq.s32.totalorder %v1005, %v1034
          %vm3126 = vcmp.eq.s32.totalorder %v1005, %v1035
          %vm3127 = vcmp.eq.s32.totalorder %v1005, %v1036
          %vm3128 = vcmp.eq.s32.totalorder %v1006, %v1033
          %vm3129 = vcmp.eq.s32.totalorder %v1006, %v1034
          %vm3130 = vcmp.eq.s32.totalorder %v1006, %v1035
          %vm3131 = vcmp.eq.s32.totalorder %v1006, %v1036
          %vm3132 = vcmp.eq.s32.totalorder %v1007, %v1033
          %vm3133 = vcmp.eq.s32.totalorder %v1007, %v1034
          %vm3134 = vcmp.eq.s32.totalorder %v1007, %v1035
          %vm3135 = vcmp.eq.s32.totalorder %v1007, %v1036
          %vm3136 = vcmp.eq.s32.totalorder %v1008, %v1033
          %vm3137 = vcmp.eq.s32.totalorder %v1008, %v1034
          %vm3138 = vcmp.eq.s32.totalorder %v1008, %v1035
          %vm3139 = vcmp.eq.s32.totalorder %v1008, %v1036
          %vm3140 = vcmp.eq.s32.totalorder %v1009, %v1033
          %vm3141 = vcmp.eq.s32.totalorder %v1009, %v1034
          %vm3142 = vcmp.eq.s32.totalorder %v1009, %v1035
          %vm3143 = vcmp.eq.s32.totalorder %v1009, %v1036
          %vm3144 = vcmp.eq.s32.totalorder %v1010, %v1033
          %vm3145 = vcmp.eq.s32.totalorder %v1010, %v1034
          %vm3146 = vcmp.eq.s32.totalorder %v1010, %v1035
          %vm3147 = vcmp.eq.s32.totalorder %v1010, %v1036
          %vm3148 = vcmp.eq.s32.totalorder %v1011, %v1033
          %vm3149 = vcmp.eq.s32.totalorder %v1011, %v1034
          %vm3150 = vcmp.eq.s32.totalorder %v1011, %v1035
          %vm3151 = vcmp.eq.s32.totalorder %v1011, %v1036
          %vm3152 = vcmp.eq.s32.totalorder %v1012, %v1033
          %vm3153 = vcmp.eq.s32.totalorder %v1012, %v1034
          %vm3154 = vcmp.eq.s32.totalorder %v1012, %v1035
          %vm3155 = vcmp.eq.s32.totalorder %v1012, %v1036
          %vm3156 = vcmp.eq.s32.totalorder %v1013, %v1033
          %vm3157 = vcmp.eq.s32.totalorder %v1013, %v1034
          %vm3158 = vcmp.eq.s32.totalorder %v1013, %v1035
          %vm3159 = vcmp.eq.s32.totalorder %v1013, %v1036
          %vm3160 = vcmp.eq.s32.totalorder %v1014, %v1033
          %vm3161 = vcmp.eq.s32.totalorder %v1014, %v1034
          %vm3162 = vcmp.eq.s32.totalorder %v1014, %v1035
          %vm3163 = vcmp.eq.s32.totalorder %v1014, %v1036
          %vm3164 = vcmp.eq.s32.totalorder %v1015, %v1033
          %vm3165 = vcmp.eq.s32.totalorder %v1015, %v1034
          %vm3166 = vcmp.eq.s32.totalorder %v1015, %v1035
          %vm3167 = vcmp.eq.s32.totalorder %v1015, %v1036
          %vm3168 = vcmp.eq.s32.totalorder %v1016, %v1033
          %vm3169 = vcmp.eq.s32.totalorder %v1016, %v1034
          %vm3170 = vcmp.eq.s32.totalorder %v1016, %v1035
          %vm3171 = vcmp.eq.s32.totalorder %v1016, %v1036
          %vm3172 = vcmp.eq.s32.totalorder %v1017, %v1033
          %vm3173 = vcmp.eq.s32.totalorder %v1017, %v1034
          %vm3174 = vcmp.eq.s32.totalorder %v1017, %v1035
          %vm3175 = vcmp.eq.s32.totalorder %v1017, %v1036
          %vm3176 = vcmp.eq.s32.totalorder %v1018, %v1033
          %vm3177 = vcmp.eq.s32.totalorder %v1018, %v1034
          %vm3178 = vcmp.eq.s32.totalorder %v1018, %v1035
          %vm3179 = vcmp.eq.s32.totalorder %v1018, %v1036
          %vm3180 = vcmp.eq.s32.totalorder %v1019, %v1033
          %vm3181 = vcmp.eq.s32.totalorder %v1019, %v1034
          %vm3182 = vcmp.eq.s32.totalorder %v1019, %v1035
          %vm3183 = vcmp.eq.s32.totalorder %v1019, %v1036
          %vm3184 = vcmp.eq.s32.totalorder %v1020, %v1033
          %vm3185 = vcmp.eq.s32.totalorder %v1020, %v1034
          %vm3186 = vcmp.eq.s32.totalorder %v1020, %v1035
          %vm3187 = vcmp.eq.s32.totalorder %v1020, %v1036
          %vm3188 = vcmp.eq.s32.totalorder %v1021, %v1033
          %vm3189 = vcmp.eq.s32.totalorder %v1021, %v1034
          %vm3190 = vcmp.eq.s32.totalorder %v1021, %v1035
          %vm3191 = vcmp.eq.s32.totalorder %v1021, %v1036
          %vm3192 = vcmp.eq.s32.totalorder %v1022, %v1033
          %vm3193 = vcmp.eq.s32.totalorder %v1022, %v1034
          %vm3194 = vcmp.eq.s32.totalorder %v1022, %v1035
          %vm3195 = vcmp.eq.s32.totalorder %v1022, %v1036
          %vm3196 = vcmp.eq.s32.totalorder %v1023, %v1033
          %vm3197 = vcmp.eq.s32.totalorder %v1023, %v1034
          %vm3198 = vcmp.eq.s32.totalorder %v1023, %v1035
          %vm3199 = vcmp.eq.s32.totalorder %v1023, %v1036
          %vm3200 = vcmp.eq.s32.totalorder %v1024, %v1033
          %vm3201 = vcmp.eq.s32.totalorder %v1024, %v1034
          %vm3202 = vcmp.eq.s32.totalorder %v1024, %v1035
          %vm3203 = vcmp.eq.s32.totalorder %v1024, %v1036
          %vm3204 = vcmp.eq.s32.totalorder %v1025, %v1033
          %vm3205 = vcmp.eq.s32.totalorder %v1025, %v1034
          %vm3206 = vcmp.eq.s32.totalorder %v1025, %v1035
          %vm3207 = vcmp.eq.s32.totalorder %v1025, %v1036
          %v3208 = vsel %vm3080, %v831, 0.0
          %v3209 = vsel %vm3081, %v832, 0.0
          %v3210 = vsel %vm3082, %v833, 0.0
          %v3211 = vsel %vm3083, %v834, 0.0
          %v3212 = vsel %vm3084, %v835, 0.0
          %v3213 = vsel %vm3085, %v836, 0.0
          %v3214 = vsel %vm3086, %v837, 0.0
          %v3215 = vsel %vm3087, %v838, 0.0
          %v3216 = vsel %vm3088, %v839, 0.0
          %v3217 = vsel %vm3089, %v840, 0.0
          %v3218 = vsel %vm3090, %v841, 0.0
          %v3219 = vsel %vm3091, %v842, 0.0
          %v3220 = vsel %vm3092, %v843, 0.0
          %v3221 = vsel %vm3093, %v844, 0.0
          %v3222 = vsel %vm3094, %v845, 0.0
          %v3223 = vsel %vm3095, %v846, 0.0
          %v3224 = vsel %vm3096, %v847, 0.0
          %v3225 = vsel %vm3097, %v848, 0.0
          %v3226 = vsel %vm3098, %v849, 0.0
          %v3227 = vsel %vm3099, %v850, 0.0
          %v3228 = vsel %vm3100, %v851, 0.0
          %v3229 = vsel %vm3101, %v852, 0.0
          %v3230 = vsel %vm3102, %v853, 0.0
          %v3231 = vsel %vm3103, %v854, 0.0
          %v3232 = vsel %vm3104, %v855, 0.0
          %v3233 = vsel %vm3105, %v856, 0.0
          %v3234 = vsel %vm3106, %v857, 0.0
          %v3235 = vsel %vm3107, %v858, 0.0
          %v3236 = vsel %vm3108, %v859, 0.0
          %v3237 = vsel %vm3109, %v860, 0.0
          %v3238 = vsel %vm3110, %v861, 0.0
          %v3239 = vsel %vm3111, %v862, 0.0
          %v3240 = vsel %vm3112, %v863, 0.0
          %v3241 = vsel %vm3113, %v864, 0.0
          %v3242 = vsel %vm3114, %v865, 0.0
          %v3243 = vsel %vm3115, %v866, 0.0
          %v3244 = vsel %vm3116, %v867, 0.0
          %v3245 = vsel %vm3117, %v868, 0.0
          %v3246 = vsel %vm3118, %v869, 0.0
          %v3247 = vsel %vm3119, %v870, 0.0
          %v3248 = vsel %vm3120, %v871, 0.0
          %v3249 = vsel %vm3121, %v872, 0.0
          %v3250 = vsel %vm3122, %v873, 0.0
          %v3251 = vsel %vm3123, %v874, 0.0
          %v3252 = vsel %vm3124, %v875, 0.0
          %v3253 = vsel %vm3125, %v876, 0.0
          %v3254 = vsel %vm3126, %v877, 0.0
          %v3255 = vsel %vm3127, %v878, 0.0
          %v3256 = vsel %vm3128, %v879, 0.0
          %v3257 = vsel %vm3129, %v880, 0.0
          %v3258 = vsel %vm3130, %v881, 0.0
          %v3259 = vsel %vm3131, %v882, 0.0
          %v3260 = vsel %vm3132, %v883, 0.0
          %v3261 = vsel %vm3133, %v884, 0.0
          %v3262 = vsel %vm3134, %v885, 0.0
          %v3263 = vsel %vm3135, %v886, 0.0
          %v3264 = vsel %vm3136, %v887, 0.0
          %v3265 = vsel %vm3137, %v888, 0.0
          %v3266 = vsel %vm3138, %v889, 0.0
          %v3267 = vsel %vm3139, %v890, 0.0
          %v3268 = vsel %vm3140, %v891, 0.0
          %v3269 = vsel %vm3141, %v892, 0.0
          %v3270 = vsel %vm3142, %v893, 0.0
          %v3271 = vsel %vm3143, %v894, 0.0
          %v3272 = vsel %vm3144, %v895, 0.0
          %v3273 = vsel %vm3145, %v896, 0.0
          %v3274 = vsel %vm3146, %v897, 0.0
          %v3275 = vsel %vm3147, %v898, 0.0
          %v3276 = vsel %vm3148, %v899, 0.0
          %v3277 = vsel %vm3149, %v900, 0.0
          %v3278 = vsel %vm3150, %v901, 0.0
          %v3279 = vsel %vm3151, %v902, 0.0
          %v3280 = vsel %vm3152, %v903, 0.0
          %v3281 = vsel %vm3153, %v904, 0.0
          %v3282 = vsel %vm3154, %v905, 0.0
          %v3283 = vsel %vm3155, %v906, 0.0
          %v3284 = vsel %vm3156, %v907, 0.0
          %v3285 = vsel %vm3157, %v908, 0.0
          %v3286 = vsel %vm3158, %v909, 0.0
          %v3287 = vsel %vm3159, %v910, 0.0
          %v3288 = vsel %vm3160, %v911, 0.0
          %v3289 = vsel %vm3161, %v912, 0.0
          %v3290 = vsel %vm3162, %v913, 0.0
          %v3291 = vsel %vm3163, %v914, 0.0
          %v3292 = vsel %vm3164, %v915, 0.0
          %v3293 = vsel %vm3165, %v916, 0.0
          %v3294 = vsel %vm3166, %v917, 0.0
          %v3295 = vsel %vm3167, %v918, 0.0
          %v3296 = vsel %vm3168, %v919, 0.0
          %v3297 = vsel %vm3169, %v920, 0.0
          %v3298 = vsel %vm3170, %v921, 0.0
          %v3299 = vsel %vm3171, %v922, 0.0
          %v3300 = vsel %vm3172, %v923, 0.0
          %v3301 = vsel %vm3173, %v924, 0.0
          %v3302 = vsel %vm3174, %v925, 0.0
          %v3303 = vsel %vm3175, %v926, 0.0
          %v3304 = vsel %vm3176, %v927, 0.0
          %v3305 = vsel %vm3177, %v928, 0.0
          %v3306 = vsel %vm3178, %v929, 0.0
          %v3307 = vsel %vm3179, %v930, 0.0
          %v3308 = vsel %vm3180, %v931, 0.0
          %v3309 = vsel %vm3181, %v932, 0.0
          %v3310 = vsel %vm3182, %v933, 0.0
          %v3311 = vsel %vm3183, %v934, 0.0
          %v3312 = vsel %vm3184, %v935, 0.0
          %v3313 = vsel %vm3185, %v936, 0.0
          %v3314 = vsel %vm3186, %v937, 0.0
          %v3315 = vsel %vm3187, %v938, 0.0
          %v3316 = vsel %vm3188, %v939, 0.0
          %v3317 = vsel %vm3189, %v940, 0.0
          %v3318 = vsel %vm3190, %v941, 0.0
          %v3319 = vsel %vm3191, %v942, 0.0
          %v3320 = vsel %vm3192, %v943, 0.0
          %v3321 = vsel %vm3193, %v944, 0.0
          %v3322 = vsel %vm3194, %v945, 0.0
          %v3323 = vsel %vm3195, %v946, 0.0
          %v3324 = vsel %vm3196, %v947, 0.0
          %v3325 = vsel %vm3197, %v948, 0.0
          %v3326 = vsel %vm3198, %v949, 0.0
          %v3327 = vsel %vm3199, %v950, 0.0
          %v3328 = vsel %vm3200, %v951, 0.0
          %v3329 = vsel %vm3201, %v952, 0.0
          %v3330 = vsel %vm3202, %v953, 0.0
          %v3331 = vsel %vm3203, %v954, 0.0
          %v3332 = vsel %vm3204, %v955, 0.0
          %v3333 = vsel %vm3205, %v956, 0.0
          %v3334 = vsel %vm3206, %v957, 0.0
          %v3335 = vsel %vm3207, %v958, 0.0
          %v3336 = vadd.f32 %v3208, %v3209
          %v3337 = vadd.f32 %v3336, %v3210
          %v3338 = vadd.f32 %v3337, %v3211
          %v3339 = vadd.f32 %v3338, %v3212
          %v3340 = vadd.f32 %v3339, %v3213
          %v3341 = vadd.f32 %v3340, %v3214
          %v3342 = vadd.f32 %v3341, %v3215
          %v3343 = vadd.f32 %v3342, %v3216
          %v3344 = vadd.f32 %v3343, %v3217
          %v3345 = vadd.f32 %v3344, %v3218
          %v3346 = vadd.f32 %v3345, %v3219
          %v3347 = vadd.f32 %v3346, %v3220
          %v3348 = vadd.f32 %v3347, %v3221
          %v3349 = vadd.f32 %v3348, %v3222
          %v3350 = vadd.f32 %v3349, %v3223
          %v3351 = vadd.f32 %v3350, %v3224
          %v3352 = vadd.f32 %v3351, %v3225
          %v3353 = vadd.f32 %v3352, %v3226
          %v3354 = vadd.f32 %v3353, %v3227
          %v3355 = vadd.f32 %v3354, %v3228
          %v3356 = vadd.f32 %v3355, %v3229
          %v3357 = vadd.f32 %v3356, %v3230
          %v3358 = vadd.f32 %v3357, %v3231
          %v3359 = vadd.f32 %v3358, %v3232
          %v3360 = vadd.f32 %v3359, %v3233
          %v3361 = vadd.f32 %v3360, %v3234
          %v3362 = vadd.f32 %v3361, %v3235
          %v3363 = vadd.f32 %v3362, %v3236
          %v3364 = vadd.f32 %v3363, %v3237
          %v3365 = vadd.f32 %v3364, %v3238
          %v3366 = vadd.f32 %v3365, %v3239
          %v3367 = vadd.f32 %v3366, %v3240
          %v3368 = vadd.f32 %v3367, %v3241
          %v3369 = vadd.f32 %v3368, %v3242
          %v3370 = vadd.f32 %v3369, %v3243
          %v3371 = vadd.f32 %v3370, %v3244
          %v3372 = vadd.f32 %v3371, %v3245
          %v3373 = vadd.f32 %v3372, %v3246
          %v3374 = vadd.f32 %v3373, %v3247
          %v3375 = vadd.f32 %v3374, %v3248
          %v3376 = vadd.f32 %v3375, %v3249
          %v3377 = vadd.f32 %v3376, %v3250
          %v3378 = vadd.f32 %v3377, %v3251
          %v3379 = vadd.f32 %v3378, %v3252
          %v3380 = vadd.f32 %v3379, %v3253
          %v3381 = vadd.f32 %v3380, %v3254
          %v3382 = vadd.f32 %v3381, %v3255
          %v3383 = vadd.f32 %v3382, %v3256
          %v3384 = vadd.f32 %v3383, %v3257
          %v3385 = vadd.f32 %v3384, %v3258
          %v3386 = vadd.f32 %v3385, %v3259
          %v3387 = vadd.f32 %v3386, %v3260
          %v3388 = vadd.f32 %v3387, %v3261
          %v3389 = vadd.f32 %v3388, %v3262
          %v3390 = vadd.f32 %v3389, %v3263
          %v3391 = vadd.f32 %v3390, %v3264
          %v3392 = vadd.f32 %v3391, %v3265
          %v3393 = vadd.f32 %v3392, %v3266
          %v3394 = vadd.f32 %v3393, %v3267
          %v3395 = vadd.f32 %v3394, %v3268
          %v3396 = vadd.f32 %v3395, %v3269
          %v3397 = vadd.f32 %v3396, %v3270
          %v3398 = vadd.f32 %v3397, %v3271
          %v3399 = vadd.f32 %v3398, %v3272
          %v3400 = vadd.f32 %v3399, %v3273
          %v3401 = vadd.f32 %v3400, %v3274
          %v3402 = vadd.f32 %v3401, %v3275
          %v3403 = vadd.f32 %v3402, %v3276
          %v3404 = vadd.f32 %v3403, %v3277
          %v3405 = vadd.f32 %v3404, %v3278
          %v3406 = vadd.f32 %v3405, %v3279
          %v3407 = vadd.f32 %v3406, %v3280
          %v3408 = vadd.f32 %v3407, %v3281
          %v3409 = vadd.f32 %v3408, %v3282
          %v3410 = vadd.f32 %v3409, %v3283
          %v3411 = vadd.f32 %v3410, %v3284
          %v3412 = vadd.f32 %v3411, %v3285
          %v3413 = vadd.f32 %v3412, %v3286
          %v3414 = vadd.f32 %v3413, %v3287
          %v3415 = vadd.f32 %v3414, %v3288
          %v3416 = vadd.f32 %v3415, %v3289
          %v3417 = vadd.f32 %v3416, %v3290
          %v3418 = vadd.f32 %v3417, %v3291
          %v3419 = vadd.f32 %v3418, %v3292
          %v3420 = vadd.f32 %v3419, %v3293
          %v3421 = vadd.f32 %v3420, %v3294
          %v3422 = vadd.f32 %v3421, %v3295
          %v3423 = vadd.f32 %v3422, %v3296
          %v3424 = vadd.f32 %v3423, %v3297
          %v3425 = vadd.f32 %v3424, %v3298
          %v3426 = vadd.f32 %v3425, %v3299
          %v3427 = vadd.f32 %v3426, %v3300
          %v3428 = vadd.f32 %v3427, %v3301
          %v3429 = vadd.f32 %v3428, %v3302
          %v3430 = vadd.f32 %v3429, %v3303
          %v3431 = vadd.f32 %v3430, %v3304
          %v3432 = vadd.f32 %v3431, %v3305
          %v3433 = vadd.f32 %v3432, %v3306
          %v3434 = vadd.f32 %v3433, %v3307
          %v3435 = vadd.f32 %v3434, %v3308
          %v3436 = vadd.f32 %v3435, %v3309
          %v3437 = vadd.f32 %v3436, %v3310
          %v3438 = vadd.f32 %v3437, %v3311
          %v3439 = vadd.f32 %v3438, %v3312
          %v3440 = vadd.f32 %v3439, %v3313
          %v3441 = vadd.f32 %v3440, %v3314
          %v3442 = vadd.f32 %v3441, %v3315
          %v3443 = vadd.f32 %v3442, %v3316
          %v3444 = vadd.f32 %v3443, %v3317
          %v3445 = vadd.f32 %v3444, %v3318
          %v3446 = vadd.f32 %v3445, %v3319
          %v3447 = vadd.f32 %v3446, %v3320
          %v3448 = vadd.f32 %v3447, %v3321
          %v3449 = vadd.f32 %v3448, %v3322
          %v3450 = vadd.f32 %v3449, %v3323
          %v3451 = vadd.f32 %v3450, %v3324
          %v3452 = vadd.f32 %v3451, %v3325
          %v3453 = vadd.f32 %v3452, %v3326
          %v3454 = vadd.f32 %v3453, %v3327
          %v3455 = vadd.f32 %v3454, %v3328
          %v3456 = vadd.f32 %v3455, %v3329
          %v3457 = vadd.f32 %v3456, %v3330
          %v3458 = vadd.f32 %v3457, %v3331
          %v3459 = vadd.f32 %v3458, %v3332
          %v3460 = vadd.f32 %v3459, %v3333
          %v3461 = vadd.f32 %v3460, %v3334
          %v3462 = vadd.f32 %v3461, %v3335
          %3463 = vadd.xlane.f32.xlu0 %v3462
          %v3464 = vpop.xlane.xlu0 %3463
          %v3465 = vrot.slane %v3464, 4
          %v3466 = vadd.f32 %v3464, %v3465
          %v3467 = vrot.slane %v3466, 2
          %v3468 = vadd.f32 %v3466, %v3467
          %v3469 = vrot.slane %v3468, 1
          %v3470 = vadd.f32 %v3468, %v3469
          %s3471 = vtos %v3470
          %v3472 = vld [vmem:[%s718] sm:$0x1]
          %v3473 = vstv %s3471
          %v3474 = vadd.f32 %v3472, %v3473
          %3475 = vst [vmem:[%s718] sm:$0x1] %v3474
        $region60: #{_clip_loss_tiled.1} parent=31 // pred_fallthru
          _
        %v3476 = vld [vmem:[%s562] sm:$0xff]
        %v3477 = vld [vmem:[%s562 + $0x8] sm:$0xff]
        %v3478 = vld [vmem:[%s562 + $0x10] sm:$0xff]
        %v3479 = vld [vmem:[%s562 + $0x18] sm:$0xff]
        %v3480 = vld [vmem:[%s562 + $0x20] sm:$0xff]
        %v3481 = vld [vmem:[%s562 + $0x28] sm:$0xff]
        %v3482 = vld [vmem:[%s562 + $0x30] sm:$0xff]
        %v3483 = vld [vmem:[%s562 + $0x38] sm:$0xff]
        %v3484 = vld [vmem:[%s562 + $0x40] sm:$0xff]
        %v3485 = vld [vmem:[%s562 + $0x48] sm:$0xff]
        %v3486 = vld [vmem:[%s562 + $0x50] sm:$0xff]
        %v3487 = vld [vmem:[%s562 + $0x58] sm:$0xff]
        %v3488 = vld [vmem:[%s562 + $0x60] sm:$0xff]
        %v3489 = vld [vmem:[%s562 + $0x68] sm:$0xff]
        %v3490 = vld [vmem:[%s562 + $0x70] sm:$0xff]
        %v3491 = vld [vmem:[%s562 + $0x78] sm:$0xff]
        %v3492 = vld [vmem:[%s562 + $0x80] sm:$0xff]
        %v3493 = vld [vmem:[%s562 + $0x88] sm:$0xff]
        %v3494 = vld [vmem:[%s562 + $0x90] sm:$0xff]
        %v3495 = vld [vmem:[%s562 + $0x98] sm:$0xff]
        %v3496 = vld [vmem:[%s562 + $0xa0] sm:$0xff]
        %v3497 = vld [vmem:[%s562 + $0xa8] sm:$0xff]
        %v3498 = vld [vmem:[%s562 + $0xb0] sm:$0xff]
        %v3499 = vld [vmem:[%s562 + $0xb8] sm:$0xff]
        %v3500 = vld [vmem:[%s562 + $0xc0] sm:$0xff]
        %v3501 = vld [vmem:[%s562 + $0xc8] sm:$0xff]
        %v3502 = vld [vmem:[%s562 + $0xd0] sm:$0xff]
        %v3503 = vld [vmem:[%s562 + $0xd8] sm:$0xff]
        %v3504 = vld [vmem:[%s562 + $0xe0] sm:$0xff]
        %v3505 = vld [vmem:[%s562 + $0xe8] sm:$0xff]
        %v3506 = vld [vmem:[%s562 + $0xf0] sm:$0xff]
        %v3507 = vld [vmem:[%s562 + $0xf8] sm:$0xff]
        %v3508 = vld [vmem:[%s562 + $0x100] sm:$0xff]
        %v3509 = vld [vmem:[%s562 + $0x108] sm:$0xff]
        %v3510 = vld [vmem:[%s562 + $0x110] sm:$0xff]
        %v3511 = vld [vmem:[%s562 + $0x118] sm:$0xff]
        %v3512 = vld [vmem:[%s562 + $0x120] sm:$0xff]
        %v3513 = vld [vmem:[%s562 + $0x128] sm:$0xff]
        %v3514 = vld [vmem:[%s562 + $0x130] sm:$0xff]
        %v3515 = vld [vmem:[%s562 + $0x138] sm:$0xff]
        %v3516 = vld [vmem:[%s562 + $0x140] sm:$0xff]
        %v3517 = vld [vmem:[%s562 + $0x148] sm:$0xff]
        %v3518 = vld [vmem:[%s562 + $0x150] sm:$0xff]
        %v3519 = vld [vmem:[%s562 + $0x158] sm:$0xff]
        %v3520 = vld [vmem:[%s562 + $0x160] sm:$0xff]
        %v3521 = vld [vmem:[%s562 + $0x168] sm:$0xff]
        %v3522 = vld [vmem:[%s562 + $0x170] sm:$0xff]
        %v3523 = vld [vmem:[%s562 + $0x178] sm:$0xff]
        %v3524 = vld [vmem:[%s562 + $0x180] sm:$0xff]
        %v3525 = vld [vmem:[%s562 + $0x188] sm:$0xff]
        %v3526 = vld [vmem:[%s562 + $0x190] sm:$0xff]
        %v3527 = vld [vmem:[%s562 + $0x198] sm:$0xff]
        %v3528 = vld [vmem:[%s562 + $0x1a0] sm:$0xff]
        %v3529 = vld [vmem:[%s562 + $0x1a8] sm:$0xff]
        %v3530 = vld [vmem:[%s562 + $0x1b0] sm:$0xff]
        %v3531 = vld [vmem:[%s562 + $0x1b8] sm:$0xff]
        %v3532 = vld [vmem:[%s562 + $0x1c0] sm:$0xff]
        %v3533 = vld [vmem:[%s562 + $0x1c8] sm:$0xff]
        %v3534 = vld [vmem:[%s562 + $0x1d0] sm:$0xff]
        %v3535 = vld [vmem:[%s562 + $0x1d8] sm:$0xff]
        %v3536 = vld [vmem:[%s562 + $0x1e0] sm:$0xff]
        %v3537 = vld [vmem:[%s562 + $0x1e8] sm:$0xff]
        %v3538 = vld [vmem:[%s562 + $0x1f0] sm:$0xff]
        %v3539 = vld [vmem:[%s562 + $0x1f8] sm:$0xff]
        %v3540 = vunpack.c.l.bf16 %v3476
        %v3541 = vunpack.c.h.bf16 %v3476
        %v3542 = vunpack.c.l.bf16 %v3477
        %v3543 = vunpack.c.h.bf16 %v3477
        %v3544 = vunpack.c.l.bf16 %v3478
        %v3545 = vunpack.c.h.bf16 %v3478
        %v3546 = vunpack.c.l.bf16 %v3479
        %v3547 = vunpack.c.h.bf16 %v3479
        %v3548 = vunpack.c.l.bf16 %v3480
        %v3549 = vunpack.c.h.bf16 %v3480
        %v3550 = vunpack.c.l.bf16 %v3481
        %v3551 = vunpack.c.h.bf16 %v3481
        %v3552 = vunpack.c.l.bf16 %v3482
        %v3553 = vunpack.c.h.bf16 %v3482
        %v3554 = vunpack.c.l.bf16 %v3483
        %v3555 = vunpack.c.h.bf16 %v3483
        %v3556 = vunpack.c.l.bf16 %v3484
        %v3557 = vunpack.c.h.bf16 %v3484
        %v3558 = vunpack.c.l.bf16 %v3485
        %v3559 = vunpack.c.h.bf16 %v3485
        %v3560 = vunpack.c.l.bf16 %v3486
        %v3561 = vunpack.c.h.bf16 %v3486
        %v3562 = vunpack.c.l.bf16 %v3487
        %v3563 = vunpack.c.h.bf16 %v3487
        %v3564 = vunpack.c.l.bf16 %v3488
        %v3565 = vunpack.c.h.bf16 %v3488
        %v3566 = vunpack.c.l.bf16 %v3489
        %v3567 = vunpack.c.h.bf16 %v3489
        %v3568 = vunpack.c.l.bf16 %v3490
        %v3569 = vunpack.c.h.bf16 %v3490
        %v3570 = vunpack.c.l.bf16 %v3491
        %v3571 = vunpack.c.h.bf16 %v3491
        %v3572 = vunpack.c.l.bf16 %v3492
        %v3573 = vunpack.c.h.bf16 %v3492
        %v3574 = vunpack.c.l.bf16 %v3493
        %v3575 = vunpack.c.h.bf16 %v3493
        %v3576 = vunpack.c.l.bf16 %v3494
        %v3577 = vunpack.c.h.bf16 %v3494
        %v3578 = vunpack.c.l.bf16 %v3495
        %v3579 = vunpack.c.h.bf16 %v3495
        %v3580 = vunpack.c.l.bf16 %v3496
        %v3581 = vunpack.c.h.bf16 %v3496
        %v3582 = vunpack.c.l.bf16 %v3497
        %v3583 = vunpack.c.h.bf16 %v3497
        %v3584 = vunpack.c.l.bf16 %v3498
        %v3585 = vunpack.c.h.bf16 %v3498
        %v3586 = vunpack.c.l.bf16 %v3499
        %v3587 = vunpack.c.h.bf16 %v3499
        %v3588 = vunpack.c.l.bf16 %v3500
        %v3589 = vunpack.c.h.bf16 %v3500
        %v3590 = vunpack.c.l.bf16 %v3501
        %v3591 = vunpack.c.h.bf16 %v3501
        %v3592 = vunpack.c.l.bf16 %v3502
        %v3593 = vunpack.c.h.bf16 %v3502
        %v3594 = vunpack.c.l.bf16 %v3503
        %v3595 = vunpack.c.h.bf16 %v3503
        %v3596 = vunpack.c.l.bf16 %v3504
        %v3597 = vunpack.c.h.bf16 %v3504
        %v3598 = vunpack.c.l.bf16 %v3505
        %v3599 = vunpack.c.h.bf16 %v3505
        %v3600 = vunpack.c.l.bf16 %v3506
        %v3601 = vunpack.c.h.bf16 %v3506
        %v3602 = vunpack.c.l.bf16 %v3507
        %v3603 = vunpack.c.h.bf16 %v3507
        %v3604 = vunpack.c.l.bf16 %v3508
        %v3605 = vunpack.c.h.bf16 %v3508
        %v3606 = vunpack.c.l.bf16 %v3509
        %v3607 = vunpack.c.h.bf16 %v3509
        %v3608 = vunpack.c.l.bf16 %v3510
        %v3609 = vunpack.c.h.bf16 %v3510
        %v3610 = vunpack.c.l.bf16 %v3511
        %v3611 = vunpack.c.h.bf16 %v3511
        %v3612 = vunpack.c.l.bf16 %v3512
        %v3613 = vunpack.c.h.bf16 %v3512
        %v3614 = vunpack.c.l.bf16 %v3513
        %v3615 = vunpack.c.h.bf16 %v3513
        %v3616 = vunpack.c.l.bf16 %v3514
        %v3617 = vunpack.c.h.bf16 %v3514
        %v3618 = vunpack.c.l.bf16 %v3515
        %v3619 = vunpack.c.h.bf16 %v3515
        %v3620 = vunpack.c.l.bf16 %v3516
        %v3621 = vunpack.c.h.bf16 %v3516
        %v3622 = vunpack.c.l.bf16 %v3517
        %v3623 = vunpack.c.h.bf16 %v3517
        %v3624 = vunpack.c.l.bf16 %v3518
        %v3625 = vunpack.c.h.bf16 %v3518
        %v3626 = vunpack.c.l.bf16 %v3519
        %v3627 = vunpack.c.h.bf16 %v3519
        %v3628 = vunpack.c.l.bf16 %v3520
        %v3629 = vunpack.c.h.bf16 %v3520
        %v3630 = vunpack.c.l.bf16 %v3521
        %v3631 = vunpack.c.h.bf16 %v3521
        %v3632 = vunpack.c.l.bf16 %v3522
        %v3633 = vunpack.c.h.bf16 %v3522
        %v3634 = vunpack.c.l.bf16 %v3523
        %v3635 = vunpack.c.h.bf16 %v3523
        %v3636 = vunpack.c.l.bf16 %v3524
        %v3637 = vunpack.c.h.bf16 %v3524
        %v3638 = vunpack.c.l.bf16 %v3525
        %v3639 = vunpack.c.h.bf16 %v3525
        %v3640 = vunpack.c.l.bf16 %v3526
        %v3641 = vunpack.c.h.bf16 %v3526
        %v3642 = vunpack.c.l.bf16 %v3527
        %v3643 = vunpack.c.h.bf16 %v3527
        %v3644 = vunpack.c.l.bf16 %v3528
        %v3645 = vunpack.c.h.bf16 %v3528
        %v3646 = vunpack.c.l.bf16 %v3529
        %v3647 = vunpack.c.h.bf16 %v3529
        %v3648 = vunpack.c.l.bf16 %v3530
        %v3649 = vunpack.c.h.bf16 %v3530
        %v3650 = vunpack.c.l.bf16 %v3531
        %v3651 = vunpack.c.h.bf16 %v3531
        %v3652 = vunpack.c.l.bf16 %v3532
        %v3653 = vunpack.c.h.bf16 %v3532
        %v3654 = vunpack.c.l.bf16 %v3533
        %v3655 = vunpack.c.h.bf16 %v3533
        %v3656 = vunpack.c.l.bf16 %v3534
        %v3657 = vunpack.c.h.bf16 %v3534
        %v3658 = vunpack.c.l.bf16 %v3535
        %v3659 = vunpack.c.h.bf16 %v3535
        %v3660 = vunpack.c.l.bf16 %v3536
        %v3661 = vunpack.c.h.bf16 %v3536
        %v3662 = vunpack.c.l.bf16 %v3537
        %v3663 = vunpack.c.h.bf16 %v3537
        %v3664 = vunpack.c.l.bf16 %v3538
        %v3665 = vunpack.c.h.bf16 %v3538
        %v3666 = vunpack.c.l.bf16 %v3539
        %v3667 = vunpack.c.h.bf16 %v3539
        %v3668 = vmax.f32 %v3540, %v3541
        %v3669 = vmax.f32 %v3668, %v3542
        %v3670 = vmax.f32 %v3669, %v3543
        %3671 = vmax.xlane.f32.xlu0 %v3670
        %v3672 = vpop.xlane.xlu0 %3671
        %v3673 = vmax.f32 %v3544, %v3545
        %v3674 = vmax.f32 %v3673, %v3546
        %v3675 = vmax.f32 %v3674, %v3547
        %3676 = vmax.xlane.f32.xlu0 %v3675
        %v3677 = vpop.xlane.xlu0 %3676
        %v3678 = vmax.f32 %v3548, %v3549
        %v3679 = vmax.f32 %v3678, %v3550
        %v3680 = vmax.f32 %v3679, %v3551
        %3681 = vmax.xlane.f32.xlu0 %v3680
        %v3682 = vpop.xlane.xlu0 %3681
        %v3683 = vmax.f32 %v3552, %v3553
        %v3684 = vmax.f32 %v3683, %v3554
        %v3685 = vmax.f32 %v3684, %v3555
        %3686 = vmax.xlane.f32.xlu0 %v3685
        %v3687 = vpop.xlane.xlu0 %3686
        %v3688 = vmax.f32 %v3556, %v3557
        %v3689 = vmax.f32 %v3688, %v3558
        %v3690 = vmax.f32 %v3689, %v3559
        %3691 = vmax.xlane.f32.xlu0 %v3690
        %v3692 = vpop.xlane.xlu0 %3691
        %v3693 = vmax.f32 %v3560, %v3561
        %v3694 = vmax.f32 %v3693, %v3562
        %v3695 = vmax.f32 %v3694, %v3563
        %3696 = vmax.xlane.f32.xlu0 %v3695
        %v3697 = vpop.xlane.xlu0 %3696
        %v3698 = vmax.f32 %v3564, %v3565
        %v3699 = vmax.f32 %v3698, %v3566
        %v3700 = vmax.f32 %v3699, %v3567
        %3701 = vmax.xlane.f32.xlu0 %v3700
        %v3702 = vpop.xlane.xlu0 %3701
        %v3703 = vmax.f32 %v3568, %v3569
        %v3704 = vmax.f32 %v3703, %v3570
        %v3705 = vmax.f32 %v3704, %v3571
        %3706 = vmax.xlane.f32.xlu0 %v3705
        %v3707 = vpop.xlane.xlu0 %3706
        %v3708 = vmax.f32 %v3572, %v3573
        %v3709 = vmax.f32 %v3708, %v3574
        %v3710 = vmax.f32 %v3709, %v3575
        %3711 = vmax.xlane.f32.xlu0 %v3710
        %v3712 = vpop.xlane.xlu0 %3711
        %v3713 = vmax.f32 %v3576, %v3577
        %v3714 = vmax.f32 %v3713, %v3578
        %v3715 = vmax.f32 %v3714, %v3579
        %3716 = vmax.xlane.f32.xlu0 %v3715
        %v3717 = vpop.xlane.xlu0 %3716
        %v3718 = vmax.f32 %v3580, %v3581
        %v3719 = vmax.f32 %v3718, %v3582
        %v3720 = vmax.f32 %v3719, %v3583
        %3721 = vmax.xlane.f32.xlu0 %v3720
        %v3722 = vpop.xlane.xlu0 %3721
        %v3723 = vmax.f32 %v3584, %v3585
        %v3724 = vmax.f32 %v3723, %v3586
        %v3725 = vmax.f32 %v3724, %v3587
        %3726 = vmax.xlane.f32.xlu0 %v3725
        %v3727 = vpop.xlane.xlu0 %3726
        %v3728 = vmax.f32 %v3588, %v3589
        %v3729 = vmax.f32 %v3728, %v3590
        %v3730 = vmax.f32 %v3729, %v3591
        %3731 = vmax.xlane.f32.xlu0 %v3730
        %v3732 = vpop.xlane.xlu0 %3731
        %v3733 = vmax.f32 %v3592, %v3593
        %v3734 = vmax.f32 %v3733, %v3594
        %v3735 = vmax.f32 %v3734, %v3595
        %3736 = vmax.xlane.f32.xlu0 %v3735
        %v3737 = vpop.xlane.xlu0 %3736
        %v3738 = vmax.f32 %v3596, %v3597
        %v3739 = vmax.f32 %v3738, %v3598
        %v3740 = vmax.f32 %v3739, %v3599
        %3741 = vmax.xlane.f32.xlu0 %v3740
        %v3742 = vpop.xlane.xlu0 %3741
        %v3743 = vmax.f32 %v3600, %v3601
        %v3744 = vmax.f32 %v3743, %v3602
        %v3745 = vmax.f32 %v3744, %v3603
        %3746 = vmax.xlane.f32.xlu0 %v3745
        %v3747 = vpop.xlane.xlu0 %3746
        %v3748 = vmax.f32 %v3604, %v3605
        %v3749 = vmax.f32 %v3748, %v3606
        %v3750 = vmax.f32 %v3749, %v3607
        %3751 = vmax.xlane.f32.xlu0 %v3750
        %v3752 = vpop.xlane.xlu0 %3751
        %v3753 = vmax.f32 %v3608, %v3609
        %v3754 = vmax.f32 %v3753, %v3610
        %v3755 = vmax.f32 %v3754, %v3611
        %3756 = vmax.xlane.f32.xlu0 %v3755
        %v3757 = vpop.xlane.xlu0 %3756
        %v3758 = vmax.f32 %v3612, %v3613
        %v3759 = vmax.f32 %v3758, %v3614
        %v3760 = vmax.f32 %v3759, %v3615
        %3761 = vmax.xlane.f32.xlu0 %v3760
        %v3762 = vpop.xlane.xlu0 %3761
        %v3763 = vmax.f32 %v3616, %v3617
        %v3764 = vmax.f32 %v3763, %v3618
        %v3765 = vmax.f32 %v3764, %v3619
        %3766 = vmax.xlane.f32.xlu0 %v3765
        %v3767 = vpop.xlane.xlu0 %3766
        %v3768 = vmax.f32 %v3620, %v3621
        %v3769 = vmax.f32 %v3768, %v3622
        %v3770 = vmax.f32 %v3769, %v3623
        %3771 = vmax.xlane.f32.xlu0 %v3770
        %v3772 = vpop.xlane.xlu0 %3771
        %v3773 = vmax.f32 %v3624, %v3625
        %v3774 = vmax.f32 %v3773, %v3626
        %v3775 = vmax.f32 %v3774, %v3627
        %3776 = vmax.xlane.f32.xlu0 %v3775
        %v3777 = vpop.xlane.xlu0 %3776
        %v3778 = vmax.f32 %v3628, %v3629
        %v3779 = vmax.f32 %v3778, %v3630
        %v3780 = vmax.f32 %v3779, %v3631
        %3781 = vmax.xlane.f32.xlu0 %v3780
        %v3782 = vpop.xlane.xlu0 %3781
        %v3783 = vmax.f32 %v3632, %v3633
        %v3784 = vmax.f32 %v3783, %v3634
        %v3785 = vmax.f32 %v3784, %v3635
        %3786 = vmax.xlane.f32.xlu0 %v3785
        %v3787 = vpop.xlane.xlu0 %3786
        %v3788 = vmax.f32 %v3636, %v3637
        %v3789 = vmax.f32 %v3788, %v3638
        %v3790 = vmax.f32 %v3789, %v3639
        %3791 = vmax.xlane.f32.xlu0 %v3790
        %v3792 = vpop.xlane.xlu0 %3791
        %v3793 = vmax.f32 %v3640, %v3641
        %v3794 = vmax.f32 %v3793, %v3642
        %v3795 = vmax.f32 %v3794, %v3643
        %3796 = vmax.xlane.f32.xlu0 %v3795
        %v3797 = vpop.xlane.xlu0 %3796
        %v3798 = vmax.f32 %v3644, %v3645
        %v3799 = vmax.f32 %v3798, %v3646
        %v3800 = vmax.f32 %v3799, %v3647
        %3801 = vmax.xlane.f32.xlu0 %v3800
        %v3802 = vpop.xlane.xlu0 %3801
        %v3803 = vmax.f32 %v3648, %v3649
        %v3804 = vmax.f32 %v3803, %v3650
        %v3805 = vmax.f32 %v3804, %v3651
        %3806 = vmax.xlane.f32.xlu0 %v3805
        %v3807 = vpop.xlane.xlu0 %3806
        %v3808 = vmax.f32 %v3652, %v3653
        %v3809 = vmax.f32 %v3808, %v3654
        %v3810 = vmax.f32 %v3809, %v3655
        %3811 = vmax.xlane.f32.xlu0 %v3810
        %v3812 = vpop.xlane.xlu0 %3811
        %v3813 = vmax.f32 %v3656, %v3657
        %v3814 = vmax.f32 %v3813, %v3658
        %v3815 = vmax.f32 %v3814, %v3659
        %3816 = vmax.xlane.f32.xlu0 %v3815
        %v3817 = vpop.xlane.xlu0 %3816
        %v3818 = vmax.f32 %v3660, %v3661
        %v3819 = vmax.f32 %v3818, %v3662
        %v3820 = vmax.f32 %v3819, %v3663
        %3821 = vmax.xlane.f32.xlu0 %v3820
        %v3822 = vpop.xlane.xlu0 %3821
        %v3823 = vmax.f32 %v3664, %v3665
        %v3824 = vmax.f32 %v3823, %v3666
        %v3825 = vmax.f32 %v3824, %v3667
        %3826 = vmax.xlane.f32.xlu0 %v3825
        %v3827 = vpop.xlane.xlu0 %3826
        %v3828 = vsub.f32 %v3540, %v3672
        %v3829 = vsub.f32 %v3541, %v3672
        %v3830 = vsub.f32 %v3542, %v3672
        %v3831 = vsub.f32 %v3543, %v3672
        %v3832 = vsub.f32 %v3544, %v3677
        %v3833 = vsub.f32 %v3545, %v3677
        %v3834 = vsub.f32 %v3546, %v3677
        %v3835 = vsub.f32 %v3547, %v3677
        %v3836 = vsub.f32 %v3548, %v3682
        %v3837 = vsub.f32 %v3549, %v3682
        %v3838 = vsub.f32 %v3550, %v3682
        %v3839 = vsub.f32 %v3551, %v3682
        %v3840 = vsub.f32 %v3552, %v3687
        %v3841 = vsub.f32 %v3553, %v3687
        %v3842 = vsub.f32 %v3554, %v3687
        %v3843 = vsub.f32 %v3555, %v3687
        %v3844 = vsub.f32 %v3556, %v3692
        %v3845 = vsub.f32 %v3557, %v3692
        %v3846 = vsub.f32 %v3558, %v3692
        %v3847 = vsub.f32 %v3559, %v3692
        %v3848 = vsub.f32 %v3560, %v3697
        %v3849 = vsub.f32 %v3561, %v3697
        %v3850 = vsub.f32 %v3562, %v3697
        %v3851 = vsub.f32 %v3563, %v3697
        %v3852 = vsub.f32 %v3564, %v3702
        %v3853 = vsub.f32 %v3565, %v3702
        %v3854 = vsub.f32 %v3566, %v3702
        %v3855 = vsub.f32 %v3567, %v3702
        %v3856 = vsub.f32 %v3568, %v3707
        %v3857 = vsub.f32 %v3569, %v3707
        %v3858 = vsub.f32 %v3570, %v3707
        %v3859 = vsub.f32 %v3571, %v3707
        %v3860 = vsub.f32 %v3572, %v3712
        %v3861 = vsub.f32 %v3573, %v3712
        %v3862 = vsub.f32 %v3574, %v3712
        %v3863 = vsub.f32 %v3575, %v3712
        %v3864 = vsub.f32 %v3576, %v3717
        %v3865 = vsub.f32 %v3577, %v3717
        %v3866 = vsub.f32 %v3578, %v3717
        %v3867 = vsub.f32 %v3579, %v3717
        %v3868 = vsub.f32 %v3580, %v3722
        %v3869 = vsub.f32 %v3581, %v3722
        %v3870 = vsub.f32 %v3582, %v3722
        %v3871 = vsub.f32 %v3583, %v3722
        %v3872 = vsub.f32 %v3584, %v3727
        %v3873 = vsub.f32 %v3585, %v3727
        %v3874 = vsub.f32 %v3586, %v3727
        %v3875 = vsub.f32 %v3587, %v3727
        %v3876 = vsub.f32 %v3588, %v3732
        %v3877 = vsub.f32 %v3589, %v3732
        %v3878 = vsub.f32 %v3590, %v3732
        %v3879 = vsub.f32 %v3591, %v3732
        %v3880 = vsub.f32 %v3592, %v3737
        %v3881 = vsub.f32 %v3593, %v3737
        %v3882 = vsub.f32 %v3594, %v3737
        %v3883 = vsub.f32 %v3595, %v3737
        %v3884 = vsub.f32 %v3596, %v3742
        %v3885 = vsub.f32 %v3597, %v3742
        %v3886 = vsub.f32 %v3598, %v3742
        %v3887 = vsub.f32 %v3599, %v3742
        %v3888 = vsub.f32 %v3600, %v3747
        %v3889 = vsub.f32 %v3601, %v3747
        %v3890 = vsub.f32 %v3602, %v3747
        %v3891 = vsub.f32 %v3603, %v3747
        %v3892 = vsub.f32 %v3604, %v3752
        %v3893 = vsub.f32 %v3605, %v3752
        %v3894 = vsub.f32 %v3606, %v3752
        %v3895 = vsub.f32 %v3607, %v3752
        %v3896 = vsub.f32 %v3608, %v3757
        %v3897 = vsub.f32 %v3609, %v3757
        %v3898 = vsub.f32 %v3610, %v3757
        %v3899 = vsub.f32 %v3611, %v3757
        %v3900 = vsub.f32 %v3612, %v3762
        %v3901 = vsub.f32 %v3613, %v3762
        %v3902 = vsub.f32 %v3614, %v3762
        %v3903 = vsub.f32 %v3615, %v3762
        %v3904 = vsub.f32 %v3616, %v3767
        %v3905 = vsub.f32 %v3617, %v3767
        %v3906 = vsub.f32 %v3618, %v3767
        %v3907 = vsub.f32 %v3619, %v3767
        %v3908 = vsub.f32 %v3620, %v3772
        %v3909 = vsub.f32 %v3621, %v3772
        %v3910 = vsub.f32 %v3622, %v3772
        %v3911 = vsub.f32 %v3623, %v3772
        %v3912 = vsub.f32 %v3624, %v3777
        %v3913 = vsub.f32 %v3625, %v3777
        %v3914 = vsub.f32 %v3626, %v3777
        %v3915 = vsub.f32 %v3627, %v3777
        %v3916 = vsub.f32 %v3628, %v3782
        %v3917 = vsub.f32 %v3629, %v3782
        %v3918 = vsub.f32 %v3630, %v3782
        %v3919 = vsub.f32 %v3631, %v3782
        %v3920 = vsub.f32 %v3632, %v3787
        %v3921 = vsub.f32 %v3633, %v3787
        %v3922 = vsub.f32 %v3634, %v3787
        %v3923 = vsub.f32 %v3635, %v3787
        %v3924 = vsub.f32 %v3636, %v3792
        %v3925 = vsub.f32 %v3637, %v3792
        %v3926 = vsub.f32 %v3638, %v3792
        %v3927 = vsub.f32 %v3639, %v3792
        %v3928 = vsub.f32 %v3640, %v3797
        %v3929 = vsub.f32 %v3641, %v3797
        %v3930 = vsub.f32 %v3642, %v3797
        %v3931 = vsub.f32 %v3643, %v3797
        %v3932 = vsub.f32 %v3644, %v3802
        %v3933 = vsub.f32 %v3645, %v3802
        %v3934 = vsub.f32 %v3646, %v3802
        %v3935 = vsub.f32 %v3647, %v3802
        %v3936 = vsub.f32 %v3648, %v3807
        %v3937 = vsub.f32 %v3649, %v3807
        %v3938 = vsub.f32 %v3650, %v3807
        %v3939 = vsub.f32 %v3651, %v3807
        %v3940 = vsub.f32 %v3652, %v3812
        %v3941 = vsub.f32 %v3653, %v3812
        %v3942 = vsub.f32 %v3654, %v3812
        %v3943 = vsub.f32 %v3655, %v3812
        %v3944 = vsub.f32 %v3656, %v3817
        %v3945 = vsub.f32 %v3657, %v3817
        %v3946 = vsub.f32 %v3658, %v3817
        %v3947 = vsub.f32 %v3659, %v3817
        %v3948 = vsub.f32 %v3660, %v3822
        %v3949 = vsub.f32 %v3661, %v3822
        %v3950 = vsub.f32 %v3662, %v3822
        %v3951 = vsub.f32 %v3663, %v3822
        %v3952 = vsub.f32 %v3664, %v3827
        %v3953 = vsub.f32 %v3665, %v3827
        %v3954 = vsub.f32 %v3666, %v3827
        %v3955 = vsub.f32 %v3667, %v3827
        %v3956 = vmul.f32 %v3828, 1.442695
        %v3957 = vpow.pop %v3956
        %v3958 = vmul.f32 %v3829, 1.442695
        %v3959 = vpow.pop %v3958
        %v3960 = vmul.f32 %v3830, 1.442695
        %v3961 = vpow.pop %v3960
        %v3962 = vmul.f32 %v3831, 1.442695
        %v3963 = vpow.pop %v3962
        %v3964 = vmul.f32 %v3832, 1.442695
        %v3965 = vpow.pop %v3964
        %v3966 = vmul.f32 %v3833, 1.442695
        %v3967 = vpow.pop %v3966
        %v3968 = vmul.f32 %v3834, 1.442695
        %v3969 = vpow.pop %v3968
        %v3970 = vmul.f32 %v3835, 1.442695
        %v3971 = vpow.pop %v3970
        %v3972 = vmul.f32 %v3836, 1.442695
        %v3973 = vpow.pop %v3972
        %v3974 = vmul.f32 %v3837, 1.442695
        %v3975 = vpow.pop %v3974
        %v3976 = vmul.f32 %v3838, 1.442695
        %v3977 = vpow.pop %v3976
        %v3978 = vmul.f32 %v3839, 1.442695
        %v3979 = vpow.pop %v3978
        %v3980 = vmul.f32 %v3840, 1.442695
        %v3981 = vpow.pop %v3980
        %v3982 = vmul.f32 %v3841, 1.442695
        %v3983 = vpow.pop %v3982
        %v3984 = vmul.f32 %v3842, 1.442695
        %v3985 = vpow.pop %v3984
        %v3986 = vmul.f32 %v3843, 1.442695
        %v3987 = vpow.pop %v3986
        %v3988 = vmul.f32 %v3844, 1.442695
        %v3989 = vpow.pop %v3988
        %v3990 = vmul.f32 %v3845, 1.442695
        %v3991 = vpow.pop %v3990
        %v3992 = vmul.f32 %v3846, 1.442695
        %v3993 = vpow.pop %v3992
        %v3994 = vmul.f32 %v3847, 1.442695
        %v3995 = vpow.pop %v3994
        %v3996 = vmul.f32 %v3848, 1.442695
        %v3997 = vpow.pop %v3996
        %v3998 = vmul.f32 %v3849, 1.442695
        %v3999 = vpow.pop %v3998
        %v4000 = vmul.f32 %v3850, 1.442695
        %v4001 = vpow.pop %v4000
        %v4002 = vmul.f32 %v3851, 1.442695
        %v4003 = vpow.pop %v4002
        %v4004 = vmul.f32 %v3852, 1.442695
        %v4005 = vpow.pop %v4004
        %v4006 = vmul.f32 %v3853, 1.442695
        %v4007 = vpow.pop %v4006
        %v4008 = vmul.f32 %v3854, 1.442695
        %v4009 = vpow.pop %v4008
        %v4010 = vmul.f32 %v3855, 1.442695
        %v4011 = vpow.pop %v4010
        %v4012 = vmul.f32 %v3856, 1.442695
        %v4013 = vpow.pop %v4012
        %v4014 = vmul.f32 %v3857, 1.442695
        %v4015 = vpow.pop %v4014
        %v4016 = vmul.f32 %v3858, 1.442695
        %v4017 = vpow.pop %v4016
        %v4018 = vmul.f32 %v3859, 1.442695
        %v4019 = vpow.pop %v4018
        %v4020 = vmul.f32 %v3860, 1.442695
        %v4021 = vpow.pop %v4020
        %v4022 = vmul.f32 %v3861, 1.442695
        %v4023 = vpow.pop %v4022
        %v4024 = vmul.f32 %v3862, 1.442695
        %v4025 = vpow.pop %v4024
        %v4026 = vmul.f32 %v3863, 1.442695
        %v4027 = vpow.pop %v4026
        %v4028 = vmul.f32 %v3864, 1.442695
        %v4029 = vpow.pop %v4028
        %v4030 = vmul.f32 %v3865, 1.442695
        %v4031 = vpow.pop %v4030
        %v4032 = vmul.f32 %v3866, 1.442695
        %v4033 = vpow.pop %v4032
        %v4034 = vmul.f32 %v3867, 1.442695
        %v4035 = vpow.pop %v4034
        %v4036 = vmul.f32 %v3868, 1.442695
        %v4037 = vpow.pop %v4036
        %v4038 = vmul.f32 %v3869, 1.442695
        %v4039 = vpow.pop %v4038
        %v4040 = vmul.f32 %v3870, 1.442695
        %v4041 = vpow.pop %v4040
        %v4042 = vmul.f32 %v3871, 1.442695
        %v4043 = vpow.pop %v4042
        %v4044 = vmul.f32 %v3872, 1.442695
        %v4045 = vpow.pop %v4044
        %v4046 = vmul.f32 %v3873, 1.442695
        %v4047 = vpow.pop %v4046
        %v4048 = vmul.f32 %v3874, 1.442695
        %v4049 = vpow.pop %v4048
        %v4050 = vmul.f32 %v3875, 1.442695
        %v4051 = vpow.pop %v4050
        %v4052 = vmul.f32 %v3876, 1.442695
        %v4053 = vpow.pop %v4052
        %v4054 = vmul.f32 %v3877, 1.442695
        %v4055 = vpow.pop %v4054
        %v4056 = vmul.f32 %v3878, 1.442695
        %v4057 = vpow.pop %v4056
        %v4058 = vmul.f32 %v3879, 1.442695
        %v4059 = vpow.pop %v4058
        %v4060 = vmul.f32 %v3880, 1.442695
        %v4061 = vpow.pop %v4060
        %v4062 = vmul.f32 %v3881, 1.442695
        %v4063 = vpow.pop %v4062
        %v4064 = vmul.f32 %v3882, 1.442695
        %v4065 = vpow.pop %v4064
        %v4066 = vmul.f32 %v3883, 1.442695
        %v4067 = vpow.pop %v4066
        %v4068 = vmul.f32 %v3884, 1.442695
        %v4069 = vpow.pop %v4068
        %v4070 = vmul.f32 %v3885, 1.442695
        %v4071 = vpow.pop %v4070
        %v4072 = vmul.f32 %v3886, 1.442695
        %v4073 = vpow.pop %v4072
        %v4074 = vmul.f32 %v3887, 1.442695
        %v4075 = vpow.pop %v4074
        %v4076 = vmul.f32 %v3888, 1.442695
        %v4077 = vpow.pop %v4076
        %v4078 = vmul.f32 %v3889, 1.442695
        %v4079 = vpow.pop %v4078
        %v4080 = vmul.f32 %v3890, 1.442695
        %v4081 = vpow.pop %v4080
        %v4082 = vmul.f32 %v3891, 1.442695
        %v4083 = vpow.pop %v4082
        %v4084 = vmul.f32 %v3892, 1.442695
        %v4085 = vpow.pop %v4084
        %v4086 = vmul.f32 %v3893, 1.442695
        %v4087 = vpow.pop %v4086
        %v4088 = vmul.f32 %v3894, 1.442695
        %v4089 = vpow.pop %v4088
        %v4090 = vmul.f32 %v3895, 1.442695
        %v4091 = vpow.pop %v4090
        %v4092 = vmul.f32 %v3896, 1.442695
        %v4093 = vpow.pop %v4092
        %v4094 = vmul.f32 %v3897, 1.442695
        %v4095 = vpow.pop %v4094
        %v4096 = vmul.f32 %v3898, 1.442695
        %v4097 = vpow.pop %v4096
        %v4098 = vmul.f32 %v3899, 1.442695
        %v4099 = vpow.pop %v4098
        %v4100 = vmul.f32 %v3900, 1.442695
        %v4101 = vpow.pop %v4100
        %v4102 = vmul.f32 %v3901, 1.442695
        %v4103 = vpow.pop %v4102
        %v4104 = vmul.f32 %v3902, 1.442695
        %v4105 = vpow.pop %v4104
        %v4106 = vmul.f32 %v3903, 1.442695
        %v4107 = vpow.pop %v4106
        %v4108 = vmul.f32 %v3904, 1.442695
        %v4109 = vpow.pop %v4108
        %v4110 = vmul.f32 %v3905, 1.442695
        %v4111 = vpow.pop %v4110
        %v4112 = vmul.f32 %v3906, 1.442695
        %v4113 = vpow.pop %v4112
        %v4114 = vmul.f32 %v3907, 1.442695
        %v4115 = vpow.pop %v4114
        %v4116 = vmul.f32 %v3908, 1.442695
        %v4117 = vpow.pop %v4116
        %v4118 = vmul.f32 %v3909, 1.442695
        %v4119 = vpow.pop %v4118
        %v4120 = vmul.f32 %v3910, 1.442695
        %v4121 = vpow.pop %v4120
        %v4122 = vmul.f32 %v3911, 1.442695
        %v4123 = vpow.pop %v4122
        %v4124 = vmul.f32 %v3912, 1.442695
        %v4125 = vpow.pop %v4124
        %v4126 = vmul.f32 %v3913, 1.442695
        %v4127 = vpow.pop %v4126
        %v4128 = vmul.f32 %v3914, 1.442695
        %v4129 = vpow.pop %v4128
        %v4130 = vmul.f32 %v3915, 1.442695
        %v4131 = vpow.pop %v4130
        %v4132 = vmul.f32 %v3916, 1.442695
        %v4133 = vpow.pop %v4132
        %v4134 = vmul.f32 %v3917, 1.442695
        %v4135 = vpow.pop %v4134
        %v4136 = vmul.f32 %v3918, 1.442695
        %v4137 = vpow.pop %v4136
        %v4138 = vmul.f32 %v3919, 1.442695
        %v4139 = vpow.pop %v4138
        %v4140 = vmul.f32 %v3920, 1.442695
        %v4141 = vpow.pop %v4140
        %v4142 = vmul.f32 %v3921, 1.442695
        %v4143 = vpow.pop %v4142
        %v4144 = vmul.f32 %v3922, 1.442695
        %v4145 = vpow.pop %v4144
        %v4146 = vmul.f32 %v3923, 1.442695
        %v4147 = vpow.pop %v4146
        %v4148 = vmul.f32 %v3924, 1.442695
        %v4149 = vpow.pop %v4148
        %v4150 = vmul.f32 %v3925, 1.442695
        %v4151 = vpow.pop %v4150
        %v4152 = vmul.f32 %v3926, 1.442695
        %v4153 = vpow.pop %v4152
        %v4154 = vmul.f32 %v3927, 1.442695
        %v4155 = vpow.pop %v4154
        %v4156 = vmul.f32 %v3928, 1.442695
        %v4157 = vpow.pop %v4156
        %v4158 = vmul.f32 %v3929, 1.442695
        %v4159 = vpow.pop %v4158
        %v4160 = vmul.f32 %v3930, 1.442695
        %v4161 = vpow.pop %v4160
        %v4162 = vmul.f32 %v3931, 1.442695
        %v4163 = vpow.pop %v4162
        %v4164 = vmul.f32 %v3932, 1.442695
        %v4165 = vpow.pop %v4164
        %v4166 = vmul.f32 %v3933, 1.442695
        %v4167 = vpow.pop %v4166
        %v4168 = vmul.f32 %v3934, 1.442695
        %v4169 = vpow.pop %v4168
        %v4170 = vmul.f32 %v3935, 1.442695
        %v4171 = vpow.pop %v4170
        %v4172 = vmul.f32 %v3936, 1.442695
        %v4173 = vpow.pop %v4172
        %v4174 = vmul.f32 %v3937, 1.442695
        %v4175 = vpow.pop %v4174
        %v4176 = vmul.f32 %v3938, 1.442695
        %v4177 = vpow.pop %v4176
        %v4178 = vmul.f32 %v3939, 1.442695
        %v4179 = vpow.pop %v4178
        %v4180 = vmul.f32 %v3940, 1.442695
        %v4181 = vpow.pop %v4180
        %v4182 = vmul.f32 %v3941, 1.442695
        %v4183 = vpow.pop %v4182
        %v4184 = vmul.f32 %v3942, 1.442695
        %v4185 = vpow.pop %v4184
        %v4186 = vmul.f32 %v3943, 1.442695
        %v4187 = vpow.pop %v4186
        %v4188 = vmul.f32 %v3944, 1.442695
        %v4189 = vpow.pop %v4188
        %v4190 = vmul.f32 %v3945, 1.442695
        %v4191 = vpow.pop %v4190
        %v4192 = vmul.f32 %v3946, 1.442695
        %v4193 = vpow.pop %v4192
        %v4194 = vmul.f32 %v3947, 1.442695
        %v4195 = vpow.pop %v4194
        %v4196 = vmul.f32 %v3948, 1.442695
        %v4197 = vpow.pop %v4196
        %v4198 = vmul.f32 %v3949, 1.442695
        %v4199 = vpow.pop %v4198
        %v4200 = vmul.f32 %v3950, 1.442695
        %v4201 = vpow.pop %v4200
        %v4202 = vmul.f32 %v3951, 1.442695
        %v4203 = vpow.pop %v4202
        %v4204 = vmul.f32 %v3952, 1.442695
        %v4205 = vpow.pop %v4204
        %v4206 = vmul.f32 %v3953, 1.442695
        %v4207 = vpow.pop %v4206
        %v4208 = vmul.f32 %v3954, 1.442695
        %v4209 = vpow.pop %v4208
        %v4210 = vmul.f32 %v3955, 1.442695
        %v4211 = vpow.pop %v4210
        %v4212 = vadd.f32 %v3957, %v3959
        %v4213 = vadd.f32 %v4212, %v3961
        %v4214 = vadd.f32 %v4213, %v3963
        %4215 = vadd.xlane.f32.xlu0 %v4214
        %v4216 = vpop.xlane.xlu0 %4215
        %v4217 = vadd.f32 %v3965, %v3967
        %v4218 = vadd.f32 %v4217, %v3969
        %v4219 = vadd.f32 %v4218, %v3971
        %4220 = vadd.xlane.f32.xlu0 %v4219
        %v4221 = vpop.xlane.xlu0 %4220
        %v4222 = vadd.f32 %v3973, %v3975
        %v4223 = vadd.f32 %v4222, %v3977
        %v4224 = vadd.f32 %v4223, %v3979
        %4225 = vadd.xlane.f32.xlu0 %v4224
        %v4226 = vpop.xlane.xlu0 %4225
        %v4227 = vadd.f32 %v3981, %v3983
        %v4228 = vadd.f32 %v4227, %v3985
        %v4229 = vadd.f32 %v4228, %v3987
        %4230 = vadd.xlane.f32.xlu0 %v4229
        %v4231 = vpop.xlane.xlu0 %4230
        %v4232 = vadd.f32 %v3989, %v3991
        %v4233 = vadd.f32 %v4232, %v3993
        %v4234 = vadd.f32 %v4233, %v3995
        %4235 = vadd.xlane.f32.xlu0 %v4234
        %v4236 = vpop.xlane.xlu0 %4235
        %v4237 = vadd.f32 %v3997, %v3999
        %v4238 = vadd.f32 %v4237, %v4001
        %v4239 = vadd.f32 %v4238, %v4003
        %4240 = vadd.xlane.f32.xlu0 %v4239
        %v4241 = vpop.xlane.xlu0 %4240
        %v4242 = vadd.f32 %v4005, %v4007
        %v4243 = vadd.f32 %v4242, %v4009
        %v4244 = vadd.f32 %v4243, %v4011
        %4245 = vadd.xlane.f32.xlu0 %v4244
        %v4246 = vpop.xlane.xlu0 %4245
        %v4247 = vadd.f32 %v4013, %v4015
        %v4248 = vadd.f32 %v4247, %v4017
        %v4249 = vadd.f32 %v4248, %v4019
        %4250 = vadd.xlane.f32.xlu0 %v4249
        %v4251 = vpop.xlane.xlu0 %4250
        %v4252 = vadd.f32 %v4021, %v4023
        %v4253 = vadd.f32 %v4252, %v4025
        %v4254 = vadd.f32 %v4253, %v4027
        %4255 = vadd.xlane.f32.xlu0 %v4254
        %v4256 = vpop.xlane.xlu0 %4255
        %v4257 = vadd.f32 %v4029, %v4031
        %v4258 = vadd.f32 %v4257, %v4033
        %v4259 = vadd.f32 %v4258, %v4035
        %4260 = vadd.xlane.f32.xlu0 %v4259
        %v4261 = vpop.xlane.xlu0 %4260
        %v4262 = vadd.f32 %v4037, %v4039
        %v4263 = vadd.f32 %v4262, %v4041
        %v4264 = vadd.f32 %v4263, %v4043
        %4265 = vadd.xlane.f32.xlu0 %v4264
        %v4266 = vpop.xlane.xlu0 %4265
        %v4267 = vadd.f32 %v4045, %v4047
        %v4268 = vadd.f32 %v4267, %v4049
        %v4269 = vadd.f32 %v4268, %v4051
        %4270 = vadd.xlane.f32.xlu0 %v4269
        %v4271 = vpop.xlane.xlu0 %4270
        %v4272 = vadd.f32 %v4053, %v4055
        %v4273 = vadd.f32 %v4272, %v4057
        %v4274 = vadd.f32 %v4273, %v4059
        %4275 = vadd.xlane.f32.xlu0 %v4274
        %v4276 = vpop.xlane.xlu0 %4275
        %v4277 = vadd.f32 %v4061, %v4063
        %v4278 = vadd.f32 %v4277, %v4065
        %v4279 = vadd.f32 %v4278, %v4067
        %4280 = vadd.xlane.f32.xlu0 %v4279
        %v4281 = vpop.xlane.xlu0 %4280
        %v4282 = vadd.f32 %v4069, %v4071
        %v4283 = vadd.f32 %v4282, %v4073
        %v4284 = vadd.f32 %v4283, %v4075
        %4285 = vadd.xlane.f32.xlu0 %v4284
        %v4286 = vpop.xlane.xlu0 %4285
        %v4287 = vadd.f32 %v4077, %v4079
        %v4288 = vadd.f32 %v4287, %v4081
        %v4289 = vadd.f32 %v4288, %v4083
        %4290 = vadd.xlane.f32.xlu0 %v4289
        %v4291 = vpop.xlane.xlu0 %4290
        %v4292 = vadd.f32 %v4085, %v4087
        %v4293 = vadd.f32 %v4292, %v4089
        %v4294 = vadd.f32 %v4293, %v4091
        %4295 = vadd.xlane.f32.xlu0 %v4294
        %v4296 = vpop.xlane.xlu0 %4295
        %v4297 = vadd.f32 %v4093, %v4095
        %v4298 = vadd.f32 %v4297, %v4097
        %v4299 = vadd.f32 %v4298, %v4099
        %4300 = vadd.xlane.f32.xlu0 %v4299
        %v4301 = vpop.xlane.xlu0 %4300
        %v4302 = vadd.f32 %v4101, %v4103
        %v4303 = vadd.f32 %v4302, %v4105
        %v4304 = vadd.f32 %v4303, %v4107
        %4305 = vadd.xlane.f32.xlu0 %v4304
        %v4306 = vpop.xlane.xlu0 %4305
        %v4307 = vadd.f32 %v4109, %v4111
        %v4308 = vadd.f32 %v4307, %v4113
        %v4309 = vadd.f32 %v4308, %v4115
        %4310 = vadd.xlane.f32.xlu0 %v4309
        %v4311 = vpop.xlane.xlu0 %4310
        %v4312 = vadd.f32 %v4117, %v4119
        %v4313 = vadd.f32 %v4312, %v4121
        %v4314 = vadd.f32 %v4313, %v4123
        %4315 = vadd.xlane.f32.xlu0 %v4314
        %v4316 = vpop.xlane.xlu0 %4315
        %v4317 = vadd.f32 %v4125, %v4127
        %v4318 = vadd.f32 %v4317, %v4129
        %v4319 = vadd.f32 %v4318, %v4131
        %4320 = vadd.xlane.f32.xlu0 %v4319
        %v4321 = vpop.xlane.xlu0 %4320
        %v4322 = vadd.f32 %v4133, %v4135
        %v4323 = vadd.f32 %v4322, %v4137
        %v4324 = vadd.f32 %v4323, %v4139
        %4325 = vadd.xlane.f32.xlu0 %v4324
        %v4326 = vpop.xlane.xlu0 %4325
        %v4327 = vadd.f32 %v4141, %v4143
        %v4328 = vadd.f32 %v4327, %v4145
        %v4329 = vadd.f32 %v4328, %v4147
        %4330 = vadd.xlane.f32.xlu0 %v4329
        %v4331 = vpop.xlane.xlu0 %4330
        %v4332 = vadd.f32 %v4149, %v4151
        %v4333 = vadd.f32 %v4332, %v4153
        %v4334 = vadd.f32 %v4333, %v4155
        %4335 = vadd.xlane.f32.xlu0 %v4334
        %v4336 = vpop.xlane.xlu0 %4335
        %v4337 = vadd.f32 %v4157, %v4159
        %v4338 = vadd.f32 %v4337, %v4161
        %v4339 = vadd.f32 %v4338, %v4163
        %4340 = vadd.xlane.f32.xlu0 %v4339
        %v4341 = vpop.xlane.xlu0 %4340
        %v4342 = vadd.f32 %v4165, %v4167
        %v4343 = vadd.f32 %v4342, %v4169
        %v4344 = vadd.f32 %v4343, %v4171
        %4345 = vadd.xlane.f32.xlu0 %v4344
        %v4346 = vpop.xlane.xlu0 %4345
        %v4347 = vadd.f32 %v4173, %v4175
        %v4348 = vadd.f32 %v4347, %v4177
        %v4349 = vadd.f32 %v4348, %v4179
        %4350 = vadd.xlane.f32.xlu0 %v4349
        %v4351 = vpop.xlane.xlu0 %4350
        %v4352 = vadd.f32 %v4181, %v4183
        %v4353 = vadd.f32 %v4352, %v4185
        %v4354 = vadd.f32 %v4353, %v4187
        %4355 = vadd.xlane.f32.xlu0 %v4354
        %v4356 = vpop.xlane.xlu0 %4355
        %v4357 = vadd.f32 %v4189, %v4191
        %v4358 = vadd.f32 %v4357, %v4193
        %v4359 = vadd.f32 %v4358, %v4195
        %4360 = vadd.xlane.f32.xlu0 %v4359
        %v4361 = vpop.xlane.xlu0 %4360
        %v4362 = vadd.f32 %v4197, %v4199
        %v4363 = vadd.f32 %v4362, %v4201
        %v4364 = vadd.f32 %v4363, %v4203
        %4365 = vadd.xlane.f32.xlu0 %v4364
        %v4366 = vpop.xlane.xlu0 %4365
        %v4367 = vadd.f32 %v4205, %v4207
        %v4368 = vadd.f32 %v4367, %v4209
        %v4369 = vadd.f32 %v4368, %v4211
        %4370 = vadd.xlane.f32.xlu0 %v4369
        %v4371 = vpop.xlane.xlu0 %4370
        %v4372 = vmax.f32 %v3672, %v3692
        %v4373 = vmax.f32 %v3677, %v3697
        %v4374 = vmax.f32 %v3682, %v3702
        %v4375 = vmax.f32 %v3687, %v3707
        %v4376 = vmax.f32 %v4372, %v3712
        %v4377 = vmax.f32 %v4373, %v3717
        %v4378 = vmax.f32 %v4374, %v3722
        %v4379 = vmax.f32 %v4375, %v3727
        %v4380 = vmax.f32 %v4376, %v3732
        %v4381 = vmax.f32 %v4377, %v3737
        %v4382 = vmax.f32 %v4378, %v3742
        %v4383 = vmax.f32 %v4379, %v3747
        %v4384 = vmax.f32 %v4380, %v3752
        %v4385 = vmax.f32 %v4381, %v3757
        %v4386 = vmax.f32 %v4382, %v3762
        %v4387 = vmax.f32 %v4383, %v3767
        %v4388 = vmax.f32 %v4384, %v3772
        %v4389 = vmax.f32 %v4385, %v3777
        %v4390 = vmax.f32 %v4386, %v3782
        %v4391 = vmax.f32 %v4387, %v3787
        %v4392 = vmax.f32 %v4388, %v3792
        %v4393 = vmax.f32 %v4389, %v3797
        %v4394 = vmax.f32 %v4390, %v3802
        %v4395 = vmax.f32 %v4391, %v3807
        %v4396 = vmax.f32 %v4392, %v3812
        %v4397 = vmax.f32 %v4393, %v3817
        %v4398 = vmax.f32 %v4394, %v3822
        %v4399 = vmax.f32 %v4395, %v3827
        %v4400 = vmax.f32 %v4396, %v4397
        %v4401 = vmax.f32 %v4398, %v4399
        %v4402 = vmax.f32 %v4400, %v4401
        %v4403 = vrot.slane %v4402, 4
        %v4404 = vmax.f32 %v4402, %v4403
        %v4405 = vrot.slane %v4404, 2
        %v4406 = vmax.f32 %v4404, %v4405
        %v4407 = vrot.slane %v4406, 1
        %v4408 = vmax.f32 %v4406, %v4407
        %s4409 = vtos %v4408
        %v4410 = vstv %s4409
        %v4411 = vsub.f32 %v3672, %v4410
        %v4412 = vsub.f32 %v3677, %v4410
        %v4413 = vsub.f32 %v3682, %v4410
        %v4414 = vsub.f32 %v3687, %v4410
        %v4415 = vsub.f32 %v3692, %v4410
        %v4416 = vsub.f32 %v3697, %v4410
        %v4417 = vsub.f32 %v3702, %v4410
        %v4418 = vsub.f32 %v3707, %v4410
        %v4419 = vsub.f32 %v3712, %v4410
        %v4420 = vsub.f32 %v3717, %v4410
        %v4421 = vsub.f32 %v3722, %v4410
        %v4422 = vsub.f32 %v3727, %v4410
        %v4423 = vsub.f32 %v3732, %v4410
        %v4424 = vsub.f32 %v3737, %v4410
        %v4425 = vsub.f32 %v3742, %v4410
        %v4426 = vsub.f32 %v3747, %v4410
        %v4427 = vsub.f32 %v3752, %v4410
        %v4428 = vsub.f32 %v3757, %v4410
        %v4429 = vsub.f32 %v3762, %v4410
        %v4430 = vsub.f32 %v3767, %v4410
        %v4431 = vsub.f32 %v3772, %v4410
        %v4432 = vsub.f32 %v3777, %v4410
        %v4433 = vsub.f32 %v3782, %v4410
        %v4434 = vsub.f32 %v3787, %v4410
        %v4435 = vsub.f32 %v3792, %v4410
        %v4436 = vsub.f32 %v3797, %v4410
        %v4437 = vsub.f32 %v3802, %v4410
        %v4438 = vsub.f32 %v3807, %v4410
        %v4439 = vsub.f32 %v3812, %v4410
        %v4440 = vsub.f32 %v3817, %v4410
        %v4441 = vsub.f32 %v3822, %v4410
        %v4442 = vsub.f32 %v3827, %v4410
        %v4443 = vmul.f32 %v4411, 1.442695
        %v4444 = vpow.pop %v4443
        %v4445 = vmul.f32 %v4412, 1.442695
        %v4446 = vpow.pop %v4445
        %v4447 = vmul.f32 %v4413, 1.442695
        %v4448 = vpow.pop %v4447
        %v4449 = vmul.f32 %v4414, 1.442695
        %v4450 = vpow.pop %v4449
        %v4451 = vmul.f32 %v4415, 1.442695
        %v4452 = vpow.pop %v4451
        %v4453 = vmul.f32 %v4416, 1.442695
        %v4454 = vpow.pop %v4453
        %v4455 = vmul.f32 %v4417, 1.442695
        %v4456 = vpow.pop %v4455
        %v4457 = vmul.f32 %v4418, 1.442695
        %v4458 = vpow.pop %v4457
        %v4459 = vmul.f32 %v4419, 1.442695
        %v4460 = vpow.pop %v4459
        %v4461 = vmul.f32 %v4420, 1.442695
        %v4462 = vpow.pop %v4461
        %v4463 = vmul.f32 %v4421, 1.442695
        %v4464 = vpow.pop %v4463
        %v4465 = vmul.f32 %v4422, 1.442695
        %v4466 = vpow.pop %v4465
        %v4467 = vmul.f32 %v4423, 1.442695
        %v4468 = vpow.pop %v4467
        %v4469 = vmul.f32 %v4424, 1.442695
        %v4470 = vpow.pop %v4469
        %v4471 = vmul.f32 %v4425, 1.442695
        %v4472 = vpow.pop %v4471
        %v4473 = vmul.f32 %v4426, 1.442695
        %v4474 = vpow.pop %v4473
        %v4475 = vmul.f32 %v4427, 1.442695
        %v4476 = vpow.pop %v4475
        %v4477 = vmul.f32 %v4428, 1.442695
        %v4478 = vpow.pop %v4477
        %v4479 = vmul.f32 %v4429, 1.442695
        %v4480 = vpow.pop %v4479
        %v4481 = vmul.f32 %v4430, 1.442695
        %v4482 = vpow.pop %v4481
        %v4483 = vmul.f32 %v4431, 1.442695
        %v4484 = vpow.pop %v4483
        %v4485 = vmul.f32 %v4432, 1.442695
        %v4486 = vpow.pop %v4485
        %v4487 = vmul.f32 %v4433, 1.442695
        %v4488 = vpow.pop %v4487
        %v4489 = vmul.f32 %v4434, 1.442695
        %v4490 = vpow.pop %v4489
        %v4491 = vmul.f32 %v4435, 1.442695
        %v4492 = vpow.pop %v4491
        %v4493 = vmul.f32 %v4436, 1.442695
        %v4494 = vpow.pop %v4493
        %v4495 = vmul.f32 %v4437, 1.442695
        %v4496 = vpow.pop %v4495
        %v4497 = vmul.f32 %v4438, 1.442695
        %v4498 = vpow.pop %v4497
        %v4499 = vmul.f32 %v4439, 1.442695
        %v4500 = vpow.pop %v4499
        %v4501 = vmul.f32 %v4440, 1.442695
        %v4502 = vpow.pop %v4501
        %v4503 = vmul.f32 %v4441, 1.442695
        %v4504 = vpow.pop %v4503
        %v4505 = vmul.f32 %v4442, 1.442695
        %v4506 = vpow.pop %v4505
        %v4507 = vmul.f32 %v3957, %v4444
        %v4508 = vmul.f32 %v3959, %v4444
        %v4509 = vmul.f32 %v3961, %v4444
        %v4510 = vmul.f32 %v3963, %v4444
        %v4511 = vmul.f32 %v3965, %v4446
        %v4512 = vmul.f32 %v3967, %v4446
        %v4513 = vmul.f32 %v3969, %v4446
        %v4514 = vmul.f32 %v3971, %v4446
        %v4515 = vmul.f32 %v3973, %v4448
        %v4516 = vmul.f32 %v3975, %v4448
        %v4517 = vmul.f32 %v3977, %v4448
        %v4518 = vmul.f32 %v3979, %v4448
        %v4519 = vmul.f32 %v3981, %v4450
        %v4520 = vmul.f32 %v3983, %v4450
        %v4521 = vmul.f32 %v3985, %v4450
        %v4522 = vmul.f32 %v3987, %v4450
        %v4523 = vmul.f32 %v3989, %v4452
        %v4524 = vmul.f32 %v3991, %v4452
        %v4525 = vmul.f32 %v3993, %v4452
        %v4526 = vmul.f32 %v3995, %v4452
        %v4527 = vmul.f32 %v3997, %v4454
        %v4528 = vmul.f32 %v3999, %v4454
        %v4529 = vmul.f32 %v4001, %v4454
        %v4530 = vmul.f32 %v4003, %v4454
        %v4531 = vmul.f32 %v4005, %v4456
        %v4532 = vmul.f32 %v4007, %v4456
        %v4533 = vmul.f32 %v4009, %v4456
        %v4534 = vmul.f32 %v4011, %v4456
        %v4535 = vmul.f32 %v4013, %v4458
        %v4536 = vmul.f32 %v4015, %v4458
        %v4537 = vmul.f32 %v4017, %v4458
        %v4538 = vmul.f32 %v4019, %v4458
        %v4539 = vmul.f32 %v4021, %v4460
        %v4540 = vmul.f32 %v4023, %v4460
        %v4541 = vmul.f32 %v4025, %v4460
        %v4542 = vmul.f32 %v4027, %v4460
        %v4543 = vmul.f32 %v4029, %v4462
        %v4544 = vmul.f32 %v4031, %v4462
        %v4545 = vmul.f32 %v4033, %v4462
        %v4546 = vmul.f32 %v4035, %v4462
        %v4547 = vmul.f32 %v4037, %v4464
        %v4548 = vmul.f32 %v4039, %v4464
        %v4549 = vmul.f32 %v4041, %v4464
        %v4550 = vmul.f32 %v4043, %v4464
        %v4551 = vmul.f32 %v4045, %v4466
        %v4552 = vmul.f32 %v4047, %v4466
        %v4553 = vmul.f32 %v4049, %v4466
        %v4554 = vmul.f32 %v4051, %v4466
        %v4555 = vmul.f32 %v4053, %v4468
        %v4556 = vmul.f32 %v4055, %v4468
        %v4557 = vmul.f32 %v4057, %v4468
        %v4558 = vmul.f32 %v4059, %v4468
        %v4559 = vmul.f32 %v4061, %v4470
        %v4560 = vmul.f32 %v4063, %v4470
        %v4561 = vmul.f32 %v4065, %v4470
        %v4562 = vmul.f32 %v4067, %v4470
        %v4563 = vmul.f32 %v4069, %v4472
        %v4564 = vmul.f32 %v4071, %v4472
        %v4565 = vmul.f32 %v4073, %v4472
        %v4566 = vmul.f32 %v4075, %v4472
        %v4567 = vmul.f32 %v4077, %v4474
        %v4568 = vmul.f32 %v4079, %v4474
        %v4569 = vmul.f32 %v4081, %v4474
        %v4570 = vmul.f32 %v4083, %v4474
        %v4571 = vmul.f32 %v4085, %v4476
        %v4572 = vmul.f32 %v4087, %v4476
        %v4573 = vmul.f32 %v4089, %v4476
        %v4574 = vmul.f32 %v4091, %v4476
        %v4575 = vmul.f32 %v4093, %v4478
        %v4576 = vmul.f32 %v4095, %v4478
        %v4577 = vmul.f32 %v4097, %v4478
        %v4578 = vmul.f32 %v4099, %v4478
        %v4579 = vmul.f32 %v4101, %v4480
        %v4580 = vmul.f32 %v4103, %v4480
        %v4581 = vmul.f32 %v4105, %v4480
        %v4582 = vmul.f32 %v4107, %v4480
        %v4583 = vmul.f32 %v4109, %v4482
        %v4584 = vmul.f32 %v4111, %v4482
        %v4585 = vmul.f32 %v4113, %v4482
        %v4586 = vmul.f32 %v4115, %v4482
        %v4587 = vmul.f32 %v4117, %v4484
        %v4588 = vmul.f32 %v4119, %v4484
        %v4589 = vmul.f32 %v4121, %v4484
        %v4590 = vmul.f32 %v4123, %v4484
        %v4591 = vmul.f32 %v4125, %v4486
        %v4592 = vmul.f32 %v4127, %v4486
        %v4593 = vmul.f32 %v4129, %v4486
        %v4594 = vmul.f32 %v4131, %v4486
        %v4595 = vmul.f32 %v4133, %v4488
        %v4596 = vmul.f32 %v4135, %v4488
        %v4597 = vmul.f32 %v4137, %v4488
        %v4598 = vmul.f32 %v4139, %v4488
        %v4599 = vmul.f32 %v4141, %v4490
        %v4600 = vmul.f32 %v4143, %v4490
        %v4601 = vmul.f32 %v4145, %v4490
        %v4602 = vmul.f32 %v4147, %v4490
        %v4603 = vmul.f32 %v4149, %v4492
        %v4604 = vmul.f32 %v4151, %v4492
        %v4605 = vmul.f32 %v4153, %v4492
        %v4606 = vmul.f32 %v4155, %v4492
        %v4607 = vmul.f32 %v4157, %v4494
        %v4608 = vmul.f32 %v4159, %v4494
        %v4609 = vmul.f32 %v4161, %v4494
        %v4610 = vmul.f32 %v4163, %v4494
        %v4611 = vmul.f32 %v4165, %v4496
        %v4612 = vmul.f32 %v4167, %v4496
        %v4613 = vmul.f32 %v4169, %v4496
        %v4614 = vmul.f32 %v4171, %v4496
        %v4615 = vmul.f32 %v4173, %v4498
        %v4616 = vmul.f32 %v4175, %v4498
        %v4617 = vmul.f32 %v4177, %v4498
        %v4618 = vmul.f32 %v4179, %v4498
        %v4619 = vmul.f32 %v4181, %v4500
        %v4620 = vmul.f32 %v4183, %v4500
        %v4621 = vmul.f32 %v4185, %v4500
        %v4622 = vmul.f32 %v4187, %v4500
        %v4623 = vmul.f32 %v4189, %v4502
        %v4624 = vmul.f32 %v4191, %v4502
        %v4625 = vmul.f32 %v4193, %v4502
        %v4626 = vmul.f32 %v4195, %v4502
        %v4627 = vmul.f32 %v4197, %v4504
        %v4628 = vmul.f32 %v4199, %v4504
        %v4629 = vmul.f32 %v4201, %v4504
        %v4630 = vmul.f32 %v4203, %v4504
        %v4631 = vmul.f32 %v4205, %v4506
        %v4632 = vmul.f32 %v4207, %v4506
        %v4633 = vmul.f32 %v4209, %v4506
        %v4634 = vmul.f32 %v4211, %v4506
        %v4635 = vadd.f32 %v4507, %v4511
        %v4636 = vadd.f32 %v4635, %v4515
        %v4637 = vadd.f32 %v4636, %v4519
        %v4638 = vadd.f32 %v4637, %v4523
        %v4639 = vadd.f32 %v4638, %v4527
        %v4640 = vadd.f32 %v4639, %v4531
        %v4641 = vadd.f32 %v4640, %v4535
        %v4642 = vadd.f32 %v4641, %v4539
        %v4643 = vadd.f32 %v4642, %v4543
        %v4644 = vadd.f32 %v4643, %v4547
        %v4645 = vadd.f32 %v4644, %v4551
        %v4646 = vadd.f32 %v4645, %v4555
        %v4647 = vadd.f32 %v4646, %v4559
        %v4648 = vadd.f32 %v4647, %v4563
        %v4649 = vadd.f32 %v4648, %v4567
        %v4650 = vadd.f32 %v4649, %v4571
        %v4651 = vadd.f32 %v4650, %v4575
        %v4652 = vadd.f32 %v4651, %v4579
        %v4653 = vadd.f32 %v4652, %v4583
        %v4654 = vadd.f32 %v4653, %v4587
        %v4655 = vadd.f32 %v4654, %v4591
        %v4656 = vadd.f32 %v4655, %v4595
        %v4657 = vadd.f32 %v4656, %v4599
        %v4658 = vadd.f32 %v4657, %v4603
        %v4659 = vadd.f32 %v4658, %v4607
        %v4660 = vadd.f32 %v4659, %v4611
        %v4661 = vadd.f32 %v4660, %v4615
        %v4662 = vadd.f32 %v4661, %v4619
        %v4663 = vadd.f32 %v4662, %v4623
        %v4664 = vadd.f32 %v4663, %v4627
        %v4665 = vadd.f32 %v4664, %v4631
        %v4666 = vrot.slane %v4665, 4
        %v4667 = vadd.f32 %v4665, %v4666
        %v4668 = vrot.slane %v4667, 2
        %v4669 = vadd.f32 %v4667, %v4668
        %v4670 = vrot.slane %v4669, 1
        %v4671 = vadd.f32 %v4669, %v4670
        %v4672 = vadd.f32 %v4508, %v4512
        %v4673 = vadd.f32 %v4672, %v4516
        %v4674 = vadd.f32 %v4673, %v4520
        %v4675 = vadd.f32 %v4674, %v4524
        %v4676 = vadd.f32 %v4675, %v4528
        %v4677 = vadd.f32 %v4676, %v4532
        %v4678 = vadd.f32 %v4677, %v4536
        %v4679 = vadd.f32 %v4678, %v4540
        %v4680 = vadd.f32 %v4679, %v4544
        %v4681 = vadd.f32 %v4680, %v4548
        %v4682 = vadd.f32 %v4681, %v4552
        %v4683 = vadd.f32 %v4682, %v4556
        %v4684 = vadd.f32 %v4683, %v4560
        %v4685 = vadd.f32 %v4684, %v4564
        %v4686 = vadd.f32 %v4685, %v4568
        %v4687 = vadd.f32 %v4686, %v4572
        %v4688 = vadd.f32 %v4687, %v4576
        %v4689 = vadd.f32 %v4688, %v4580
        %v4690 = vadd.f32 %v4689, %v4584
        %v4691 = vadd.f32 %v4690, %v4588
        %v4692 = vadd.f32 %v4691, %v4592
        %v4693 = vadd.f32 %v4692, %v4596
        %v4694 = vadd.f32 %v4693, %v4600
        %v4695 = vadd.f32 %v4694, %v4604
        %v4696 = vadd.f32 %v4695, %v4608
        %v4697 = vadd.f32 %v4696, %v4612
        %v4698 = vadd.f32 %v4697, %v4616
        %v4699 = vadd.f32 %v4698, %v4620
        %v4700 = vadd.f32 %v4699, %v4624
        %v4701 = vadd.f32 %v4700, %v4628
        %v4702 = vadd.f32 %v4701, %v4632
        %v4703 = vrot.slane %v4702, 4
        %v4704 = vadd.f32 %v4702, %v4703
        %v4705 = vrot.slane %v4704, 2
        %v4706 = vadd.f32 %v4704, %v4705
        %v4707 = vrot.slane %v4706, 1
        %v4708 = vadd.f32 %v4706, %v4707
        %v4709 = vadd.f32 %v4509, %v4513
        %v4710 = vadd.f32 %v4709, %v4517
        %v4711 = vadd.f32 %v4710, %v4521
        %v4712 = vadd.f32 %v4711, %v4525
        %v4713 = vadd.f32 %v4712, %v4529
        %v4714 = vadd.f32 %v4713, %v4533
        %v4715 = vadd.f32 %v4714, %v4537
        %v4716 = vadd.f32 %v4715, %v4541
        %v4717 = vadd.f32 %v4716, %v4545
        %v4718 = vadd.f32 %v4717, %v4549
        %v4719 = vadd.f32 %v4718, %v4553
        %v4720 = vadd.f32 %v4719, %v4557
        %v4721 = vadd.f32 %v4720, %v4561
        %v4722 = vadd.f32 %v4721, %v4565
        %v4723 = vadd.f32 %v4722, %v4569
        %v4724 = vadd.f32 %v4723, %v4573
        %v4725 = vadd.f32 %v4724, %v4577
        %v4726 = vadd.f32 %v4725, %v4581
        %v4727 = vadd.f32 %v4726, %v4585
        %v4728 = vadd.f32 %v4727, %v4589
        %v4729 = vadd.f32 %v4728, %v4593
        %v4730 = vadd.f32 %v4729, %v4597
        %v4731 = vadd.f32 %v4730, %v4601
        %v4732 = vadd.f32 %v4731, %v4605
        %v4733 = vadd.f32 %v4732, %v4609
        %v4734 = vadd.f32 %v4733, %v4613
        %v4735 = vadd.f32 %v4734, %v4617
        %v4736 = vadd.f32 %v4735, %v4621
        %v4737 = vadd.f32 %v4736, %v4625
        %v4738 = vadd.f32 %v4737, %v4629
        %v4739 = vadd.f32 %v4738, %v4633
        %v4740 = vrot.slane %v4739, 4
        %v4741 = vadd.f32 %v4739, %v4740
        %v4742 = vrot.slane %v4741, 2
        %v4743 = vadd.f32 %v4741, %v4742
        %v4744 = vrot.slane %v4743, 1
        %v4745 = vadd.f32 %v4743, %v4744
        %v4746 = vadd.f32 %v4510, %v4514
        %v4747 = vadd.f32 %v4746, %v4518
        %v4748 = vadd.f32 %v4747, %v4522
        %v4749 = vadd.f32 %v4748, %v4526
        %v4750 = vadd.f32 %v4749, %v4530
        %v4751 = vadd.f32 %v4750, %v4534
        %v4752 = vadd.f32 %v4751, %v4538
        %v4753 = vadd.f32 %v4752, %v4542
        %v4754 = vadd.f32 %v4753, %v4546
        %v4755 = vadd.f32 %v4754, %v4550
        %v4756 = vadd.f32 %v4755, %v4554
        %v4757 = vadd.f32 %v4756, %v4558
        %v4758 = vadd.f32 %v4757, %v4562
        %v4759 = vadd.f32 %v4758, %v4566
        %v4760 = vadd.f32 %v4759, %v4570
        %v4761 = vadd.f32 %v4760, %v4574
        %v4762 = vadd.f32 %v4761, %v4578
        %v4763 = vadd.f32 %v4762, %v4582
        %v4764 = vadd.f32 %v4763, %v4586
        %v4765 = vadd.f32 %v4764, %v4590
        %v4766 = vadd.f32 %v4765, %v4594
        %v4767 = vadd.f32 %v4766, %v4598
        %v4768 = vadd.f32 %v4767, %v4602
        %v4769 = vadd.f32 %v4768, %v4606
        %v4770 = vadd.f32 %v4769, %v4610
        %v4771 = vadd.f32 %v4770, %v4614
        %v4772 = vadd.f32 %v4771, %v4618
        %v4773 = vadd.f32 %v4772, %v4622
        %v4774 = vadd.f32 %v4773, %v4626
        %v4775 = vadd.f32 %v4774, %v4630
        %v4776 = vadd.f32 %v4775, %v4634
        %v4777 = vrot.slane %v4776, 4
        %v4778 = vadd.f32 %v4776, %v4777
        %v4779 = vrot.slane %v4778, 2
        %v4780 = vadd.f32 %v4778, %v4779
        %v4781 = vrot.slane %v4780, 1
        %v4782 = vadd.f32 %v4780, %v4781
        %v4783 = vmin.f32 %v4671, %v4708
        %v4784 = vmin.f32 %v4745, %v4782
        %v4785 = vmin.f32 %v4783, %v4784
        %4786 = vmin.xlane.f32.xlu0 %v4785
        %v4787 = vpop.xlane.xlu0 %4786
        %s4788 = vtos %v4787
        %p4789 = scmp.lt.f32.partialorder %s4788, 1e-20
        // Predicated region
        $region61: #{_clip_loss_tiled.1} parent=31 // pred_check
          %p4790 = pneg %p4789
        $region62: #{_clip_loss_tiled.1} parent=31 // pred_check_branch
          %4792 = sbr.rel (%p4790) target = $region64
        $region63: #{_clip_loss_tiled.1} parent=31 // pred_region
          %v4793 = vmax.f32 %v3540, %v3544
          %v4794 = vmax.f32 %v4793, %v3548
          %v4795 = vmax.f32 %v4794, %v3552
          %v4796 = vmax.f32 %v4795, %v3556
          %v4797 = vmax.f32 %v4796, %v3560
          %v4798 = vmax.f32 %v4797, %v3564
          %v4799 = vmax.f32 %v4798, %v3568
          %v4800 = vmax.f32 %v4799, %v3572
          %v4801 = vmax.f32 %v4800, %v3576
          %v4802 = vmax.f32 %v4801, %v3580
          %v4803 = vmax.f32 %v4802, %v3584
          %v4804 = vmax.f32 %v4803, %v3588
          %v4805 = vmax.f32 %v4804, %v3592
          %v4806 = vmax.f32 %v4805, %v3596
          %v4807 = vmax.f32 %v4806, %v3600
          %v4808 = vmax.f32 %v4807, %v3604
          %v4809 = vmax.f32 %v4808, %v3608
          %v4810 = vmax.f32 %v4809, %v3612
          %v4811 = vmax.f32 %v4810, %v3616
          %v4812 = vmax.f32 %v4811, %v3620
          %v4813 = vmax.f32 %v4812, %v3624
          %v4814 = vmax.f32 %v4813, %v3628
          %v4815 = vmax.f32 %v4814, %v3632
          %v4816 = vmax.f32 %v4815, %v3636
          %v4817 = vmax.f32 %v4816, %v3640
          %v4818 = vmax.f32 %v4817, %v3644
          %v4819 = vmax.f32 %v4818, %v3648
          %v4820 = vmax.f32 %v4819, %v3652
          %v4821 = vmax.f32 %v4820, %v3656
          %v4822 = vmax.f32 %v4821, %v3660
          %v4823 = vmax.f32 %v4822, %v3664
          %v4824 = vrot.slane %v4823, 4
          %v4825 = vmax.f32 %v4823, %v4824
          %v4826 = vrot.slane %v4825, 2
          %v4827 = vmax.f32 %v4825, %v4826
          %v4828 = vrot.slane %v4827, 1
          %v4829 = vmax.f32 %v4827, %v4828
          %v4830 = vmax.f32 %v3541, %v3545
          %v4831 = vmax.f32 %v4830, %v3549
          %v4832 = vmax.f32 %v4831, %v3553
          %v4833 = vmax.f32 %v4832, %v3557
          %v4834 = vmax.f32 %v4833, %v3561
          %v4835 = vmax.f32 %v4834, %v3565
          %v4836 = vmax.f32 %v4835, %v3569
          %v4837 = vmax.f32 %v4836, %v3573
          %v4838 = vmax.f32 %v4837, %v3577
          %v4839 = vmax.f32 %v4838, %v3581
          %v4840 = vmax.f32 %v4839, %v3585
          %v4841 = vmax.f32 %v4840, %v3589
          %v4842 = vmax.f32 %v4841, %v3593
          %v4843 = vmax.f32 %v4842, %v3597
          %v4844 = vmax.f32 %v4843, %v3601
          %v4845 = vmax.f32 %v4844, %v3605
          %v4846 = vmax.f32 %v4845, %v3609
          %v4847 = vmax.f32 %v4846, %v3613
          %v4848 = vmax.f32 %v4847, %v3617
          %v4849 = vmax.f32 %v4848, %v3621
          %v4850 = vmax.f32 %v4849, %v3625
          %v4851 = vmax.f32 %v4850, %v3629
          %v4852 = vmax.f32 %v4851, %v3633
          %v4853 = vmax.f32 %v4852, %v3637
          %v4854 = vmax.f32 %v4853, %v3641
          %v4855 = vmax.f32 %v4854, %v3645
          %v4856 = vmax.f32 %v4855, %v3649
          %v4857 = vmax.f32 %v4856, %v3653
          %v4858 = vmax.f32 %v4857, %v3657
          %v4859 = vmax.f32 %v4858, %v3661
          %v4860 = vmax.f32 %v4859, %v3665
          %v4861 = vrot.slane %v4860, 4
          %v4862 = vmax.f32 %v4860, %v4861
          %v4863 = vrot.slane %v4862, 2
          %v4864 = vmax.f32 %v4862, %v4863
          %v4865 = vrot.slane %v4864, 1
          %v4866 = vmax.f32 %v4864, %v4865
          %v4867 = vmax.f32 %v3542, %v3546
          %v4868 = vmax.f32 %v4867, %v3550
          %v4869 = vmax.f32 %v4868, %v3554
          %v4870 = vmax.f32 %v4869, %v3558
          %v4871 = vmax.f32 %v4870, %v3562
          %v4872 = vmax.f32 %v4871, %v3566
          %v4873 = vmax.f32 %v4872, %v3570
          %v4874 = vmax.f32 %v4873, %v3574
          %v4875 = vmax.f32 %v4874, %v3578
          %v4876 = vmax.f32 %v4875, %v3582
          %v4877 = vmax.f32 %v4876, %v3586
          %v4878 = vmax.f32 %v4877, %v3590
          %v4879 = vmax.f32 %v4878, %v3594
          %v4880 = vmax.f32 %v4879, %v3598
          %v4881 = vmax.f32 %v4880, %v3602
          %v4882 = vmax.f32 %v4881, %v3606
          %v4883 = vmax.f32 %v4882, %v3610
          %v4884 = vmax.f32 %v4883, %v3614
          %v4885 = vmax.f32 %v4884, %v3618
          %v4886 = vmax.f32 %v4885, %v3622
          %v4887 = vmax.f32 %v4886, %v3626
          %v4888 = vmax.f32 %v4887, %v3630
          %v4889 = vmax.f32 %v4888, %v3634
          %v4890 = vmax.f32 %v4889, %v3638
          %v4891 = vmax.f32 %v4890, %v3642
          %v4892 = vmax.f32 %v4891, %v3646
          %v4893 = vmax.f32 %v4892, %v3650
          %v4894 = vmax.f32 %v4893, %v3654
          %v4895 = vmax.f32 %v4894, %v3658
          %v4896 = vmax.f32 %v4895, %v3662
          %v4897 = vmax.f32 %v4896, %v3666
          %v4898 = vrot.slane %v4897, 4
          %v4899 = vmax.f32 %v4897, %v4898
          %v4900 = vrot.slane %v4899, 2
          %v4901 = vmax.f32 %v4899, %v4900
          %v4902 = vrot.slane %v4901, 1
          %v4903 = vmax.f32 %v4901, %v4902
          %v4904 = vmax.f32 %v3543, %v3547
          %v4905 = vmax.f32 %v4904, %v3551
          %v4906 = vmax.f32 %v4905, %v3555
          %v4907 = vmax.f32 %v4906, %v3559
          %v4908 = vmax.f32 %v4907, %v3563
          %v4909 = vmax.f32 %v4908, %v3567
          %v4910 = vmax.f32 %v4909, %v3571
          %v4911 = vmax.f32 %v4910, %v3575
          %v4912 = vmax.f32 %v4911, %v3579
          %v4913 = vmax.f32 %v4912, %v3583
          %v4914 = vmax.f32 %v4913, %v3587
          %v4915 = vmax.f32 %v4914, %v3591
          %v4916 = vmax.f32 %v4915, %v3595
          %v4917 = vmax.f32 %v4916, %v3599
          %v4918 = vmax.f32 %v4917, %v3603
          %v4919 = vmax.f32 %v4918, %v3607
          %v4920 = vmax.f32 %v4919, %v3611
          %v4921 = vmax.f32 %v4920, %v3615
          %v4922 = vmax.f32 %v4921, %v3619
          %v4923 = vmax.f32 %v4922, %v3623
          %v4924 = vmax.f32 %v4923, %v3627
          %v4925 = vmax.f32 %v4924, %v3631
          %v4926 = vmax.f32 %v4925, %v3635
          %v4927 = vmax.f32 %v4926, %v3639
          %v4928 = vmax.f32 %v4927, %v3643
          %v4929 = vmax.f32 %v4928, %v3647
          %v4930 = vmax.f32 %v4929, %v3651
          %v4931 = vmax.f32 %v4930, %v3655
          %v4932 = vmax.f32 %v4931, %v3659
          %v4933 = vmax.f32 %v4932, %v3663
          %v4934 = vmax.f32 %v4933, %v3667
          %v4935 = vrot.slane %v4934, 4
          %v4936 = vmax.f32 %v4934, %v4935
          %v4937 = vrot.slane %v4936, 2
          %v4938 = vmax.f32 %v4936, %v4937
          %v4939 = vrot.slane %v4938, 1
          %v4940 = vmax.f32 %v4938, %v4939
          %v4941 = vsub.f32 %v3540, %v4829
          %v4942 = vsub.f32 %v3541, %v4866
          %v4943 = vsub.f32 %v3542, %v4903
          %v4944 = vsub.f32 %v3543, %v4940
          %v4945 = vsub.f32 %v3544, %v4829
          %v4946 = vsub.f32 %v3545, %v4866
          %v4947 = vsub.f32 %v3546, %v4903
          %v4948 = vsub.f32 %v3547, %v4940
          %v4949 = vsub.f32 %v3548, %v4829
          %v4950 = vsub.f32 %v3549, %v4866
          %v4951 = vsub.f32 %v3550, %v4903
          %v4952 = vsub.f32 %v3551, %v4940
          %v4953 = vsub.f32 %v3552, %v4829
          %v4954 = vsub.f32 %v3553, %v4866
          %v4955 = vsub.f32 %v3554, %v4903
          %v4956 = vsub.f32 %v3555, %v4940
          %v4957 = vsub.f32 %v3556, %v4829
          %v4958 = vsub.f32 %v3557, %v4866
          %v4959 = vsub.f32 %v3558, %v4903
          %v4960 = vsub.f32 %v3559, %v4940
          %v4961 = vsub.f32 %v3560, %v4829
          %v4962 = vsub.f32 %v3561, %v4866
          %v4963 = vsub.f32 %v3562, %v4903
          %v4964 = vsub.f32 %v3563, %v4940
          %v4965 = vsub.f32 %v3564, %v4829
          %v4966 = vsub.f32 %v3565, %v4866
          %v4967 = vsub.f32 %v3566, %v4903
          %v4968 = vsub.f32 %v3567, %v4940
          %v4969 = vsub.f32 %v3568, %v4829
          %v4970 = vsub.f32 %v3569, %v4866
          %v4971 = vsub.f32 %v3570, %v4903
          %v4972 = vsub.f32 %v3571, %v4940
          %v4973 = vsub.f32 %v3572, %v4829
          %v4974 = vsub.f32 %v3573, %v4866
          %v4975 = vsub.f32 %v3574, %v4903
          %v4976 = vsub.f32 %v3575, %v4940
          %v4977 = vsub.f32 %v3576, %v4829
          %v4978 = vsub.f32 %v3577, %v4866
          %v4979 = vsub.f32 %v3578, %v4903
          %v4980 = vsub.f32 %v3579, %v4940
          %v4981 = vsub.f32 %v3580, %v4829
          %v4982 = vsub.f32 %v3581, %v4866
          %v4983 = vsub.f32 %v3582, %v4903
          %v4984 = vsub.f32 %v3583, %v4940
          %v4985 = vsub.f32 %v3584, %v4829
          %v4986 = vsub.f32 %v3585, %v4866
          %v4987 = vsub.f32 %v3586, %v4903
          %v4988 = vsub.f32 %v3587, %v4940
          %v4989 = vsub.f32 %v3588, %v4829
          %v4990 = vsub.f32 %v3589, %v4866
          %v4991 = vsub.f32 %v3590, %v4903
          %v4992 = vsub.f32 %v3591, %v4940
          %v4993 = vsub.f32 %v3592, %v4829
          %v4994 = vsub.f32 %v3593, %v4866
          %v4995 = vsub.f32 %v3594, %v4903
          %v4996 = vsub.f32 %v3595, %v4940
          %v4997 = vsub.f32 %v3596, %v4829
          %v4998 = vsub.f32 %v3597, %v4866
          %v4999 = vsub.f32 %v3598, %v4903
          %v5000 = vsub.f32 %v3599, %v4940
          %v5001 = vsub.f32 %v3600, %v4829
          %v5002 = vsub.f32 %v3601, %v4866
          %v5003 = vsub.f32 %v3602, %v4903
          %v5004 = vsub.f32 %v3603, %v4940
          %v5005 = vsub.f32 %v3604, %v4829
          %v5006 = vsub.f32 %v3605, %v4866
          %v5007 = vsub.f32 %v3606, %v4903
          %v5008 = vsub.f32 %v3607, %v4940
          %v5009 = vsub.f32 %v3608, %v4829
          %v5010 = vsub.f32 %v3609, %v4866
          %v5011 = vsub.f32 %v3610, %v4903
          %v5012 = vsub.f32 %v3611, %v4940
          %v5013 = vsub.f32 %v3612, %v4829
          %v5014 = vsub.f32 %v3613, %v4866
          %v5015 = vsub.f32 %v3614, %v4903
          %v5016 = vsub.f32 %v3615, %v4940
          %v5017 = vsub.f32 %v3616, %v4829
          %v5018 = vsub.f32 %v3617, %v4866
          %v5019 = vsub.f32 %v3618, %v4903
          %v5020 = vsub.f32 %v3619, %v4940
          %v5021 = vsub.f32 %v3620, %v4829
          %v5022 = vsub.f32 %v3621, %v4866
          %v5023 = vsub.f32 %v3622, %v4903
          %v5024 = vsub.f32 %v3623, %v4940
          %v5025 = vsub.f32 %v3624, %v4829
          %v5026 = vsub.f32 %v3625, %v4866
          %v5027 = vsub.f32 %v3626, %v4903
          %v5028 = vsub.f32 %v3627, %v4940
          %v5029 = vsub.f32 %v3628, %v4829
          %v5030 = vsub.f32 %v3629, %v4866
          %v5031 = vsub.f32 %v3630, %v4903
          %v5032 = vsub.f32 %v3631, %v4940
          %v5033 = vsub.f32 %v3632, %v4829
          %v5034 = vsub.f32 %v3633, %v4866
          %v5035 = vsub.f32 %v3634, %v4903
          %v5036 = vsub.f32 %v3635, %v4940
          %v5037 = vsub.f32 %v3636, %v4829
          %v5038 = vsub.f32 %v3637, %v4866
          %v5039 = vsub.f32 %v3638, %v4903
          %v5040 = vsub.f32 %v3639, %v4940
          %v5041 = vsub.f32 %v3640, %v4829
          %v5042 = vsub.f32 %v3641, %v4866
          %v5043 = vsub.f32 %v3642, %v4903
          %v5044 = vsub.f32 %v3643, %v4940
          %v5045 = vsub.f32 %v3644, %v4829
          %v5046 = vsub.f32 %v3645, %v4866
          %v5047 = vsub.f32 %v3646, %v4903
          %v5048 = vsub.f32 %v3647, %v4940
          %v5049 = vsub.f32 %v3648, %v4829
          %v5050 = vsub.f32 %v3649, %v4866
          %v5051 = vsub.f32 %v3650, %v4903
          %v5052 = vsub.f32 %v3651, %v4940
          %v5053 = vsub.f32 %v3652, %v4829
          %v5054 = vsub.f32 %v3653, %v4866
          %v5055 = vsub.f32 %v3654, %v4903
          %v5056 = vsub.f32 %v3655, %v4940
          %v5057 = vsub.f32 %v3656, %v4829
          %v5058 = vsub.f32 %v3657, %v4866
          %v5059 = vsub.f32 %v3658, %v4903
          %v5060 = vsub.f32 %v3659, %v4940
          %v5061 = vsub.f32 %v3660, %v4829
          %v5062 = vsub.f32 %v3661, %v4866
          %v5063 = vsub.f32 %v3662, %v4903
          %v5064 = vsub.f32 %v3663, %v4940
          %v5065 = vsub.f32 %v3664, %v4829
          %v5066 = vsub.f32 %v3665, %v4866
          %v5067 = vsub.f32 %v3666, %v4903
          %v5068 = vsub.f32 %v3667, %v4940
          %v5069 = vmul.f32 %v4941, 1.442695
          %v5070 = vpow.pop %v5069
          %v5071 = vmul.f32 %v4942, 1.442695
          %v5072 = vpow.pop %v5071
          %v5073 = vmul.f32 %v4943, 1.442695
          %v5074 = vpow.pop %v5073
          %v5075 = vmul.f32 %v4944, 1.442695
          %v5076 = vpow.pop %v5075
          %v5077 = vmul.f32 %v4945, 1.442695
          %v5078 = vpow.pop %v5077
          %v5079 = vmul.f32 %v4946, 1.442695
          %v5080 = vpow.pop %v5079
          %v5081 = vmul.f32 %v4947, 1.442695
          %v5082 = vpow.pop %v5081
          %v5083 = vmul.f32 %v4948, 1.442695
          %v5084 = vpow.pop %v5083
          %v5085 = vmul.f32 %v4949, 1.442695
          %v5086 = vpow.pop %v5085
          %v5087 = vmul.f32 %v4950, 1.442695
          %v5088 = vpow.pop %v5087
          %v5089 = vmul.f32 %v4951, 1.442695
          %v5090 = vpow.pop %v5089
          %v5091 = vmul.f32 %v4952, 1.442695
          %v5092 = vpow.pop %v5091
          %v5093 = vmul.f32 %v4953, 1.442695
          %v5094 = vpow.pop %v5093
          %v5095 = vmul.f32 %v4954, 1.442695
          %v5096 = vpow.pop %v5095
          %v5097 = vmul.f32 %v4955, 1.442695
          %v5098 = vpow.pop %v5097
          %v5099 = vmul.f32 %v4956, 1.442695
          %v5100 = vpow.pop %v5099
          %v5101 = vmul.f32 %v4957, 1.442695
          %v5102 = vpow.pop %v5101
          %v5103 = vmul.f32 %v4958, 1.442695
          %v5104 = vpow.pop %v5103
          %v5105 = vmul.f32 %v4959, 1.442695
          %v5106 = vpow.pop %v5105
          %v5107 = vmul.f32 %v4960, 1.442695
          %v5108 = vpow.pop %v5107
          %v5109 = vmul.f32 %v4961, 1.442695
          %v5110 = vpow.pop %v5109
          %v5111 = vmul.f32 %v4962, 1.442695
          %v5112 = vpow.pop %v5111
          %v5113 = vmul.f32 %v4963, 1.442695
          %v5114 = vpow.pop %v5113
          %v5115 = vmul.f32 %v4964, 1.442695
          %v5116 = vpow.pop %v5115
          %v5117 = vmul.f32 %v4965, 1.442695
          %v5118 = vpow.pop %v5117
          %v5119 = vmul.f32 %v4966, 1.442695
          %v5120 = vpow.pop %v5119
          %v5121 = vmul.f32 %v4967, 1.442695
          %v5122 = vpow.pop %v5121
          %v5123 = vmul.f32 %v4968, 1.442695
          %v5124 = vpow.pop %v5123
          %v5125 = vmul.f32 %v4969, 1.442695
          %v5126 = vpow.pop %v5125
          %v5127 = vmul.f32 %v4970, 1.442695
          %v5128 = vpow.pop %v5127
          %v5129 = vmul.f32 %v4971, 1.442695
          %v5130 = vpow.pop %v5129
          %v5131 = vmul.f32 %v4972, 1.442695
          %v5132 = vpow.pop %v5131
          %v5133 = vmul.f32 %v4973, 1.442695
          %v5134 = vpow.pop %v5133
          %v5135 = vmul.f32 %v4974, 1.442695
          %v5136 = vpow.pop %v5135
          %v5137 = vmul.f32 %v4975, 1.442695
          %v5138 = vpow.pop %v5137
          %v5139 = vmul.f32 %v4976, 1.442695
          %v5140 = vpow.pop %v5139
          %v5141 = vmul.f32 %v4977, 1.442695
          %v5142 = vpow.pop %v5141
          %v5143 = vmul.f32 %v4978, 1.442695
          %v5144 = vpow.pop %v5143
          %v5145 = vmul.f32 %v4979, 1.442695
          %v5146 = vpow.pop %v5145
          %v5147 = vmul.f32 %v4980, 1.442695
          %v5148 = vpow.pop %v5147
          %v5149 = vmul.f32 %v4981, 1.442695
          %v5150 = vpow.pop %v5149
          %v5151 = vmul.f32 %v4982, 1.442695
          %v5152 = vpow.pop %v5151
          %v5153 = vmul.f32 %v4983, 1.442695
          %v5154 = vpow.pop %v5153
          %v5155 = vmul.f32 %v4984, 1.442695
          %v5156 = vpow.pop %v5155
          %v5157 = vmul.f32 %v4985, 1.442695
          %v5158 = vpow.pop %v5157
          %v5159 = vmul.f32 %v4986, 1.442695
          %v5160 = vpow.pop %v5159
          %v5161 = vmul.f32 %v4987, 1.442695
          %v5162 = vpow.pop %v5161
          %v5163 = vmul.f32 %v4988, 1.442695
          %v5164 = vpow.pop %v5163
          %v5165 = vmul.f32 %v4989, 1.442695
          %v5166 = vpow.pop %v5165
          %v5167 = vmul.f32 %v4990, 1.442695
          %v5168 = vpow.pop %v5167
          %v5169 = vmul.f32 %v4991, 1.442695
          %v5170 = vpow.pop %v5169
          %v5171 = vmul.f32 %v4992, 1.442695
          %v5172 = vpow.pop %v5171
          %v5173 = vmul.f32 %v4993, 1.442695
          %v5174 = vpow.pop %v5173
          %v5175 = vmul.f32 %v4994, 1.442695
          %v5176 = vpow.pop %v5175
          %v5177 = vmul.f32 %v4995, 1.442695
          %v5178 = vpow.pop %v5177
          %v5179 = vmul.f32 %v4996, 1.442695
          %v5180 = vpow.pop %v5179
          %v5181 = vmul.f32 %v4997, 1.442695
          %v5182 = vpow.pop %v5181
          %v5183 = vmul.f32 %v4998, 1.442695
          %v5184 = vpow.pop %v5183
          %v5185 = vmul.f32 %v4999, 1.442695
          %v5186 = vpow.pop %v5185
          %v5187 = vmul.f32 %v5000, 1.442695
          %v5188 = vpow.pop %v5187
          %v5189 = vmul.f32 %v5001, 1.442695
          %v5190 = vpow.pop %v5189
          %v5191 = vmul.f32 %v5002, 1.442695
          %v5192 = vpow.pop %v5191
          %v5193 = vmul.f32 %v5003, 1.442695
          %v5194 = vpow.pop %v5193
          %v5195 = vmul.f32 %v5004, 1.442695
          %v5196 = vpow.pop %v5195
          %v5197 = vmul.f32 %v5005, 1.442695
          %v5198 = vpow.pop %v5197
          %v5199 = vmul.f32 %v5006, 1.442695
          %v5200 = vpow.pop %v5199
          %v5201 = vmul.f32 %v5007, 1.442695
          %v5202 = vpow.pop %v5201
          %v5203 = vmul.f32 %v5008, 1.442695
          %v5204 = vpow.pop %v5203
          %v5205 = vmul.f32 %v5009, 1.442695
          %v5206 = vpow.pop %v5205
          %v5207 = vmul.f32 %v5010, 1.442695
          %v5208 = vpow.pop %v5207
          %v5209 = vmul.f32 %v5011, 1.442695
          %v5210 = vpow.pop %v5209
          %v5211 = vmul.f32 %v5012, 1.442695
          %v5212 = vpow.pop %v5211
          %v5213 = vmul.f32 %v5013, 1.442695
          %v5214 = vpow.pop %v5213
          %v5215 = vmul.f32 %v5014, 1.442695
          %v5216 = vpow.pop %v5215
          %v5217 = vmul.f32 %v5015, 1.442695
          %v5218 = vpow.pop %v5217
          %v5219 = vmul.f32 %v5016, 1.442695
          %v5220 = vpow.pop %v5219
          %v5221 = vmul.f32 %v5017, 1.442695
          %v5222 = vpow.pop %v5221
          %v5223 = vmul.f32 %v5018, 1.442695
          %v5224 = vpow.pop %v5223
          %v5225 = vmul.f32 %v5019, 1.442695
          %v5226 = vpow.pop %v5225
          %v5227 = vmul.f32 %v5020, 1.442695
          %v5228 = vpow.pop %v5227
          %v5229 = vmul.f32 %v5021, 1.442695
          %v5230 = vpow.pop %v5229
          %v5231 = vmul.f32 %v5022, 1.442695
          %v5232 = vpow.pop %v5231
          %v5233 = vmul.f32 %v5023, 1.442695
          %v5234 = vpow.pop %v5233
          %v5235 = vmul.f32 %v5024, 1.442695
          %v5236 = vpow.pop %v5235
          %v5237 = vmul.f32 %v5025, 1.442695
          %v5238 = vpow.pop %v5237
          %v5239 = vmul.f32 %v5026, 1.442695
          %v5240 = vpow.pop %v5239
          %v5241 = vmul.f32 %v5027, 1.442695
          %v5242 = vpow.pop %v5241
          %v5243 = vmul.f32 %v5028, 1.442695
          %v5244 = vpow.pop %v5243
          %v5245 = vmul.f32 %v5029, 1.442695
          %v5246 = vpow.pop %v5245
          %v5247 = vmul.f32 %v5030, 1.442695
          %v5248 = vpow.pop %v5247
          %v5249 = vmul.f32 %v5031, 1.442695
          %v5250 = vpow.pop %v5249
          %v5251 = vmul.f32 %v5032, 1.442695
          %v5252 = vpow.pop %v5251
          %v5253 = vmul.f32 %v5033, 1.442695
          %v5254 = vpow.pop %v5253
          %v5255 = vmul.f32 %v5034, 1.442695
          %v5256 = vpow.pop %v5255
          %v5257 = vmul.f32 %v5035, 1.442695
          %v5258 = vpow.pop %v5257
          %v5259 = vmul.f32 %v5036, 1.442695
          %v5260 = vpow.pop %v5259
          %v5261 = vmul.f32 %v5037, 1.442695
          %v5262 = vpow.pop %v5261
          %v5263 = vmul.f32 %v5038, 1.442695
          %v5264 = vpow.pop %v5263
          %v5265 = vmul.f32 %v5039, 1.442695
          %v5266 = vpow.pop %v5265
          %v5267 = vmul.f32 %v5040, 1.442695
          %v5268 = vpow.pop %v5267
          %v5269 = vmul.f32 %v5041, 1.442695
          %v5270 = vpow.pop %v5269
          %v5271 = vmul.f32 %v5042, 1.442695
          %v5272 = vpow.pop %v5271
          %v5273 = vmul.f32 %v5043, 1.442695
          %v5274 = vpow.pop %v5273
          %v5275 = vmul.f32 %v5044, 1.442695
          %v5276 = vpow.pop %v5275
          %v5277 = vmul.f32 %v5045, 1.442695
          %v5278 = vpow.pop %v5277
          %v5279 = vmul.f32 %v5046, 1.442695
          %v5280 = vpow.pop %v5279
          %v5281 = vmul.f32 %v5047, 1.442695
          %v5282 = vpow.pop %v5281
          %v5283 = vmul.f32 %v5048, 1.442695
          %v5284 = vpow.pop %v5283
          %v5285 = vmul.f32 %v5049, 1.442695
          %v5286 = vpow.pop %v5285
          %v5287 = vmul.f32 %v5050, 1.442695
          %v5288 = vpow.pop %v5287
          %v5289 = vmul.f32 %v5051, 1.442695
          %v5290 = vpow.pop %v5289
          %v5291 = vmul.f32 %v5052, 1.442695
          %v5292 = vpow.pop %v5291
          %v5293 = vmul.f32 %v5053, 1.442695
          %v5294 = vpow.pop %v5293
          %v5295 = vmul.f32 %v5054, 1.442695
          %v5296 = vpow.pop %v5295
          %v5297 = vmul.f32 %v5055, 1.442695
          %v5298 = vpow.pop %v5297
          %v5299 = vmul.f32 %v5056, 1.442695
          %v5300 = vpow.pop %v5299
          %v5301 = vmul.f32 %v5057, 1.442695
          %v5302 = vpow.pop %v5301
          %v5303 = vmul.f32 %v5058, 1.442695
          %v5304 = vpow.pop %v5303
          %v5305 = vmul.f32 %v5059, 1.442695
          %v5306 = vpow.pop %v5305
          %v5307 = vmul.f32 %v5060, 1.442695
          %v5308 = vpow.pop %v5307
          %v5309 = vmul.f32 %v5061, 1.442695
          %v5310 = vpow.pop %v5309
          %v5311 = vmul.f32 %v5062, 1.442695
          %v5312 = vpow.pop %v5311
          %v5313 = vmul.f32 %v5063, 1.442695
          %v5314 = vpow.pop %v5313
          %v5315 = vmul.f32 %v5064, 1.442695
          %v5316 = vpow.pop %v5315
          %v5317 = vmul.f32 %v5065, 1.442695
          %v5318 = vpow.pop %v5317
          %v5319 = vmul.f32 %v5066, 1.442695
          %v5320 = vpow.pop %v5319
          %v5321 = vmul.f32 %v5067, 1.442695
          %v5322 = vpow.pop %v5321
          %v5323 = vmul.f32 %v5068, 1.442695
          %v5324 = vpow.pop %v5323
          %v5325 = vadd.f32 %v5070, %v5078
          %v5326 = vadd.f32 %v5325, %v5086
          %v5327 = vadd.f32 %v5326, %v5094
          %v5328 = vadd.f32 %v5327, %v5102
          %v5329 = vadd.f32 %v5328, %v5110
          %v5330 = vadd.f32 %v5329, %v5118
          %v5331 = vadd.f32 %v5330, %v5126
          %v5332 = vadd.f32 %v5331, %v5134
          %v5333 = vadd.f32 %v5332, %v5142
          %v5334 = vadd.f32 %v5333, %v5150
          %v5335 = vadd.f32 %v5334, %v5158
          %v5336 = vadd.f32 %v5335, %v5166
          %v5337 = vadd.f32 %v5336, %v5174
          %v5338 = vadd.f32 %v5337, %v5182
          %v5339 = vadd.f32 %v5338, %v5190
          %v5340 = vadd.f32 %v5339, %v5198
          %v5341 = vadd.f32 %v5340, %v5206
          %v5342 = vadd.f32 %v5341, %v5214
          %v5343 = vadd.f32 %v5342, %v5222
          %v5344 = vadd.f32 %v5343, %v5230
          %v5345 = vadd.f32 %v5344, %v5238
          %v5346 = vadd.f32 %v5345, %v5246
          %v5347 = vadd.f32 %v5346, %v5254
          %v5348 = vadd.f32 %v5347, %v5262
          %v5349 = vadd.f32 %v5348, %v5270
          %v5350 = vadd.f32 %v5349, %v5278
          %v5351 = vadd.f32 %v5350, %v5286
          %v5352 = vadd.f32 %v5351, %v5294
          %v5353 = vadd.f32 %v5352, %v5302
          %v5354 = vadd.f32 %v5353, %v5310
          %v5355 = vadd.f32 %v5354, %v5318
          %v5356 = vrot.slane %v5355, 4
          %v5357 = vadd.f32 %v5355, %v5356
          %v5358 = vrot.slane %v5357, 2
          %v5359 = vadd.f32 %v5357, %v5358
          %v5360 = vrot.slane %v5359, 1
          %v5361 = vadd.f32 %v5359, %v5360
          %v5362 = vadd.f32 %v5072, %v5080
          %v5363 = vadd.f32 %v5362, %v5088
          %v5364 = vadd.f32 %v5363, %v5096
          %v5365 = vadd.f32 %v5364, %v5104
          %v5366 = vadd.f32 %v5365, %v5112
          %v5367 = vadd.f32 %v5366, %v5120
          %v5368 = vadd.f32 %v5367, %v5128
          %v5369 = vadd.f32 %v5368, %v5136
          %v5370 = vadd.f32 %v5369, %v5144
          %v5371 = vadd.f32 %v5370, %v5152
          %v5372 = vadd.f32 %v5371, %v5160
          %v5373 = vadd.f32 %v5372, %v5168
          %v5374 = vadd.f32 %v5373, %v5176
          %v5375 = vadd.f32 %v5374, %v5184
          %v5376 = vadd.f32 %v5375, %v5192
          %v5377 = vadd.f32 %v5376, %v5200
          %v5378 = vadd.f32 %v5377, %v5208
          %v5379 = vadd.f32 %v5378, %v5216
          %v5380 = vadd.f32 %v5379, %v5224
          %v5381 = vadd.f32 %v5380, %v5232
          %v5382 = vadd.f32 %v5381, %v5240
          %v5383 = vadd.f32 %v5382, %v5248
          %v5384 = vadd.f32 %v5383, %v5256
          %v5385 = vadd.f32 %v5384, %v5264
          %v5386 = vadd.f32 %v5385, %v5272
          %v5387 = vadd.f32 %v5386, %v5280
          %v5388 = vadd.f32 %v5387, %v5288
          %v5389 = vadd.f32 %v5388, %v5296
          %v5390 = vadd.f32 %v5389, %v5304
          %v5391 = vadd.f32 %v5390, %v5312
          %v5392 = vadd.f32 %v5391, %v5320
          %v5393 = vrot.slane %v5392, 4
          %v5394 = vadd.f32 %v5392, %v5393
          %v5395 = vrot.slane %v5394, 2
          %v5396 = vadd.f32 %v5394, %v5395
          %v5397 = vrot.slane %v5396, 1
          %v5398 = vadd.f32 %v5396, %v5397
          %v5399 = vadd.f32 %v5074, %v5082
          %v5400 = vadd.f32 %v5399, %v5090
          %v5401 = vadd.f32 %v5400, %v5098
          %v5402 = vadd.f32 %v5401, %v5106
          %v5403 = vadd.f32 %v5402, %v5114
          %v5404 = vadd.f32 %v5403, %v5122
          %v5405 = vadd.f32 %v5404, %v5130
          %v5406 = vadd.f32 %v5405, %v5138
          %v5407 = vadd.f32 %v5406, %v5146
          %v5408 = vadd.f32 %v5407, %v5154
          %v5409 = vadd.f32 %v5408, %v5162
          %v5410 = vadd.f32 %v5409, %v5170
          %v5411 = vadd.f32 %v5410, %v5178
          %v5412 = vadd.f32 %v5411, %v5186
          %v5413 = vadd.f32 %v5412, %v5194
          %v5414 = vadd.f32 %v5413, %v5202
          %v5415 = vadd.f32 %v5414, %v5210
          %v5416 = vadd.f32 %v5415, %v5218
          %v5417 = vadd.f32 %v5416, %v5226
          %v5418 = vadd.f32 %v5417, %v5234
          %v5419 = vadd.f32 %v5418, %v5242
          %v5420 = vadd.f32 %v5419, %v5250
          %v5421 = vadd.f32 %v5420, %v5258
          %v5422 = vadd.f32 %v5421, %v5266
          %v5423 = vadd.f32 %v5422, %v5274
          %v5424 = vadd.f32 %v5423, %v5282
          %v5425 = vadd.f32 %v5424, %v5290
          %v5426 = vadd.f32 %v5425, %v5298
          %v5427 = vadd.f32 %v5426, %v5306
          %v5428 = vadd.f32 %v5427, %v5314
          %v5429 = vadd.f32 %v5428, %v5322
          %v5430 = vrot.slane %v5429, 4
          %v5431 = vadd.f32 %v5429, %v5430
          %v5432 = vrot.slane %v5431, 2
          %v5433 = vadd.f32 %v5431, %v5432
          %v5434 = vrot.slane %v5433, 1
          %v5435 = vadd.f32 %v5433, %v5434
          %v5436 = vadd.f32 %v5076, %v5084
          %v5437 = vadd.f32 %v5436, %v5092
          %v5438 = vadd.f32 %v5437, %v5100
          %v5439 = vadd.f32 %v5438, %v5108
          %v5440 = vadd.f32 %v5439, %v5116
          %v5441 = vadd.f32 %v5440, %v5124
          %v5442 = vadd.f32 %v5441, %v5132
          %v5443 = vadd.f32 %v5442, %v5140
          %v5444 = vadd.f32 %v5443, %v5148
          %v5445 = vadd.f32 %v5444, %v5156
          %v5446 = vadd.f32 %v5445, %v5164
          %v5447 = vadd.f32 %v5446, %v5172
          %v5448 = vadd.f32 %v5447, %v5180
          %v5449 = vadd.f32 %v5448, %v5188
          %v5450 = vadd.f32 %v5449, %v5196
          %v5451 = vadd.f32 %v5450, %v5204
          %v5452 = vadd.f32 %v5451, %v5212
          %v5453 = vadd.f32 %v5452, %v5220
          %v5454 = vadd.f32 %v5453, %v5228
          %v5455 = vadd.f32 %v5454, %v5236
          %v5456 = vadd.f32 %v5455, %v5244
          %v5457 = vadd.f32 %v5456, %v5252
          %v5458 = vadd.f32 %v5457, %v5260
          %v5459 = vadd.f32 %v5458, %v5268
          %v5460 = vadd.f32 %v5459, %v5276
          %v5461 = vadd.f32 %v5460, %v5284
          %v5462 = vadd.f32 %v5461, %v5292
          %v5463 = vadd.f32 %v5462, %v5300
          %v5464 = vadd.f32 %v5463, %v5308
          %v5465 = vadd.f32 %v5464, %v5316
          %v5466 = vadd.f32 %v5465, %v5324
          %v5467 = vrot.slane %v5466, 4
          %v5468 = vadd.f32 %v5466, %v5467
          %v5469 = vrot.slane %v5468, 2
          %v5470 = vadd.f32 %v5468, %v5469
          %v5471 = vrot.slane %v5470, 1
          %v5472 = vadd.f32 %v5470, %v5471
          %v5477 = vrot.slane %v5398, 7
          %v5478 = vrot.slane %v5435, 6
          %v5479 = vrot.slane %v5472, 5
          %vm5480 = vcmask 1040384
          %v5481 = vsel %vm5480, %v5361, %v5477
          %vm5482 = vcmask 1042434
          %v5483 = vsel %vm5482, %v5478, %v5479
          %vm5484 = vcmask 1041408
          %v5485 = vsel %vm5484, %v5481, %v5483
          %v5487 = vlaneseq
          %vm5488 = vcmp.ge.s32.totalorder %v5487, 0
          %vm5489 = vcmp.lt.s32.totalorder %v5487, 512
          %vm5490 = vmand %vm5488, %vm5489
          %5491 = vst.msk [vmem:[%s735] sm:$0xf] %vm5490, %v5485
          %v5496 = vrot.slane %v4866, 7
          %v5497 = vrot.slane %v4903, 6
          %v5498 = vrot.slane %v4940, 5
          %v5499 = vsel %vm5480, %v4829, %v5496
          %v5500 = vsel %vm5482, %v5497, %v5498
          %v5501 = vsel %vm5484, %v5499, %v5500
          %5503 = vst.msk [vmem:[%s726] sm:$0xf] %vm5490, %v5501
        $region64: #{_clip_loss_tiled.1} parent=31 // pred_fallthru
          _
        %p5504 = pneg %p4789
        // Predicated region
        $region65: #{_clip_loss_tiled.1} parent=31 // pred_check
          _
        $region66: #{_clip_loss_tiled.1} parent=31 // pred_check_branch
          %5506 = sbr.rel (%p4789) target = $region68
        $region67: #{_clip_loss_tiled.1} parent=31 // pred_region
          %v5507 = vlaneseq
          %vm5508 = vcmp.ge.s32.totalorder %v5507, 0
          %vm5509 = vcmp.lt.s32.totalorder %v5507, 512
          %vm5510 = vmand %vm5508, %vm5509
          %5511 = vst.msk [vmem:[%s726] sm:$0xf] %vm5510, %v4410
          %v5516 = vrot.slane %v4708, 7
          %v5517 = vrot.slane %v4745, 6
          %v5518 = vrot.slane %v4782, 5
          %vm5519 = vcmask 1040384
          %v5520 = vsel %vm5519, %v4671, %v5516
          %vm5521 = vcmask 1042434
          %v5522 = vsel %vm5521, %v5517, %v5518
          %vm5523 = vcmask 1041408
          %v5524 = vsel %vm5523, %v5520, %v5522
          %5526 = vst.msk [vmem:[%s735] sm:$0xf] %vm5510, %v5524
        $region68: #{_clip_loss_tiled.1} parent=31 // pred_fallthru
          _
        %v5527 = vlog2.pop %v4216
        %v5528 = vmul.f32 %v5527, 0.6931472
        %v5529 = vlog2.pop %v4221
        %v5530 = vmul.f32 %v5529, 0.6931472
        %v5531 = vlog2.pop %v4226
        %v5532 = vmul.f32 %v5531, 0.6931472
        %v5533 = vlog2.pop %v4231
        %v5534 = vmul.f32 %v5533, 0.6931472
        %v5535 = vlog2.pop %v4236
        %v5536 = vmul.f32 %v5535, 0.6931472
        %v5537 = vlog2.pop %v4241
        %v5538 = vmul.f32 %v5537, 0.6931472
        %v5539 = vlog2.pop %v4246
        %v5540 = vmul.f32 %v5539, 0.6931472
        %v5541 = vlog2.pop %v4251
        %v5542 = vmul.f32 %v5541, 0.6931472
        %v5543 = vlog2.pop %v4256
        %v5544 = vmul.f32 %v5543, 0.6931472
        %v5545 = vlog2.pop %v4261
        %v5546 = vmul.f32 %v5545, 0.6931472
        %v5547 = vlog2.pop %v4266
        %v5548 = vmul.f32 %v5547, 0.6931472
        %v5549 = vlog2.pop %v4271
        %v5550 = vmul.f32 %v5549, 0.6931472
        %v5551 = vlog2.pop %v4276
        %v5552 = vmul.f32 %v5551, 0.6931472
        %v5553 = vlog2.pop %v4281
        %v5554 = vmul.f32 %v5553, 0.6931472
        %v5555 = vlog2.pop %v4286
        %v5556 = vmul.f32 %v5555, 0.6931472
        %v5557 = vlog2.pop %v4291
        %v5558 = vmul.f32 %v5557, 0.6931472
        %v5559 = vlog2.pop %v4296
        %v5560 = vmul.f32 %v5559, 0.6931472
        %v5561 = vlog2.pop %v4301
        %v5562 = vmul.f32 %v5561, 0.6931472
        %v5563 = vlog2.pop %v4306
        %v5564 = vmul.f32 %v5563, 0.6931472
        %v5565 = vlog2.pop %v4311
        %v5566 = vmul.f32 %v5565, 0.6931472
        %v5567 = vlog2.pop %v4316
        %v5568 = vmul.f32 %v5567, 0.6931472
        %v5569 = vlog2.pop %v4321
        %v5570 = vmul.f32 %v5569, 0.6931472
        %v5571 = vlog2.pop %v4326
        %v5572 = vmul.f32 %v5571, 0.6931472
        %v5573 = vlog2.pop %v4331
        %v5574 = vmul.f32 %v5573, 0.6931472
        %v5575 = vlog2.pop %v4336
        %v5576 = vmul.f32 %v5575, 0.6931472
        %v5577 = vlog2.pop %v4341
        %v5578 = vmul.f32 %v5577, 0.6931472
        %v5579 = vlog2.pop %v4346
        %v5580 = vmul.f32 %v5579, 0.6931472
        %v5581 = vlog2.pop %v4351
        %v5582 = vmul.f32 %v5581, 0.6931472
        %v5583 = vlog2.pop %v4356
        %v5584 = vmul.f32 %v5583, 0.6931472
        %v5585 = vlog2.pop %v4361
        %v5586 = vmul.f32 %v5585, 0.6931472
        %v5587 = vlog2.pop %v4366
        %v5588 = vmul.f32 %v5587, 0.6931472
        %v5589 = vlog2.pop %v4371
        %v5590 = vmul.f32 %v5589, 0.6931472
        %v5591 = vadd.f32 %v5528, %v3672
        %v5592 = vadd.f32 %v5530, %v3677
        %v5593 = vadd.f32 %v5532, %v3682
        %v5594 = vadd.f32 %v5534, %v3687
        %v5595 = vadd.f32 %v5536, %v3692
        %v5596 = vadd.f32 %v5538, %v3697
        %v5597 = vadd.f32 %v5540, %v3702
        %v5598 = vadd.f32 %v5542, %v3707
        %v5599 = vadd.f32 %v5544, %v3712
        %v5600 = vadd.f32 %v5546, %v3717
        %v5601 = vadd.f32 %v5548, %v3722
        %v5602 = vadd.f32 %v5550, %v3727
        %v5603 = vadd.f32 %v5552, %v3732
        %v5604 = vadd.f32 %v5554, %v3737
        %v5605 = vadd.f32 %v5556, %v3742
        %v5606 = vadd.f32 %v5558, %v3747
        %v5607 = vadd.f32 %v5560, %v3752
        %v5608 = vadd.f32 %v5562, %v3757
        %v5609 = vadd.f32 %v5564, %v3762
        %v5610 = vadd.f32 %v5566, %v3767
        %v5611 = vadd.f32 %v5568, %v3772
        %v5612 = vadd.f32 %v5570, %v3777
        %v5613 = vadd.f32 %v5572, %v3782
        %v5614 = vadd.f32 %v5574, %v3787
        %v5615 = vadd.f32 %v5576, %v3792
        %v5616 = vadd.f32 %v5578, %v3797
        %v5617 = vadd.f32 %v5580, %v3802
        %v5618 = vadd.f32 %v5582, %v3807
        %v5619 = vadd.f32 %v5584, %v3812
        %v5620 = vadd.f32 %v5586, %v3817
        %v5621 = vadd.f32 %v5588, %v3822
        %v5622 = vadd.f32 %v5590, %v3827
        %v5623 = vsel %vm2992, %v5591, 0.0
        %v5624 = vsel %vm2992, %v5592, 0.0
        %v5625 = vadd.f32 %v5623, %v5624
        %v5626 = vsel %vm2992, %v5593, 0.0
        %v5627 = vadd.f32 %v5625, %v5626
        %v5628 = vsel %vm2992, %v5594, 0.0
        %v5629 = vadd.f32 %v5627, %v5628
        %v5630 = vsel %vm2992, %v5595, 0.0
        %v5631 = vadd.f32 %v5629, %v5630
        %v5632 = vsel %vm2992, %v5596, 0.0
        %v5633 = vadd.f32 %v5631, %v5632
        %v5634 = vsel %vm2992, %v5597, 0.0
        %v5635 = vadd.f32 %v5633, %v5634
        %v5636 = vsel %vm2992, %v5598, 0.0
        %v5637 = vadd.f32 %v5635, %v5636
        %v5638 = vsel %vm2992, %v5599, 0.0
        %v5639 = vadd.f32 %v5637, %v5638
        %v5640 = vsel %vm2992, %v5600, 0.0
        %v5641 = vadd.f32 %v5639, %v5640
        %v5642 = vsel %vm2992, %v5601, 0.0
        %v5643 = vadd.f32 %v5641, %v5642
        %v5644 = vsel %vm2992, %v5602, 0.0
        %v5645 = vadd.f32 %v5643, %v5644
        %v5646 = vsel %vm2992, %v5603, 0.0
        %v5647 = vadd.f32 %v5645, %v5646
        %v5648 = vsel %vm2992, %v5604, 0.0
        %v5649 = vadd.f32 %v5647, %v5648
        %v5650 = vsel %vm2992, %v5605, 0.0
        %v5651 = vadd.f32 %v5649, %v5650
        %v5652 = vsel %vm2992, %v5606, 0.0
        %v5653 = vadd.f32 %v5651, %v5652
        %v5654 = vsel %vm2992, %v5607, 0.0
        %v5655 = vadd.f32 %v5653, %v5654
        %v5656 = vsel %vm2992, %v5608, 0.0
        %v5657 = vadd.f32 %v5655, %v5656
        %v5658 = vsel %vm2992, %v5609, 0.0
        %v5659 = vadd.f32 %v5657, %v5658
        %v5660 = vsel %vm2992, %v5610, 0.0
        %v5661 = vadd.f32 %v5659, %v5660
        %v5662 = vsel %vm2992, %v5611, 0.0
        %v5663 = vadd.f32 %v5661, %v5662
        %v5664 = vsel %vm2992, %v5612, 0.0
        %v5665 = vadd.f32 %v5663, %v5664
        %v5666 = vsel %vm2992, %v5613, 0.0
        %v5667 = vadd.f32 %v5665, %v5666
        %v5668 = vsel %vm2992, %v5614, 0.0
        %v5669 = vadd.f32 %v5667, %v5668
        %v5670 = vsel %vm2992, %v5615, 0.0
        %v5671 = vadd.f32 %v5669, %v5670
        %v5672 = vsel %vm2992, %v5616, 0.0
        %v5673 = vadd.f32 %v5671, %v5672
        %v5674 = vsel %vm2992, %v5617, 0.0
        %v5675 = vadd.f32 %v5673, %v5674
        %v5676 = vsel %vm2992, %v5618, 0.0
        %v5677 = vadd.f32 %v5675, %v5676
        %v5678 = vsel %vm2992, %v5619, 0.0
        %v5679 = vadd.f32 %v5677, %v5678
        %v5680 = vsel %vm2992, %v5620, 0.0
        %v5681 = vadd.f32 %v5679, %v5680
        %v5682 = vsel %vm2992, %v5621, 0.0
        %v5683 = vadd.f32 %v5681, %v5682
        %v5684 = vsel %vm2992, %v5622, 0.0
        %v5685 = vadd.f32 %v5683, %v5684
        %5686 = vadd.xlane.f32.xlu0 %v5685
        %v5687 = vpop.xlane.xlu0 %5686
        %v5688 = vrot.slane %v5687, 4
        %v5689 = vadd.f32 %v5687, %v5688
        %v5690 = vrot.slane %v5689, 2
        %v5691 = vadd.f32 %v5689, %v5690
        %v5692 = vrot.slane %v5691, 1
        %v5693 = vadd.f32 %v5691, %v5692
        %s5694 = vtos %v5693
        %v5695 = vstv %s5694
        %5696 = vst [vmem:[%s739] sm:$0x1] %v5695
        // Predicated region
        $region69: #{_clip_loss_tiled.1} parent=31 // pred_check
          %p5697 = pneg %p3067
        $region70: #{_clip_loss_tiled.1} parent=31 // pred_check_branch
          %5699 = sbr.rel (%p5697) target = $region72
        $region71: #{_clip_loss_tiled.1} parent=31 // pred_region
          %5700 = vst [vmem:[%s742] sm:$0x1] 0.0
        $region72: #{_clip_loss_tiled.1} parent=31 // pred_fallthru
          _
        // Predicated region
        $region73: #{_clip_loss_tiled.1} parent=31 // pred_check
          _
        $region74: #{_clip_loss_tiled.1} parent=31 // pred_check_branch
          %5702 = sbr.rel (%p3076) target = $region76
        $region75: #{_clip_loss_tiled.1} parent=31 // pred_region
          %vm5703 = vcmp.eq.s32.totalorder %v994, %v1033
          %vm5704 = vcmp.eq.s32.totalorder %v994, %v1034
          %vm5705 = vcmp.eq.s32.totalorder %v994, %v1035
          %vm5706 = vcmp.eq.s32.totalorder %v994, %v1036
          %vm5707 = vcmp.eq.s32.totalorder %v995, %v1033
          %vm5708 = vcmp.eq.s32.totalorder %v995, %v1034
          %vm5709 = vcmp.eq.s32.totalorder %v995, %v1035
          %vm5710 = vcmp.eq.s32.totalorder %v995, %v1036
          %vm5711 = vcmp.eq.s32.totalorder %v996, %v1033
          %vm5712 = vcmp.eq.s32.totalorder %v996, %v1034
          %vm5713 = vcmp.eq.s32.totalorder %v996, %v1035
          %vm5714 = vcmp.eq.s32.totalorder %v996, %v1036
          %vm5715 = vcmp.eq.s32.totalorder %v997, %v1033
          %vm5716 = vcmp.eq.s32.totalorder %v997, %v1034
          %vm5717 = vcmp.eq.s32.totalorder %v997, %v1035
          %vm5718 = vcmp.eq.s32.totalorder %v997, %v1036
          %vm5719 = vcmp.eq.s32.totalorder %v998, %v1033
          %vm5720 = vcmp.eq.s32.totalorder %v998, %v1034
          %vm5721 = vcmp.eq.s32.totalorder %v998, %v1035
          %vm5722 = vcmp.eq.s32.totalorder %v998, %v1036
          %vm5723 = vcmp.eq.s32.totalorder %v999, %v1033
          %vm5724 = vcmp.eq.s32.totalorder %v999, %v1034
          %vm5725 = vcmp.eq.s32.totalorder %v999, %v1035
          %vm5726 = vcmp.eq.s32.totalorder %v999, %v1036
          %vm5727 = vcmp.eq.s32.totalorder %v1000, %v1033
          %vm5728 = vcmp.eq.s32.totalorder %v1000, %v1034
          %vm5729 = vcmp.eq.s32.totalorder %v1000, %v1035
          %vm5730 = vcmp.eq.s32.totalorder %v1000, %v1036
          %vm5731 = vcmp.eq.s32.totalorder %v1001, %v1033
          %vm5732 = vcmp.eq.s32.totalorder %v1001, %v1034
          %vm5733 = vcmp.eq.s32.totalorder %v1001, %v1035
          %vm5734 = vcmp.eq.s32.totalorder %v1001, %v1036
          %vm5735 = vcmp.eq.s32.totalorder %v1002, %v1033
          %vm5736 = vcmp.eq.s32.totalorder %v1002, %v1034
          %vm5737 = vcmp.eq.s32.totalorder %v1002, %v1035
          %vm5738 = vcmp.eq.s32.totalorder %v1002, %v1036
          %vm5739 = vcmp.eq.s32.totalorder %v1003, %v1033
          %vm5740 = vcmp.eq.s32.totalorder %v1003, %v1034
          %vm5741 = vcmp.eq.s32.totalorder %v1003, %v1035
          %vm5742 = vcmp.eq.s32.totalorder %v1003, %v1036
          %vm5743 = vcmp.eq.s32.totalorder %v1004, %v1033
          %vm5744 = vcmp.eq.s32.totalorder %v1004, %v1034
          %vm5745 = vcmp.eq.s32.totalorder %v1004, %v1035
          %vm5746 = vcmp.eq.s32.totalorder %v1004, %v1036
          %vm5747 = vcmp.eq.s32.totalorder %v1005, %v1033
          %vm5748 = vcmp.eq.s32.totalorder %v1005, %v1034
          %vm5749 = vcmp.eq.s32.totalorder %v1005, %v1035
          %vm5750 = vcmp.eq.s32.totalorder %v1005, %v1036
          %vm5751 = vcmp.eq.s32.totalorder %v1006, %v1033
          %vm5752 = vcmp.eq.s32.totalorder %v1006, %v1034
          %vm5753 = vcmp.eq.s32.totalorder %v1006, %v1035
          %vm5754 = vcmp.eq.s32.totalorder %v1006, %v1036
          %vm5755 = vcmp.eq.s32.totalorder %v1007, %v1033
          %vm5756 = vcmp.eq.s32.totalorder %v1007, %v1034
          %vm5757 = vcmp.eq.s32.totalorder %v1007, %v1035
          %vm5758 = vcmp.eq.s32.totalorder %v1007, %v1036
          %vm5759 = vcmp.eq.s32.totalorder %v1008, %v1033
          %vm5760 = vcmp.eq.s32.totalorder %v1008, %v1034
          %vm5761 = vcmp.eq.s32.totalorder %v1008, %v1035
          %vm5762 = vcmp.eq.s32.totalorder %v1008, %v1036
          %vm5763 = vcmp.eq.s32.totalorder %v1009, %v1033
          %vm5764 = vcmp.eq.s32.totalorder %v1009, %v1034
          %vm5765 = vcmp.eq.s32.totalorder %v1009, %v1035
          %vm5766 = vcmp.eq.s32.totalorder %v1009, %v1036
          %vm5767 = vcmp.eq.s32.totalorder %v1010, %v1033
          %vm5768 = vcmp.eq.s32.totalorder %v1010, %v1034
          %vm5769 = vcmp.eq.s32.totalorder %v1010, %v1035
          %vm5770 = vcmp.eq.s32.totalorder %v1010, %v1036
          %vm5771 = vcmp.eq.s32.totalorder %v1011, %v1033
          %vm5772 = vcmp.eq.s32.totalorder %v1011, %v1034
          %vm5773 = vcmp.eq.s32.totalorder %v1011, %v1035
          %vm5774 = vcmp.eq.s32.totalorder %v1011, %v1036
          %vm5775 = vcmp.eq.s32.totalorder %v1012, %v1033
          %vm5776 = vcmp.eq.s32.totalorder %v1012, %v1034
          %vm5777 = vcmp.eq.s32.totalorder %v1012, %v1035
          %vm5778 = vcmp.eq.s32.totalorder %v1012, %v1036
          %vm5779 = vcmp.eq.s32.totalorder %v1013, %v1033
          %vm5780 = vcmp.eq.s32.totalorder %v1013, %v1034
          %vm5781 = vcmp.eq.s32.totalorder %v1013, %v1035
          %vm5782 = vcmp.eq.s32.totalorder %v1013, %v1036
          %vm5783 = vcmp.eq.s32.totalorder %v1014, %v1033
          %vm5784 = vcmp.eq.s32.totalorder %v1014, %v1034
          %vm5785 = vcmp.eq.s32.totalorder %v1014, %v1035
          %vm5786 = vcmp.eq.s32.totalorder %v1014, %v1036
          %vm5787 = vcmp.eq.s32.totalorder %v1015, %v1033
          %vm5788 = vcmp.eq.s32.totalorder %v1015, %v1034
          %vm5789 = vcmp.eq.s32.totalorder %v1015, %v1035
          %vm5790 = vcmp.eq.s32.totalorder %v1015, %v1036
          %vm5791 = vcmp.eq.s32.totalorder %v1016, %v1033
          %vm5792 = vcmp.eq.s32.totalorder %v1016, %v1034
          %vm5793 = vcmp.eq.s32.totalorder %v1016, %v1035
          %vm5794 = vcmp.eq.s32.totalorder %v1016, %v1036
          %vm5795 = vcmp.eq.s32.totalorder %v1017, %v1033
          %vm5796 = vcmp.eq.s32.totalorder %v1017, %v1034
          %vm5797 = vcmp.eq.s32.totalorder %v1017, %v1035
          %vm5798 = vcmp.eq.s32.totalorder %v1017, %v1036
          %vm5799 = vcmp.eq.s32.totalorder %v1018, %v1033
          %vm5800 = vcmp.eq.s32.totalorder %v1018, %v1034
          %vm5801 = vcmp.eq.s32.totalorder %v1018, %v1035
          %vm5802 = vcmp.eq.s32.totalorder %v1018, %v1036
          %vm5803 = vcmp.eq.s32.totalorder %v1019, %v1033
          %vm5804 = vcmp.eq.s32.totalorder %v1019, %v1034
          %vm5805 = vcmp.eq.s32.totalorder %v1019, %v1035
          %vm5806 = vcmp.eq.s32.totalorder %v1019, %v1036
          %vm5807 = vcmp.eq.s32.totalorder %v1020, %v1033
          %vm5808 = vcmp.eq.s32.totalorder %v1020, %v1034
          %vm5809 = vcmp.eq.s32.totalorder %v1020, %v1035
          %vm5810 = vcmp.eq.s32.totalorder %v1020, %v1036
          %vm5811 = vcmp.eq.s32.totalorder %v1021, %v1033
          %vm5812 = vcmp.eq.s32.totalorder %v1021, %v1034
          %vm5813 = vcmp.eq.s32.totalorder %v1021, %v1035
          %vm5814 = vcmp.eq.s32.totalorder %v1021, %v1036
          %vm5815 = vcmp.eq.s32.totalorder %v1022, %v1033
          %vm5816 = vcmp.eq.s32.totalorder %v1022, %v1034
          %vm5817 = vcmp.eq.s32.totalorder %v1022, %v1035
          %vm5818 = vcmp.eq.s32.totalorder %v1022, %v1036
          %vm5819 = vcmp.eq.s32.totalorder %v1023, %v1033
          %vm5820 = vcmp.eq.s32.totalorder %v1023, %v1034
          %vm5821 = vcmp.eq.s32.totalorder %v1023, %v1035
          %vm5822 = vcmp.eq.s32.totalorder %v1023, %v1036
          %vm5823 = vcmp.eq.s32.totalorder %v1024, %v1033
          %vm5824 = vcmp.eq.s32.totalorder %v1024, %v1034
          %vm5825 = vcmp.eq.s32.totalorder %v1024, %v1035
          %vm5826 = vcmp.eq.s32.totalorder %v1024, %v1036
          %vm5827 = vcmp.eq.s32.totalorder %v1025, %v1033
          %vm5828 = vcmp.eq.s32.totalorder %v1025, %v1034
          %vm5829 = vcmp.eq.s32.totalorder %v1025, %v1035
          %vm5830 = vcmp.eq.s32.totalorder %v1025, %v1036
          %v5831 = vsel %vm5703, %v3540, 0.0
          %v5832 = vsel %vm5704, %v3541, 0.0
          %v5833 = vsel %vm5705, %v3542, 0.0
          %v5834 = vsel %vm5706, %v3543, 0.0
          %v5835 = vsel %vm5707, %v3544, 0.0
          %v5836 = vsel %vm5708, %v3545, 0.0
          %v5837 = vsel %vm5709, %v3546, 0.0
          %v5838 = vsel %vm5710, %v3547, 0.0
          %v5839 = vsel %vm5711, %v3548, 0.0
          %v5840 = vsel %vm5712, %v3549, 0.0
          %v5841 = vsel %vm5713, %v3550, 0.0
          %v5842 = vsel %vm5714, %v3551, 0.0
          %v5843 = vsel %vm5715, %v3552, 0.0
          %v5844 = vsel %vm5716, %v3553, 0.0
          %v5845 = vsel %vm5717, %v3554, 0.0
          %v5846 = vsel %vm5718, %v3555, 0.0
          %v5847 = vsel %vm5719, %v3556, 0.0
          %v5848 = vsel %vm5720, %v3557, 0.0
          %v5849 = vsel %vm5721, %v3558, 0.0
          %v5850 = vsel %vm5722, %v3559, 0.0
          %v5851 = vsel %vm5723, %v3560, 0.0
          %v5852 = vsel %vm5724, %v3561, 0.0
          %v5853 = vsel %vm5725, %v3562, 0.0
          %v5854 = vsel %vm5726, %v3563, 0.0
          %v5855 = vsel %vm5727, %v3564, 0.0
          %v5856 = vsel %vm5728, %v3565, 0.0
          %v5857 = vsel %vm5729, %v3566, 0.0
          %v5858 = vsel %vm5730, %v3567, 0.0
          %v5859 = vsel %vm5731, %v3568, 0.0
          %v5860 = vsel %vm5732, %v3569, 0.0
          %v5861 = vsel %vm5733, %v3570, 0.0
          %v5862 = vsel %vm5734, %v3571, 0.0
          %v5863 = vsel %vm5735, %v3572, 0.0
          %v5864 = vsel %vm5736, %v3573, 0.0
          %v5865 = vsel %vm5737, %v3574, 0.0
          %v5866 = vsel %vm5738, %v3575, 0.0
          %v5867 = vsel %vm5739, %v3576, 0.0
          %v5868 = vsel %vm5740, %v3577, 0.0
          %v5869 = vsel %vm5741, %v3578, 0.0
          %v5870 = vsel %vm5742, %v3579, 0.0
          %v5871 = vsel %vm5743, %v3580, 0.0
          %v5872 = vsel %vm5744, %v3581, 0.0
          %v5873 = vsel %vm5745, %v3582, 0.0
          %v5874 = vsel %vm5746, %v3583, 0.0
          %v5875 = vsel %vm5747, %v3584, 0.0
          %v5876 = vsel %vm5748, %v3585, 0.0
          %v5877 = vsel %vm5749, %v3586, 0.0
          %v5878 = vsel %vm5750, %v3587, 0.0
          %v5879 = vsel %vm5751, %v3588, 0.0
          %v5880 = vsel %vm5752, %v3589, 0.0
          %v5881 = vsel %vm5753, %v3590, 0.0
          %v5882 = vsel %vm5754, %v3591, 0.0
          %v5883 = vsel %vm5755, %v3592, 0.0
          %v5884 = vsel %vm5756, %v3593, 0.0
          %v5885 = vsel %vm5757, %v3594, 0.0
          %v5886 = vsel %vm5758, %v3595, 0.0
          %v5887 = vsel %vm5759, %v3596, 0.0
          %v5888 = vsel %vm5760, %v3597, 0.0
          %v5889 = vsel %vm5761, %v3598, 0.0
          %v5890 = vsel %vm5762, %v3599, 0.0
          %v5891 = vsel %vm5763, %v3600, 0.0
          %v5892 = vsel %vm5764, %v3601, 0.0
          %v5893 = vsel %vm5765, %v3602, 0.0
          %v5894 = vsel %vm5766, %v3603, 0.0
          %v5895 = vsel %vm5767, %v3604, 0.0
          %v5896 = vsel %vm5768, %v3605, 0.0
          %v5897 = vsel %vm5769, %v3606, 0.0
          %v5898 = vsel %vm5770, %v3607, 0.0
          %v5899 = vsel %vm5771, %v3608, 0.0
          %v5900 = vsel %vm5772, %v3609, 0.0
          %v5901 = vsel %vm5773, %v3610, 0.0
          %v5902 = vsel %vm5774, %v3611, 0.0
          %v5903 = vsel %vm5775, %v3612, 0.0
          %v5904 = vsel %vm5776, %v3613, 0.0
          %v5905 = vsel %vm5777, %v3614, 0.0
          %v5906 = vsel %vm5778, %v3615, 0.0
          %v5907 = vsel %vm5779, %v3616, 0.0
          %v5908 = vsel %vm5780, %v3617, 0.0
          %v5909 = vsel %vm5781, %v3618, 0.0
          %v5910 = vsel %vm5782, %v3619, 0.0
          %v5911 = vsel %vm5783, %v3620, 0.0
          %v5912 = vsel %vm5784, %v3621, 0.0
          %v5913 = vsel %vm5785, %v3622, 0.0
          %v5914 = vsel %vm5786, %v3623, 0.0
          %v5915 = vsel %vm5787, %v3624, 0.0
          %v5916 = vsel %vm5788, %v3625, 0.0
          %v5917 = vsel %vm5789, %v3626, 0.0
          %v5918 = vsel %vm5790, %v3627, 0.0
          %v5919 = vsel %vm5791, %v3628, 0.0
          %v5920 = vsel %vm5792, %v3629, 0.0
          %v5921 = vsel %vm5793, %v3630, 0.0
          %v5922 = vsel %vm5794, %v3631, 0.0
          %v5923 = vsel %vm5795, %v3632, 0.0
          %v5924 = vsel %vm5796, %v3633, 0.0
          %v5925 = vsel %vm5797, %v3634, 0.0
          %v5926 = vsel %vm5798, %v3635, 0.0
          %v5927 = vsel %vm5799, %v3636, 0.0
          %v5928 = vsel %vm5800, %v3637, 0.0
          %v5929 = vsel %vm5801, %v3638, 0.0
          %v5930 = vsel %vm5802, %v3639, 0.0
          %v5931 = vsel %vm5803, %v3640, 0.0
          %v5932 = vsel %vm5804, %v3641, 0.0
          %v5933 = vsel %vm5805, %v3642, 0.0
          %v5934 = vsel %vm5806, %v3643, 0.0
          %v5935 = vsel %vm5807, %v3644, 0.0
          %v5936 = vsel %vm5808, %v3645, 0.0
          %v5937 = vsel %vm5809, %v3646, 0.0
          %v5938 = vsel %vm5810, %v3647, 0.0
          %v5939 = vsel %vm5811, %v3648, 0.0
          %v5940 = vsel %vm5812, %v3649, 0.0
          %v5941 = vsel %vm5813, %v3650, 0.0
          %v5942 = vsel %vm5814, %v3651, 0.0
          %v5943 = vsel %vm5815, %v3652, 0.0
          %v5944 = vsel %vm5816, %v3653, 0.0
          %v5945 = vsel %vm5817, %v3654, 0.0
          %v5946 = vsel %vm5818, %v3655, 0.0
          %v5947 = vsel %vm5819, %v3656, 0.0
          %v5948 = vsel %vm5820, %v3657, 0.0
          %v5949 = vsel %vm5821, %v3658, 0.0
          %v5950 = vsel %vm5822, %v3659, 0.0
          %v5951 = vsel %vm5823, %v3660, 0.0
          %v5952 = vsel %vm5824, %v3661, 0.0
          %v5953 = vsel %vm5825, %v3662, 0.0
          %v5954 = vsel %vm5826, %v3663, 0.0
          %v5955 = vsel %vm5827, %v3664, 0.0
          %v5956 = vsel %vm5828, %v3665, 0.0
          %v5957 = vsel %vm5829, %v3666, 0.0
          %v5958 = vsel %vm5830, %v3667, 0.0
          %v5959 = vadd.f32 %v5831, %v5832
          %v5960 = vadd.f32 %v5959, %v5833
          %v5961 = vadd.f32 %v5960, %v5834
          %v5962 = vadd.f32 %v5961, %v5835
          %v5963 = vadd.f32 %v5962, %v5836
          %v5964 = vadd.f32 %v5963, %v5837
          %v5965 = vadd.f32 %v5964, %v5838
          %v5966 = vadd.f32 %v5965, %v5839
          %v5967 = vadd.f32 %v5966, %v5840
          %v5968 = vadd.f32 %v5967, %v5841
          %v5969 = vadd.f32 %v5968, %v5842
          %v5970 = vadd.f32 %v5969, %v5843
          %v5971 = vadd.f32 %v5970, %v5844
          %v5972 = vadd.f32 %v5971, %v5845
          %v5973 = vadd.f32 %v5972, %v5846
          %v5974 = vadd.f32 %v5973, %v5847
          %v5975 = vadd.f32 %v5974, %v5848
          %v5976 = vadd.f32 %v5975, %v5849
          %v5977 = vadd.f32 %v5976, %v5850
          %v5978 = vadd.f32 %v5977, %v5851
          %v5979 = vadd.f32 %v5978, %v5852
          %v5980 = vadd.f32 %v5979, %v5853
          %v5981 = vadd.f32 %v5980, %v5854
          %v5982 = vadd.f32 %v5981, %v5855
          %v5983 = vadd.f32 %v5982, %v5856
          %v5984 = vadd.f32 %v5983, %v5857
          %v5985 = vadd.f32 %v5984, %v5858
          %v5986 = vadd.f32 %v5985, %v5859
          %v5987 = vadd.f32 %v5986, %v5860
          %v5988 = vadd.f32 %v5987, %v5861
          %v5989 = vadd.f32 %v5988, %v5862
          %v5990 = vadd.f32 %v5989, %v5863
          %v5991 = vadd.f32 %v5990, %v5864
          %v5992 = vadd.f32 %v5991, %v5865
          %v5993 = vadd.f32 %v5992, %v5866
          %v5994 = vadd.f32 %v5993, %v5867
          %v5995 = vadd.f32 %v5994, %v5868
          %v5996 = vadd.f32 %v5995, %v5869
          %v5997 = vadd.f32 %v5996, %v5870
          %v5998 = vadd.f32 %v5997, %v5871
          %v5999 = vadd.f32 %v5998, %v5872
          %v6000 = vadd.f32 %v5999, %v5873
          %v6001 = vadd.f32 %v6000, %v5874
          %v6002 = vadd.f32 %v6001, %v5875
          %v6003 = vadd.f32 %v6002, %v5876
          %v6004 = vadd.f32 %v6003, %v5877
          %v6005 = vadd.f32 %v6004, %v5878
          %v6006 = vadd.f32 %v6005, %v5879
          %v6007 = vadd.f32 %v6006, %v5880
          %v6008 = vadd.f32 %v6007, %v5881
          %v6009 = vadd.f32 %v6008, %v5882
          %v6010 = vadd.f32 %v6009, %v5883
          %v6011 = vadd.f32 %v6010, %v5884
          %v6012 = vadd.f32 %v6011, %v5885
          %v6013 = vadd.f32 %v6012, %v5886
          %v6014 = vadd.f32 %v6013, %v5887
          %v6015 = vadd.f32 %v6014, %v5888
          %v6016 = vadd.f32 %v6015, %v5889
          %v6017 = vadd.f32 %v6016, %v5890
          %v6018 = vadd.f32 %v6017, %v5891
          %v6019 = vadd.f32 %v6018, %v5892
          %v6020 = vadd.f32 %v6019, %v5893
          %v6021 = vadd.f32 %v6020, %v5894
          %v6022 = vadd.f32 %v6021, %v5895
          %v6023 = vadd.f32 %v6022, %v5896
          %v6024 = vadd.f32 %v6023, %v5897
          %v6025 = vadd.f32 %v6024, %v5898
          %v6026 = vadd.f32 %v6025, %v5899
          %v6027 = vadd.f32 %v6026, %v5900
          %v6028 = vadd.f32 %v6027, %v5901
          %v6029 = vadd.f32 %v6028, %v5902
          %v6030 = vadd.f32 %v6029, %v5903
          %v6031 = vadd.f32 %v6030, %v5904
          %v6032 = vadd.f32 %v6031, %v5905
          %v6033 = vadd.f32 %v6032, %v5906
          %v6034 = vadd.f32 %v6033, %v5907
          %v6035 = vadd.f32 %v6034, %v5908
          %v6036 = vadd.f32 %v6035, %v5909
          %v6037 = vadd.f32 %v6036, %v5910
          %v6038 = vadd.f32 %v6037, %v5911
          %v6039 = vadd.f32 %v6038, %v5912
          %v6040 = vadd.f32 %v6039, %v5913
          %v6041 = vadd.f32 %v6040, %v5914
          %v6042 = vadd.f32 %v6041, %v5915
          %v6043 = vadd.f32 %v6042, %v5916
          %v6044 = vadd.f32 %v6043, %v5917
          %v6045 = vadd.f32 %v6044, %v5918
          %v6046 = vadd.f32 %v6045, %v5919
          %v6047 = vadd.f32 %v6046, %v5920
          %v6048 = vadd.f32 %v6047, %v5921
          %v6049 = vadd.f32 %v6048, %v5922
          %v6050 = vadd.f32 %v6049, %v5923
          %v6051 = vadd.f32 %v6050, %v5924
          %v6052 = vadd.f32 %v6051, %v5925
          %v6053 = vadd.f32 %v6052, %v5926
          %v6054 = vadd.f32 %v6053, %v5927
          %v6055 = vadd.f32 %v6054, %v5928
          %v6056 = vadd.f32 %v6055, %v5929
          %v6057 = vadd.f32 %v6056, %v5930
          %v6058 = vadd.f32 %v6057, %v5931
          %v6059 = vadd.f32 %v6058, %v5932
          %v6060 = vadd.f32 %v6059, %v5933
          %v6061 = vadd.f32 %v6060, %v5934
          %v6062 = vadd.f32 %v6061, %v5935
          %v6063 = vadd.f32 %v6062, %v5936
          %v6064 = vadd.f32 %v6063, %v5937
          %v6065 = vadd.f32 %v6064, %v5938
          %v6066 = vadd.f32 %v6065, %v5939
          %v6067 = vadd.f32 %v6066, %v5940
          %v6068 = vadd.f32 %v6067, %v5941
          %v6069 = vadd.f32 %v6068, %v5942
          %v6070 = vadd.f32 %v6069, %v5943
          %v6071 = vadd.f32 %v6070, %v5944
          %v6072 = vadd.f32 %v6071, %v5945
          %v6073 = vadd.f32 %v6072, %v5946
          %v6074 = vadd.f32 %v6073, %v5947
          %v6075 = vadd.f32 %v6074, %v5948
          %v6076 = vadd.f32 %v6075, %v5949
          %v6077 = vadd.f32 %v6076, %v5950
          %v6078 = vadd.f32 %v6077, %v5951
          %v6079 = vadd.f32 %v6078, %v5952
          %v6080 = vadd.f32 %v6079, %v5953
          %v6081 = vadd.f32 %v6080, %v5954
          %v6082 = vadd.f32 %v6081, %v5955
          %v6083 = vadd.f32 %v6082, %v5956
          %v6084 = vadd.f32 %v6083, %v5957
          %v6085 = vadd.f32 %v6084, %v5958
          %6086 = vadd.xlane.f32.xlu0 %v6085
          %v6087 = vpop.xlane.xlu0 %6086
          %v6088 = vrot.slane %v6087, 4
          %v6089 = vadd.f32 %v6087, %v6088
          %v6090 = vrot.slane %v6089, 2
          %v6091 = vadd.f32 %v6089, %v6090
          %v6092 = vrot.slane %v6091, 1
          %v6093 = vadd.f32 %v6091, %v6092
          %s6094 = vtos %v6093
          %v6095 = vld [vmem:[%s742] sm:$0x1]
          %v6096 = vstv %s6094
          %v6097 = vadd.f32 %v6095, %v6096
          %6098 = vst [vmem:[%s742] sm:$0x1] %v6097
        $region76: #{_clip_loss_tiled.1} parent=31 // pred_fallthru
          _
        %v6099 = vld [vmem:[%s572] sm:$0xff]
        %v6100 = vld [vmem:[%s572 + $0x8] sm:$0xff]
        %v6101 = vld [vmem:[%s572 + $0x10] sm:$0xff]
        %v6102 = vld [vmem:[%s572 + $0x18] sm:$0xff]
        %v6103 = vld [vmem:[%s572 + $0x20] sm:$0xff]
        %v6104 = vld [vmem:[%s572 + $0x28] sm:$0xff]
        %v6105 = vld [vmem:[%s572 + $0x30] sm:$0xff]
        %v6106 = vld [vmem:[%s572 + $0x38] sm:$0xff]
        %v6107 = vld [vmem:[%s572 + $0x40] sm:$0xff]
        %v6108 = vld [vmem:[%s572 + $0x48] sm:$0xff]
        %v6109 = vld [vmem:[%s572 + $0x50] sm:$0xff]
        %v6110 = vld [vmem:[%s572 + $0x58] sm:$0xff]
        %v6111 = vld [vmem:[%s572 + $0x60] sm:$0xff]
        %v6112 = vld [vmem:[%s572 + $0x68] sm:$0xff]
        %v6113 = vld [vmem:[%s572 + $0x70] sm:$0xff]
        %v6114 = vld [vmem:[%s572 + $0x78] sm:$0xff]
        %v6115 = vld [vmem:[%s572 + $0x80] sm:$0xff]
        %v6116 = vld [vmem:[%s572 + $0x88] sm:$0xff]
        %v6117 = vld [vmem:[%s572 + $0x90] sm:$0xff]
        %v6118 = vld [vmem:[%s572 + $0x98] sm:$0xff]
        %v6119 = vld [vmem:[%s572 + $0xa0] sm:$0xff]
        %v6120 = vld [vmem:[%s572 + $0xa8] sm:$0xff]
        %v6121 = vld [vmem:[%s572 + $0xb0] sm:$0xff]
        %v6122 = vld [vmem:[%s572 + $0xb8] sm:$0xff]
        %v6123 = vld [vmem:[%s572 + $0xc0] sm:$0xff]
        %v6124 = vld [vmem:[%s572 + $0xc8] sm:$0xff]
        %v6125 = vld [vmem:[%s572 + $0xd0] sm:$0xff]
        %v6126 = vld [vmem:[%s572 + $0xd8] sm:$0xff]
        %v6127 = vld [vmem:[%s572 + $0xe0] sm:$0xff]
        %v6128 = vld [vmem:[%s572 + $0xe8] sm:$0xff]
        %v6129 = vld [vmem:[%s572 + $0xf0] sm:$0xff]
        %v6130 = vld [vmem:[%s572 + $0xf8] sm:$0xff]
        %v6131 = vld [vmem:[%s572 + $0x100] sm:$0xff]
        %v6132 = vld [vmem:[%s572 + $0x108] sm:$0xff]
        %v6133 = vld [vmem:[%s572 + $0x110] sm:$0xff]
        %v6134 = vld [vmem:[%s572 + $0x118] sm:$0xff]
        %v6135 = vld [vmem:[%s572 + $0x120] sm:$0xff]
        %v6136 = vld [vmem:[%s572 + $0x128] sm:$0xff]
        %v6137 = vld [vmem:[%s572 + $0x130] sm:$0xff]
        %v6138 = vld [vmem:[%s572 + $0x138] sm:$0xff]
        %v6139 = vld [vmem:[%s572 + $0x140] sm:$0xff]
        %v6140 = vld [vmem:[%s572 + $0x148] sm:$0xff]
        %v6141 = vld [vmem:[%s572 + $0x150] sm:$0xff]
        %v6142 = vld [vmem:[%s572 + $0x158] sm:$0xff]
        %v6143 = vld [vmem:[%s572 + $0x160] sm:$0xff]
        %v6144 = vld [vmem:[%s572 + $0x168] sm:$0xff]
        %v6145 = vld [vmem:[%s572 + $0x170] sm:$0xff]
        %v6146 = vld [vmem:[%s572 + $0x178] sm:$0xff]
        %v6147 = vld [vmem:[%s572 + $0x180] sm:$0xff]
        %v6148 = vld [vmem:[%s572 + $0x188] sm:$0xff]
        %v6149 = vld [vmem:[%s572 + $0x190] sm:$0xff]
        %v6150 = vld [vmem:[%s572 + $0x198] sm:$0xff]
        %v6151 = vld [vmem:[%s572 + $0x1a0] sm:$0xff]
        %v6152 = vld [vmem:[%s572 + $0x1a8] sm:$0xff]
        %v6153 = vld [vmem:[%s572 + $0x1b0] sm:$0xff]
        %v6154 = vld [vmem:[%s572 + $0x1b8] sm:$0xff]
        %v6155 = vld [vmem:[%s572 + $0x1c0] sm:$0xff]
        %v6156 = vld [vmem:[%s572 + $0x1c8] sm:$0xff]
        %v6157 = vld [vmem:[%s572 + $0x1d0] sm:$0xff]
        %v6158 = vld [vmem:[%s572 + $0x1d8] sm:$0xff]
        %v6159 = vld [vmem:[%s572 + $0x1e0] sm:$0xff]
        %v6160 = vld [vmem:[%s572 + $0x1e8] sm:$0xff]
        %v6161 = vld [vmem:[%s572 + $0x1f0] sm:$0xff]
        %v6162 = vld [vmem:[%s572 + $0x1f8] sm:$0xff]
        %v6163 = vunpack.c.l.bf16 %v6099
        %v6164 = vunpack.c.h.bf16 %v6099
        %v6165 = vunpack.c.l.bf16 %v6100
        %v6166 = vunpack.c.h.bf16 %v6100
        %v6167 = vunpack.c.l.bf16 %v6101
        %v6168 = vunpack.c.h.bf16 %v6101
        %v6169 = vunpack.c.l.bf16 %v6102
        %v6170 = vunpack.c.h.bf16 %v6102
        %v6171 = vunpack.c.l.bf16 %v6103
        %v6172 = vunpack.c.h.bf16 %v6103
        %v6173 = vunpack.c.l.bf16 %v6104
        %v6174 = vunpack.c.h.bf16 %v6104
        %v6175 = vunpack.c.l.bf16 %v6105
        %v6176 = vunpack.c.h.bf16 %v6105
        %v6177 = vunpack.c.l.bf16 %v6106
        %v6178 = vunpack.c.h.bf16 %v6106
        %v6179 = vunpack.c.l.bf16 %v6107
        %v6180 = vunpack.c.h.bf16 %v6107
        %v6181 = vunpack.c.l.bf16 %v6108
        %v6182 = vunpack.c.h.bf16 %v6108
        %v6183 = vunpack.c.l.bf16 %v6109
        %v6184 = vunpack.c.h.bf16 %v6109
        %v6185 = vunpack.c.l.bf16 %v6110
        %v6186 = vunpack.c.h.bf16 %v6110
        %v6187 = vunpack.c.l.bf16 %v6111
        %v6188 = vunpack.c.h.bf16 %v6111
        %v6189 = vunpack.c.l.bf16 %v6112
        %v6190 = vunpack.c.h.bf16 %v6112
        %v6191 = vunpack.c.l.bf16 %v6113
        %v6192 = vunpack.c.h.bf16 %v6113
        %v6193 = vunpack.c.l.bf16 %v6114
        %v6194 = vunpack.c.h.bf16 %v6114
        %v6195 = vunpack.c.l.bf16 %v6115
        %v6196 = vunpack.c.h.bf16 %v6115
        %v6197 = vunpack.c.l.bf16 %v6116
        %v6198 = vunpack.c.h.bf16 %v6116
        %v6199 = vunpack.c.l.bf16 %v6117
        %v6200 = vunpack.c.h.bf16 %v6117
        %v6201 = vunpack.c.l.bf16 %v6118
        %v6202 = vunpack.c.h.bf16 %v6118
        %v6203 = vunpack.c.l.bf16 %v6119
        %v6204 = vunpack.c.h.bf16 %v6119
        %v6205 = vunpack.c.l.bf16 %v6120
        %v6206 = vunpack.c.h.bf16 %v6120
        %v6207 = vunpack.c.l.bf16 %v6121
        %v6208 = vunpack.c.h.bf16 %v6121
        %v6209 = vunpack.c.l.bf16 %v6122
        %v6210 = vunpack.c.h.bf16 %v6122
        %v6211 = vunpack.c.l.bf16 %v6123
        %v6212 = vunpack.c.h.bf16 %v6123
        %v6213 = vunpack.c.l.bf16 %v6124
        %v6214 = vunpack.c.h.bf16 %v6124
        %v6215 = vunpack.c.l.bf16 %v6125
        %v6216 = vunpack.c.h.bf16 %v6125
        %v6217 = vunpack.c.l.bf16 %v6126
        %v6218 = vunpack.c.h.bf16 %v6126
        %v6219 = vunpack.c.l.bf16 %v6127
        %v6220 = vunpack.c.h.bf16 %v6127
        %v6221 = vunpack.c.l.bf16 %v6128
        %v6222 = vunpack.c.h.bf16 %v6128
        %v6223 = vunpack.c.l.bf16 %v6129
        %v6224 = vunpack.c.h.bf16 %v6129
        %v6225 = vunpack.c.l.bf16 %v6130
        %v6226 = vunpack.c.h.bf16 %v6130
        %v6227 = vunpack.c.l.bf16 %v6131
        %v6228 = vunpack.c.h.bf16 %v6131
        %v6229 = vunpack.c.l.bf16 %v6132
        %v6230 = vunpack.c.h.bf16 %v6132
        %v6231 = vunpack.c.l.bf16 %v6133
        %v6232 = vunpack.c.h.bf16 %v6133
        %v6233 = vunpack.c.l.bf16 %v6134
        %v6234 = vunpack.c.h.bf16 %v6134
        %v6235 = vunpack.c.l.bf16 %v6135
        %v6236 = vunpack.c.h.bf16 %v6135
        %v6237 = vunpack.c.l.bf16 %v6136
        %v6238 = vunpack.c.h.bf16 %v6136
        %v6239 = vunpack.c.l.bf16 %v6137
        %v6240 = vunpack.c.h.bf16 %v6137
        %v6241 = vunpack.c.l.bf16 %v6138
        %v6242 = vunpack.c.h.bf16 %v6138
        %v6243 = vunpack.c.l.bf16 %v6139
        %v6244 = vunpack.c.h.bf16 %v6139
        %v6245 = vunpack.c.l.bf16 %v6140
        %v6246 = vunpack.c.h.bf16 %v6140
        %v6247 = vunpack.c.l.bf16 %v6141
        %v6248 = vunpack.c.h.bf16 %v6141
        %v6249 = vunpack.c.l.bf16 %v6142
        %v6250 = vunpack.c.h.bf16 %v6142
        %v6251 = vunpack.c.l.bf16 %v6143
        %v6252 = vunpack.c.h.bf16 %v6143
        %v6253 = vunpack.c.l.bf16 %v6144
        %v6254 = vunpack.c.h.bf16 %v6144
        %v6255 = vunpack.c.l.bf16 %v6145
        %v6256 = vunpack.c.h.bf16 %v6145
        %v6257 = vunpack.c.l.bf16 %v6146
        %v6258 = vunpack.c.h.bf16 %v6146
        %v6259 = vunpack.c.l.bf16 %v6147
        %v6260 = vunpack.c.h.bf16 %v6147
        %v6261 = vunpack.c.l.bf16 %v6148
        %v6262 = vunpack.c.h.bf16 %v6148
        %v6263 = vunpack.c.l.bf16 %v6149
        %v6264 = vunpack.c.h.bf16 %v6149
        %v6265 = vunpack.c.l.bf16 %v6150
        %v6266 = vunpack.c.h.bf16 %v6150
        %v6267 = vunpack.c.l.bf16 %v6151
        %v6268 = vunpack.c.h.bf16 %v6151
        %v6269 = vunpack.c.l.bf16 %v6152
        %v6270 = vunpack.c.h.bf16 %v6152
        %v6271 = vunpack.c.l.bf16 %v6153
        %v6272 = vunpack.c.h.bf16 %v6153
        %v6273 = vunpack.c.l.bf16 %v6154
        %v6274 = vunpack.c.h.bf16 %v6154
        %v6275 = vunpack.c.l.bf16 %v6155
        %v6276 = vunpack.c.h.bf16 %v6155
        %v6277 = vunpack.c.l.bf16 %v6156
        %v6278 = vunpack.c.h.bf16 %v6156
        %v6279 = vunpack.c.l.bf16 %v6157
        %v6280 = vunpack.c.h.bf16 %v6157
        %v6281 = vunpack.c.l.bf16 %v6158
        %v6282 = vunpack.c.h.bf16 %v6158
        %v6283 = vunpack.c.l.bf16 %v6159
        %v6284 = vunpack.c.h.bf16 %v6159
        %v6285 = vunpack.c.l.bf16 %v6160
        %v6286 = vunpack.c.h.bf16 %v6160
        %v6287 = vunpack.c.l.bf16 %v6161
        %v6288 = vunpack.c.h.bf16 %v6161
        %v6289 = vunpack.c.l.bf16 %v6162
        %v6290 = vunpack.c.h.bf16 %v6162
        %v6291 = vmax.f32 %v6163, %v6164
        %v6292 = vmax.f32 %v6291, %v6165
        %v6293 = vmax.f32 %v6292, %v6166
        %6294 = vmax.xlane.f32.xlu0 %v6293
        %v6295 = vpop.xlane.xlu0 %6294
        %v6296 = vmax.f32 %v6167, %v6168
        %v6297 = vmax.f32 %v6296, %v6169
        %v6298 = vmax.f32 %v6297, %v6170
        %6299 = vmax.xlane.f32.xlu0 %v6298
        %v6300 = vpop.xlane.xlu0 %6299
        %v6301 = vmax.f32 %v6171, %v6172
        %v6302 = vmax.f32 %v6301, %v6173
        %v6303 = vmax.f32 %v6302, %v6174
        %6304 = vmax.xlane.f32.xlu0 %v6303
        %v6305 = vpop.xlane.xlu0 %6304
        %v6306 = vmax.f32 %v6175, %v6176
        %v6307 = vmax.f32 %v6306, %v6177
        %v6308 = vmax.f32 %v6307, %v6178
        %6309 = vmax.xlane.f32.xlu0 %v6308
        %v6310 = vpop.xlane.xlu0 %6309
        %v6311 = vmax.f32 %v6179, %v6180
        %v6312 = vmax.f32 %v6311, %v6181
        %v6313 = vmax.f32 %v6312, %v6182
        %6314 = vmax.xlane.f32.xlu0 %v6313
        %v6315 = vpop.xlane.xlu0 %6314
        %v6316 = vmax.f32 %v6183, %v6184
        %v6317 = vmax.f32 %v6316, %v6185
        %v6318 = vmax.f32 %v6317, %v6186
        %6319 = vmax.xlane.f32.xlu0 %v6318
        %v6320 = vpop.xlane.xlu0 %6319
        %v6321 = vmax.f32 %v6187, %v6188
        %v6322 = vmax.f32 %v6321, %v6189
        %v6323 = vmax.f32 %v6322, %v6190
        %6324 = vmax.xlane.f32.xlu0 %v6323
        %v6325 = vpop.xlane.xlu0 %6324
        %v6326 = vmax.f32 %v6191, %v6192
        %v6327 = vmax.f32 %v6326, %v6193
        %v6328 = vmax.f32 %v6327, %v6194
        %6329 = vmax.xlane.f32.xlu0 %v6328
        %v6330 = vpop.xlane.xlu0 %6329
        %v6331 = vmax.f32 %v6195, %v6196
        %v6332 = vmax.f32 %v6331, %v6197
        %v6333 = vmax.f32 %v6332, %v6198
        %6334 = vmax.xlane.f32.xlu0 %v6333
        %v6335 = vpop.xlane.xlu0 %6334
        %v6336 = vmax.f32 %v6199, %v6200
        %v6337 = vmax.f32 %v6336, %v6201
        %v6338 = vmax.f32 %v6337, %v6202
        %6339 = vmax.xlane.f32.xlu0 %v6338
        %v6340 = vpop.xlane.xlu0 %6339
        %v6341 = vmax.f32 %v6203, %v6204
        %v6342 = vmax.f32 %v6341, %v6205
        %v6343 = vmax.f32 %v6342, %v6206
        %6344 = vmax.xlane.f32.xlu0 %v6343
        %v6345 = vpop.xlane.xlu0 %6344
        %v6346 = vmax.f32 %v6207, %v6208
        %v6347 = vmax.f32 %v6346, %v6209
        %v6348 = vmax.f32 %v6347, %v6210
        %6349 = vmax.xlane.f32.xlu0 %v6348
        %v6350 = vpop.xlane.xlu0 %6349
        %v6351 = vmax.f32 %v6211, %v6212
        %v6352 = vmax.f32 %v6351, %v6213
        %v6353 = vmax.f32 %v6352, %v6214
        %6354 = vmax.xlane.f32.xlu0 %v6353
        %v6355 = vpop.xlane.xlu0 %6354
        %v6356 = vmax.f32 %v6215, %v6216
        %v6357 = vmax.f32 %v6356, %v6217
        %v6358 = vmax.f32 %v6357, %v6218
        %6359 = vmax.xlane.f32.xlu0 %v6358
        %v6360 = vpop.xlane.xlu0 %6359
        %v6361 = vmax.f32 %v6219, %v6220
        %v6362 = vmax.f32 %v6361, %v6221
        %v6363 = vmax.f32 %v6362, %v6222
        %6364 = vmax.xlane.f32.xlu0 %v6363
        %v6365 = vpop.xlane.xlu0 %6364
        %v6366 = vmax.f32 %v6223, %v6224
        %v6367 = vmax.f32 %v6366, %v6225
        %v6368 = vmax.f32 %v6367, %v6226
        %6369 = vmax.xlane.f32.xlu0 %v6368
        %v6370 = vpop.xlane.xlu0 %6369
        %v6371 = vmax.f32 %v6227, %v6228
        %v6372 = vmax.f32 %v6371, %v6229
        %v6373 = vmax.f32 %v6372, %v6230
        %6374 = vmax.xlane.f32.xlu0 %v6373
        %v6375 = vpop.xlane.xlu0 %6374
        %v6376 = vmax.f32 %v6231, %v6232
        %v6377 = vmax.f32 %v6376, %v6233
        %v6378 = vmax.f32 %v6377, %v6234
        %6379 = vmax.xlane.f32.xlu0 %v6378
        %v6380 = vpop.xlane.xlu0 %6379
        %v6381 = vmax.f32 %v6235, %v6236
        %v6382 = vmax.f32 %v6381, %v6237
        %v6383 = vmax.f32 %v6382, %v6238
        %6384 = vmax.xlane.f32.xlu0 %v6383
        %v6385 = vpop.xlane.xlu0 %6384
        %v6386 = vmax.f32 %v6239, %v6240
        %v6387 = vmax.f32 %v6386, %v6241
        %v6388 = vmax.f32 %v6387, %v6242
        %6389 = vmax.xlane.f32.xlu0 %v6388
        %v6390 = vpop.xlane.xlu0 %6389
        %v6391 = vmax.f32 %v6243, %v6244
        %v6392 = vmax.f32 %v6391, %v6245
        %v6393 = vmax.f32 %v6392, %v6246
        %6394 = vmax.xlane.f32.xlu0 %v6393
        %v6395 = vpop.xlane.xlu0 %6394
        %v6396 = vmax.f32 %v6247, %v6248
        %v6397 = vmax.f32 %v6396, %v6249
        %v6398 = vmax.f32 %v6397, %v6250
        %6399 = vmax.xlane.f32.xlu0 %v6398
        %v6400 = vpop.xlane.xlu0 %6399
        %v6401 = vmax.f32 %v6251, %v6252
        %v6402 = vmax.f32 %v6401, %v6253
        %v6403 = vmax.f32 %v6402, %v6254
        %6404 = vmax.xlane.f32.xlu0 %v6403
        %v6405 = vpop.xlane.xlu0 %6404
        %v6406 = vmax.f32 %v6255, %v6256
        %v6407 = vmax.f32 %v6406, %v6257
        %v6408 = vmax.f32 %v6407, %v6258
        %6409 = vmax.xlane.f32.xlu0 %v6408
        %v6410 = vpop.xlane.xlu0 %6409
        %v6411 = vmax.f32 %v6259, %v6260
        %v6412 = vmax.f32 %v6411, %v6261
        %v6413 = vmax.f32 %v6412, %v6262
        %6414 = vmax.xlane.f32.xlu0 %v6413
        %v6415 = vpop.xlane.xlu0 %6414
        %v6416 = vmax.f32 %v6263, %v6264
        %v6417 = vmax.f32 %v6416, %v6265
        %v6418 = vmax.f32 %v6417, %v6266
        %6419 = vmax.xlane.f32.xlu0 %v6418
        %v6420 = vpop.xlane.xlu0 %6419
        %v6421 = vmax.f32 %v6267, %v6268
        %v6422 = vmax.f32 %v6421, %v6269
        %v6423 = vmax.f32 %v6422, %v6270
        %6424 = vmax.xlane.f32.xlu0 %v6423
        %v6425 = vpop.xlane.xlu0 %6424
        %v6426 = vmax.f32 %v6271, %v6272
        %v6427 = vmax.f32 %v6426, %v6273
        %v6428 = vmax.f32 %v6427, %v6274
        %6429 = vmax.xlane.f32.xlu0 %v6428
        %v6430 = vpop.xlane.xlu0 %6429
        %v6431 = vmax.f32 %v6275, %v6276
        %v6432 = vmax.f32 %v6431, %v6277
        %v6433 = vmax.f32 %v6432, %v6278
        %6434 = vmax.xlane.f32.xlu0 %v6433
        %v6435 = vpop.xlane.xlu0 %6434
        %v6436 = vmax.f32 %v6279, %v6280
        %v6437 = vmax.f32 %v6436, %v6281
        %v6438 = vmax.f32 %v6437, %v6282
        %6439 = vmax.xlane.f32.xlu0 %v6438
        %v6440 = vpop.xlane.xlu0 %6439
        %v6441 = vmax.f32 %v6283, %v6284
        %v6442 = vmax.f32 %v6441, %v6285
        %v6443 = vmax.f32 %v6442, %v6286
        %6444 = vmax.xlane.f32.xlu0 %v6443
        %v6445 = vpop.xlane.xlu0 %6444
        %v6446 = vmax.f32 %v6287, %v6288
        %v6447 = vmax.f32 %v6446, %v6289
        %v6448 = vmax.f32 %v6447, %v6290
        %6449 = vmax.xlane.f32.xlu0 %v6448
        %v6450 = vpop.xlane.xlu0 %6449
        %v6451 = vsub.f32 %v6163, %v6295
        %v6452 = vsub.f32 %v6164, %v6295
        %v6453 = vsub.f32 %v6165, %v6295
        %v6454 = vsub.f32 %v6166, %v6295
        %v6455 = vsub.f32 %v6167, %v6300
        %v6456 = vsub.f32 %v6168, %v6300
        %v6457 = vsub.f32 %v6169, %v6300
        %v6458 = vsub.f32 %v6170, %v6300
        %v6459 = vsub.f32 %v6171, %v6305
        %v6460 = vsub.f32 %v6172, %v6305
        %v6461 = vsub.f32 %v6173, %v6305
        %v6462 = vsub.f32 %v6174, %v6305
        %v6463 = vsub.f32 %v6175, %v6310
        %v6464 = vsub.f32 %v6176, %v6310
        %v6465 = vsub.f32 %v6177, %v6310
        %v6466 = vsub.f32 %v6178, %v6310
        %v6467 = vsub.f32 %v6179, %v6315
        %v6468 = vsub.f32 %v6180, %v6315
        %v6469 = vsub.f32 %v6181, %v6315
        %v6470 = vsub.f32 %v6182, %v6315
        %v6471 = vsub.f32 %v6183, %v6320
        %v6472 = vsub.f32 %v6184, %v6320
        %v6473 = vsub.f32 %v6185, %v6320
        %v6474 = vsub.f32 %v6186, %v6320
        %v6475 = vsub.f32 %v6187, %v6325
        %v6476 = vsub.f32 %v6188, %v6325
        %v6477 = vsub.f32 %v6189, %v6325
        %v6478 = vsub.f32 %v6190, %v6325
        %v6479 = vsub.f32 %v6191, %v6330
        %v6480 = vsub.f32 %v6192, %v6330
        %v6481 = vsub.f32 %v6193, %v6330
        %v6482 = vsub.f32 %v6194, %v6330
        %v6483 = vsub.f32 %v6195, %v6335
        %v6484 = vsub.f32 %v6196, %v6335
        %v6485 = vsub.f32 %v6197, %v6335
        %v6486 = vsub.f32 %v6198, %v6335
        %v6487 = vsub.f32 %v6199, %v6340
        %v6488 = vsub.f32 %v6200, %v6340
        %v6489 = vsub.f32 %v6201, %v6340
        %v6490 = vsub.f32 %v6202, %v6340
        %v6491 = vsub.f32 %v6203, %v6345
        %v6492 = vsub.f32 %v6204, %v6345
        %v6493 = vsub.f32 %v6205, %v6345
        %v6494 = vsub.f32 %v6206, %v6345
        %v6495 = vsub.f32 %v6207, %v6350
        %v6496 = vsub.f32 %v6208, %v6350
        %v6497 = vsub.f32 %v6209, %v6350
        %v6498 = vsub.f32 %v6210, %v6350
        %v6499 = vsub.f32 %v6211, %v6355
        %v6500 = vsub.f32 %v6212, %v6355
        %v6501 = vsub.f32 %v6213, %v6355
        %v6502 = vsub.f32 %v6214, %v6355
        %v6503 = vsub.f32 %v6215, %v6360
        %v6504 = vsub.f32 %v6216, %v6360
        %v6505 = vsub.f32 %v6217, %v6360
        %v6506 = vsub.f32 %v6218, %v6360
        %v6507 = vsub.f32 %v6219, %v6365
        %v6508 = vsub.f32 %v6220, %v6365
        %v6509 = vsub.f32 %v6221, %v6365
        %v6510 = vsub.f32 %v6222, %v6365
        %v6511 = vsub.f32 %v6223, %v6370
        %v6512 = vsub.f32 %v6224, %v6370
        %v6513 = vsub.f32 %v6225, %v6370
        %v6514 = vsub.f32 %v6226, %v6370
        %v6515 = vsub.f32 %v6227, %v6375
        %v6516 = vsub.f32 %v6228, %v6375
        %v6517 = vsub.f32 %v6229, %v6375
        %v6518 = vsub.f32 %v6230, %v6375
        %v6519 = vsub.f32 %v6231, %v6380
        %v6520 = vsub.f32 %v6232, %v6380
        %v6521 = vsub.f32 %v6233, %v6380
        %v6522 = vsub.f32 %v6234, %v6380
        %v6523 = vsub.f32 %v6235, %v6385
        %v6524 = vsub.f32 %v6236, %v6385
        %v6525 = vsub.f32 %v6237, %v6385
        %v6526 = vsub.f32 %v6238, %v6385
        %v6527 = vsub.f32 %v6239, %v6390
        %v6528 = vsub.f32 %v6240, %v6390
        %v6529 = vsub.f32 %v6241, %v6390
        %v6530 = vsub.f32 %v6242, %v6390
        %v6531 = vsub.f32 %v6243, %v6395
        %v6532 = vsub.f32 %v6244, %v6395
        %v6533 = vsub.f32 %v6245, %v6395
        %v6534 = vsub.f32 %v6246, %v6395
        %v6535 = vsub.f32 %v6247, %v6400
        %v6536 = vsub.f32 %v6248, %v6400
        %v6537 = vsub.f32 %v6249, %v6400
        %v6538 = vsub.f32 %v6250, %v6400
        %v6539 = vsub.f32 %v6251, %v6405
        %v6540 = vsub.f32 %v6252, %v6405
        %v6541 = vsub.f32 %v6253, %v6405
        %v6542 = vsub.f32 %v6254, %v6405
        %v6543 = vsub.f32 %v6255, %v6410
        %v6544 = vsub.f32 %v6256, %v6410
        %v6545 = vsub.f32 %v6257, %v6410
        %v6546 = vsub.f32 %v6258, %v6410
        %v6547 = vsub.f32 %v6259, %v6415
        %v6548 = vsub.f32 %v6260, %v6415
        %v6549 = vsub.f32 %v6261, %v6415
        %v6550 = vsub.f32 %v6262, %v6415
        %v6551 = vsub.f32 %v6263, %v6420
        %v6552 = vsub.f32 %v6264, %v6420
        %v6553 = vsub.f32 %v6265, %v6420
        %v6554 = vsub.f32 %v6266, %v6420
        %v6555 = vsub.f32 %v6267, %v6425
        %v6556 = vsub.f32 %v6268, %v6425
        %v6557 = vsub.f32 %v6269, %v6425
        %v6558 = vsub.f32 %v6270, %v6425
        %v6559 = vsub.f32 %v6271, %v6430
        %v6560 = vsub.f32 %v6272, %v6430
        %v6561 = vsub.f32 %v6273, %v6430
        %v6562 = vsub.f32 %v6274, %v6430
        %v6563 = vsub.f32 %v6275, %v6435
        %v6564 = vsub.f32 %v6276, %v6435
        %v6565 = vsub.f32 %v6277, %v6435
        %v6566 = vsub.f32 %v6278, %v6435
        %v6567 = vsub.f32 %v6279, %v6440
        %v6568 = vsub.f32 %v6280, %v6440
        %v6569 = vsub.f32 %v6281, %v6440
        %v6570 = vsub.f32 %v6282, %v6440
        %v6571 = vsub.f32 %v6283, %v6445
        %v6572 = vsub.f32 %v6284, %v6445
        %v6573 = vsub.f32 %v6285, %v6445
        %v6574 = vsub.f32 %v6286, %v6445
        %v6575 = vsub.f32 %v6287, %v6450
        %v6576 = vsub.f32 %v6288, %v6450
        %v6577 = vsub.f32 %v6289, %v6450
        %v6578 = vsub.f32 %v6290, %v6450
        %v6579 = vmul.f32 %v6451, 1.442695
        %v6580 = vpow.pop %v6579
        %v6581 = vmul.f32 %v6452, 1.442695
        %v6582 = vpow.pop %v6581
        %v6583 = vmul.f32 %v6453, 1.442695
        %v6584 = vpow.pop %v6583
        %v6585 = vmul.f32 %v6454, 1.442695
        %v6586 = vpow.pop %v6585
        %v6587 = vmul.f32 %v6455, 1.442695
        %v6588 = vpow.pop %v6587
        %v6589 = vmul.f32 %v6456, 1.442695
        %v6590 = vpow.pop %v6589
        %v6591 = vmul.f32 %v6457, 1.442695
        %v6592 = vpow.pop %v6591
        %v6593 = vmul.f32 %v6458, 1.442695
        %v6594 = vpow.pop %v6593
        %v6595 = vmul.f32 %v6459, 1.442695
        %v6596 = vpow.pop %v6595
        %v6597 = vmul.f32 %v6460, 1.442695
        %v6598 = vpow.pop %v6597
        %v6599 = vmul.f32 %v6461, 1.442695
        %v6600 = vpow.pop %v6599
        %v6601 = vmul.f32 %v6462, 1.442695
        %v6602 = vpow.pop %v6601
        %v6603 = vmul.f32 %v6463, 1.442695
        %v6604 = vpow.pop %v6603
        %v6605 = vmul.f32 %v6464, 1.442695
        %v6606 = vpow.pop %v6605
        %v6607 = vmul.f32 %v6465, 1.442695
        %v6608 = vpow.pop %v6607
        %v6609 = vmul.f32 %v6466, 1.442695
        %v6610 = vpow.pop %v6609
        %v6611 = vmul.f32 %v6467, 1.442695
        %v6612 = vpow.pop %v6611
        %v6613 = vmul.f32 %v6468, 1.442695
        %v6614 = vpow.pop %v6613
        %v6615 = vmul.f32 %v6469, 1.442695
        %v6616 = vpow.pop %v6615
        %v6617 = vmul.f32 %v6470, 1.442695
        %v6618 = vpow.pop %v6617
        %v6619 = vmul.f32 %v6471, 1.442695
        %v6620 = vpow.pop %v6619
        %v6621 = vmul.f32 %v6472, 1.442695
        %v6622 = vpow.pop %v6621
        %v6623 = vmul.f32 %v6473, 1.442695
        %v6624 = vpow.pop %v6623
        %v6625 = vmul.f32 %v6474, 1.442695
        %v6626 = vpow.pop %v6625
        %v6627 = vmul.f32 %v6475, 1.442695
        %v6628 = vpow.pop %v6627
        %v6629 = vmul.f32 %v6476, 1.442695
        %v6630 = vpow.pop %v6629
        %v6631 = vmul.f32 %v6477, 1.442695
        %v6632 = vpow.pop %v6631
        %v6633 = vmul.f32 %v6478, 1.442695
        %v6634 = vpow.pop %v6633
        %v6635 = vmul.f32 %v6479, 1.442695
        %v6636 = vpow.pop %v6635
        %v6637 = vmul.f32 %v6480, 1.442695
        %v6638 = vpow.pop %v6637
        %v6639 = vmul.f32 %v6481, 1.442695
        %v6640 = vpow.pop %v6639
        %v6641 = vmul.f32 %v6482, 1.442695
        %v6642 = vpow.pop %v6641
        %v6643 = vmul.f32 %v6483, 1.442695
        %v6644 = vpow.pop %v6643
        %v6645 = vmul.f32 %v6484, 1.442695
        %v6646 = vpow.pop %v6645
        %v6647 = vmul.f32 %v6485, 1.442695
        %v6648 = vpow.pop %v6647
        %v6649 = vmul.f32 %v6486, 1.442695
        %v6650 = vpow.pop %v6649
        %v6651 = vmul.f32 %v6487, 1.442695
        %v6652 = vpow.pop %v6651
        %v6653 = vmul.f32 %v6488, 1.442695
        %v6654 = vpow.pop %v6653
        %v6655 = vmul.f32 %v6489, 1.442695
        %v6656 = vpow.pop %v6655
        %v6657 = vmul.f32 %v6490, 1.442695
        %v6658 = vpow.pop %v6657
        %v6659 = vmul.f32 %v6491, 1.442695
        %v6660 = vpow.pop %v6659
        %v6661 = vmul.f32 %v6492, 1.442695
        %v6662 = vpow.pop %v6661
        %v6663 = vmul.f32 %v6493, 1.442695
        %v6664 = vpow.pop %v6663
        %v6665 = vmul.f32 %v6494, 1.442695
        %v6666 = vpow.pop %v6665
        %v6667 = vmul.f32 %v6495, 1.442695
        %v6668 = vpow.pop %v6667
        %v6669 = vmul.f32 %v6496, 1.442695
        %v6670 = vpow.pop %v6669
        %v6671 = vmul.f32 %v6497, 1.442695
        %v6672 = vpow.pop %v6671
        %v6673 = vmul.f32 %v6498, 1.442695
        %v6674 = vpow.pop %v6673
        %v6675 = vmul.f32 %v6499, 1.442695
        %v6676 = vpow.pop %v6675
        %v6677 = vmul.f32 %v6500, 1.442695
        %v6678 = vpow.pop %v6677
        %v6679 = vmul.f32 %v6501, 1.442695
        %v6680 = vpow.pop %v6679
        %v6681 = vmul.f32 %v6502, 1.442695
        %v6682 = vpow.pop %v6681
        %v6683 = vmul.f32 %v6503, 1.442695
        %v6684 = vpow.pop %v6683
        %v6685 = vmul.f32 %v6504, 1.442695
        %v6686 = vpow.pop %v6685
        %v6687 = vmul.f32 %v6505, 1.442695
        %v6688 = vpow.pop %v6687
        %v6689 = vmul.f32 %v6506, 1.442695
        %v6690 = vpow.pop %v6689
        %v6691 = vmul.f32 %v6507, 1.442695
        %v6692 = vpow.pop %v6691
        %v6693 = vmul.f32 %v6508, 1.442695
        %v6694 = vpow.pop %v6693
        %v6695 = vmul.f32 %v6509, 1.442695
        %v6696 = vpow.pop %v6695
        %v6697 = vmul.f32 %v6510, 1.442695
        %v6698 = vpow.pop %v6697
        %v6699 = vmul.f32 %v6511, 1.442695
        %v6700 = vpow.pop %v6699
        %v6701 = vmul.f32 %v6512, 1.442695
        %v6702 = vpow.pop %v6701
        %v6703 = vmul.f32 %v6513, 1.442695
        %v6704 = vpow.pop %v6703
        %v6705 = vmul.f32 %v6514, 1.442695
        %v6706 = vpow.pop %v6705
        %v6707 = vmul.f32 %v6515, 1.442695
        %v6708 = vpow.pop %v6707
        %v6709 = vmul.f32 %v6516, 1.442695
        %v6710 = vpow.pop %v6709
        %v6711 = vmul.f32 %v6517, 1.442695
        %v6712 = vpow.pop %v6711
        %v6713 = vmul.f32 %v6518, 1.442695
        %v6714 = vpow.pop %v6713
        %v6715 = vmul.f32 %v6519, 1.442695
        %v6716 = vpow.pop %v6715
        %v6717 = vmul.f32 %v6520, 1.442695
        %v6718 = vpow.pop %v6717
        %v6719 = vmul.f32 %v6521, 1.442695
        %v6720 = vpow.pop %v6719
        %v6721 = vmul.f32 %v6522, 1.442695
        %v6722 = vpow.pop %v6721
        %v6723 = vmul.f32 %v6523, 1.442695
        %v6724 = vpow.pop %v6723
        %v6725 = vmul.f32 %v6524, 1.442695
        %v6726 = vpow.pop %v6725
        %v6727 = vmul.f32 %v6525, 1.442695
        %v6728 = vpow.pop %v6727
        %v6729 = vmul.f32 %v6526, 1.442695
        %v6730 = vpow.pop %v6729
        %v6731 = vmul.f32 %v6527, 1.442695
        %v6732 = vpow.pop %v6731
        %v6733 = vmul.f32 %v6528, 1.442695
        %v6734 = vpow.pop %v6733
        %v6735 = vmul.f32 %v6529, 1.442695
        %v6736 = vpow.pop %v6735
        %v6737 = vmul.f32 %v6530, 1.442695
        %v6738 = vpow.pop %v6737
        %v6739 = vmul.f32 %v6531, 1.442695
        %v6740 = vpow.pop %v6739
        %v6741 = vmul.f32 %v6532, 1.442695
        %v6742 = vpow.pop %v6741
        %v6743 = vmul.f32 %v6533, 1.442695
        %v6744 = vpow.pop %v6743
        %v6745 = vmul.f32 %v6534, 1.442695
        %v6746 = vpow.pop %v6745
        %v6747 = vmul.f32 %v6535, 1.442695
        %v6748 = vpow.pop %v6747
        %v6749 = vmul.f32 %v6536, 1.442695
        %v6750 = vpow.pop %v6749
        %v6751 = vmul.f32 %v6537, 1.442695
        %v6752 = vpow.pop %v6751
        %v6753 = vmul.f32 %v6538, 1.442695
        %v6754 = vpow.pop %v6753
        %v6755 = vmul.f32 %v6539, 1.442695
        %v6756 = vpow.pop %v6755
        %v6757 = vmul.f32 %v6540, 1.442695
        %v6758 = vpow.pop %v6757
        %v6759 = vmul.f32 %v6541, 1.442695
        %v6760 = vpow.pop %v6759
        %v6761 = vmul.f32 %v6542, 1.442695
        %v6762 = vpow.pop %v6761
        %v6763 = vmul.f32 %v6543, 1.442695
        %v6764 = vpow.pop %v6763
        %v6765 = vmul.f32 %v6544, 1.442695
        %v6766 = vpow.pop %v6765
        %v6767 = vmul.f32 %v6545, 1.442695
        %v6768 = vpow.pop %v6767
        %v6769 = vmul.f32 %v6546, 1.442695
        %v6770 = vpow.pop %v6769
        %v6771 = vmul.f32 %v6547, 1.442695
        %v6772 = vpow.pop %v6771
        %v6773 = vmul.f32 %v6548, 1.442695
        %v6774 = vpow.pop %v6773
        %v6775 = vmul.f32 %v6549, 1.442695
        %v6776 = vpow.pop %v6775
        %v6777 = vmul.f32 %v6550, 1.442695
        %v6778 = vpow.pop %v6777
        %v6779 = vmul.f32 %v6551, 1.442695
        %v6780 = vpow.pop %v6779
        %v6781 = vmul.f32 %v6552, 1.442695
        %v6782 = vpow.pop %v6781
        %v6783 = vmul.f32 %v6553, 1.442695
        %v6784 = vpow.pop %v6783
        %v6785 = vmul.f32 %v6554, 1.442695
        %v6786 = vpow.pop %v6785
        %v6787 = vmul.f32 %v6555, 1.442695
        %v6788 = vpow.pop %v6787
        %v6789 = vmul.f32 %v6556, 1.442695
        %v6790 = vpow.pop %v6789
        %v6791 = vmul.f32 %v6557, 1.442695
        %v6792 = vpow.pop %v6791
        %v6793 = vmul.f32 %v6558, 1.442695
        %v6794 = vpow.pop %v6793
        %v6795 = vmul.f32 %v6559, 1.442695
        %v6796 = vpow.pop %v6795
        %v6797 = vmul.f32 %v6560, 1.442695
        %v6798 = vpow.pop %v6797
        %v6799 = vmul.f32 %v6561, 1.442695
        %v6800 = vpow.pop %v6799
        %v6801 = vmul.f32 %v6562, 1.442695
        %v6802 = vpow.pop %v6801
        %v6803 = vmul.f32 %v6563, 1.442695
        %v6804 = vpow.pop %v6803
        %v6805 = vmul.f32 %v6564, 1.442695
        %v6806 = vpow.pop %v6805
        %v6807 = vmul.f32 %v6565, 1.442695
        %v6808 = vpow.pop %v6807
        %v6809 = vmul.f32 %v6566, 1.442695
        %v6810 = vpow.pop %v6809
        %v6811 = vmul.f32 %v6567, 1.442695
        %v6812 = vpow.pop %v6811
        %v6813 = vmul.f32 %v6568, 1.442695
        %v6814 = vpow.pop %v6813
        %v6815 = vmul.f32 %v6569, 1.442695
        %v6816 = vpow.pop %v6815
        %v6817 = vmul.f32 %v6570, 1.442695
        %v6818 = vpow.pop %v6817
        %v6819 = vmul.f32 %v6571, 1.442695
        %v6820 = vpow.pop %v6819
        %v6821 = vmul.f32 %v6572, 1.442695
        %v6822 = vpow.pop %v6821
        %v6823 = vmul.f32 %v6573, 1.442695
        %v6824 = vpow.pop %v6823
        %v6825 = vmul.f32 %v6574, 1.442695
        %v6826 = vpow.pop %v6825
        %v6827 = vmul.f32 %v6575, 1.442695
        %v6828 = vpow.pop %v6827
        %v6829 = vmul.f32 %v6576, 1.442695
        %v6830 = vpow.pop %v6829
        %v6831 = vmul.f32 %v6577, 1.442695
        %v6832 = vpow.pop %v6831
        %v6833 = vmul.f32 %v6578, 1.442695
        %v6834 = vpow.pop %v6833
        %v6835 = vadd.f32 %v6580, %v6582
        %v6836 = vadd.f32 %v6835, %v6584
        %v6837 = vadd.f32 %v6836, %v6586
        %6838 = vadd.xlane.f32.xlu0 %v6837
        %v6839 = vpop.xlane.xlu0 %6838
        %v6840 = vadd.f32 %v6588, %v6590
        %v6841 = vadd.f32 %v6840, %v6592
        %v6842 = vadd.f32 %v6841, %v6594
        %6843 = vadd.xlane.f32.xlu0 %v6842
        %v6844 = vpop.xlane.xlu0 %6843
        %v6845 = vadd.f32 %v6596, %v6598
        %v6846 = vadd.f32 %v6845, %v6600
        %v6847 = vadd.f32 %v6846, %v6602
        %6848 = vadd.xlane.f32.xlu0 %v6847
        %v6849 = vpop.xlane.xlu0 %6848
        %v6850 = vadd.f32 %v6604, %v6606
        %v6851 = vadd.f32 %v6850, %v6608
        %v6852 = vadd.f32 %v6851, %v6610
        %6853 = vadd.xlane.f32.xlu0 %v6852
        %v6854 = vpop.xlane.xlu0 %6853
        %v6855 = vadd.f32 %v6612, %v6614
        %v6856 = vadd.f32 %v6855, %v6616
        %v6857 = vadd.f32 %v6856, %v6618
        %6858 = vadd.xlane.f32.xlu0 %v6857
        %v6859 = vpop.xlane.xlu0 %6858
        %v6860 = vadd.f32 %v6620, %v6622
        %v6861 = vadd.f32 %v6860, %v6624
        %v6862 = vadd.f32 %v6861, %v6626
        %6863 = vadd.xlane.f32.xlu0 %v6862
        %v6864 = vpop.xlane.xlu0 %6863
        %v6865 = vadd.f32 %v6628, %v6630
        %v6866 = vadd.f32 %v6865, %v6632
        %v6867 = vadd.f32 %v6866, %v6634
        %6868 = vadd.xlane.f32.xlu0 %v6867
        %v6869 = vpop.xlane.xlu0 %6868
        %v6870 = vadd.f32 %v6636, %v6638
        %v6871 = vadd.f32 %v6870, %v6640
        %v6872 = vadd.f32 %v6871, %v6642
        %6873 = vadd.xlane.f32.xlu0 %v6872
        %v6874 = vpop.xlane.xlu0 %6873
        %v6875 = vadd.f32 %v6644, %v6646
        %v6876 = vadd.f32 %v6875, %v6648
        %v6877 = vadd.f32 %v6876, %v6650
        %6878 = vadd.xlane.f32.xlu0 %v6877
        %v6879 = vpop.xlane.xlu0 %6878
        %v6880 = vadd.f32 %v6652, %v6654
        %v6881 = vadd.f32 %v6880, %v6656
        %v6882 = vadd.f32 %v6881, %v6658
        %6883 = vadd.xlane.f32.xlu0 %v6882
        %v6884 = vpop.xlane.xlu0 %6883
        %v6885 = vadd.f32 %v6660, %v6662
        %v6886 = vadd.f32 %v6885, %v6664
        %v6887 = vadd.f32 %v6886, %v6666
        %6888 = vadd.xlane.f32.xlu0 %v6887
        %v6889 = vpop.xlane.xlu0 %6888
        %v6890 = vadd.f32 %v6668, %v6670
        %v6891 = vadd.f32 %v6890, %v6672
        %v6892 = vadd.f32 %v6891, %v6674
        %6893 = vadd.xlane.f32.xlu0 %v6892
        %v6894 = vpop.xlane.xlu0 %6893
        %v6895 = vadd.f32 %v6676, %v6678
        %v6896 = vadd.f32 %v6895, %v6680
        %v6897 = vadd.f32 %v6896, %v6682
        %6898 = vadd.xlane.f32.xlu0 %v6897
        %v6899 = vpop.xlane.xlu0 %6898
        %v6900 = vadd.f32 %v6684, %v6686
        %v6901 = vadd.f32 %v6900, %v6688
        %v6902 = vadd.f32 %v6901, %v6690
        %6903 = vadd.xlane.f32.xlu0 %v6902
        %v6904 = vpop.xlane.xlu0 %6903
        %v6905 = vadd.f32 %v6692, %v6694
        %v6906 = vadd.f32 %v6905, %v6696
        %v6907 = vadd.f32 %v6906, %v6698
        %6908 = vadd.xlane.f32.xlu0 %v6907
        %v6909 = vpop.xlane.xlu0 %6908
        %v6910 = vadd.f32 %v6700, %v6702
        %v6911 = vadd.f32 %v6910, %v6704
        %v6912 = vadd.f32 %v6911, %v6706
        %6913 = vadd.xlane.f32.xlu0 %v6912
        %v6914 = vpop.xlane.xlu0 %6913
        %v6915 = vadd.f32 %v6708, %v6710
        %v6916 = vadd.f32 %v6915, %v6712
        %v6917 = vadd.f32 %v6916, %v6714
        %6918 = vadd.xlane.f32.xlu0 %v6917
        %v6919 = vpop.xlane.xlu0 %6918
        %v6920 = vadd.f32 %v6716, %v6718
        %v6921 = vadd.f32 %v6920, %v6720
        %v6922 = vadd.f32 %v6921, %v6722
        %6923 = vadd.xlane.f32.xlu0 %v6922
        %v6924 = vpop.xlane.xlu0 %6923
        %v6925 = vadd.f32 %v6724, %v6726
        %v6926 = vadd.f32 %v6925, %v6728
        %v6927 = vadd.f32 %v6926, %v6730
        %6928 = vadd.xlane.f32.xlu0 %v6927
        %v6929 = vpop.xlane.xlu0 %6928
        %v6930 = vadd.f32 %v6732, %v6734
        %v6931 = vadd.f32 %v6930, %v6736
        %v6932 = vadd.f32 %v6931, %v6738
        %6933 = vadd.xlane.f32.xlu0 %v6932
        %v6934 = vpop.xlane.xlu0 %6933
        %v6935 = vadd.f32 %v6740, %v6742
        %v6936 = vadd.f32 %v6935, %v6744
        %v6937 = vadd.f32 %v6936, %v6746
        %6938 = vadd.xlane.f32.xlu0 %v6937
        %v6939 = vpop.xlane.xlu0 %6938
        %v6940 = vadd.f32 %v6748, %v6750
        %v6941 = vadd.f32 %v6940, %v6752
        %v6942 = vadd.f32 %v6941, %v6754
        %6943 = vadd.xlane.f32.xlu0 %v6942
        %v6944 = vpop.xlane.xlu0 %6943
        %v6945 = vadd.f32 %v6756, %v6758
        %v6946 = vadd.f32 %v6945, %v6760
        %v6947 = vadd.f32 %v6946, %v6762
        %6948 = vadd.xlane.f32.xlu0 %v6947
        %v6949 = vpop.xlane.xlu0 %6948
        %v6950 = vadd.f32 %v6764, %v6766
        %v6951 = vadd.f32 %v6950, %v6768
        %v6952 = vadd.f32 %v6951, %v6770
        %6953 = vadd.xlane.f32.xlu0 %v6952
        %v6954 = vpop.xlane.xlu0 %6953
        %v6955 = vadd.f32 %v6772, %v6774
        %v6956 = vadd.f32 %v6955, %v6776
        %v6957 = vadd.f32 %v6956, %v6778
        %6958 = vadd.xlane.f32.xlu0 %v6957
        %v6959 = vpop.xlane.xlu0 %6958
        %v6960 = vadd.f32 %v6780, %v6782
        %v6961 = vadd.f32 %v6960, %v6784
        %v6962 = vadd.f32 %v6961, %v6786
        %6963 = vadd.xlane.f32.xlu0 %v6962
        %v6964 = vpop.xlane.xlu0 %6963
        %v6965 = vadd.f32 %v6788, %v6790
        %v6966 = vadd.f32 %v6965, %v6792
        %v6967 = vadd.f32 %v6966, %v6794
        %6968 = vadd.xlane.f32.xlu0 %v6967
        %v6969 = vpop.xlane.xlu0 %6968
        %v6970 = vadd.f32 %v6796, %v6798
        %v6971 = vadd.f32 %v6970, %v6800
        %v6972 = vadd.f32 %v6971, %v6802
        %6973 = vadd.xlane.f32.xlu0 %v6972
        %v6974 = vpop.xlane.xlu0 %6973
        %v6975 = vadd.f32 %v6804, %v6806
        %v6976 = vadd.f32 %v6975, %v6808
        %v6977 = vadd.f32 %v6976, %v6810
        %6978 = vadd.xlane.f32.xlu0 %v6977
        %v6979 = vpop.xlane.xlu0 %6978
        %v6980 = vadd.f32 %v6812, %v6814
        %v6981 = vadd.f32 %v6980, %v6816
        %v6982 = vadd.f32 %v6981, %v6818
        %6983 = vadd.xlane.f32.xlu0 %v6982
        %v6984 = vpop.xlane.xlu0 %6983
        %v6985 = vadd.f32 %v6820, %v6822
        %v6986 = vadd.f32 %v6985, %v6824
        %v6987 = vadd.f32 %v6986, %v6826
        %6988 = vadd.xlane.f32.xlu0 %v6987
        %v6989 = vpop.xlane.xlu0 %6988
        %v6990 = vadd.f32 %v6828, %v6830
        %v6991 = vadd.f32 %v6990, %v6832
        %v6992 = vadd.f32 %v6991, %v6834
        %6993 = vadd.xlane.f32.xlu0 %v6992
        %v6994 = vpop.xlane.xlu0 %6993
        %v6995 = vmax.f32 %v6295, %v6315
        %v6996 = vmax.f32 %v6300, %v6320
        %v6997 = vmax.f32 %v6305, %v6325
        %v6998 = vmax.f32 %v6310, %v6330
        %v6999 = vmax.f32 %v6995, %v6335
        %v7000 = vmax.f32 %v6996, %v6340
        %v7001 = vmax.f32 %v6997, %v6345
        %v7002 = vmax.f32 %v6998, %v6350
        %v7003 = vmax.f32 %v6999, %v6355
        %v7004 = vmax.f32 %v7000, %v6360
        %v7005 = vmax.f32 %v7001, %v6365
        %v7006 = vmax.f32 %v7002, %v6370
        %v7007 = vmax.f32 %v7003, %v6375
        %v7008 = vmax.f32 %v7004, %v6380
        %v7009 = vmax.f32 %v7005, %v6385
        %v7010 = vmax.f32 %v7006, %v6390
        %v7011 = vmax.f32 %v7007, %v6395
        %v7012 = vmax.f32 %v7008, %v6400
        %v7013 = vmax.f32 %v7009, %v6405
        %v7014 = vmax.f32 %v7010, %v6410
        %v7015 = vmax.f32 %v7011, %v6415
        %v7016 = vmax.f32 %v7012, %v6420
        %v7017 = vmax.f32 %v7013, %v6425
        %v7018 = vmax.f32 %v7014, %v6430
        %v7019 = vmax.f32 %v7015, %v6435
        %v7020 = vmax.f32 %v7016, %v6440
        %v7021 = vmax.f32 %v7017, %v6445
        %v7022 = vmax.f32 %v7018, %v6450
        %v7023 = vmax.f32 %v7019, %v7020
        %v7024 = vmax.f32 %v7021, %v7022
        %v7025 = vmax.f32 %v7023, %v7024
        %v7026 = vrot.slane %v7025, 4
        %v7027 = vmax.f32 %v7025, %v7026
        %v7028 = vrot.slane %v7027, 2
        %v7029 = vmax.f32 %v7027, %v7028
        %v7030 = vrot.slane %v7029, 1
        %v7031 = vmax.f32 %v7029, %v7030
        %s7032 = vtos %v7031
        %v7033 = vstv %s7032
        %v7034 = vsub.f32 %v6295, %v7033
        %v7035 = vsub.f32 %v6300, %v7033
        %v7036 = vsub.f32 %v6305, %v7033
        %v7037 = vsub.f32 %v6310, %v7033
        %v7038 = vsub.f32 %v6315, %v7033
        %v7039 = vsub.f32 %v6320, %v7033
        %v7040 = vsub.f32 %v6325, %v7033
        %v7041 = vsub.f32 %v6330, %v7033
        %v7042 = vsub.f32 %v6335, %v7033
        %v7043 = vsub.f32 %v6340, %v7033
        %v7044 = vsub.f32 %v6345, %v7033
        %v7045 = vsub.f32 %v6350, %v7033
        %v7046 = vsub.f32 %v6355, %v7033
        %v7047 = vsub.f32 %v6360, %v7033
        %v7048 = vsub.f32 %v6365, %v7033
        %v7049 = vsub.f32 %v6370, %v7033
        %v7050 = vsub.f32 %v6375, %v7033
        %v7051 = vsub.f32 %v6380, %v7033
        %v7052 = vsub.f32 %v6385, %v7033
        %v7053 = vsub.f32 %v6390, %v7033
        %v7054 = vsub.f32 %v6395, %v7033
        %v7055 = vsub.f32 %v6400, %v7033
        %v7056 = vsub.f32 %v6405, %v7033
        %v7057 = vsub.f32 %v6410, %v7033
        %v7058 = vsub.f32 %v6415, %v7033
        %v7059 = vsub.f32 %v6420, %v7033
        %v7060 = vsub.f32 %v6425, %v7033
        %v7061 = vsub.f32 %v6430, %v7033
        %v7062 = vsub.f32 %v6435, %v7033
        %v7063 = vsub.f32 %v6440, %v7033
        %v7064 = vsub.f32 %v6445, %v7033
        %v7065 = vsub.f32 %v6450, %v7033
        %v7066 = vmul.f32 %v7034, 1.442695
        %v7067 = vpow.pop %v7066
        %v7068 = vmul.f32 %v7035, 1.442695
        %v7069 = vpow.pop %v7068
        %v7070 = vmul.f32 %v7036, 1.442695
        %v7071 = vpow.pop %v7070
        %v7072 = vmul.f32 %v7037, 1.442695
        %v7073 = vpow.pop %v7072
        %v7074 = vmul.f32 %v7038, 1.442695
        %v7075 = vpow.pop %v7074
        %v7076 = vmul.f32 %v7039, 1.442695
        %v7077 = vpow.pop %v7076
        %v7078 = vmul.f32 %v7040, 1.442695
        %v7079 = vpow.pop %v7078
        %v7080 = vmul.f32 %v7041, 1.442695
        %v7081 = vpow.pop %v7080
        %v7082 = vmul.f32 %v7042, 1.442695
        %v7083 = vpow.pop %v7082
        %v7084 = vmul.f32 %v7043, 1.442695
        %v7085 = vpow.pop %v7084
        %v7086 = vmul.f32 %v7044, 1.442695
        %v7087 = vpow.pop %v7086
        %v7088 = vmul.f32 %v7045, 1.442695
        %v7089 = vpow.pop %v7088
        %v7090 = vmul.f32 %v7046, 1.442695
        %v7091 = vpow.pop %v7090
        %v7092 = vmul.f32 %v7047, 1.442695
        %v7093 = vpow.pop %v7092
        %v7094 = vmul.f32 %v7048, 1.442695
        %v7095 = vpow.pop %v7094
        %v7096 = vmul.f32 %v7049, 1.442695
        %v7097 = vpow.pop %v7096
        %v7098 = vmul.f32 %v7050, 1.442695
        %v7099 = vpow.pop %v7098
        %v7100 = vmul.f32 %v7051, 1.442695
        %v7101 = vpow.pop %v7100
        %v7102 = vmul.f32 %v7052, 1.442695
        %v7103 = vpow.pop %v7102
        %v7104 = vmul.f32 %v7053, 1.442695
        %v7105 = vpow.pop %v7104
        %v7106 = vmul.f32 %v7054, 1.442695
        %v7107 = vpow.pop %v7106
        %v7108 = vmul.f32 %v7055, 1.442695
        %v7109 = vpow.pop %v7108
        %v7110 = vmul.f32 %v7056, 1.442695
        %v7111 = vpow.pop %v7110
        %v7112 = vmul.f32 %v7057, 1.442695
        %v7113 = vpow.pop %v7112
        %v7114 = vmul.f32 %v7058, 1.442695
        %v7115 = vpow.pop %v7114
        %v7116 = vmul.f32 %v7059, 1.442695
        %v7117 = vpow.pop %v7116
        %v7118 = vmul.f32 %v7060, 1.442695
        %v7119 = vpow.pop %v7118
        %v7120 = vmul.f32 %v7061, 1.442695
        %v7121 = vpow.pop %v7120
        %v7122 = vmul.f32 %v7062, 1.442695
        %v7123 = vpow.pop %v7122
        %v7124 = vmul.f32 %v7063, 1.442695
        %v7125 = vpow.pop %v7124
        %v7126 = vmul.f32 %v7064, 1.442695
        %v7127 = vpow.pop %v7126
        %v7128 = vmul.f32 %v7065, 1.442695
        %v7129 = vpow.pop %v7128
        %v7130 = vmul.f32 %v6580, %v7067
        %v7131 = vmul.f32 %v6582, %v7067
        %v7132 = vmul.f32 %v6584, %v7067
        %v7133 = vmul.f32 %v6586, %v7067
        %v7134 = vmul.f32 %v6588, %v7069
        %v7135 = vmul.f32 %v6590, %v7069
        %v7136 = vmul.f32 %v6592, %v7069
        %v7137 = vmul.f32 %v6594, %v7069
        %v7138 = vmul.f32 %v6596, %v7071
        %v7139 = vmul.f32 %v6598, %v7071
        %v7140 = vmul.f32 %v6600, %v7071
        %v7141 = vmul.f32 %v6602, %v7071
        %v7142 = vmul.f32 %v6604, %v7073
        %v7143 = vmul.f32 %v6606, %v7073
        %v7144 = vmul.f32 %v6608, %v7073
        %v7145 = vmul.f32 %v6610, %v7073
        %v7146 = vmul.f32 %v6612, %v7075
        %v7147 = vmul.f32 %v6614, %v7075
        %v7148 = vmul.f32 %v6616, %v7075
        %v7149 = vmul.f32 %v6618, %v7075
        %v7150 = vmul.f32 %v6620, %v7077
        %v7151 = vmul.f32 %v6622, %v7077
        %v7152 = vmul.f32 %v6624, %v7077
        %v7153 = vmul.f32 %v6626, %v7077
        %v7154 = vmul.f32 %v6628, %v7079
        %v7155 = vmul.f32 %v6630, %v7079
        %v7156 = vmul.f32 %v6632, %v7079
        %v7157 = vmul.f32 %v6634, %v7079
        %v7158 = vmul.f32 %v6636, %v7081
        %v7159 = vmul.f32 %v6638, %v7081
        %v7160 = vmul.f32 %v6640, %v7081
        %v7161 = vmul.f32 %v6642, %v7081
        %v7162 = vmul.f32 %v6644, %v7083
        %v7163 = vmul.f32 %v6646, %v7083
        %v7164 = vmul.f32 %v6648, %v7083
        %v7165 = vmul.f32 %v6650, %v7083
        %v7166 = vmul.f32 %v6652, %v7085
        %v7167 = vmul.f32 %v6654, %v7085
        %v7168 = vmul.f32 %v6656, %v7085
        %v7169 = vmul.f32 %v6658, %v7085
        %v7170 = vmul.f32 %v6660, %v7087
        %v7171 = vmul.f32 %v6662, %v7087
        %v7172 = vmul.f32 %v6664, %v7087
        %v7173 = vmul.f32 %v6666, %v7087
        %v7174 = vmul.f32 %v6668, %v7089
        %v7175 = vmul.f32 %v6670, %v7089
        %v7176 = vmul.f32 %v6672, %v7089
        %v7177 = vmul.f32 %v6674, %v7089
        %v7178 = vmul.f32 %v6676, %v7091
        %v7179 = vmul.f32 %v6678, %v7091
        %v7180 = vmul.f32 %v6680, %v7091
        %v7181 = vmul.f32 %v6682, %v7091
        %v7182 = vmul.f32 %v6684, %v7093
        %v7183 = vmul.f32 %v6686, %v7093
        %v7184 = vmul.f32 %v6688, %v7093
        %v7185 = vmul.f32 %v6690, %v7093
        %v7186 = vmul.f32 %v6692, %v7095
        %v7187 = vmul.f32 %v6694, %v7095
        %v7188 = vmul.f32 %v6696, %v7095
        %v7189 = vmul.f32 %v6698, %v7095
        %v7190 = vmul.f32 %v6700, %v7097
        %v7191 = vmul.f32 %v6702, %v7097
        %v7192 = vmul.f32 %v6704, %v7097
        %v7193 = vmul.f32 %v6706, %v7097
        %v7194 = vmul.f32 %v6708, %v7099
        %v7195 = vmul.f32 %v6710, %v7099
        %v7196 = vmul.f32 %v6712, %v7099
        %v7197 = vmul.f32 %v6714, %v7099
        %v7198 = vmul.f32 %v6716, %v7101
        %v7199 = vmul.f32 %v6718, %v7101
        %v7200 = vmul.f32 %v6720, %v7101
        %v7201 = vmul.f32 %v6722, %v7101
        %v7202 = vmul.f32 %v6724, %v7103
        %v7203 = vmul.f32 %v6726, %v7103
        %v7204 = vmul.f32 %v6728, %v7103
        %v7205 = vmul.f32 %v6730, %v7103
        %v7206 = vmul.f32 %v6732, %v7105
        %v7207 = vmul.f32 %v6734, %v7105
        %v7208 = vmul.f32 %v6736, %v7105
        %v7209 = vmul.f32 %v6738, %v7105
        %v7210 = vmul.f32 %v6740, %v7107
        %v7211 = vmul.f32 %v6742, %v7107
        %v7212 = vmul.f32 %v6744, %v7107
        %v7213 = vmul.f32 %v6746, %v7107
        %v7214 = vmul.f32 %v6748, %v7109
        %v7215 = vmul.f32 %v6750, %v7109
        %v7216 = vmul.f32 %v6752, %v7109
        %v7217 = vmul.f32 %v6754, %v7109
        %v7218 = vmul.f32 %v6756, %v7111
        %v7219 = vmul.f32 %v6758, %v7111
        %v7220 = vmul.f32 %v6760, %v7111
        %v7221 = vmul.f32 %v6762, %v7111
        %v7222 = vmul.f32 %v6764, %v7113
        %v7223 = vmul.f32 %v6766, %v7113
        %v7224 = vmul.f32 %v6768, %v7113
        %v7225 = vmul.f32 %v6770, %v7113
        %v7226 = vmul.f32 %v6772, %v7115
        %v7227 = vmul.f32 %v6774, %v7115
        %v7228 = vmul.f32 %v6776, %v7115
        %v7229 = vmul.f32 %v6778, %v7115
        %v7230 = vmul.f32 %v6780, %v7117
        %v7231 = vmul.f32 %v6782, %v7117
        %v7232 = vmul.f32 %v6784, %v7117
        %v7233 = vmul.f32 %v6786, %v7117
        %v7234 = vmul.f32 %v6788, %v7119
        %v7235 = vmul.f32 %v6790, %v7119
        %v7236 = vmul.f32 %v6792, %v7119
        %v7237 = vmul.f32 %v6794, %v7119
        %v7238 = vmul.f32 %v6796, %v7121
        %v7239 = vmul.f32 %v6798, %v7121
        %v7240 = vmul.f32 %v6800, %v7121
        %v7241 = vmul.f32 %v6802, %v7121
        %v7242 = vmul.f32 %v6804, %v7123
        %v7243 = vmul.f32 %v6806, %v7123
        %v7244 = vmul.f32 %v6808, %v7123
        %v7245 = vmul.f32 %v6810, %v7123
        %v7246 = vmul.f32 %v6812, %v7125
        %v7247 = vmul.f32 %v6814, %v7125
        %v7248 = vmul.f32 %v6816, %v7125
        %v7249 = vmul.f32 %v6818, %v7125
        %v7250 = vmul.f32 %v6820, %v7127
        %v7251 = vmul.f32 %v6822, %v7127
        %v7252 = vmul.f32 %v6824, %v7127
        %v7253 = vmul.f32 %v6826, %v7127
        %v7254 = vmul.f32 %v6828, %v7129
        %v7255 = vmul.f32 %v6830, %v7129
        %v7256 = vmul.f32 %v6832, %v7129
        %v7257 = vmul.f32 %v6834, %v7129
        %v7258 = vadd.f32 %v7130, %v7134
        %v7259 = vadd.f32 %v7258, %v7138
        %v7260 = vadd.f32 %v7259, %v7142
        %v7261 = vadd.f32 %v7260, %v7146
        %v7262 = vadd.f32 %v7261, %v7150
        %v7263 = vadd.f32 %v7262, %v7154
        %v7264 = vadd.f32 %v7263, %v7158
        %v7265 = vadd.f32 %v7264, %v7162
        %v7266 = vadd.f32 %v7265, %v7166
        %v7267 = vadd.f32 %v7266, %v7170
        %v7268 = vadd.f32 %v7267, %v7174
        %v7269 = vadd.f32 %v7268, %v7178
        %v7270 = vadd.f32 %v7269, %v7182
        %v7271 = vadd.f32 %v7270, %v7186
        %v7272 = vadd.f32 %v7271, %v7190
        %v7273 = vadd.f32 %v7272, %v7194
        %v7274 = vadd.f32 %v7273, %v7198
        %v7275 = vadd.f32 %v7274, %v7202
        %v7276 = vadd.f32 %v7275, %v7206
        %v7277 = vadd.f32 %v7276, %v7210
        %v7278 = vadd.f32 %v7277, %v7214
        %v7279 = vadd.f32 %v7278, %v7218
        %v7280 = vadd.f32 %v7279, %v7222
        %v7281 = vadd.f32 %v7280, %v7226
        %v7282 = vadd.f32 %v7281, %v7230
        %v7283 = vadd.f32 %v7282, %v7234
        %v7284 = vadd.f32 %v7283, %v7238
        %v7285 = vadd.f32 %v7284, %v7242
        %v7286 = vadd.f32 %v7285, %v7246
        %v7287 = vadd.f32 %v7286, %v7250
        %v7288 = vadd.f32 %v7287, %v7254
        %v7289 = vrot.slane %v7288, 4
        %v7290 = vadd.f32 %v7288, %v7289
        %v7291 = vrot.slane %v7290, 2
        %v7292 = vadd.f32 %v7290, %v7291
        %v7293 = vrot.slane %v7292, 1
        %v7294 = vadd.f32 %v7292, %v7293
        %v7295 = vadd.f32 %v7131, %v7135
        %v7296 = vadd.f32 %v7295, %v7139
        %v7297 = vadd.f32 %v7296, %v7143
        %v7298 = vadd.f32 %v7297, %v7147
        %v7299 = vadd.f32 %v7298, %v7151
        %v7300 = vadd.f32 %v7299, %v7155
        %v7301 = vadd.f32 %v7300, %v7159
        %v7302 = vadd.f32 %v7301, %v7163
        %v7303 = vadd.f32 %v7302, %v7167
        %v7304 = vadd.f32 %v7303, %v7171
        %v7305 = vadd.f32 %v7304, %v7175
        %v7306 = vadd.f32 %v7305, %v7179
        %v7307 = vadd.f32 %v7306, %v7183
        %v7308 = vadd.f32 %v7307, %v7187
        %v7309 = vadd.f32 %v7308, %v7191
        %v7310 = vadd.f32 %v7309, %v7195
        %v7311 = vadd.f32 %v7310, %v7199
        %v7312 = vadd.f32 %v7311, %v7203
        %v7313 = vadd.f32 %v7312, %v7207
        %v7314 = vadd.f32 %v7313, %v7211
        %v7315 = vadd.f32 %v7314, %v7215
        %v7316 = vadd.f32 %v7315, %v7219
        %v7317 = vadd.f32 %v7316, %v7223
        %v7318 = vadd.f32 %v7317, %v7227
        %v7319 = vadd.f32 %v7318, %v7231
        %v7320 = vadd.f32 %v7319, %v7235
        %v7321 = vadd.f32 %v7320, %v7239
        %v7322 = vadd.f32 %v7321, %v7243
        %v7323 = vadd.f32 %v7322, %v7247
        %v7324 = vadd.f32 %v7323, %v7251
        %v7325 = vadd.f32 %v7324, %v7255
        %v7326 = vrot.slane %v7325, 4
        %v7327 = vadd.f32 %v7325, %v7326
        %v7328 = vrot.slane %v7327, 2
        %v7329 = vadd.f32 %v7327, %v7328
        %v7330 = vrot.slane %v7329, 1
        %v7331 = vadd.f32 %v7329, %v7330
        %v7332 = vadd.f32 %v7132, %v7136
        %v7333 = vadd.f32 %v7332, %v7140
        %v7334 = vadd.f32 %v7333, %v7144
        %v7335 = vadd.f32 %v7334, %v7148
        %v7336 = vadd.f32 %v7335, %v7152
        %v7337 = vadd.f32 %v7336, %v7156
        %v7338 = vadd.f32 %v7337, %v7160
        %v7339 = vadd.f32 %v7338, %v7164
        %v7340 = vadd.f32 %v7339, %v7168
        %v7341 = vadd.f32 %v7340, %v7172
        %v7342 = vadd.f32 %v7341, %v7176
        %v7343 = vadd.f32 %v7342, %v7180
        %v7344 = vadd.f32 %v7343, %v7184
        %v7345 = vadd.f32 %v7344, %v7188
        %v7346 = vadd.f32 %v7345, %v7192
        %v7347 = vadd.f32 %v7346, %v7196
        %v7348 = vadd.f32 %v7347, %v7200
        %v7349 = vadd.f32 %v7348, %v7204
        %v7350 = vadd.f32 %v7349, %v7208
        %v7351 = vadd.f32 %v7350, %v7212
        %v7352 = vadd.f32 %v7351, %v7216
        %v7353 = vadd.f32 %v7352, %v7220
        %v7354 = vadd.f32 %v7353, %v7224
        %v7355 = vadd.f32 %v7354, %v7228
        %v7356 = vadd.f32 %v7355, %v7232
        %v7357 = vadd.f32 %v7356, %v7236
        %v7358 = vadd.f32 %v7357, %v7240
        %v7359 = vadd.f32 %v7358, %v7244
        %v7360 = vadd.f32 %v7359, %v7248
        %v7361 = vadd.f32 %v7360, %v7252
        %v7362 = vadd.f32 %v7361, %v7256
        %v7363 = vrot.slane %v7362, 4
        %v7364 = vadd.f32 %v7362, %v7363
        %v7365 = vrot.slane %v7364, 2
        %v7366 = vadd.f32 %v7364, %v7365
        %v7367 = vrot.slane %v7366, 1
        %v7368 = vadd.f32 %v7366, %v7367
        %v7369 = vadd.f32 %v7133, %v7137
        %v7370 = vadd.f32 %v7369, %v7141
        %v7371 = vadd.f32 %v7370, %v7145
        %v7372 = vadd.f32 %v7371, %v7149
        %v7373 = vadd.f32 %v7372, %v7153
        %v7374 = vadd.f32 %v7373, %v7157
        %v7375 = vadd.f32 %v7374, %v7161
        %v7376 = vadd.f32 %v7375, %v7165
        %v7377 = vadd.f32 %v7376, %v7169
        %v7378 = vadd.f32 %v7377, %v7173
        %v7379 = vadd.f32 %v7378, %v7177
        %v7380 = vadd.f32 %v7379, %v7181
        %v7381 = vadd.f32 %v7380, %v7185
        %v7382 = vadd.f32 %v7381, %v7189
        %v7383 = vadd.f32 %v7382, %v7193
        %v7384 = vadd.f32 %v7383, %v7197
        %v7385 = vadd.f32 %v7384, %v7201
        %v7386 = vadd.f32 %v7385, %v7205
        %v7387 = vadd.f32 %v7386, %v7209
        %v7388 = vadd.f32 %v7387, %v7213
        %v7389 = vadd.f32 %v7388, %v7217
        %v7390 = vadd.f32 %v7389, %v7221
        %v7391 = vadd.f32 %v7390, %v7225
        %v7392 = vadd.f32 %v7391, %v7229
        %v7393 = vadd.f32 %v7392, %v7233
        %v7394 = vadd.f32 %v7393, %v7237
        %v7395 = vadd.f32 %v7394, %v7241
        %v7396 = vadd.f32 %v7395, %v7245
        %v7397 = vadd.f32 %v7396, %v7249
        %v7398 = vadd.f32 %v7397, %v7253
        %v7399 = vadd.f32 %v7398, %v7257
        %v7400 = vrot.slane %v7399, 4
        %v7401 = vadd.f32 %v7399, %v7400
        %v7402 = vrot.slane %v7401, 2
        %v7403 = vadd.f32 %v7401, %v7402
        %v7404 = vrot.slane %v7403, 1
        %v7405 = vadd.f32 %v7403, %v7404
        %v7406 = vmin.f32 %v7294, %v7331
        %v7407 = vmin.f32 %v7368, %v7405
        %v7408 = vmin.f32 %v7406, %v7407
        %7409 = vmin.xlane.f32.xlu0 %v7408
        %v7410 = vpop.xlane.xlu0 %7409
        %s7411 = vtos %v7410
        %p7412 = scmp.lt.f32.partialorder %s7411, 1e-20
        // Predicated region
        $region77: #{_clip_loss_tiled.1} parent=31 // pred_check
          %p7413 = pneg %p7412
        $region78: #{_clip_loss_tiled.1} parent=31 // pred_check_branch
          %7415 = sbr.rel (%p7413) target = $region80
        $region79: #{_clip_loss_tiled.1} parent=31 // pred_region
          %v7416 = vmax.f32 %v6163, %v6167
          %v7417 = vmax.f32 %v7416, %v6171
          %v7418 = vmax.f32 %v7417, %v6175
          %v7419 = vmax.f32 %v7418, %v6179
          %v7420 = vmax.f32 %v7419, %v6183
          %v7421 = vmax.f32 %v7420, %v6187
          %v7422 = vmax.f32 %v7421, %v6191
          %v7423 = vmax.f32 %v7422, %v6195
          %v7424 = vmax.f32 %v7423, %v6199
          %v7425 = vmax.f32 %v7424, %v6203
          %v7426 = vmax.f32 %v7425, %v6207
          %v7427 = vmax.f32 %v7426, %v6211
          %v7428 = vmax.f32 %v7427, %v6215
          %v7429 = vmax.f32 %v7428, %v6219
          %v7430 = vmax.f32 %v7429, %v6223
          %v7431 = vmax.f32 %v7430, %v6227
          %v7432 = vmax.f32 %v7431, %v6231
          %v7433 = vmax.f32 %v7432, %v6235
          %v7434 = vmax.f32 %v7433, %v6239
          %v7435 = vmax.f32 %v7434, %v6243
          %v7436 = vmax.f32 %v7435, %v6247
          %v7437 = vmax.f32 %v7436, %v6251
          %v7438 = vmax.f32 %v7437, %v6255
          %v7439 = vmax.f32 %v7438, %v6259
          %v7440 = vmax.f32 %v7439, %v6263
          %v7441 = vmax.f32 %v7440, %v6267
          %v7442 = vmax.f32 %v7441, %v6271
          %v7443 = vmax.f32 %v7442, %v6275
          %v7444 = vmax.f32 %v7443, %v6279
          %v7445 = vmax.f32 %v7444, %v6283
          %v7446 = vmax.f32 %v7445, %v6287
          %v7447 = vrot.slane %v7446, 4
          %v7448 = vmax.f32 %v7446, %v7447
          %v7449 = vrot.slane %v7448, 2
          %v7450 = vmax.f32 %v7448, %v7449
          %v7451 = vrot.slane %v7450, 1
          %v7452 = vmax.f32 %v7450, %v7451
          %v7453 = vmax.f32 %v6164, %v6168
          %v7454 = vmax.f32 %v7453, %v6172
          %v7455 = vmax.f32 %v7454, %v6176
          %v7456 = vmax.f32 %v7455, %v6180
          %v7457 = vmax.f32 %v7456, %v6184
          %v7458 = vmax.f32 %v7457, %v6188
          %v7459 = vmax.f32 %v7458, %v6192
          %v7460 = vmax.f32 %v7459, %v6196
          %v7461 = vmax.f32 %v7460, %v6200
          %v7462 = vmax.f32 %v7461, %v6204
          %v7463 = vmax.f32 %v7462, %v6208
          %v7464 = vmax.f32 %v7463, %v6212
          %v7465 = vmax.f32 %v7464, %v6216
          %v7466 = vmax.f32 %v7465, %v6220
          %v7467 = vmax.f32 %v7466, %v6224
          %v7468 = vmax.f32 %v7467, %v6228
          %v7469 = vmax.f32 %v7468, %v6232
          %v7470 = vmax.f32 %v7469, %v6236
          %v7471 = vmax.f32 %v7470, %v6240
          %v7472 = vmax.f32 %v7471, %v6244
          %v7473 = vmax.f32 %v7472, %v6248
          %v7474 = vmax.f32 %v7473, %v6252
          %v7475 = vmax.f32 %v7474, %v6256
          %v7476 = vmax.f32 %v7475, %v6260
          %v7477 = vmax.f32 %v7476, %v6264
          %v7478 = vmax.f32 %v7477, %v6268
          %v7479 = vmax.f32 %v7478, %v6272
          %v7480 = vmax.f32 %v7479, %v6276
          %v7481 = vmax.f32 %v7480, %v6280
          %v7482 = vmax.f32 %v7481, %v6284
          %v7483 = vmax.f32 %v7482, %v6288
          %v7484 = vrot.slane %v7483, 4
          %v7485 = vmax.f32 %v7483, %v7484
          %v7486 = vrot.slane %v7485, 2
          %v7487 = vmax.f32 %v7485, %v7486
          %v7488 = vrot.slane %v7487, 1
          %v7489 = vmax.f32 %v7487, %v7488
          %v7490 = vmax.f32 %v6165, %v6169
          %v7491 = vmax.f32 %v7490, %v6173
          %v7492 = vmax.f32 %v7491, %v6177
          %v7493 = vmax.f32 %v7492, %v6181
          %v7494 = vmax.f32 %v7493, %v6185
          %v7495 = vmax.f32 %v7494, %v6189
          %v7496 = vmax.f32 %v7495, %v6193
          %v7497 = vmax.f32 %v7496, %v6197
          %v7498 = vmax.f32 %v7497, %v6201
          %v7499 = vmax.f32 %v7498, %v6205
          %v7500 = vmax.f32 %v7499, %v6209
          %v7501 = vmax.f32 %v7500, %v6213
          %v7502 = vmax.f32 %v7501, %v6217
          %v7503 = vmax.f32 %v7502, %v6221
          %v7504 = vmax.f32 %v7503, %v6225
          %v7505 = vmax.f32 %v7504, %v6229
          %v7506 = vmax.f32 %v7505, %v6233
          %v7507 = vmax.f32 %v7506, %v6237
          %v7508 = vmax.f32 %v7507, %v6241
          %v7509 = vmax.f32 %v7508, %v6245
          %v7510 = vmax.f32 %v7509, %v6249
          %v7511 = vmax.f32 %v7510, %v6253
          %v7512 = vmax.f32 %v7511, %v6257
          %v7513 = vmax.f32 %v7512, %v6261
          %v7514 = vmax.f32 %v7513, %v6265
          %v7515 = vmax.f32 %v7514, %v6269
          %v7516 = vmax.f32 %v7515, %v6273
          %v7517 = vmax.f32 %v7516, %v6277
          %v7518 = vmax.f32 %v7517, %v6281
          %v7519 = vmax.f32 %v7518, %v6285
          %v7520 = vmax.f32 %v7519, %v6289
          %v7521 = vrot.slane %v7520, 4
          %v7522 = vmax.f32 %v7520, %v7521
          %v7523 = vrot.slane %v7522, 2
          %v7524 = vmax.f32 %v7522, %v7523
          %v7525 = vrot.slane %v7524, 1
          %v7526 = vmax.f32 %v7524, %v7525
          %v7527 = vmax.f32 %v6166, %v6170
          %v7528 = vmax.f32 %v7527, %v6174
          %v7529 = vmax.f32 %v7528, %v6178
          %v7530 = vmax.f32 %v7529, %v6182
          %v7531 = vmax.f32 %v7530, %v6186
          %v7532 = vmax.f32 %v7531, %v6190
          %v7533 = vmax.f32 %v7532, %v6194
          %v7534 = vmax.f32 %v7533, %v6198
          %v7535 = vmax.f32 %v7534, %v6202
          %v7536 = vmax.f32 %v7535, %v6206
          %v7537 = vmax.f32 %v7536, %v6210
          %v7538 = vmax.f32 %v7537, %v6214
          %v7539 = vmax.f32 %v7538, %v6218
          %v7540 = vmax.f32 %v7539, %v6222
          %v7541 = vmax.f32 %v7540, %v6226
          %v7542 = vmax.f32 %v7541, %v6230
          %v7543 = vmax.f32 %v7542, %v6234
          %v7544 = vmax.f32 %v7543, %v6238
          %v7545 = vmax.f32 %v7544, %v6242
          %v7546 = vmax.f32 %v7545, %v6246
          %v7547 = vmax.f32 %v7546, %v6250
          %v7548 = vmax.f32 %v7547, %v6254
          %v7549 = vmax.f32 %v7548, %v6258
          %v7550 = vmax.f32 %v7549, %v6262
          %v7551 = vmax.f32 %v7550, %v6266
          %v7552 = vmax.f32 %v7551, %v6270
          %v7553 = vmax.f32 %v7552, %v6274
          %v7554 = vmax.f32 %v7553, %v6278
          %v7555 = vmax.f32 %v7554, %v6282
          %v7556 = vmax.f32 %v7555, %v6286
          %v7557 = vmax.f32 %v7556, %v6290
          %v7558 = vrot.slane %v7557, 4
          %v7559 = vmax.f32 %v7557, %v7558
          %v7560 = vrot.slane %v7559, 2
          %v7561 = vmax.f32 %v7559, %v7560
          %v7562 = vrot.slane %v7561, 1
          %v7563 = vmax.f32 %v7561, %v7562
          %v7564 = vsub.f32 %v6163, %v7452
          %v7565 = vsub.f32 %v6164, %v7489
          %v7566 = vsub.f32 %v6165, %v7526
          %v7567 = vsub.f32 %v6166, %v7563
          %v7568 = vsub.f32 %v6167, %v7452
          %v7569 = vsub.f32 %v6168, %v7489
          %v7570 = vsub.f32 %v6169, %v7526
          %v7571 = vsub.f32 %v6170, %v7563
          %v7572 = vsub.f32 %v6171, %v7452
          %v7573 = vsub.f32 %v6172, %v7489
          %v7574 = vsub.f32 %v6173, %v7526
          %v7575 = vsub.f32 %v6174, %v7563
          %v7576 = vsub.f32 %v6175, %v7452
          %v7577 = vsub.f32 %v6176, %v7489
          %v7578 = vsub.f32 %v6177, %v7526
          %v7579 = vsub.f32 %v6178, %v7563
          %v7580 = vsub.f32 %v6179, %v7452
          %v7581 = vsub.f32 %v6180, %v7489
          %v7582 = vsub.f32 %v6181, %v7526
          %v7583 = vsub.f32 %v6182, %v7563
          %v7584 = vsub.f32 %v6183, %v7452
          %v7585 = vsub.f32 %v6184, %v7489
          %v7586 = vsub.f32 %v6185, %v7526
          %v7587 = vsub.f32 %v6186, %v7563
          %v7588 = vsub.f32 %v6187, %v7452
          %v7589 = vsub.f32 %v6188, %v7489
          %v7590 = vsub.f32 %v6189, %v7526
          %v7591 = vsub.f32 %v6190, %v7563
          %v7592 = vsub.f32 %v6191, %v7452
          %v7593 = vsub.f32 %v6192, %v7489
          %v7594 = vsub.f32 %v6193, %v7526
          %v7595 = vsub.f32 %v6194, %v7563
          %v7596 = vsub.f32 %v6195, %v7452
          %v7597 = vsub.f32 %v6196, %v7489
          %v7598 = vsub.f32 %v6197, %v7526
          %v7599 = vsub.f32 %v6198, %v7563
          %v7600 = vsub.f32 %v6199, %v7452
          %v7601 = vsub.f32 %v6200, %v7489
          %v7602 = vsub.f32 %v6201, %v7526
          %v7603 = vsub.f32 %v6202, %v7563
          %v7604 = vsub.f32 %v6203, %v7452
          %v7605 = vsub.f32 %v6204, %v7489
          %v7606 = vsub.f32 %v6205, %v7526
          %v7607 = vsub.f32 %v6206, %v7563
          %v7608 = vsub.f32 %v6207, %v7452
          %v7609 = vsub.f32 %v6208, %v7489
          %v7610 = vsub.f32 %v6209, %v7526
          %v7611 = vsub.f32 %v6210, %v7563
          %v7612 = vsub.f32 %v6211, %v7452
          %v7613 = vsub.f32 %v6212, %v7489
          %v7614 = vsub.f32 %v6213, %v7526
          %v7615 = vsub.f32 %v6214, %v7563
          %v7616 = vsub.f32 %v6215, %v7452
          %v7617 = vsub.f32 %v6216, %v7489
          %v7618 = vsub.f32 %v6217, %v7526
          %v7619 = vsub.f32 %v6218, %v7563
          %v7620 = vsub.f32 %v6219, %v7452
          %v7621 = vsub.f32 %v6220, %v7489
          %v7622 = vsub.f32 %v6221, %v7526
          %v7623 = vsub.f32 %v6222, %v7563
          %v7624 = vsub.f32 %v6223, %v7452
          %v7625 = vsub.f32 %v6224, %v7489
          %v7626 = vsub.f32 %v6225, %v7526
          %v7627 = vsub.f32 %v6226, %v7563
          %v7628 = vsub.f32 %v6227, %v7452
          %v7629 = vsub.f32 %v6228, %v7489
          %v7630 = vsub.f32 %v6229, %v7526
          %v7631 = vsub.f32 %v6230, %v7563
          %v7632 = vsub.f32 %v6231, %v7452
          %v7633 = vsub.f32 %v6232, %v7489
          %v7634 = vsub.f32 %v6233, %v7526
          %v7635 = vsub.f32 %v6234, %v7563
          %v7636 = vsub.f32 %v6235, %v7452
          %v7637 = vsub.f32 %v6236, %v7489
          %v7638 = vsub.f32 %v6237, %v7526
          %v7639 = vsub.f32 %v6238, %v7563
          %v7640 = vsub.f32 %v6239, %v7452
          %v7641 = vsub.f32 %v6240, %v7489
          %v7642 = vsub.f32 %v6241, %v7526
          %v7643 = vsub.f32 %v6242, %v7563
          %v7644 = vsub.f32 %v6243, %v7452
          %v7645 = vsub.f32 %v6244, %v7489
          %v7646 = vsub.f32 %v6245, %v7526
          %v7647 = vsub.f32 %v6246, %v7563
          %v7648 = vsub.f32 %v6247, %v7452
          %v7649 = vsub.f32 %v6248, %v7489
          %v7650 = vsub.f32 %v6249, %v7526
          %v7651 = vsub.f32 %v6250, %v7563
          %v7652 = vsub.f32 %v6251, %v7452
          %v7653 = vsub.f32 %v6252, %v7489
          %v7654 = vsub.f32 %v6253, %v7526
          %v7655 = vsub.f32 %v6254, %v7563
          %v7656 = vsub.f32 %v6255, %v7452
          %v7657 = vsub.f32 %v6256, %v7489
          %v7658 = vsub.f32 %v6257, %v7526
          %v7659 = vsub.f32 %v6258, %v7563
          %v7660 = vsub.f32 %v6259, %v7452
          %v7661 = vsub.f32 %v6260, %v7489
          %v7662 = vsub.f32 %v6261, %v7526
          %v7663 = vsub.f32 %v6262, %v7563
          %v7664 = vsub.f32 %v6263, %v7452
          %v7665 = vsub.f32 %v6264, %v7489
          %v7666 = vsub.f32 %v6265, %v7526
          %v7667 = vsub.f32 %v6266, %v7563
          %v7668 = vsub.f32 %v6267, %v7452
          %v7669 = vsub.f32 %v6268, %v7489
          %v7670 = vsub.f32 %v6269, %v7526
          %v7671 = vsub.f32 %v6270, %v7563
          %v7672 = vsub.f32 %v6271, %v7452
          %v7673 = vsub.f32 %v6272, %v7489
          %v7674 = vsub.f32 %v6273, %v7526
          %v7675 = vsub.f32 %v6274, %v7563
          %v7676 = vsub.f32 %v6275, %v7452
          %v7677 = vsub.f32 %v6276, %v7489
          %v7678 = vsub.f32 %v6277, %v7526
          %v7679 = vsub.f32 %v6278, %v7563
          %v7680 = vsub.f32 %v6279, %v7452
          %v7681 = vsub.f32 %v6280, %v7489
          %v7682 = vsub.f32 %v6281, %v7526
          %v7683 = vsub.f32 %v6282, %v7563
          %v7684 = vsub.f32 %v6283, %v7452
          %v7685 = vsub.f32 %v6284, %v7489
          %v7686 = vsub.f32 %v6285, %v7526
          %v7687 = vsub.f32 %v6286, %v7563
          %v7688 = vsub.f32 %v6287, %v7452
          %v7689 = vsub.f32 %v6288, %v7489
          %v7690 = vsub.f32 %v6289, %v7526
          %v7691 = vsub.f32 %v6290, %v7563
          %v7692 = vmul.f32 %v7564, 1.442695
          %v7693 = vpow.pop %v7692
          %v7694 = vmul.f32 %v7565, 1.442695
          %v7695 = vpow.pop %v7694
          %v7696 = vmul.f32 %v7566, 1.442695
          %v7697 = vpow.pop %v7696
          %v7698 = vmul.f32 %v7567, 1.442695
          %v7699 = vpow.pop %v7698
          %v7700 = vmul.f32 %v7568, 1.442695
          %v7701 = vpow.pop %v7700
          %v7702 = vmul.f32 %v7569, 1.442695
          %v7703 = vpow.pop %v7702
          %v7704 = vmul.f32 %v7570, 1.442695
          %v7705 = vpow.pop %v7704
          %v7706 = vmul.f32 %v7571, 1.442695
          %v7707 = vpow.pop %v7706
          %v7708 = vmul.f32 %v7572, 1.442695
          %v7709 = vpow.pop %v7708
          %v7710 = vmul.f32 %v7573, 1.442695
          %v7711 = vpow.pop %v7710
          %v7712 = vmul.f32 %v7574, 1.442695
          %v7713 = vpow.pop %v7712
          %v7714 = vmul.f32 %v7575, 1.442695
          %v7715 = vpow.pop %v7714
          %v7716 = vmul.f32 %v7576, 1.442695
          %v7717 = vpow.pop %v7716
          %v7718 = vmul.f32 %v7577, 1.442695
          %v7719 = vpow.pop %v7718
          %v7720 = vmul.f32 %v7578, 1.442695
          %v7721 = vpow.pop %v7720
          %v7722 = vmul.f32 %v7579, 1.442695
          %v7723 = vpow.pop %v7722
          %v7724 = vmul.f32 %v7580, 1.442695
          %v7725 = vpow.pop %v7724
          %v7726 = vmul.f32 %v7581, 1.442695
          %v7727 = vpow.pop %v7726
          %v7728 = vmul.f32 %v7582, 1.442695
          %v7729 = vpow.pop %v7728
          %v7730 = vmul.f32 %v7583, 1.442695
          %v7731 = vpow.pop %v7730
          %v7732 = vmul.f32 %v7584, 1.442695
          %v7733 = vpow.pop %v7732
          %v7734 = vmul.f32 %v7585, 1.442695
          %v7735 = vpow.pop %v7734
          %v7736 = vmul.f32 %v7586, 1.442695
          %v7737 = vpow.pop %v7736
          %v7738 = vmul.f32 %v7587, 1.442695
          %v7739 = vpow.pop %v7738
          %v7740 = vmul.f32 %v7588, 1.442695
          %v7741 = vpow.pop %v7740
          %v7742 = vmul.f32 %v7589, 1.442695
          %v7743 = vpow.pop %v7742
          %v7744 = vmul.f32 %v7590, 1.442695
          %v7745 = vpow.pop %v7744
          %v7746 = vmul.f32 %v7591, 1.442695
          %v7747 = vpow.pop %v7746
          %v7748 = vmul.f32 %v7592, 1.442695
          %v7749 = vpow.pop %v7748
          %v7750 = vmul.f32 %v7593, 1.442695
          %v7751 = vpow.pop %v7750
          %v7752 = vmul.f32 %v7594, 1.442695
          %v7753 = vpow.pop %v7752
          %v7754 = vmul.f32 %v7595, 1.442695
          %v7755 = vpow.pop %v7754
          %v7756 = vmul.f32 %v7596, 1.442695
          %v7757 = vpow.pop %v7756
          %v7758 = vmul.f32 %v7597, 1.442695
          %v7759 = vpow.pop %v7758
          %v7760 = vmul.f32 %v7598, 1.442695
          %v7761 = vpow.pop %v7760
          %v7762 = vmul.f32 %v7599, 1.442695
          %v7763 = vpow.pop %v7762
          %v7764 = vmul.f32 %v7600, 1.442695
          %v7765 = vpow.pop %v7764
          %v7766 = vmul.f32 %v7601, 1.442695
          %v7767 = vpow.pop %v7766
          %v7768 = vmul.f32 %v7602, 1.442695
          %v7769 = vpow.pop %v7768
          %v7770 = vmul.f32 %v7603, 1.442695
          %v7771 = vpow.pop %v7770
          %v7772 = vmul.f32 %v7604, 1.442695
          %v7773 = vpow.pop %v7772
          %v7774 = vmul.f32 %v7605, 1.442695
          %v7775 = vpow.pop %v7774
          %v7776 = vmul.f32 %v7606, 1.442695
          %v7777 = vpow.pop %v7776
          %v7778 = vmul.f32 %v7607, 1.442695
          %v7779 = vpow.pop %v7778
          %v7780 = vmul.f32 %v7608, 1.442695
          %v7781 = vpow.pop %v7780
          %v7782 = vmul.f32 %v7609, 1.442695
          %v7783 = vpow.pop %v7782
          %v7784 = vmul.f32 %v7610, 1.442695
          %v7785 = vpow.pop %v7784
          %v7786 = vmul.f32 %v7611, 1.442695
          %v7787 = vpow.pop %v7786
          %v7788 = vmul.f32 %v7612, 1.442695
          %v7789 = vpow.pop %v7788
          %v7790 = vmul.f32 %v7613, 1.442695
          %v7791 = vpow.pop %v7790
          %v7792 = vmul.f32 %v7614, 1.442695
          %v7793 = vpow.pop %v7792
          %v7794 = vmul.f32 %v7615, 1.442695
          %v7795 = vpow.pop %v7794
          %v7796 = vmul.f32 %v7616, 1.442695
          %v7797 = vpow.pop %v7796
          %v7798 = vmul.f32 %v7617, 1.442695
          %v7799 = vpow.pop %v7798
          %v7800 = vmul.f32 %v7618, 1.442695
          %v7801 = vpow.pop %v7800
          %v7802 = vmul.f32 %v7619, 1.442695
          %v7803 = vpow.pop %v7802
          %v7804 = vmul.f32 %v7620, 1.442695
          %v7805 = vpow.pop %v7804
          %v7806 = vmul.f32 %v7621, 1.442695
          %v7807 = vpow.pop %v7806
          %v7808 = vmul.f32 %v7622, 1.442695
          %v7809 = vpow.pop %v7808
          %v7810 = vmul.f32 %v7623, 1.442695
          %v7811 = vpow.pop %v7810
          %v7812 = vmul.f32 %v7624, 1.442695
          %v7813 = vpow.pop %v7812
          %v7814 = vmul.f32 %v7625, 1.442695
          %v7815 = vpow.pop %v7814
          %v7816 = vmul.f32 %v7626, 1.442695
          %v7817 = vpow.pop %v7816
          %v7818 = vmul.f32 %v7627, 1.442695
          %v7819 = vpow.pop %v7818
          %v7820 = vmul.f32 %v7628, 1.442695
          %v7821 = vpow.pop %v7820
          %v7822 = vmul.f32 %v7629, 1.442695
          %v7823 = vpow.pop %v7822
          %v7824 = vmul.f32 %v7630, 1.442695
          %v7825 = vpow.pop %v7824
          %v7826 = vmul.f32 %v7631, 1.442695
          %v7827 = vpow.pop %v7826
          %v7828 = vmul.f32 %v7632, 1.442695
          %v7829 = vpow.pop %v7828
          %v7830 = vmul.f32 %v7633, 1.442695
          %v7831 = vpow.pop %v7830
          %v7832 = vmul.f32 %v7634, 1.442695
          %v7833 = vpow.pop %v7832
          %v7834 = vmul.f32 %v7635, 1.442695
          %v7835 = vpow.pop %v7834
          %v7836 = vmul.f32 %v7636, 1.442695
          %v7837 = vpow.pop %v7836
          %v7838 = vmul.f32 %v7637, 1.442695
          %v7839 = vpow.pop %v7838
          %v7840 = vmul.f32 %v7638, 1.442695
          %v7841 = vpow.pop %v7840
          %v7842 = vmul.f32 %v7639, 1.442695
          %v7843 = vpow.pop %v7842
          %v7844 = vmul.f32 %v7640, 1.442695
          %v7845 = vpow.pop %v7844
          %v7846 = vmul.f32 %v7641, 1.442695
          %v7847 = vpow.pop %v7846
          %v7848 = vmul.f32 %v7642, 1.442695
          %v7849 = vpow.pop %v7848
          %v7850 = vmul.f32 %v7643, 1.442695
          %v7851 = vpow.pop %v7850
          %v7852 = vmul.f32 %v7644, 1.442695
          %v7853 = vpow.pop %v7852
          %v7854 = vmul.f32 %v7645, 1.442695
          %v7855 = vpow.pop %v7854
          %v7856 = vmul.f32 %v7646, 1.442695
          %v7857 = vpow.pop %v7856
          %v7858 = vmul.f32 %v7647, 1.442695
          %v7859 = vpow.pop %v7858
          %v7860 = vmul.f32 %v7648, 1.442695
          %v7861 = vpow.pop %v7860
          %v7862 = vmul.f32 %v7649, 1.442695
          %v7863 = vpow.pop %v7862
          %v7864 = vmul.f32 %v7650, 1.442695
          %v7865 = vpow.pop %v7864
          %v7866 = vmul.f32 %v7651, 1.442695
          %v7867 = vpow.pop %v7866
          %v7868 = vmul.f32 %v7652, 1.442695
          %v7869 = vpow.pop %v7868
          %v7870 = vmul.f32 %v7653, 1.442695
          %v7871 = vpow.pop %v7870
          %v7872 = vmul.f32 %v7654, 1.442695
          %v7873 = vpow.pop %v7872
          %v7874 = vmul.f32 %v7655, 1.442695
          %v7875 = vpow.pop %v7874
          %v7876 = vmul.f32 %v7656, 1.442695
          %v7877 = vpow.pop %v7876
          %v7878 = vmul.f32 %v7657, 1.442695
          %v7879 = vpow.pop %v7878
          %v7880 = vmul.f32 %v7658, 1.442695
          %v7881 = vpow.pop %v7880
          %v7882 = vmul.f32 %v7659, 1.442695
          %v7883 = vpow.pop %v7882
          %v7884 = vmul.f32 %v7660, 1.442695
          %v7885 = vpow.pop %v7884
          %v7886 = vmul.f32 %v7661, 1.442695
          %v7887 = vpow.pop %v7886
          %v7888 = vmul.f32 %v7662, 1.442695
          %v7889 = vpow.pop %v7888
          %v7890 = vmul.f32 %v7663, 1.442695
          %v7891 = vpow.pop %v7890
          %v7892 = vmul.f32 %v7664, 1.442695
          %v7893 = vpow.pop %v7892
          %v7894 = vmul.f32 %v7665, 1.442695
          %v7895 = vpow.pop %v7894
          %v7896 = vmul.f32 %v7666, 1.442695
          %v7897 = vpow.pop %v7896
          %v7898 = vmul.f32 %v7667, 1.442695
          %v7899 = vpow.pop %v7898
          %v7900 = vmul.f32 %v7668, 1.442695
          %v7901 = vpow.pop %v7900
          %v7902 = vmul.f32 %v7669, 1.442695
          %v7903 = vpow.pop %v7902
          %v7904 = vmul.f32 %v7670, 1.442695
          %v7905 = vpow.pop %v7904
          %v7906 = vmul.f32 %v7671, 1.442695
          %v7907 = vpow.pop %v7906
          %v7908 = vmul.f32 %v7672, 1.442695
          %v7909 = vpow.pop %v7908
          %v7910 = vmul.f32 %v7673, 1.442695
          %v7911 = vpow.pop %v7910
          %v7912 = vmul.f32 %v7674, 1.442695
          %v7913 = vpow.pop %v7912
          %v7914 = vmul.f32 %v7675, 1.442695
          %v7915 = vpow.pop %v7914
          %v7916 = vmul.f32 %v7676, 1.442695
          %v7917 = vpow.pop %v7916
          %v7918 = vmul.f32 %v7677, 1.442695
          %v7919 = vpow.pop %v7918
          %v7920 = vmul.f32 %v7678, 1.442695
          %v7921 = vpow.pop %v7920
          %v7922 = vmul.f32 %v7679, 1.442695
          %v7923 = vpow.pop %v7922
          %v7924 = vmul.f32 %v7680, 1.442695
          %v7925 = vpow.pop %v7924
          %v7926 = vmul.f32 %v7681, 1.442695
          %v7927 = vpow.pop %v7926
          %v7928 = vmul.f32 %v7682, 1.442695
          %v7929 = vpow.pop %v7928
          %v7930 = vmul.f32 %v7683, 1.442695
          %v7931 = vpow.pop %v7930
          %v7932 = vmul.f32 %v7684, 1.442695
          %v7933 = vpow.pop %v7932
          %v7934 = vmul.f32 %v7685, 1.442695
          %v7935 = vpow.pop %v7934
          %v7936 = vmul.f32 %v7686, 1.442695
          %v7937 = vpow.pop %v7936
          %v7938 = vmul.f32 %v7687, 1.442695
          %v7939 = vpow.pop %v7938
          %v7940 = vmul.f32 %v7688, 1.442695
          %v7941 = vpow.pop %v7940
          %v7942 = vmul.f32 %v7689, 1.442695
          %v7943 = vpow.pop %v7942
          %v7944 = vmul.f32 %v7690, 1.442695
          %v7945 = vpow.pop %v7944
          %v7946 = vmul.f32 %v7691, 1.442695
          %v7947 = vpow.pop %v7946
          %v7948 = vadd.f32 %v7693, %v7701
          %v7949 = vadd.f32 %v7948, %v7709
          %v7950 = vadd.f32 %v7949, %v7717
          %v7951 = vadd.f32 %v7950, %v7725
          %v7952 = vadd.f32 %v7951, %v7733
          %v7953 = vadd.f32 %v7952, %v7741
          %v7954 = vadd.f32 %v7953, %v7749
          %v7955 = vadd.f32 %v7954, %v7757
          %v7956 = vadd.f32 %v7955, %v7765
          %v7957 = vadd.f32 %v7956, %v7773
          %v7958 = vadd.f32 %v7957, %v7781
          %v7959 = vadd.f32 %v7958, %v7789
          %v7960 = vadd.f32 %v7959, %v7797
          %v7961 = vadd.f32 %v7960, %v7805
          %v7962 = vadd.f32 %v7961, %v7813
          %v7963 = vadd.f32 %v7962, %v7821
          %v7964 = vadd.f32 %v7963, %v7829
          %v7965 = vadd.f32 %v7964, %v7837
          %v7966 = vadd.f32 %v7965, %v7845
          %v7967 = vadd.f32 %v7966, %v7853
          %v7968 = vadd.f32 %v7967, %v7861
          %v7969 = vadd.f32 %v7968, %v7869
          %v7970 = vadd.f32 %v7969, %v7877
          %v7971 = vadd.f32 %v7970, %v7885
          %v7972 = vadd.f32 %v7971, %v7893
          %v7973 = vadd.f32 %v7972, %v7901
          %v7974 = vadd.f32 %v7973, %v7909
          %v7975 = vadd.f32 %v7974, %v7917
          %v7976 = vadd.f32 %v7975, %v7925
          %v7977 = vadd.f32 %v7976, %v7933
          %v7978 = vadd.f32 %v7977, %v7941
          %v7979 = vrot.slane %v7978, 4
          %v7980 = vadd.f32 %v7978, %v7979
          %v7981 = vrot.slane %v7980, 2
          %v7982 = vadd.f32 %v7980, %v7981
          %v7983 = vrot.slane %v7982, 1
          %v7984 = vadd.f32 %v7982, %v7983
          %v7985 = vadd.f32 %v7695, %v7703
          %v7986 = vadd.f32 %v7985, %v7711
          %v7987 = vadd.f32 %v7986, %v7719
          %v7988 = vadd.f32 %v7987, %v7727
          %v7989 = vadd.f32 %v7988, %v7735
          %v7990 = vadd.f32 %v7989, %v7743
          %v7991 = vadd.f32 %v7990, %v7751
          %v7992 = vadd.f32 %v7991, %v7759
          %v7993 = vadd.f32 %v7992, %v7767
          %v7994 = vadd.f32 %v7993, %v7775
          %v7995 = vadd.f32 %v7994, %v7783
          %v7996 = vadd.f32 %v7995, %v7791
          %v7997 = vadd.f32 %v7996, %v7799
          %v7998 = vadd.f32 %v7997, %v7807
          %v7999 = vadd.f32 %v7998, %v7815
          %v8000 = vadd.f32 %v7999, %v7823
          %v8001 = vadd.f32 %v8000, %v7831
          %v8002 = vadd.f32 %v8001, %v7839
          %v8003 = vadd.f32 %v8002, %v7847
          %v8004 = vadd.f32 %v8003, %v7855
          %v8005 = vadd.f32 %v8004, %v7863
          %v8006 = vadd.f32 %v8005, %v7871
          %v8007 = vadd.f32 %v8006, %v7879
          %v8008 = vadd.f32 %v8007, %v7887
          %v8009 = vadd.f32 %v8008, %v7895
          %v8010 = vadd.f32 %v8009, %v7903
          %v8011 = vadd.f32 %v8010, %v7911
          %v8012 = vadd.f32 %v8011, %v7919
          %v8013 = vadd.f32 %v8012, %v7927
          %v8014 = vadd.f32 %v8013, %v7935
          %v8015 = vadd.f32 %v8014, %v7943
          %v8016 = vrot.slane %v8015, 4
          %v8017 = vadd.f32 %v8015, %v8016
          %v8018 = vrot.slane %v8017, 2
          %v8019 = vadd.f32 %v8017, %v8018
          %v8020 = vrot.slane %v8019, 1
          %v8021 = vadd.f32 %v8019, %v8020
          %v8022 = vadd.f32 %v7697, %v7705
          %v8023 = vadd.f32 %v8022, %v7713
          %v8024 = vadd.f32 %v8023, %v7721
          %v8025 = vadd.f32 %v8024, %v7729
          %v8026 = vadd.f32 %v8025, %v7737
          %v8027 = vadd.f32 %v8026, %v7745
          %v8028 = vadd.f32 %v8027, %v7753
          %v8029 = vadd.f32 %v8028, %v7761
          %v8030 = vadd.f32 %v8029, %v7769
          %v8031 = vadd.f32 %v8030, %v7777
          %v8032 = vadd.f32 %v8031, %v7785
          %v8033 = vadd.f32 %v8032, %v7793
          %v8034 = vadd.f32 %v8033, %v7801
          %v8035 = vadd.f32 %v8034, %v7809
          %v8036 = vadd.f32 %v8035, %v7817
          %v8037 = vadd.f32 %v8036, %v7825
          %v8038 = vadd.f32 %v8037, %v7833
          %v8039 = vadd.f32 %v8038, %v7841
          %v8040 = vadd.f32 %v8039, %v7849
          %v8041 = vadd.f32 %v8040, %v7857
          %v8042 = vadd.f32 %v8041, %v7865
          %v8043 = vadd.f32 %v8042, %v7873
          %v8044 = vadd.f32 %v8043, %v7881
          %v8045 = vadd.f32 %v8044, %v7889
          %v8046 = vadd.f32 %v8045, %v7897
          %v8047 = vadd.f32 %v8046, %v7905
          %v8048 = vadd.f32 %v8047, %v7913
          %v8049 = vadd.f32 %v8048, %v7921
          %v8050 = vadd.f32 %v8049, %v7929
          %v8051 = vadd.f32 %v8050, %v7937
          %v8052 = vadd.f32 %v8051, %v7945
          %v8053 = vrot.slane %v8052, 4
          %v8054 = vadd.f32 %v8052, %v8053
          %v8055 = vrot.slane %v8054, 2
          %v8056 = vadd.f32 %v8054, %v8055
          %v8057 = vrot.slane %v8056, 1
          %v8058 = vadd.f32 %v8056, %v8057
          %v8059 = vadd.f32 %v7699, %v7707
          %v8060 = vadd.f32 %v8059, %v7715
          %v8061 = vadd.f32 %v8060, %v7723
          %v8062 = vadd.f32 %v8061, %v7731
          %v8063 = vadd.f32 %v8062, %v7739
          %v8064 = vadd.f32 %v8063, %v7747
          %v8065 = vadd.f32 %v8064, %v7755
          %v8066 = vadd.f32 %v8065, %v7763
          %v8067 = vadd.f32 %v8066, %v7771
          %v8068 = vadd.f32 %v8067, %v7779
          %v8069 = vadd.f32 %v8068, %v7787
          %v8070 = vadd.f32 %v8069, %v7795
          %v8071 = vadd.f32 %v8070, %v7803
          %v8072 = vadd.f32 %v8071, %v7811
          %v8073 = vadd.f32 %v8072, %v7819
          %v8074 = vadd.f32 %v8073, %v7827
          %v8075 = vadd.f32 %v8074, %v7835
          %v8076 = vadd.f32 %v8075, %v7843
          %v8077 = vadd.f32 %v8076, %v7851
          %v8078 = vadd.f32 %v8077, %v7859
          %v8079 = vadd.f32 %v8078, %v7867
          %v8080 = vadd.f32 %v8079, %v7875
          %v8081 = vadd.f32 %v8080, %v7883
          %v8082 = vadd.f32 %v8081, %v7891
          %v8083 = vadd.f32 %v8082, %v7899
          %v8084 = vadd.f32 %v8083, %v7907
          %v8085 = vadd.f32 %v8084, %v7915
          %v8086 = vadd.f32 %v8085, %v7923
          %v8087 = vadd.f32 %v8086, %v7931
          %v8088 = vadd.f32 %v8087, %v7939
          %v8089 = vadd.f32 %v8088, %v7947
          %v8090 = vrot.slane %v8089, 4
          %v8091 = vadd.f32 %v8089, %v8090
          %v8092 = vrot.slane %v8091, 2
          %v8093 = vadd.f32 %v8091, %v8092
          %v8094 = vrot.slane %v8093, 1
          %v8095 = vadd.f32 %v8093, %v8094
          %v8100 = vrot.slane %v8021, 7
          %v8101 = vrot.slane %v8058, 6
          %v8102 = vrot.slane %v8095, 5
          %vm8103 = vcmask 1040384
          %v8104 = vsel %vm8103, %v7984, %v8100
          %vm8105 = vcmask 1042434
          %v8106 = vsel %vm8105, %v8101, %v8102
          %vm8107 = vcmask 1041408
          %v8108 = vsel %vm8107, %v8104, %v8106
          %v8110 = vlaneseq
          %vm8111 = vcmp.ge.s32.totalorder %v8110, 0
          %vm8112 = vcmp.lt.s32.totalorder %v8110, 512
          %vm8113 = vmand %vm8111, %vm8112
          %8114 = vst.msk [vmem:[%s759] sm:$0xf] %vm8113, %v8108
          %v8119 = vrot.slane %v7489, 7
          %v8120 = vrot.slane %v7526, 6
          %v8121 = vrot.slane %v7563, 5
          %v8122 = vsel %vm8103, %v7452, %v8119
          %v8123 = vsel %vm8105, %v8120, %v8121
          %v8124 = vsel %vm8107, %v8122, %v8123
          %8126 = vst.msk [vmem:[%s750] sm:$0xf] %vm8113, %v8124
        $region80: #{_clip_loss_tiled.1} parent=31 // pred_fallthru
          _
        %p8127 = pneg %p7412
        // Predicated region
        $region81: #{_clip_loss_tiled.1} parent=31 // pred_check
          _
        $region82: #{_clip_loss_tiled.1} parent=31 // pred_check_branch
          %8129 = sbr.rel (%p7412) target = $region84
        $region83: #{_clip_loss_tiled.1} parent=31 // pred_region
          %v8130 = vlaneseq
          %vm8131 = vcmp.ge.s32.totalorder %v8130, 0
          %vm8132 = vcmp.lt.s32.totalorder %v8130, 512
          %vm8133 = vmand %vm8131, %vm8132
          %8134 = vst.msk [vmem:[%s750] sm:$0xf] %vm8133, %v7033
          %v8139 = vrot.slane %v7331, 7
          %v8140 = vrot.slane %v7368, 6
          %v8141 = vrot.slane %v7405, 5
          %vm8142 = vcmask 1040384
          %v8143 = vsel %vm8142, %v7294, %v8139
          %vm8144 = vcmask 1042434
          %v8145 = vsel %vm8144, %v8140, %v8141
          %vm8146 = vcmask 1041408
          %v8147 = vsel %vm8146, %v8143, %v8145
          %8149 = vst.msk [vmem:[%s759] sm:$0xf] %vm8133, %v8147
        $region84: #{_clip_loss_tiled.1} parent=31 // pred_fallthru
          _
        %v8150 = vlog2.pop %v6839
        %v8151 = vmul.f32 %v8150, 0.6931472
        %v8152 = vlog2.pop %v6844
        %v8153 = vmul.f32 %v8152, 0.6931472
        %v8154 = vlog2.pop %v6849
        %v8155 = vmul.f32 %v8154, 0.6931472
        %v8156 = vlog2.pop %v6854
        %v8157 = vmul.f32 %v8156, 0.6931472
        %v8158 = vlog2.pop %v6859
        %v8159 = vmul.f32 %v8158, 0.6931472
        %v8160 = vlog2.pop %v6864
        %v8161 = vmul.f32 %v8160, 0.6931472
        %v8162 = vlog2.pop %v6869
        %v8163 = vmul.f32 %v8162, 0.6931472
        %v8164 = vlog2.pop %v6874
        %v8165 = vmul.f32 %v8164, 0.6931472
        %v8166 = vlog2.pop %v6879
        %v8167 = vmul.f32 %v8166, 0.6931472
        %v8168 = vlog2.pop %v6884
        %v8169 = vmul.f32 %v8168, 0.6931472
        %v8170 = vlog2.pop %v6889
        %v8171 = vmul.f32 %v8170, 0.6931472
        %v8172 = vlog2.pop %v6894
        %v8173 = vmul.f32 %v8172, 0.6931472
        %v8174 = vlog2.pop %v6899
        %v8175 = vmul.f32 %v8174, 0.6931472
        %v8176 = vlog2.pop %v6904
        %v8177 = vmul.f32 %v8176, 0.6931472
        %v8178 = vlog2.pop %v6909
        %v8179 = vmul.f32 %v8178, 0.6931472
        %v8180 = vlog2.pop %v6914
        %v8181 = vmul.f32 %v8180, 0.6931472
        %v8182 = vlog2.pop %v6919
        %v8183 = vmul.f32 %v8182, 0.6931472
        %v8184 = vlog2.pop %v6924
        %v8185 = vmul.f32 %v8184, 0.6931472
        %v8186 = vlog2.pop %v6929
        %v8187 = vmul.f32 %v8186, 0.6931472
        %v8188 = vlog2.pop %v6934
        %v8189 = vmul.f32 %v8188, 0.6931472
        %v8190 = vlog2.pop %v6939
        %v8191 = vmul.f32 %v8190, 0.6931472
        %v8192 = vlog2.pop %v6944
        %v8193 = vmul.f32 %v8192, 0.6931472
        %v8194 = vlog2.pop %v6949
        %v8195 = vmul.f32 %v8194, 0.6931472
        %v8196 = vlog2.pop %v6954
        %v8197 = vmul.f32 %v8196, 0.6931472
        %v8198 = vlog2.pop %v6959
        %v8199 = vmul.f32 %v8198, 0.6931472
        %v8200 = vlog2.pop %v6964
        %v8201 = vmul.f32 %v8200, 0.6931472
        %v8202 = vlog2.pop %v6969
        %v8203 = vmul.f32 %v8202, 0.6931472
        %v8204 = vlog2.pop %v6974
        %v8205 = vmul.f32 %v8204, 0.6931472
        %v8206 = vlog2.pop %v6979
        %v8207 = vmul.f32 %v8206, 0.6931472
        %v8208 = vlog2.pop %v6984
        %v8209 = vmul.f32 %v8208, 0.6931472
        %v8210 = vlog2.pop %v6989
        %v8211 = vmul.f32 %v8210, 0.6931472
        %v8212 = vlog2.pop %v6994
        %v8213 = vmul.f32 %v8212, 0.6931472
        %v8214 = vadd.f32 %v8151, %v6295
        %v8215 = vadd.f32 %v8153, %v6300
        %v8216 = vadd.f32 %v8155, %v6305
        %v8217 = vadd.f32 %v8157, %v6310
        %v8218 = vadd.f32 %v8159, %v6315
        %v8219 = vadd.f32 %v8161, %v6320
        %v8220 = vadd.f32 %v8163, %v6325
        %v8221 = vadd.f32 %v8165, %v6330
        %v8222 = vadd.f32 %v8167, %v6335
        %v8223 = vadd.f32 %v8169, %v6340
        %v8224 = vadd.f32 %v8171, %v6345
        %v8225 = vadd.f32 %v8173, %v6350
        %v8226 = vadd.f32 %v8175, %v6355
        %v8227 = vadd.f32 %v8177, %v6360
        %v8228 = vadd.f32 %v8179, %v6365
        %v8229 = vadd.f32 %v8181, %v6370
        %v8230 = vadd.f32 %v8183, %v6375
        %v8231 = vadd.f32 %v8185, %v6380
        %v8232 = vadd.f32 %v8187, %v6385
        %v8233 = vadd.f32 %v8189, %v6390
        %v8234 = vadd.f32 %v8191, %v6395
        %v8235 = vadd.f32 %v8193, %v6400
        %v8236 = vadd.f32 %v8195, %v6405
        %v8237 = vadd.f32 %v8197, %v6410
        %v8238 = vadd.f32 %v8199, %v6415
        %v8239 = vadd.f32 %v8201, %v6420
        %v8240 = vadd.f32 %v8203, %v6425
        %v8241 = vadd.f32 %v8205, %v6430
        %v8242 = vadd.f32 %v8207, %v6435
        %v8243 = vadd.f32 %v8209, %v6440
        %v8244 = vadd.f32 %v8211, %v6445
        %v8245 = vadd.f32 %v8213, %v6450
        %v8246 = vsel %vm2992, %v8214, 0.0
        %v8247 = vsel %vm2992, %v8215, 0.0
        %v8248 = vadd.f32 %v8246, %v8247
        %v8249 = vsel %vm2992, %v8216, 0.0
        %v8250 = vadd.f32 %v8248, %v8249
        %v8251 = vsel %vm2992, %v8217, 0.0
        %v8252 = vadd.f32 %v8250, %v8251
        %v8253 = vsel %vm2992, %v8218, 0.0
        %v8254 = vadd.f32 %v8252, %v8253
        %v8255 = vsel %vm2992, %v8219, 0.0
        %v8256 = vadd.f32 %v8254, %v8255
        %v8257 = vsel %vm2992, %v8220, 0.0
        %v8258 = vadd.f32 %v8256, %v8257
        %v8259 = vsel %vm2992, %v8221, 0.0
        %v8260 = vadd.f32 %v8258, %v8259
        %v8261 = vsel %vm2992, %v8222, 0.0
        %v8262 = vadd.f32 %v8260, %v8261
        %v8263 = vsel %vm2992, %v8223, 0.0
        %v8264 = vadd.f32 %v8262, %v8263
        %v8265 = vsel %vm2992, %v8224, 0.0
        %v8266 = vadd.f32 %v8264, %v8265
        %v8267 = vsel %vm2992, %v8225, 0.0
        %v8268 = vadd.f32 %v8266, %v8267
        %v8269 = vsel %vm2992, %v8226, 0.0
        %v8270 = vadd.f32 %v8268, %v8269
        %v8271 = vsel %vm2992, %v8227, 0.0
        %v8272 = vadd.f32 %v8270, %v8271
        %v8273 = vsel %vm2992, %v8228, 0.0
        %v8274 = vadd.f32 %v8272, %v8273
        %v8275 = vsel %vm2992, %v8229, 0.0
        %v8276 = vadd.f32 %v8274, %v8275
        %v8277 = vsel %vm2992, %v8230, 0.0
        %v8278 = vadd.f32 %v8276, %v8277
        %v8279 = vsel %vm2992, %v8231, 0.0
        %v8280 = vadd.f32 %v8278, %v8279
        %v8281 = vsel %vm2992, %v8232, 0.0
        %v8282 = vadd.f32 %v8280, %v8281
        %v8283 = vsel %vm2992, %v8233, 0.0
        %v8284 = vadd.f32 %v8282, %v8283
        %v8285 = vsel %vm2992, %v8234, 0.0
        %v8286 = vadd.f32 %v8284, %v8285
        %v8287 = vsel %vm2992, %v8235, 0.0
        %v8288 = vadd.f32 %v8286, %v8287
        %v8289 = vsel %vm2992, %v8236, 0.0
        %v8290 = vadd.f32 %v8288, %v8289
        %v8291 = vsel %vm2992, %v8237, 0.0
        %v8292 = vadd.f32 %v8290, %v8291
        %v8293 = vsel %vm2992, %v8238, 0.0
        %v8294 = vadd.f32 %v8292, %v8293
        %v8295 = vsel %vm2992, %v8239, 0.0
        %v8296 = vadd.f32 %v8294, %v8295
        %v8297 = vsel %vm2992, %v8240, 0.0
        %v8298 = vadd.f32 %v8296, %v8297
        %v8299 = vsel %vm2992, %v8241, 0.0
        %v8300 = vadd.f32 %v8298, %v8299
        %v8301 = vsel %vm2992, %v8242, 0.0
        %v8302 = vadd.f32 %v8300, %v8301
        %v8303 = vsel %vm2992, %v8243, 0.0
        %v8304 = vadd.f32 %v8302, %v8303
        %v8305 = vsel %vm2992, %v8244, 0.0
        %v8306 = vadd.f32 %v8304, %v8305
        %v8307 = vsel %vm2992, %v8245, 0.0
        %v8308 = vadd.f32 %v8306, %v8307
        %8309 = vadd.xlane.f32.xlu0 %v8308
        %v8310 = vpop.xlane.xlu0 %8309
        %v8311 = vrot.slane %v8310, 4
        %v8312 = vadd.f32 %v8310, %v8311
        %v8313 = vrot.slane %v8312, 2
        %v8314 = vadd.f32 %v8312, %v8313
        %v8315 = vrot.slane %v8314, 1
        %v8316 = vadd.f32 %v8314, %v8315
        %s8317 = vtos %v8316
        %v8318 = vstv %s8317
        %8319 = vst [vmem:[%s763] sm:$0x1] %v8318
        // Predicated region
        $region85: #{_clip_loss_tiled.1} parent=31 // pred_check
          %p8320 = pneg %p3067
        $region86: #{_clip_loss_tiled.1} parent=31 // pred_check_branch
          %8322 = sbr.rel (%p8320) target = $region88
        $region87: #{_clip_loss_tiled.1} parent=31 // pred_region
          %8323 = vst [vmem:[%s766] sm:$0x1] 0.0
        $region88: #{_clip_loss_tiled.1} parent=31 // pred_fallthru
          _
        // Predicated region
        $region89: #{_clip_loss_tiled.1} parent=31 // pred_check
          _
        $region90: #{_clip_loss_tiled.1} parent=31 // pred_check_branch
          %8325 = sbr.rel (%p3076) target = $region92
        $region91: #{_clip_loss_tiled.1} parent=31 // pred_region
          %vm8326 = vcmp.eq.s32.totalorder %v994, %v1033
          %vm8327 = vcmp.eq.s32.totalorder %v994, %v1034
          %vm8328 = vcmp.eq.s32.totalorder %v994, %v1035
          %vm8329 = vcmp.eq.s32.totalorder %v994, %v1036
          %vm8330 = vcmp.eq.s32.totalorder %v995, %v1033
          %vm8331 = vcmp.eq.s32.totalorder %v995, %v1034
          %vm8332 = vcmp.eq.s32.totalorder %v995, %v1035
          %vm8333 = vcmp.eq.s32.totalorder %v995, %v1036
          %vm8334 = vcmp.eq.s32.totalorder %v996, %v1033
          %vm8335 = vcmp.eq.s32.totalorder %v996, %v1034
          %vm8336 = vcmp.eq.s32.totalorder %v996, %v1035
          %vm8337 = vcmp.eq.s32.totalorder %v996, %v1036
          %vm8338 = vcmp.eq.s32.totalorder %v997, %v1033
          %vm8339 = vcmp.eq.s32.totalorder %v997, %v1034
          %vm8340 = vcmp.eq.s32.totalorder %v997, %v1035
          %vm8341 = vcmp.eq.s32.totalorder %v997, %v1036
          %vm8342 = vcmp.eq.s32.totalorder %v998, %v1033
          %vm8343 = vcmp.eq.s32.totalorder %v998, %v1034
          %vm8344 = vcmp.eq.s32.totalorder %v998, %v1035
          %vm8345 = vcmp.eq.s32.totalorder %v998, %v1036
          %vm8346 = vcmp.eq.s32.totalorder %v999, %v1033
          %vm8347 = vcmp.eq.s32.totalorder %v999, %v1034
          %vm8348 = vcmp.eq.s32.totalorder %v999, %v1035
          %vm8349 = vcmp.eq.s32.totalorder %v999, %v1036
          %vm8350 = vcmp.eq.s32.totalorder %v1000, %v1033
          %vm8351 = vcmp.eq.s32.totalorder %v1000, %v1034
          %vm8352 = vcmp.eq.s32.totalorder %v1000, %v1035
          %vm8353 = vcmp.eq.s32.totalorder %v1000, %v1036
          %vm8354 = vcmp.eq.s32.totalorder %v1001, %v1033
          %vm8355 = vcmp.eq.s32.totalorder %v1001, %v1034
          %vm8356 = vcmp.eq.s32.totalorder %v1001, %v1035
          %vm8357 = vcmp.eq.s32.totalorder %v1001, %v1036
          %vm8358 = vcmp.eq.s32.totalorder %v1002, %v1033
          %vm8359 = vcmp.eq.s32.totalorder %v1002, %v1034
          %vm8360 = vcmp.eq.s32.totalorder %v1002, %v1035
          %vm8361 = vcmp.eq.s32.totalorder %v1002, %v1036
          %vm8362 = vcmp.eq.s32.totalorder %v1003, %v1033
          %vm8363 = vcmp.eq.s32.totalorder %v1003, %v1034
          %vm8364 = vcmp.eq.s32.totalorder %v1003, %v1035
          %vm8365 = vcmp.eq.s32.totalorder %v1003, %v1036
          %vm8366 = vcmp.eq.s32.totalorder %v1004, %v1033
          %vm8367 = vcmp.eq.s32.totalorder %v1004, %v1034
          %vm8368 = vcmp.eq.s32.totalorder %v1004, %v1035
          %vm8369 = vcmp.eq.s32.totalorder %v1004, %v1036
          %vm8370 = vcmp.eq.s32.totalorder %v1005, %v1033
          %vm8371 = vcmp.eq.s32.totalorder %v1005, %v1034
          %vm8372 = vcmp.eq.s32.totalorder %v1005, %v1035
          %vm8373 = vcmp.eq.s32.totalorder %v1005, %v1036
          %vm8374 = vcmp.eq.s32.totalorder %v1006, %v1033
          %vm8375 = vcmp.eq.s32.totalorder %v1006, %v1034
          %vm8376 = vcmp.eq.s32.totalorder %v1006, %v1035
          %vm8377 = vcmp.eq.s32.totalorder %v1006, %v1036
          %vm8378 = vcmp.eq.s32.totalorder %v1007, %v1033
          %vm8379 = vcmp.eq.s32.totalorder %v1007, %v1034
          %vm8380 = vcmp.eq.s32.totalorder %v1007, %v1035
          %vm8381 = vcmp.eq.s32.totalorder %v1007, %v1036
          %vm8382 = vcmp.eq.s32.totalorder %v1008, %v1033
          %vm8383 = vcmp.eq.s32.totalorder %v1008, %v1034
          %vm8384 = vcmp.eq.s32.totalorder %v1008, %v1035
          %vm8385 = vcmp.eq.s32.totalorder %v1008, %v1036
          %vm8386 = vcmp.eq.s32.totalorder %v1009, %v1033
          %vm8387 = vcmp.eq.s32.totalorder %v1009, %v1034
          %vm8388 = vcmp.eq.s32.totalorder %v1009, %v1035
          %vm8389 = vcmp.eq.s32.totalorder %v1009, %v1036
          %vm8390 = vcmp.eq.s32.totalorder %v1010, %v1033
          %vm8391 = vcmp.eq.s32.totalorder %v1010, %v1034
          %vm8392 = vcmp.eq.s32.totalorder %v1010, %v1035
          %vm8393 = vcmp.eq.s32.totalorder %v1010, %v1036
          %vm8394 = vcmp.eq.s32.totalorder %v1011, %v1033
          %vm8395 = vcmp.eq.s32.totalorder %v1011, %v1034
          %vm8396 = vcmp.eq.s32.totalorder %v1011, %v1035
          %vm8397 = vcmp.eq.s32.totalorder %v1011, %v1036
          %vm8398 = vcmp.eq.s32.totalorder %v1012, %v1033
          %vm8399 = vcmp.eq.s32.totalorder %v1012, %v1034
          %vm8400 = vcmp.eq.s32.totalorder %v1012, %v1035
          %vm8401 = vcmp.eq.s32.totalorder %v1012, %v1036
          %vm8402 = vcmp.eq.s32.totalorder %v1013, %v1033
          %vm8403 = vcmp.eq.s32.totalorder %v1013, %v1034
          %vm8404 = vcmp.eq.s32.totalorder %v1013, %v1035
          %vm8405 = vcmp.eq.s32.totalorder %v1013, %v1036
          %vm8406 = vcmp.eq.s32.totalorder %v1014, %v1033
          %vm8407 = vcmp.eq.s32.totalorder %v1014, %v1034
          %vm8408 = vcmp.eq.s32.totalorder %v1014, %v1035
          %vm8409 = vcmp.eq.s32.totalorder %v1014, %v1036
          %vm8410 = vcmp.eq.s32.totalorder %v1015, %v1033
          %vm8411 = vcmp.eq.s32.totalorder %v1015, %v1034
          %vm8412 = vcmp.eq.s32.totalorder %v1015, %v1035
          %vm8413 = vcmp.eq.s32.totalorder %v1015, %v1036
          %vm8414 = vcmp.eq.s32.totalorder %v1016, %v1033
          %vm8415 = vcmp.eq.s32.totalorder %v1016, %v1034
          %vm8416 = vcmp.eq.s32.totalorder %v1016, %v1035
          %vm8417 = vcmp.eq.s32.totalorder %v1016, %v1036
          %vm8418 = vcmp.eq.s32.totalorder %v1017, %v1033
          %vm8419 = vcmp.eq.s32.totalorder %v1017, %v1034
          %vm8420 = vcmp.eq.s32.totalorder %v1017, %v1035
          %vm8421 = vcmp.eq.s32.totalorder %v1017, %v1036
          %vm8422 = vcmp.eq.s32.totalorder %v1018, %v1033
          %vm8423 = vcmp.eq.s32.totalorder %v1018, %v1034
          %vm8424 = vcmp.eq.s32.totalorder %v1018, %v1035
          %vm8425 = vcmp.eq.s32.totalorder %v1018, %v1036
          %vm8426 = vcmp.eq.s32.totalorder %v1019, %v1033
          %vm8427 = vcmp.eq.s32.totalorder %v1019, %v1034
          %vm8428 = vcmp.eq.s32.totalorder %v1019, %v1035
          %vm8429 = vcmp.eq.s32.totalorder %v1019, %v1036
          %vm8430 = vcmp.eq.s32.totalorder %v1020, %v1033
          %vm8431 = vcmp.eq.s32.totalorder %v1020, %v1034
          %vm8432 = vcmp.eq.s32.totalorder %v1020, %v1035
          %vm8433 = vcmp.eq.s32.totalorder %v1020, %v1036
          %vm8434 = vcmp.eq.s32.totalorder %v1021, %v1033
          %vm8435 = vcmp.eq.s32.totalorder %v1021, %v1034
          %vm8436 = vcmp.eq.s32.totalorder %v1021, %v1035
          %vm8437 = vcmp.eq.s32.totalorder %v1021, %v1036
          %vm8438 = vcmp.eq.s32.totalorder %v1022, %v1033
          %vm8439 = vcmp.eq.s32.totalorder %v1022, %v1034
          %vm8440 = vcmp.eq.s32.totalorder %v1022, %v1035
          %vm8441 = vcmp.eq.s32.totalorder %v1022, %v1036
          %vm8442 = vcmp.eq.s32.totalorder %v1023, %v1033
          %vm8443 = vcmp.eq.s32.totalorder %v1023, %v1034
          %vm8444 = vcmp.eq.s32.totalorder %v1023, %v1035
          %vm8445 = vcmp.eq.s32.totalorder %v1023, %v1036
          %vm8446 = vcmp.eq.s32.totalorder %v1024, %v1033
          %vm8447 = vcmp.eq.s32.totalorder %v1024, %v1034
          %vm8448 = vcmp.eq.s32.totalorder %v1024, %v1035
          %vm8449 = vcmp.eq.s32.totalorder %v1024, %v1036
          %vm8450 = vcmp.eq.s32.totalorder %v1025, %v1033
          %vm8451 = vcmp.eq.s32.totalorder %v1025, %v1034
          %vm8452 = vcmp.eq.s32.totalorder %v1025, %v1035
          %vm8453 = vcmp.eq.s32.totalorder %v1025, %v1036
          %v8454 = vsel %vm8326, %v6163, 0.0
          %v8455 = vsel %vm8327, %v6164, 0.0
          %v8456 = vsel %vm8328, %v6165, 0.0
          %v8457 = vsel %vm8329, %v6166, 0.0
          %v8458 = vsel %vm8330, %v6167, 0.0
          %v8459 = vsel %vm8331, %v6168, 0.0
          %v8460 = vsel %vm8332, %v6169, 0.0
          %v8461 = vsel %vm8333, %v6170, 0.0
          %v8462 = vsel %vm8334, %v6171, 0.0
          %v8463 = vsel %vm8335, %v6172, 0.0
          %v8464 = vsel %vm8336, %v6173, 0.0
          %v8465 = vsel %vm8337, %v6174, 0.0
          %v8466 = vsel %vm8338, %v6175, 0.0
          %v8467 = vsel %vm8339, %v6176, 0.0
          %v8468 = vsel %vm8340, %v6177, 0.0
          %v8469 = vsel %vm8341, %v6178, 0.0
          %v8470 = vsel %vm8342, %v6179, 0.0
          %v8471 = vsel %vm8343, %v6180, 0.0
          %v8472 = vsel %vm8344, %v6181, 0.0
          %v8473 = vsel %vm8345, %v6182, 0.0
          %v8474 = vsel %vm8346, %v6183, 0.0
          %v8475 = vsel %vm8347, %v6184, 0.0
          %v8476 = vsel %vm8348, %v6185, 0.0
          %v8477 = vsel %vm8349, %v6186, 0.0
          %v8478 = vsel %vm8350, %v6187, 0.0
          %v8479 = vsel %vm8351, %v6188, 0.0
          %v8480 = vsel %vm8352, %v6189, 0.0
          %v8481 = vsel %vm8353, %v6190, 0.0
          %v8482 = vsel %vm8354, %v6191, 0.0
          %v8483 = vsel %vm8355, %v6192, 0.0
          %v8484 = vsel %vm8356, %v6193, 0.0
          %v8485 = vsel %vm8357, %v6194, 0.0
          %v8486 = vsel %vm8358, %v6195, 0.0
          %v8487 = vsel %vm8359, %v6196, 0.0
          %v8488 = vsel %vm8360, %v6197, 0.0
          %v8489 = vsel %vm8361, %v6198, 0.0
          %v8490 = vsel %vm8362, %v6199, 0.0
          %v8491 = vsel %vm8363, %v6200, 0.0
          %v8492 = vsel %vm8364, %v6201, 0.0
          %v8493 = vsel %vm8365, %v6202, 0.0
          %v8494 = vsel %vm8366, %v6203, 0.0
          %v8495 = vsel %vm8367, %v6204, 0.0
          %v8496 = vsel %vm8368, %v6205, 0.0
          %v8497 = vsel %vm8369, %v6206, 0.0
          %v8498 = vsel %vm8370, %v6207, 0.0
          %v8499 = vsel %vm8371, %v6208, 0.0
          %v8500 = vsel %vm8372, %v6209, 0.0
          %v8501 = vsel %vm8373, %v6210, 0.0
          %v8502 = vsel %vm8374, %v6211, 0.0
          %v8503 = vsel %vm8375, %v6212, 0.0
          %v8504 = vsel %vm8376, %v6213, 0.0
          %v8505 = vsel %vm8377, %v6214, 0.0
          %v8506 = vsel %vm8378, %v6215, 0.0
          %v8507 = vsel %vm8379, %v6216, 0.0
          %v8508 = vsel %vm8380, %v6217, 0.0
          %v8509 = vsel %vm8381, %v6218, 0.0
          %v8510 = vsel %vm8382, %v6219, 0.0
          %v8511 = vsel %vm8383, %v6220, 0.0
          %v8512 = vsel %vm8384, %v6221, 0.0
          %v8513 = vsel %vm8385, %v6222, 0.0
          %v8514 = vsel %vm8386, %v6223, 0.0
          %v8515 = vsel %vm8387, %v6224, 0.0
          %v8516 = vsel %vm8388, %v6225, 0.0
          %v8517 = vsel %vm8389, %v6226, 0.0
          %v8518 = vsel %vm8390, %v6227, 0.0
          %v8519 = vsel %vm8391, %v6228, 0.0
          %v8520 = vsel %vm8392, %v6229, 0.0
          %v8521 = vsel %vm8393, %v6230, 0.0
          %v8522 = vsel %vm8394, %v6231, 0.0
          %v8523 = vsel %vm8395, %v6232, 0.0
          %v8524 = vsel %vm8396, %v6233, 0.0
          %v8525 = vsel %vm8397, %v6234, 0.0
          %v8526 = vsel %vm8398, %v6235, 0.0
          %v8527 = vsel %vm8399, %v6236, 0.0
          %v8528 = vsel %vm8400, %v6237, 0.0
          %v8529 = vsel %vm8401, %v6238, 0.0
          %v8530 = vsel %vm8402, %v6239, 0.0
          %v8531 = vsel %vm8403, %v6240, 0.0
          %v8532 = vsel %vm8404, %v6241, 0.0
          %v8533 = vsel %vm8405, %v6242, 0.0
          %v8534 = vsel %vm8406, %v6243, 0.0
          %v8535 = vsel %vm8407, %v6244, 0.0
          %v8536 = vsel %vm8408, %v6245, 0.0
          %v8537 = vsel %vm8409, %v6246, 0.0
          %v8538 = vsel %vm8410, %v6247, 0.0
          %v8539 = vsel %vm8411, %v6248, 0.0
          %v8540 = vsel %vm8412, %v6249, 0.0
          %v8541 = vsel %vm8413, %v6250, 0.0
          %v8542 = vsel %vm8414, %v6251, 0.0
          %v8543 = vsel %vm8415, %v6252, 0.0
          %v8544 = vsel %vm8416, %v6253, 0.0
          %v8545 = vsel %vm8417, %v6254, 0.0
          %v8546 = vsel %vm8418, %v6255, 0.0
          %v8547 = vsel %vm8419, %v6256, 0.0
          %v8548 = vsel %vm8420, %v6257, 0.0
          %v8549 = vsel %vm8421, %v6258, 0.0
          %v8550 = vsel %vm8422, %v6259, 0.0
          %v8551 = vsel %vm8423, %v6260, 0.0
          %v8552 = vsel %vm8424, %v6261, 0.0
          %v8553 = vsel %vm8425, %v6262, 0.0
          %v8554 = vsel %vm8426, %v6263, 0.0
          %v8555 = vsel %vm8427, %v6264, 0.0
          %v8556 = vsel %vm8428, %v6265, 0.0
          %v8557 = vsel %vm8429, %v6266, 0.0
          %v8558 = vsel %vm8430, %v6267, 0.0
          %v8559 = vsel %vm8431, %v6268, 0.0
          %v8560 = vsel %vm8432, %v6269, 0.0
          %v8561 = vsel %vm8433, %v6270, 0.0
          %v8562 = vsel %vm8434, %v6271, 0.0
          %v8563 = vsel %vm8435, %v6272, 0.0
          %v8564 = vsel %vm8436, %v6273, 0.0
          %v8565 = vsel %vm8437, %v6274, 0.0
          %v8566 = vsel %vm8438, %v6275, 0.0
          %v8567 = vsel %vm8439, %v6276, 0.0
          %v8568 = vsel %vm8440, %v6277, 0.0
          %v8569 = vsel %vm8441, %v6278, 0.0
          %v8570 = vsel %vm8442, %v6279, 0.0
          %v8571 = vsel %vm8443, %v6280, 0.0
          %v8572 = vsel %vm8444, %v6281, 0.0
          %v8573 = vsel %vm8445, %v6282, 0.0
          %v8574 = vsel %vm8446, %v6283, 0.0
          %v8575 = vsel %vm8447, %v6284, 0.0
          %v8576 = vsel %vm8448, %v6285, 0.0
          %v8577 = vsel %vm8449, %v6286, 0.0
          %v8578 = vsel %vm8450, %v6287, 0.0
          %v8579 = vsel %vm8451, %v6288, 0.0
          %v8580 = vsel %vm8452, %v6289, 0.0
          %v8581 = vsel %vm8453, %v6290, 0.0
          %v8582 = vadd.f32 %v8454, %v8455
          %v8583 = vadd.f32 %v8582, %v8456
          %v8584 = vadd.f32 %v8583, %v8457
          %v8585 = vadd.f32 %v8584, %v8458
          %v8586 = vadd.f32 %v8585, %v8459
          %v8587 = vadd.f32 %v8586, %v8460
          %v8588 = vadd.f32 %v8587, %v8461
          %v8589 = vadd.f32 %v8588, %v8462
          %v8590 = vadd.f32 %v8589, %v8463
          %v8591 = vadd.f32 %v8590, %v8464
          %v8592 = vadd.f32 %v8591, %v8465
          %v8593 = vadd.f32 %v8592, %v8466
          %v8594 = vadd.f32 %v8593, %v8467
          %v8595 = vadd.f32 %v8594, %v8468
          %v8596 = vadd.f32 %v8595, %v8469
          %v8597 = vadd.f32 %v8596, %v8470
          %v8598 = vadd.f32 %v8597, %v8471
          %v8599 = vadd.f32 %v8598, %v8472
          %v8600 = vadd.f32 %v8599, %v8473
          %v8601 = vadd.f32 %v8600, %v8474
          %v8602 = vadd.f32 %v8601, %v8475
          %v8603 = vadd.f32 %v8602, %v8476
          %v8604 = vadd.f32 %v8603, %v8477
          %v8605 = vadd.f32 %v8604, %v8478
          %v8606 = vadd.f32 %v8605, %v8479
          %v8607 = vadd.f32 %v8606, %v8480
          %v8608 = vadd.f32 %v8607, %v8481
          %v8609 = vadd.f32 %v8608, %v8482
          %v8610 = vadd.f32 %v8609, %v8483
          %v8611 = vadd.f32 %v8610, %v8484
          %v8612 = vadd.f32 %v8611, %v8485
          %v8613 = vadd.f32 %v8612, %v8486
          %v8614 = vadd.f32 %v8613, %v8487
          %v8615 = vadd.f32 %v8614, %v8488
          %v8616 = vadd.f32 %v8615, %v8489
          %v8617 = vadd.f32 %v8616, %v8490
          %v8618 = vadd.f32 %v8617, %v8491
          %v8619 = vadd.f32 %v8618, %v8492
          %v8620 = vadd.f32 %v8619, %v8493
          %v8621 = vadd.f32 %v8620, %v8494
          %v8622 = vadd.f32 %v8621, %v8495
          %v8623 = vadd.f32 %v8622, %v8496
          %v8624 = vadd.f32 %v8623, %v8497
          %v8625 = vadd.f32 %v8624, %v8498
          %v8626 = vadd.f32 %v8625, %v8499
          %v8627 = vadd.f32 %v8626, %v8500
          %v8628 = vadd.f32 %v8627, %v8501
          %v8629 = vadd.f32 %v8628, %v8502
          %v8630 = vadd.f32 %v8629, %v8503
          %v8631 = vadd.f32 %v8630, %v8504
          %v8632 = vadd.f32 %v8631, %v8505
          %v8633 = vadd.f32 %v8632, %v8506
          %v8634 = vadd.f32 %v8633, %v8507
          %v8635 = vadd.f32 %v8634, %v8508
          %v8636 = vadd.f32 %v8635, %v8509
          %v8637 = vadd.f32 %v8636, %v8510
          %v8638 = vadd.f32 %v8637, %v8511
          %v8639 = vadd.f32 %v8638, %v8512
          %v8640 = vadd.f32 %v8639, %v8513
          %v8641 = vadd.f32 %v8640, %v8514
          %v8642 = vadd.f32 %v8641, %v8515
          %v8643 = vadd.f32 %v8642, %v8516
          %v8644 = vadd.f32 %v8643, %v8517
          %v8645 = vadd.f32 %v8644, %v8518
          %v8646 = vadd.f32 %v8645, %v8519
          %v8647 = vadd.f32 %v8646, %v8520
          %v8648 = vadd.f32 %v8647, %v8521
          %v8649 = vadd.f32 %v8648, %v8522
          %v8650 = vadd.f32 %v8649, %v8523
          %v8651 = vadd.f32 %v8650, %v8524
          %v8652 = vadd.f32 %v8651, %v8525
          %v8653 = vadd.f32 %v8652, %v8526
          %v8654 = vadd.f32 %v8653, %v8527
          %v8655 = vadd.f32 %v8654, %v8528
          %v8656 = vadd.f32 %v8655, %v8529
          %v8657 = vadd.f32 %v8656, %v8530
          %v8658 = vadd.f32 %v8657, %v8531
          %v8659 = vadd.f32 %v8658, %v8532
          %v8660 = vadd.f32 %v8659, %v8533
          %v8661 = vadd.f32 %v8660, %v8534
          %v8662 = vadd.f32 %v8661, %v8535
          %v8663 = vadd.f32 %v8662, %v8536
          %v8664 = vadd.f32 %v8663, %v8537
          %v8665 = vadd.f32 %v8664, %v8538
          %v8666 = vadd.f32 %v8665, %v8539
          %v8667 = vadd.f32 %v8666, %v8540
          %v8668 = vadd.f32 %v8667, %v8541
          %v8669 = vadd.f32 %v8668, %v8542
          %v8670 = vadd.f32 %v8669, %v8543
          %v8671 = vadd.f32 %v8670, %v8544
          %v8672 = vadd.f32 %v8671, %v8545
          %v8673 = vadd.f32 %v8672, %v8546
          %v8674 = vadd.f32 %v8673, %v8547
          %v8675 = vadd.f32 %v8674, %v8548
          %v8676 = vadd.f32 %v8675, %v8549
          %v8677 = vadd.f32 %v8676, %v8550
          %v8678 = vadd.f32 %v8677, %v8551
          %v8679 = vadd.f32 %v8678, %v8552
          %v8680 = vadd.f32 %v8679, %v8553
          %v8681 = vadd.f32 %v8680, %v8554
          %v8682 = vadd.f32 %v8681, %v8555
          %v8683 = vadd.f32 %v8682, %v8556
          %v8684 = vadd.f32 %v8683, %v8557
          %v8685 = vadd.f32 %v8684, %v8558
          %v8686 = vadd.f32 %v8685, %v8559
          %v8687 = vadd.f32 %v8686, %v8560
          %v8688 = vadd.f32 %v8687, %v8561
          %v8689 = vadd.f32 %v8688, %v8562
          %v8690 = vadd.f32 %v8689, %v8563
          %v8691 = vadd.f32 %v8690, %v8564
          %v8692 = vadd.f32 %v8691, %v8565
          %v8693 = vadd.f32 %v8692, %v8566
          %v8694 = vadd.f32 %v8693, %v8567
          %v8695 = vadd.f32 %v8694, %v8568
          %v8696 = vadd.f32 %v8695, %v8569
          %v8697 = vadd.f32 %v8696, %v8570
          %v8698 = vadd.f32 %v8697, %v8571
          %v8699 = vadd.f32 %v8698, %v8572
          %v8700 = vadd.f32 %v8699, %v8573
          %v8701 = vadd.f32 %v8700, %v8574
          %v8702 = vadd.f32 %v8701, %v8575
          %v8703 = vadd.f32 %v8702, %v8576
          %v8704 = vadd.f32 %v8703, %v8577
          %v8705 = vadd.f32 %v8704, %v8578
          %v8706 = vadd.f32 %v8705, %v8579
          %v8707 = vadd.f32 %v8706, %v8580
          %v8708 = vadd.f32 %v8707, %v8581
          %8709 = vadd.xlane.f32.xlu0 %v8708
          %v8710 = vpop.xlane.xlu0 %8709
          %v8711 = vrot.slane %v8710, 4
          %v8712 = vadd.f32 %v8710, %v8711
          %v8713 = vrot.slane %v8712, 2
          %v8714 = vadd.f32 %v8712, %v8713
          %v8715 = vrot.slane %v8714, 1
          %v8716 = vadd.f32 %v8714, %v8715
          %s8717 = vtos %v8716
          %v8718 = vld [vmem:[%s766] sm:$0x1]
          %v8719 = vstv %s8717
          %v8720 = vadd.f32 %v8718, %v8719
          %8721 = vst [vmem:[%s766] sm:$0x1] %v8720
        $region92: #{_clip_loss_tiled.1} parent=31 // pred_fallthru
          _
        %s8722 = smul.u32 4, %s37
        %p8723 = scmp.lt.s32.totalorder %s36, 1
        %s8724 = scalar_select %p8723, %s36, 1
        %p8725 = scmp.lt.s32.totalorder %s8722, 3
        %s8726 = scalar_select %p8725, %s8722, 3
        %s8727 = smul.addr %s8724, 4
        %s8728 = sadd.s32 %s8726, %s8727
        %s8729 = scalar_lea.vmem %s3, %s8728
        %s8730 = smul.u32 4, %s37
        %p8731 = scmp.lt.s32.totalorder %s36, 1
        %s8732 = scalar_select %p8731, %s36, 1
        %p8733 = scmp.lt.s32.totalorder %s8730, 3
        %s8734 = scalar_select %p8733, %s8730, 3
        %s8735 = smul.addr %s8732, 4
        %s8736 = sadd.s32 %s8734, %s8735
        %s8737 = scalar_lea.vmem %s4, %s8736
        %p8738 = scmp.lt.s32.totalorder %s36, 1
        %s8739 = scalar_select %p8738, %s36, 1
        %s8740 = scalar_lea.vmem %s5, %s8739
        %p8741 = scmp.lt.s32.totalorder %s36, 1
        %s8742 = scalar_select %p8741, %s36, 1
        %s8743 = scalar_lea.vmem %s6, %s8742
        %s8744 = smul.u32 4, %s37
        %p8745 = scmp.lt.s32.totalorder %s36, 1
        %s8746 = scalar_select %p8745, %s36, 1
        %p8747 = scmp.lt.s32.totalorder %s8744, 3
        %s8748 = scalar_select %p8747, %s8744, 3
        %s8749 = smul.addr %s8746, 4
        %s8750 = sadd.s32 %s8748, %s8749
        %s8751 = scalar_lea.vmem %s7, %s8750
        %s8752 = smul.u32 4, %s37
        %p8753 = scmp.lt.s32.totalorder %s36, 1
        %s8754 = scalar_select %p8753, %s36, 1
        %p8755 = scmp.lt.s32.totalorder %s8752, 3
        %s8756 = scalar_select %p8755, %s8752, 3
        %s8757 = smul.addr %s8754, 4
        %s8758 = sadd.s32 %s8756, %s8757
        %s8759 = scalar_lea.vmem %s8, %s8758
        %p8760 = scmp.lt.s32.totalorder %s36, 1
        %s8761 = scalar_select %p8760, %s36, 1
        %s8762 = scalar_lea.vmem %s9, %s8761
        %p8763 = scmp.lt.s32.totalorder %s36, 1
        %s8764 = scalar_select %p8763, %s36, 1
        %s8765 = scalar_lea.vmem %s10, %s8764
        %s8766 = smul.u32 4, %s37
        %p8767 = scmp.lt.s32.totalorder %s36, 1
        %s8768 = scalar_select %p8767, %s36, 1
        %p8769 = scmp.lt.s32.totalorder %s8766, 3
        %s8770 = scalar_select %p8769, %s8766, 3
        %s8771 = smul.addr %s8768, 4
        %s8772 = sadd.s32 %s8770, %s8771
        %s8773 = scalar_lea.vmem %s11, %s8772
        %s8774 = smul.u32 4, %s37
        %p8775 = scmp.lt.s32.totalorder %s36, 1
        %s8776 = scalar_select %p8775, %s36, 1
        %p8777 = scmp.lt.s32.totalorder %s8774, 3
        %s8778 = scalar_select %p8777, %s8774, 3
        %s8779 = smul.addr %s8776, 4
        %s8780 = sadd.s32 %s8778, %s8779
        %s8781 = scalar_lea.vmem %s12, %s8780
        %p8782 = scmp.lt.s32.totalorder %s36, 1
        %s8783 = scalar_select %p8782, %s36, 1
        %s8784 = scalar_lea.vmem %s13, %s8783
        %p8785 = scmp.lt.s32.totalorder %s36, 1
        %s8786 = scalar_select %p8785, %s36, 1
        %s8787 = scalar_lea.vmem %s14, %s8786
        // Predicated region
        $region93: #{_clip_loss_tiled.1} parent=31 // pred_check
          %p8788 = pneg %p148
        $region94: #{_clip_loss_tiled.1} parent=31 // pred_check_branch
          %8790 = sbr.rel (%p8788) target = $region96
        $region95: #{_clip_loss_tiled.1} parent=31 // pred_region
          %s8791 = smul.u32 4, %s37
        $region96: #{_clip_loss_tiled.1} parent=31 // pred_fallthru
          _
        // Predicated region
        $region97: #{_clip_loss_tiled.1} parent=31 // pred_check
          %p8792 = pneg %p176
        $region98: #{_clip_loss_tiled.1} parent=31 // pred_check_branch
          %8794 = sbr.rel (%p8792) target = $region100
        $region99: #{_clip_loss_tiled.1} parent=31 // pred_region
          %s8795 = smul.u32 4, %s37
        $region100: #{_clip_loss_tiled.1} parent=31 // pred_fallthru
          _
        // Predicated region
        $region101: #{_clip_loss_tiled.1} parent=31 // pred_check
          %p8796 = pneg %p202
        $region102: #{_clip_loss_tiled.1} parent=31 // pred_check_branch
          %8798 = sbr.rel (%p8796) target = $region104
        $region103: #{_clip_loss_tiled.1} parent=31 // pred_region
          _
        $region104: #{_clip_loss_tiled.1} parent=31 // pred_fallthru
          _
        // Predicated region
        $region105: #{_clip_loss_tiled.1} parent=31 // pred_check
          %p8799 = pneg %p228
        $region106: #{_clip_loss_tiled.1} parent=31 // pred_check_branch
          %8801 = sbr.rel (%p8799) target = $region108
        $region107: #{_clip_loss_tiled.1} parent=31 // pred_region
          _
        $region108: #{_clip_loss_tiled.1} parent=31 // pred_fallthru
          _
        // Predicated region
        $region109: #{_clip_loss_tiled.1} parent=31 // pred_check
          %p8802 = pneg %p256
        $region110: #{_clip_loss_tiled.1} parent=31 // pred_check_branch
          %8804 = sbr.rel (%p8802) target = $region112
        $region111: #{_clip_loss_tiled.1} parent=31 // pred_region
          %s8805 = smul.u32 4, %s37
        $region112: #{_clip_loss_tiled.1} parent=31 // pred_fallthru
          _
        // Predicated region
        $region113: #{_clip_loss_tiled.1} parent=31 // pred_check
          %p8806 = pneg %p284
        $region114: #{_clip_loss_tiled.1} parent=31 // pred_check_branch
          %8808 = sbr.rel (%p8806) target = $region116
        $region115: #{_clip_loss_tiled.1} parent=31 // pred_region
          %s8809 = smul.u32 4, %s37
        $region116: #{_clip_loss_tiled.1} parent=31 // pred_fallthru
          _
        // Predicated region
        $region117: #{_clip_loss_tiled.1} parent=31 // pred_check
          %p8810 = pneg %p310
        $region118: #{_clip_loss_tiled.1} parent=31 // pred_check_branch
          %8812 = sbr.rel (%p8810) target = $region120
        $region119: #{_clip_loss_tiled.1} parent=31 // pred_region
          _
        $region120: #{_clip_loss_tiled.1} parent=31 // pred_fallthru
          _
        // Predicated region
        $region121: #{_clip_loss_tiled.1} parent=31 // pred_check
          %p8813 = pneg %p336
        $region122: #{_clip_loss_tiled.1} parent=31 // pred_check_branch
          %8815 = sbr.rel (%p8813) target = $region124
        $region123: #{_clip_loss_tiled.1} parent=31 // pred_region
          _
        $region124: #{_clip_loss_tiled.1} parent=31 // pred_fallthru
          _
        // Predicated region
        $region125: #{_clip_loss_tiled.1} parent=31 // pred_check
          %p8816 = pneg %p364
        $region126: #{_clip_loss_tiled.1} parent=31 // pred_check_branch
          %8818 = sbr.rel (%p8816) target = $region128
        $region127: #{_clip_loss_tiled.1} parent=31 // pred_region
          %s8819 = smul.u32 4, %s37
        $region128: #{_clip_loss_tiled.1} parent=31 // pred_fallthru
          _
        // Predicated region
        $region129: #{_clip_loss_tiled.1} parent=31 // pred_check
          %p8820 = pneg %p392
        $region130: #{_clip_loss_tiled.1} parent=31 // pred_check_branch
          %8822 = sbr.rel (%p8820) target = $region132
        $region131: #{_clip_loss_tiled.1} parent=31 // pred_region
          %s8823 = smul.u32 4, %s37
        $region132: #{_clip_loss_tiled.1} parent=31 // pred_fallthru
          _
        // Predicated region
        $region133: #{_clip_loss_tiled.1} parent=31 // pred_check
          %p8824 = pneg %p418
        $region134: #{_clip_loss_tiled.1} parent=31 // pred_check_branch
          %8826 = sbr.rel (%p8824) target = $region136
        $region135: #{_clip_loss_tiled.1} parent=31 // pred_region
          _
        $region136: #{_clip_loss_tiled.1} parent=31 // pred_fallthru
          _
        // Predicated region
        $region137: #{_clip_loss_tiled.1} parent=31 // pred_check
          %p8827 = pneg %p444
        $region138: #{_clip_loss_tiled.1} parent=31 // pred_check_branch
          %8829 = sbr.rel (%p8827) target = $region140
        $region139: #{_clip_loss_tiled.1} parent=31 // pred_region
          _
        $region140: #{_clip_loss_tiled.1} parent=31 // pred_fallthru
          _
      $region32: #{_clip_loss_tiled.1} parent=5 // pred_fallthru
        _
      %p8830 = scmp.le.s32.totalorder 2, %s27
      // Predicated region
      $region141: #{_clip_loss_tiled.1} parent=5 // pred_check
        %p8831 = pneg %p8830
      $region142: #{_clip_loss_tiled.1} parent=5 // pred_check_branch
        %8833 = sbr.rel (%p8831) target = $region144
      $region143: #{_clip_loss_tiled.1} parent=5 // pred_region
        %s8834 = ssub.s32 %s27, 2
        // Predicated region
        $region145: #{_clip_loss_tiled.1} parent=143 // pred_check
          %p8835 = pneg %p154
        $region146: #{_clip_loss_tiled.1} parent=143 // pred_check_branch
          %8837 = sbr.rel (%p8835) target = $region148
        $region147: #{_clip_loss_tiled.1} parent=143 // pred_region
          %s8838 = smul.u32 4, %s39
          %p8839 = scmp.lt.s32.totalorder %s38, 1
          %s8840 = scalar_select %p8839, %s38, 1
          %p8841 = scmp.lt.s32.totalorder %s8838, 3
          %s8842 = scalar_select %p8841, %s8838, 3
          %s8843 = smul.addr %s8840, 4
          %s8844 = sadd.s32 %s8842, %s8843
          %s8845 = scalar_lea.vmem %s3, %s8844
        $region148: #{_clip_loss_tiled.1} parent=143 // pred_fallthru
          _
        // Predicated region
        $region149: #{_clip_loss_tiled.1} parent=143 // pred_check
          %p8846 = pneg %p182
        $region150: #{_clip_loss_tiled.1} parent=143 // pred_check_branch
          %8848 = sbr.rel (%p8846) target = $region152
        $region151: #{_clip_loss_tiled.1} parent=143 // pred_region
          %s8849 = smul.u32 4, %s39
          %p8850 = scmp.lt.s32.totalorder %s38, 1
          %s8851 = scalar_select %p8850, %s38, 1
          %p8852 = scmp.lt.s32.totalorder %s8849, 3
          %s8853 = scalar_select %p8852, %s8849, 3
          %s8854 = smul.addr %s8851, 4
          %s8855 = sadd.s32 %s8853, %s8854
          %s8856 = scalar_lea.vmem %s4, %s8855
        $region152: #{_clip_loss_tiled.1} parent=143 // pred_fallthru
          _
        // Predicated region
        $region153: #{_clip_loss_tiled.1} parent=143 // pred_check
          %p8857 = pneg %p208
        $region154: #{_clip_loss_tiled.1} parent=143 // pred_check_branch
          %8859 = sbr.rel (%p8857) target = $region156
        $region155: #{_clip_loss_tiled.1} parent=143 // pred_region
          %p8860 = scmp.lt.s32.totalorder %s38, 1
          %s8861 = scalar_select %p8860, %s38, 1
          %s8862 = scalar_lea.vmem %s5, %s8861
        $region156: #{_clip_loss_tiled.1} parent=143 // pred_fallthru
          _
        // Predicated region
        $region157: #{_clip_loss_tiled.1} parent=143 // pred_check
          %p8863 = pneg %p234
        $region158: #{_clip_loss_tiled.1} parent=143 // pred_check_branch
          %8865 = sbr.rel (%p8863) target = $region160
        $region159: #{_clip_loss_tiled.1} parent=143 // pred_region
          %p8866 = scmp.lt.s32.totalorder %s38, 1
          %s8867 = scalar_select %p8866, %s38, 1
          %s8868 = scalar_lea.vmem %s6, %s8867
        $region160: #{_clip_loss_tiled.1} parent=143 // pred_fallthru
          _
        // Predicated region
        $region161: #{_clip_loss_tiled.1} parent=143 // pred_check
          %p8869 = pneg %p262
        $region162: #{_clip_loss_tiled.1} parent=143 // pred_check_branch
          %8871 = sbr.rel (%p8869) target = $region164
        $region163: #{_clip_loss_tiled.1} parent=143 // pred_region
          %s8872 = smul.u32 4, %s39
          %p8873 = scmp.lt.s32.totalorder %s38, 1
          %s8874 = scalar_select %p8873, %s38, 1
          %p8875 = scmp.lt.s32.totalorder %s8872, 3
          %s8876 = scalar_select %p8875, %s8872, 3
          %s8877 = smul.addr %s8874, 4
          %s8878 = sadd.s32 %s8876, %s8877
          %s8879 = scalar_lea.vmem %s7, %s8878
        $region164: #{_clip_loss_tiled.1} parent=143 // pred_fallthru
          _
        // Predicated region
        $region165: #{_clip_loss_tiled.1} parent=143 // pred_check
          %p8880 = pneg %p290
        $region166: #{_clip_loss_tiled.1} parent=143 // pred_check_branch
          %8882 = sbr.rel (%p8880) target = $region168
        $region167: #{_clip_loss_tiled.1} parent=143 // pred_region
          %s8883 = smul.u32 4, %s39
          %p8884 = scmp.lt.s32.totalorder %s38, 1
          %s8885 = scalar_select %p8884, %s38, 1
          %p8886 = scmp.lt.s32.totalorder %s8883, 3
          %s8887 = scalar_select %p8886, %s8883, 3
          %s8888 = smul.addr %s8885, 4
          %s8889 = sadd.s32 %s8887, %s8888
          %s8890 = scalar_lea.vmem %s8, %s8889
        $region168: #{_clip_loss_tiled.1} parent=143 // pred_fallthru
          _
        // Predicated region
        $region169: #{_clip_loss_tiled.1} parent=143 // pred_check
          %p8891 = pneg %p316
        $region170: #{_clip_loss_tiled.1} parent=143 // pred_check_branch
          %8893 = sbr.rel (%p8891) target = $region172
        $region171: #{_clip_loss_tiled.1} parent=143 // pred_region
          %p8894 = scmp.lt.s32.totalorder %s38, 1
          %s8895 = scalar_select %p8894, %s38, 1
          %s8896 = scalar_lea.vmem %s9, %s8895
        $region172: #{_clip_loss_tiled.1} parent=143 // pred_fallthru
          _
        // Predicated region
        $region173: #{_clip_loss_tiled.1} parent=143 // pred_check
          %p8897 = pneg %p342
        $region174: #{_clip_loss_tiled.1} parent=143 // pred_check_branch
          %8899 = sbr.rel (%p8897) target = $region176
        $region175: #{_clip_loss_tiled.1} parent=143 // pred_region
          %p8900 = scmp.lt.s32.totalorder %s38, 1
          %s8901 = scalar_select %p8900, %s38, 1
          %s8902 = scalar_lea.vmem %s10, %s8901
        $region176: #{_clip_loss_tiled.1} parent=143 // pred_fallthru
          _
        // Predicated region
        $region177: #{_clip_loss_tiled.1} parent=143 // pred_check
          %p8903 = pneg %p370
        $region178: #{_clip_loss_tiled.1} parent=143 // pred_check_branch
          %8905 = sbr.rel (%p8903) target = $region180
        $region179: #{_clip_loss_tiled.1} parent=143 // pred_region
          %s8906 = smul.u32 4, %s39
          %p8907 = scmp.lt.s32.totalorder %s38, 1
          %s8908 = scalar_select %p8907, %s38, 1
          %p8909 = scmp.lt.s32.totalorder %s8906, 3
          %s8910 = scalar_select %p8909, %s8906, 3
          %s8911 = smul.addr %s8908, 4
          %s8912 = sadd.s32 %s8910, %s8911
          %s8913 = scalar_lea.vmem %s11, %s8912
        $region180: #{_clip_loss_tiled.1} parent=143 // pred_fallthru
          _
        // Predicated region
        $region181: #{_clip_loss_tiled.1} parent=143 // pred_check
          %p8914 = pneg %p398
        $region182: #{_clip_loss_tiled.1} parent=143 // pred_check_branch
          %8916 = sbr.rel (%p8914) target = $region184
        $region183: #{_clip_loss_tiled.1} parent=143 // pred_region
          %s8917 = smul.u32 4, %s39
          %p8918 = scmp.lt.s32.totalorder %s38, 1
          %s8919 = scalar_select %p8918, %s38, 1
          %p8920 = scmp.lt.s32.totalorder %s8917, 3
          %s8921 = scalar_select %p8920, %s8917, 3
          %s8922 = smul.addr %s8919, 4
          %s8923 = sadd.s32 %s8921, %s8922
          %s8924 = scalar_lea.vmem %s12, %s8923
        $region184: #{_clip_loss_tiled.1} parent=143 // pred_fallthru
          _
        // Predicated region
        $region185: #{_clip_loss_tiled.1} parent=143 // pred_check
          %p8925 = pneg %p424
        $region186: #{_clip_loss_tiled.1} parent=143 // pred_check_branch
          %8927 = sbr.rel (%p8925) target = $region188
        $region187: #{_clip_loss_tiled.1} parent=143 // pred_region
          %p8928 = scmp.lt.s32.totalorder %s38, 1
          %s8929 = scalar_select %p8928, %s38, 1
          %s8930 = scalar_lea.vmem %s13, %s8929
        $region188: #{_clip_loss_tiled.1} parent=143 // pred_fallthru
          _
        // Predicated region
        $region189: #{_clip_loss_tiled.1} parent=143 // pred_check
          %p8931 = pneg %p450
        $region190: #{_clip_loss_tiled.1} parent=143 // pred_check_branch
          %8933 = sbr.rel (%p8931) target = $region192
        $region191: #{_clip_loss_tiled.1} parent=143 // pred_region
          %p8934 = scmp.lt.s32.totalorder %s38, 1
          %s8935 = scalar_select %p8934, %s38, 1
          %s8936 = scalar_lea.vmem %s14, %s8935
        $region192: #{_clip_loss_tiled.1} parent=143 // pred_fallthru
          _
      $region144: #{_clip_loss_tiled.1} parent=5 // pred_fallthru
        _
    $region6: #{_clip_loss_tiled.1} parent=1 // loop_footer
      %s31 = sadd.s32 1, %s27
    $region7: #{_clip_loss_tiled.1} parent=1 // loop_footer_branch
      %26 = sbr.rel target = $region3
    $region8: #{_clip_loss_tiled.1} parent=1 // loop_exit
      _
    %8937 = vsyncpa [#allocation9], 1
    %s8938 = scalar_lea.sflag [#allocation9], 1
    %8939 = vsyncpa %s8938, 1
    %8940 = vsyncpa [#allocation11], 1
    %s8941 = scalar_lea.sflag [#allocation11], 1
    %8942 = vsyncpa %s8941, 1

</llo_original>
